<compile_context>
chip_gen: v6e
topology: v6e:2x2x1
jax: 0.10.0
libtpu: 0.0.40
codegen_flags: <defaults>
</compile_context>

<pallas_src>
import functools

import jax
import jax.numpy as jnp
from jax import lax
from jax.experimental import pallas as pl
from jax.experimental.pallas import tpu as pltpu

_LN_EPS = 1e-5


def _layer_norm(v, gamma, beta):
    mu = jnp.mean(v, axis=-1, keepdims=True)
    var = jnp.mean(jnp.square(v - mu), axis=-1, keepdims=True)
    return (v - mu) * lax.rsqrt(var + _LN_EPS) * gamma + beta


# ----------------------------------------------------------------------------
# Fused Pallas kernel: embedding -> L x encoder layer -> final LN -> FC -> Tanhshrink
# ----------------------------------------------------------------------------
def transformer_kernel(x_ref, emb_w_ref, wqkv_ref, bq_ref, wo_ref,
                       w1_ref, w2_ref, vec_ref, out_ref):
    """One grid step processes a block of Bblk sequences (token rows folded together).

    x_ref    : (1, Bblk*T, I)          folded input tokens of this block
    emb_w    : (I, d)                  embedding Linear weight (already (in, out))
    wqkv     : (L*3*nhead, d, hd)      per-layer, per-head q/k/v projection weights
    bq       : (L*nhead, 1, hd)        per-head Q bias (K bias dropped, V bias folded)
    wo       : (L*nhead, hd, d)        per-head attention out-projection weights
    w1/w2    : (L, d, F) / (L, F, d)   FFN weights
    vec      : (4+7L+O, Wmax)          packed bias/LN/fc-vector table (row indexed)
    out_ref  : (1, Bblk, O)
    """
    Bblk = out_ref.shape[1]
    O = out_ref.shape[2]
    N = x_ref.shape[1]                       # Bblk * T folded token rows
    T = N // Bblk
    d = emb_w_ref.shape[1]
    L = w1_ref.shape[0]
    F = w1_ref.shape[2]
    hd = wqkv_ref.shape[2]
    nhead = wqkv_ref.shape[0] // (3 * L)
    scale = 1.0 / (hd ** 0.5)

    def vec(row, width):                     # (1, width) row of the packed vector table
        return vec_ref[row:row + 1, :width]

    x = x_ref[0].astype(jnp.float32)                                      # (N, I)
    h = jnp.dot(x, emb_w_ref[...], preferred_element_type=jnp.float32) + vec(0, d)

    for l in range(L):                        # static -> fully unrolled
        base = 1 + 7 * l
        bo_eff = vec(base + 0, d)             # out-proj bias with folded V bias
        ln1g, ln1b = vec(base + 1, d), vec(base + 2, d)
        b1 = vec(base + 3, F)
        b2 = vec(base + 4, d)
        ln2g, ln2b = vec(base + 5, d), vec(base + 6, d)

        # ---- multi-head self-attention (heads on a leading weight axis: no lane slicing)
        attn = jnp.zeros((N, d), jnp.float32)
        for hh in range(nhead):               # static; each head's ctx folded into out-proj
            wq = wqkv_ref[(l * 3 + 0) * nhead + hh]          # (d, hd) leading-axis views
            wk = wqkv_ref[(l * 3 + 1) * nhead + hh]
            wv = wqkv_ref[(l * 3 + 2) * nhead + hh]
            qb = bq_ref[l * nhead + hh]                      # (1, hd)

            q = (jnp.dot(h, wq, preferred_element_type=jnp.float32) + qb) * scale
            k = jnp.dot(h, wk, preferred_element_type=jnp.float32)
            v = jnp.dot(h, wv, preferred_element_type=jnp.float32)

            # per-sequence attention: fold token rows back to (Bblk, T, hd) (leading split)
            q3 = q.reshape(Bblk, T, hd)
            k3 = k.reshape(Bblk, T, hd)
            v3 = v.reshape(Bblk, T, hd)
            s = jnp.einsum('bqd,bkd->bqk', q3, k3,
                           preferred_element_type=jnp.float32)            # (Bblk, T, T)
            s = s - jnp.max(s, axis=-1, keepdims=True)
            p = jnp.exp(s)
            p = p * pl.reciprocal(jnp.sum(p, axis=-1, keepdims=True), approx=True)
            ctx = jnp.einsum('bqk,bkd->bqd', p, v3,
                             preferred_element_type=jnp.float32)          # (Bblk, T, hd)
            attn = attn + jnp.dot(ctx.reshape(N, hd), wo_ref[l * nhead + hh],
                                  preferred_element_type=jnp.float32)
        attn = attn + bo_eff                                              # (N, d)

        # ---- Add & Norm (post-LN, PyTorch default norm_first=False)
        h = _layer_norm(h + attn, ln1g, ln1b)

        # ---- Feed-forward: Linear -> ReLU -> Linear, Add & Norm
        ff = jnp.maximum(
            jnp.dot(h, w1_ref[l], preferred_element_type=jnp.float32) + b1, 0.0)
        ff = jnp.dot(ff, w2_ref[l], preferred_element_type=jnp.float32) + b2
        h = _layer_norm(h + ff, ln2g, ln2b)

    # Final encoder LayerNorm (nn.Transformer's encoder includes one).
    h = _layer_norm(h, vec(1 + 7 * L, d), vec(2 + 7 * L, d))

    # Last time step of each sequence -> FC -> Tanhshrink.
    h_last = h.reshape(Bblk, T, d)[:, T - 1, :]                           # (Bblk, d)
    fcb = vec(3 + 7 * L + O, O)
    if O == 1:
        # VPU multiply + lane reduction instead of a 1-column matmul.
        y = jnp.sum(h_last * vec(3 + 7 * L, d), axis=-1, keepdims=True) + fcb
    else:
        fcw_t = vec_ref[3 + 7 * L:3 + 7 * L + O, :d]                      # (O, d)
        y = lax.dot_general(h_last, fcw_t, (((1,), (1,)), ((), ())),
                            preferred_element_type=jnp.float32) + fcb
    out_ref[0] = (y - jnp.tanh(y)).astype(out_ref.dtype)


# ----------------------------------------------------------------------------
# Wrapper
# ----------------------------------------------------------------------------
def _full_spec(arr):
    """Whole-array VMEM block with a constant index map (DMA'd once, revisited)."""
    zeros = (0,) * arr.ndim
    return pl.BlockSpec(arr.shape, lambda g: zeros)


@functools.partial(jax.jit, static_argnames=("block_b",))
def transformer_forward(x, packed, *, block_b=None):
    """x: (B, T, input_size) batch_first.  `packed` from pack_params().  Returns (B, O)."""
    emb_w, wqkv_h, bq_h, wo_h, w1, w2, vec_tab = packed
    B, T, I = x.shape
    L = w1.shape[0]
    O = vec_tab.shape[0] - (4 + 7 * L)

    if block_b is None:
        target = max(1, 128 // T)                        # ~128 token rows per grid step
        block_b = max(1, min(target, -(-B // 2)))        # keep >=2 parallel steps (v7x)
    G = -(-B // block_b)
    B_pad = G * block_b
    if B_pad != B:                                       # pad batch; padded rows discarded
        x = jnp.concatenate([x, jnp.zeros((B_pad - B, T, I), x.dtype)], axis=0)
    x3 = x.reshape(G, block_b * T, I)                    # fold tokens of each block

    weights = (emb_w, wqkv_h, bq_h, wo_h, w1, w2, vec_tab)
    out = pl.pallas_call(
        transformer_kernel,
        out_shape=jax.ShapeDtypeStruct((G, block_b, O), jnp.float32),
        grid=(G,),
        in_specs=[pl.BlockSpec((1, block_b * T, I), lambda g: (g, 0, 0))]
                 + [_full_spec(w) for w in weights],
        out_specs=pl.BlockSpec((1, block_b, O), lambda g: (g, 0, 0)),
        compiler_params=pltpu.CompilerParams(
            dimension_semantics=("parallel",),           # blocks shard across TensorCores
            vmem_limit_bytes=32 * 1024 * 1024),
    )(x3, *weights)
    return out.reshape(B_pad, O)[:B]


# ----------------------------------------------------------------------------
# Parameter packing: original (in, out)-layout params -> kernel slabs
# ----------------------------------------------------------------------------
def pack_params(params, nhead):
    (emb_w, emb_b, wqkv, bqkv, wo, bo, ln1g, ln1b,
     w1, b1, w2, b2, ln2g, ln2b, encg, encb, fcw, fcb) = params
    L, d, _ = wqkv.shape
    F = w1.shape[2]
    O = fcw.shape[1]
    assert d % nhead == 0
    hd = d // nhead

    # Per-head q/k/v projection weights: (L, d, 3d) -> (L*3*nhead, d, hd).
    w5 = wqkv.reshape(L, d, 3, nhead, hd)
    wqkv_h = jnp.transpose(w5, (0, 2, 3, 1, 4)).reshape(L * 3 * nhead, d, hd)

    # Q bias per head.  K bias dropped (softmax row-shift invariance).  V bias folded
    # into an effective output bias:  sum_h (p_h @ 1*vb_h) @ Wo_h = 1 * (vb_full @ Wo).
    bq_h = bqkv.reshape(L, 3, nhead, hd)[:, 0].reshape(L * nhead, 1, hd)
    bo_eff = bo + jnp.einsum('lxd,ldo->lxo', bqkv[:, :, 2 * d:], wo)

    # Per-head out-projection: (L, d, d) -> (L*nhead, hd, d).
    wo_h = wo.reshape(L, nhead, hd, d).reshape(L * nhead, hd, d)

    # Packed vector table: every (1, *) bias / LN / fc vector becomes one row.
    fcw_t = fcw.T                                        # (O, d)
    wmax = max(d, F, O)

    def row(v, width):
        return jnp.pad(v, (0, wmax - width))

    rows = [row(emb_b[0], d)]
    for l in range(L):
        rows += [row(bo_eff[l, 0], d), row(ln1g[l, 0], d), row(ln1b[l, 0], d),
                 row(b1[l, 0], F), row(b2[l, 0], d),
                 row(ln2g[l, 0], d), row(ln2b[l, 0], d)]
    rows += [row(encg[0], d), row(encb[0], d)]
    rows += [row(fcw_t[o], d) for o in range(O)]
    rows += [row(fcb[0], O)]
    vec_tab = jnp.stack(rows).astype(jnp.float32)        # (4 + 7L + O, wmax)

    return (emb_w, wqkv_h, bq_h, wo_h, w1, w2, vec_tab)


# ----------------------------------------------------------------------------
# Pure-JAX reference (operates on the ORIGINAL params; ground truth for the check)
# ----------------------------------------------------------------------------
def transformer_forward_ref(x, params, nhead):
    (emb_w, emb_b, wqkv, bqkv, wo, bo, ln1g, ln1b,
     w1, b1, w2, b2, ln2g, ln2b, encg, encb, fcw, fcb) = params
    d_model = emb_w.shape[1]
    head_dim = d_model // nhead
    scale = 1.0 / (head_dim ** 0.5)
    B, T, _ = x.shape
    num_layers = wqkv.shape[0]

    h = x @ emb_w + emb_b
    for l in range(num_layers):
        qkv = h @ wqkv[l] + bqkv[l]
        q = qkv[..., :d_model]
        k = qkv[..., d_model:2 * d_model]
        v = qkv[..., 2 * d_model:]
        qh = q.reshape(B, T, nhead, head_dim).transpose(0, 2, 1, 3) * scale
        kh = k.reshape(B, T, nhead, head_dim).transpose(0, 2, 1, 3)
        vh = v.reshape(B, T, nhead, head_dim).transpose(0, 2, 1, 3)
        s = jnp.einsum('bhqd,bhkd->bhqk', qh, kh)
        p = jax.nn.softmax(s, axis=-1)
        ctx = jnp.einsum('bhqk,bhkd->bhqd', p, vh).transpose(0, 2, 1, 3).reshape(B, T, d_model)
        attn = ctx @ wo[l] + bo[l]
        h = _layer_norm(h + attn, ln1g[l], ln1b[l])
        ff = jax.nn.relu(h @ w1[l] + b1[l]) @ w2[l] + b2[l]
        h = _layer_norm(h + ff, ln2g[l], ln2b[l])
    h = _layer_norm(h, encg, encb)
    y = h[:, -1, :] @ fcw + fcb
    return y - jnp.tanh(y)


# ----------------------------------------------------------------------------
# Deterministic parameter init (PyTorch-style uniform(-1/sqrt(fan_in), ...));
# weights are stored ALREADY transposed to (in, out) so the forward never transposes.
# ----------------------------------------------------------------------------
def init_params(key, input_size, d_model, nhead, num_encoder_layers,
                dim_feedforward, output_size):
    def linear(k, fan_in, fan_out):
        k1, k2 = jax.random.split(k)
        bound = 1.0 / (fan_in ** 0.5)
        w = jax.random.uniform(k1, (fan_in, fan_out), jnp.float32, -bound, bound)
        b = jax.random.uniform(k2, (1, fan_out), jnp.float32, -bound, bound)
        return w, b

    def ln_params(k):
        k1, k2 = jax.random.split(k)
        g = 1.0 + 0.1 * jax.random.uniform(k1, (1, d_model), jnp.float32, -1.0, 1.0)
        b = 0.1 * jax.random.uniform(k2, (1, d_model), jnp.float32, -1.0, 1.0)
        return g, b

    key, k_emb = jax.random.split(key)
    emb_w, emb_b = linear(k_emb, input_size, d_model)

    wqkv_l, bqkv_l, wo_l, bo_l = [], [], [], []
    ln1g_l, ln1b_l, w1_l, b1_l, w2_l, b2_l, ln2g_l, ln2b_l = ([] for _ in range(8))
    for _ in range(num_encoder_layers):
        key, ka, kb, kc, kd, ke, kf = jax.random.split(key, 7)
        w_qkv, b_qkv = linear(ka, d_model, 3 * d_model)
        w_o, b_o = linear(kb, d_model, d_model)
        w1, b1 = linear(kc, d_model, dim_feedforward)
        w2, b2 = linear(kd, dim_feedforward, d_model)
        g1, bb1 = ln_params(ke)
        g2, bb2 = ln_params(kf)
        wqkv_l.append(w_qkv); bqkv_l.append(b_qkv)
        wo_l.append(w_o); bo_l.append(b_o)
        w1_l.append(w1); b1_l.append(b1)
        w2_l.append(w2); b2_l.append(b2)
        ln1g_l.append(g1); ln1b_l.append(bb1)
        ln2g_l.append(g2); ln2b_l.append(bb2)

    key, k_enc, k_fc = jax.random.split(key, 3)
    encg, encb = ln_params(k_enc)
    fc_w, fc_b = linear(k_fc, d_model, output_size)

    return (emb_w, emb_b,
            jnp.stack(wqkv_l), jnp.stack(bqkv_l),
            jnp.stack(wo_l), jnp.stack(bo_l),
            jnp.stack(ln1g_l), jnp.stack(ln1b_l),
            jnp.stack(w1_l), jnp.stack(b1_l),
            jnp.stack(w2_l), jnp.stack(b2_l),
            jnp.stack(ln2g_l), jnp.stack(ln2b_l),
            encg, encb, fc_w, fc_b)


if __name__ == "__main__":
    # Small shapes consistent with the module's forward (B=8 exercises batch folding
    # with 2 parallel grid steps of Bblk=4 sequences / 32 token rows each).
    B, T = 8, 8
    input_size = 4
    d_model = 32
    nhead = 4
    num_encoder_layers = 2
    dim_feedforward = 64
    output_size = 1

    key = jax.random.PRNGKey(0)
    key, kx = jax.random.split(key)
    x = jax.random.normal(kx, (B, T, input_size), jnp.float32)

    params = init_params(key, input_size, d_model, nhead, num_encoder_layers,
                         dim_feedforward, output_size)
    packed = pack_params(params, nhead)

    out = transformer_forward(x, packed)
    out = jax.block_until_ready(out)

    ref = transformer_forward_ref(x, params, nhead)
    assert out.shape == (B, output_size), out.shape
    # Tolerance accounts for the EUP approximate-reciprocal softmax denominator.
    assert jnp.allclose(out, ref, atol=3e-3, rtol=3e-3), (out, ref)

    print("KERNEL_OK")
</pallas_src>

<mosaic_0001>
module attributes {stable_mosaic.version = 11 : i64} {
  func.func @transformer_kernel(%arg0: i32, %arg1: memref<1x32x4xf32, #tpu.memory_space<vmem>>, %arg2: memref<4x32xf32, #tpu.memory_space<vmem>>, %arg3: memref<24x32x8xf32, #tpu.memory_space<vmem>>, %arg4: memref<8x1x8xf32, #tpu.memory_space<vmem>>, %arg5: memref<8x8x32xf32, #tpu.memory_space<vmem>>, %arg6: memref<2x32x64xf32, #tpu.memory_space<vmem>>, %arg7: memref<2x64x32xf32, #tpu.memory_space<vmem>>, %arg8: memref<19x64xf32, #tpu.memory_space<vmem>>, %arg9: memref<1x4x1xf32, #tpu.memory_space<vmem>>) attributes {dimension_semantics = [#tpu.dimension_semantics<parallel>], iteration_bounds = array<i64: 2>, scalar_prefetch = 0 : i64, scratch_operands = 0 : i64, tpu.core_type = #tpu.core_type<tc>, window_params = [{transform_indices = @transform_0, window_bounds = array<i64: 1, 32, 4>}, {pipeline_mode = #tpu.pipeline_mode<synchronous>, transform_indices = @transform_1, window_bounds = array<i64: 4, 32>}, {pipeline_mode = #tpu.pipeline_mode<synchronous>, transform_indices = @transform_2, window_bounds = array<i64: 24, 32, 8>}, {pipeline_mode = #tpu.pipeline_mode<synchronous>, transform_indices = @transform_3, window_bounds = array<i64: 8, 1, 8>}, {pipeline_mode = #tpu.pipeline_mode<synchronous>, transform_indices = @transform_4, window_bounds = array<i64: 8, 8, 32>}, {pipeline_mode = #tpu.pipeline_mode<synchronous>, transform_indices = @transform_5, window_bounds = array<i64: 2, 32, 64>}, {pipeline_mode = #tpu.pipeline_mode<synchronous>, transform_indices = @transform_6, window_bounds = array<i64: 2, 64, 32>}, {pipeline_mode = #tpu.pipeline_mode<synchronous>, transform_indices = @transform_7, window_bounds = array<i64: 19, 64>}, {transform_indices = @transform_8, window_bounds = array<i64: 1, 4, 1>}]} {
    %c0 = arith.constant 0 : index
    %c0_0 = arith.constant 0 : index
    %c0_1 = arith.constant 0 : index
    %0 = vector.load %arg1[%c0, %c0_0, %c0_1] : memref<1x32x4xf32, #tpu.memory_space<vmem>>, vector<1x32x4xf32>
    %1 = vector.shape_cast %0 : vector<1x32x4xf32> to vector<32x4xf32>
    %c0_2 = arith.constant 0 : index
    %c0_3 = arith.constant 0 : index
    %2 = vector.load %arg2[%c0_2, %c0_3] : memref<4x32xf32, #tpu.memory_space<vmem>>, vector<4x32xf32>
    %cst = arith.constant dense<0.000000e+00> : vector<32x32xf32>
    %3 = tpu.matmul %1, %2, %cst {dimension_numbers = #tpu.dot_dimension_numbers<[1], [0], [0], [1], [0, 0, 1, 1], [], []>} : vector<32x4xf32>, vector<4x32xf32>, vector<32x32xf32> -> vector<32x32xf32>
    %c0_4 = arith.constant 0 : index
    %c0_5 = arith.constant 0 : index
    %4 = vector.load %arg8[%c0_4, %c0_5] : memref<19x64xf32, #tpu.memory_space<vmem>>, vector<1x32xf32>
    %5 = vector.broadcast %4 : vector<1x32xf32> to vector<32x32xf32>
    %6 = arith.addf %3, %5 : vector<32x32xf32>
    %c1 = arith.constant 1 : index
    %c0_6 = arith.constant 0 : index
    %7 = vector.load %arg8[%c1, %c0_6] : memref<19x64xf32, #tpu.memory_space<vmem>>, vector<1x32xf32>
    %c2 = arith.constant 2 : index
    %c0_7 = arith.constant 0 : index
    %8 = vector.load %arg8[%c2, %c0_7] : memref<19x64xf32, #tpu.memory_space<vmem>>, vector<1x32xf32>
    %c3 = arith.constant 3 : index
    %c0_8 = arith.constant 0 : index
    %9 = vector.load %arg8[%c3, %c0_8] : memref<19x64xf32, #tpu.memory_space<vmem>>, vector<1x32xf32>
    %c4 = arith.constant 4 : index
    %c0_9 = arith.constant 0 : index
    %10 = vector.load %arg8[%c4, %c0_9] : memref<19x64xf32, #tpu.memory_space<vmem>>, vector<1x64xf32>
    %c5 = arith.constant 5 : index
    %c0_10 = arith.constant 0 : index
    %11 = vector.load %arg8[%c5, %c0_10] : memref<19x64xf32, #tpu.memory_space<vmem>>, vector<1x32xf32>
    %c6 = arith.constant 6 : index
    %c0_11 = arith.constant 0 : index
    %12 = vector.load %arg8[%c6, %c0_11] : memref<19x64xf32, #tpu.memory_space<vmem>>, vector<1x32xf32>
    %c7 = arith.constant 7 : index
    %c0_12 = arith.constant 0 : index
    %13 = vector.load %arg8[%c7, %c0_12] : memref<19x64xf32, #tpu.memory_space<vmem>>, vector<1x32xf32>
    %cst_13 = arith.constant 0.000000e+00 : f32
    %14 = vector.broadcast %cst_13 : f32 to vector<32x32xf32>
    %c0_14 = arith.constant 0 : index
    %c0_15 = arith.constant 0 : index
    %c0_16 = arith.constant 0 : index
    %15 = vector.load %arg3[%c0_14, %c0_15, %c0_16] : memref<24x32x8xf32, #tpu.memory_space<vmem>>, vector<1x32x8xf32>
    %16 = vector.shape_cast %15 : vector<1x32x8xf32> to vector<32x8xf32>
    %c4_17 = arith.constant 4 : index
    %c0_18 = arith.constant 0 : index
    %c0_19 = arith.constant 0 : index
    %17 = vector.load %arg3[%c4_17, %c0_18, %c0_19] : memref<24x32x8xf32, #tpu.memory_space<vmem>>, vector<1x32x8xf32>
    %18 = vector.shape_cast %17 : vector<1x32x8xf32> to vector<32x8xf32>
    %c8 = arith.constant 8 : index
    %c0_20 = arith.constant 0 : index
    %c0_21 = arith.constant 0 : index
    %19 = vector.load %arg3[%c8, %c0_20, %c0_21] : memref<24x32x8xf32, #tpu.memory_space<vmem>>, vector<1x32x8xf32>
    %20 = vector.shape_cast %19 : vector<1x32x8xf32> to vector<32x8xf32>
    %c0_22 = arith.constant 0 : index
    %c0_23 = arith.constant 0 : index
    %c0_24 = arith.constant 0 : index
    %21 = vector.load %arg4[%c0_22, %c0_23, %c0_24] : memref<8x1x8xf32, #tpu.memory_space<vmem>>, vector<1x1x8xf32>
    %22 = vector.shape_cast %21 : vector<1x1x8xf32> to vector<1x8xf32>
    %cst_25 = arith.constant dense<0.000000e+00> : vector<32x8xf32>
    %23 = tpu.matmul %6, %16, %cst_25 {dimension_numbers = #tpu.dot_dimension_numbers<[1], [0], [0], [1], [0, 0, 1, 1], [], []>} : vector<32x32xf32>, vector<32x8xf32>, vector<32x8xf32> -> vector<32x8xf32>
    %24 = vector.broadcast %22 : vector<1x8xf32> to vector<32x8xf32>
    %25 = arith.addf %23, %24 : vector<32x8xf32>
    %cst_26 = arith.constant 0.353553385 : f32
    %26 = vector.broadcast %cst_26 : f32 to vector<32x8xf32>
    %27 = arith.mulf %25, %26 : vector<32x8xf32>
    %cst_27 = arith.constant dense<0.000000e+00> : vector<32x8xf32>
    %28 = tpu.matmul %6, %18, %cst_27 {dimension_numbers = #tpu.dot_dimension_numbers<[1], [0], [0], [1], [0, 0, 1, 1], [], []>} : vector<32x32xf32>, vector<32x8xf32>, vector<32x8xf32> -> vector<32x8xf32>
    %cst_28 = arith.constant dense<0.000000e+00> : vector<32x8xf32>
    %29 = tpu.matmul %6, %20, %cst_28 {dimension_numbers = #tpu.dot_dimension_numbers<[1], [0], [0], [1], [0, 0, 1, 1], [], []>} : vector<32x32xf32>, vector<32x8xf32>, vector<32x8xf32> -> vector<32x8xf32>
    %30 = vector.shape_cast %27 : vector<32x8xf32> to vector<4x8x8xf32>
    %31 = vector.shape_cast %28 : vector<32x8xf32> to vector<4x8x8xf32>
    %32 = vector.shape_cast %29 : vector<32x8xf32> to vector<4x8x8xf32>
    "tpu.trace_start"() <{level = 10 : i32, message = "bqd,bkd->bqk"}> : () -> ()
    %cst_29 = arith.constant dense<0.000000e+00> : vector<4x8x8xf32>
    %33 = tpu.matmul %30, %31, %cst_29 {dimension_numbers = #tpu.dot_dimension_numbers<[2], [2], [1], [1], [0, 0, 0, 1, 1, 1], [0], [0]>} : vector<4x8x8xf32>, vector<4x8x8xf32>, vector<4x8x8xf32> -> vector<4x8x8xf32>
    "tpu.trace_stop"() : () -> ()
    %cst_30 = arith.constant dense<0xFF800000> : vector<4x8xf32>
    %34 = vector.multi_reduction <maximumf>, %33, %cst_30 [2] : vector<4x8x8xf32> to vector<4x8xf32>
    %35 = vector.shape_cast %34 : vector<4x8xf32> to vector<4x8x1xf32>
    %36 = vector.broadcast %35 : vector<4x8x1xf32> to vector<4x8x8xf32>
    %37 = arith.subf %33, %36 : vector<4x8x8xf32>
    %38 = math.exp %37 : vector<4x8x8xf32>
    %cst_31 = arith.constant dense<0.000000e+00> : vector<4x8xf32>
    %39 = vector.multi_reduction <add>, %38, %cst_31 [2] : vector<4x8x8xf32> to vector<4x8xf32>
    %40 = vector.shape_cast %39 : vector<4x8xf32> to vector<4x8x1xf32>
    %41 = tpu.reciprocal %40 {approx = true} : vector<4x8x1xf32> -> vector<4x8x1xf32>
    %42 = vector.broadcast %41 : vector<4x8x1xf32> to vector<4x8x8xf32>
    %43 = arith.mulf %38, %42 : vector<4x8x8xf32>
    "tpu.trace_start"() <{level = 10 : i32, message = "bqk,bkd->bqd"}> : () -> ()
    %cst_32 = arith.constant dense<0.000000e+00> : vector<4x8x8xf32>
    %44 = tpu.matmul %43, %32, %cst_32 {dimension_numbers = #tpu.dot_dimension_numbers<[2], [1], [1], [2], [0, 0, 0, 1, 1, 2], [0], [0]>} : vector<4x8x8xf32>, vector<4x8x8xf32>, vector<4x8x8xf32> -> vector<4x8x8xf32>
    "tpu.trace_stop"() : () -> ()
    %45 = vector.shape_cast %44 : vector<4x8x8xf32> to vector<32x8xf32>
    %c0_33 = arith.constant 0 : index
    %c0_34 = arith.constant 0 : index
    %c0_35 = arith.constant 0 : index
    %46 = vector.load %arg5[%c0_33, %c0_34, %c0_35] : memref<8x8x32xf32, #tpu.memory_space<vmem>>, vector<1x8x32xf32>
    %47 = vector.shape_cast %46 : vector<1x8x32xf32> to vector<8x32xf32>
    %cst_36 = arith.constant dense<0.000000e+00> : vector<32x32xf32>
    %48 = tpu.matmul %45, %47, %cst_36 {dimension_numbers = #tpu.dot_dimension_numbers<[1], [0], [0], [1], [0, 0, 1, 1], [], []>} : vector<32x8xf32>, vector<8x32xf32>, vector<32x32xf32> -> vector<32x32xf32>
    %49 = arith.addf %14, %48 : vector<32x32xf32>
    %c1_37 = arith.constant 1 : index
    %c0_38 = arith.constant 0 : index
    %c0_39 = arith.constant 0 : index
    %50 = vector.load %arg3[%c1_37, %c0_38, %c0_39] : memref<24x32x8xf32, #tpu.memory_space<vmem>>, vector<1x32x8xf32>
    %51 = vector.shape_cast %50 : vector<1x32x8xf32> to vector<32x8xf32>
    %c5_40 = arith.constant 5 : index
    %c0_41 = arith.constant 0 : index
    %c0_42 = arith.constant 0 : index
    %52 = vector.load %arg3[%c5_40, %c0_41, %c0_42] : memref<24x32x8xf32, #tpu.memory_space<vmem>>, vector<1x32x8xf32>
    %53 = vector.shape_cast %52 : vector<1x32x8xf32> to vector<32x8xf32>
    %c9 = arith.constant 9 : index
    %c0_43 = arith.constant 0 : index
    %c0_44 = arith.constant 0 : index
    %54 = vector.load %arg3[%c9, %c0_43, %c0_44] : memref<24x32x8xf32, #tpu.memory_space<vmem>>, vector<1x32x8xf32>
    %55 = vector.shape_cast %54 : vector<1x32x8xf32> to vector<32x8xf32>
    %c1_45 = arith.constant 1 : index
    %c0_46 = arith.constant 0 : index
    %c0_47 = arith.constant 0 : index
    %56 = vector.load %arg4[%c1_45, %c0_46, %c0_47] : memref<8x1x8xf32, #tpu.memory_space<vmem>>, vector<1x1x8xf32>
    %57 = vector.shape_cast %56 : vector<1x1x8xf32> to vector<1x8xf32>
    %cst_48 = arith.constant dense<0.000000e+00> : vector<32x8xf32>
    %58 = tpu.matmul %6, %51, %cst_48 {dimension_numbers = #tpu.dot_dimension_numbers<[1], [0], [0], [1], [0, 0, 1, 1], [], []>} : vector<32x32xf32>, vector<32x8xf32>, vector<32x8xf32> -> vector<32x8xf32>
    %59 = vector.broadcast %57 : vector<1x8xf32> to vector<32x8xf32>
    %60 = arith.addf %58, %59 : vector<32x8xf32>
    %cst_49 = arith.constant 0.353553385 : f32
    %61 = vector.broadcast %cst_49 : f32 to vector<32x8xf32>
    %62 = arith.mulf %60, %61 : vector<32x8xf32>
    %cst_50 = arith.constant dense<0.000000e+00> : vector<32x8xf32>
    %63 = tpu.matmul %6, %53, %cst_50 {dimension_numbers = #tpu.dot_dimension_numbers<[1], [0], [0], [1], [0, 0, 1, 1], [], []>} : vector<32x32xf32>, vector<32x8xf32>, vector<32x8xf32> -> vector<32x8xf32>
    %cst_51 = arith.constant dense<0.000000e+00> : vector<32x8xf32>
    %64 = tpu.matmul %6, %55, %cst_51 {dimension_numbers = #tpu.dot_dimension_numbers<[1], [0], [0], [1], [0, 0, 1, 1], [], []>} : vector<32x32xf32>, vector<32x8xf32>, vector<32x8xf32> -> vector<32x8xf32>
    %65 = vector.shape_cast %62 : vector<32x8xf32> to vector<4x8x8xf32>
    %66 = vector.shape_cast %63 : vector<32x8xf32> to vector<4x8x8xf32>
    %67 = vector.shape_cast %64 : vector<32x8xf32> to vector<4x8x8xf32>
    "tpu.trace_start"() <{level = 10 : i32, message = "bqd,bkd->bqk"}> : () -> ()
    %cst_52 = arith.constant dense<0.000000e+00> : vector<4x8x8xf32>
    %68 = tpu.matmul %65, %66, %cst_52 {dimension_numbers = #tpu.dot_dimension_numbers<[2], [2], [1], [1], [0, 0, 0, 1, 1, 1], [0], [0]>} : vector<4x8x8xf32>, vector<4x8x8xf32>, vector<4x8x8xf32> -> vector<4x8x8xf32>
    "tpu.trace_stop"() : () -> ()
    %cst_53 = arith.constant dense<0xFF800000> : vector<4x8xf32>
    %69 = vector.multi_reduction <maximumf>, %68, %cst_53 [2] : vector<4x8x8xf32> to vector<4x8xf32>
    %70 = vector.shape_cast %69 : vector<4x8xf32> to vector<4x8x1xf32>
    %71 = vector.broadcast %70 : vector<4x8x1xf32> to vector<4x8x8xf32>
    %72 = arith.subf %68, %71 : vector<4x8x8xf32>
    %73 = math.exp %72 : vector<4x8x8xf32>
    %cst_54 = arith.constant dense<0.000000e+00> : vector<4x8xf32>
    %74 = vector.multi_reduction <add>, %73, %cst_54 [2] : vector<4x8x8xf32> to vector<4x8xf32>
    %75 = vector.shape_cast %74 : vector<4x8xf32> to vector<4x8x1xf32>
    %76 = tpu.reciprocal %75 {approx = true} : vector<4x8x1xf32> -> vector<4x8x1xf32>
    %77 = vector.broadcast %76 : vector<4x8x1xf32> to vector<4x8x8xf32>
    %78 = arith.mulf %73, %77 : vector<4x8x8xf32>
    "tpu.trace_start"() <{level = 10 : i32, message = "bqk,bkd->bqd"}> : () -> ()
    %cst_55 = arith.constant dense<0.000000e+00> : vector<4x8x8xf32>
    %79 = tpu.matmul %78, %67, %cst_55 {dimension_numbers = #tpu.dot_dimension_numbers<[2], [1], [1], [2], [0, 0, 0, 1, 1, 2], [0], [0]>} : vector<4x8x8xf32>, vector<4x8x8xf32>, vector<4x8x8xf32> -> vector<4x8x8xf32>
    "tpu.trace_stop"() : () -> ()
    %80 = vector.shape_cast %79 : vector<4x8x8xf32> to vector<32x8xf32>
    %c1_56 = arith.constant 1 : index
    %c0_57 = arith.constant 0 : index
    %c0_58 = arith.constant 0 : index
    %81 = vector.load %arg5[%c1_56, %c0_57, %c0_58] : memref<8x8x32xf32, #tpu.memory_space<vmem>>, vector<1x8x32xf32>
    %82 = vector.shape_cast %81 : vector<1x8x32xf32> to vector<8x32xf32>
    %cst_59 = arith.constant dense<0.000000e+00> : vector<32x32xf32>
    %83 = tpu.matmul %80, %82, %cst_59 {dimension_numbers = #tpu.dot_dimension_numbers<[1], [0], [0], [1], [0, 0, 1, 1], [], []>} : vector<32x8xf32>, vector<8x32xf32>, vector<32x32xf32> -> vector<32x32xf32>
    %84 = arith.addf %49, %83 : vector<32x32xf32>
    %c2_60 = arith.constant 2 : index
    %c0_61 = arith.constant 0 : index
    %c0_62 = arith.constant 0 : index
    %85 = vector.load %arg3[%c2_60, %c0_61, %c0_62] : memref<24x32x8xf32, #tpu.memory_space<vmem>>, vector<1x32x8xf32>
    %86 = vector.shape_cast %85 : vector<1x32x8xf32> to vector<32x8xf32>
    %c6_63 = arith.constant 6 : index
    %c0_64 = arith.constant 0 : index
    %c0_65 = arith.constant 0 : index
    %87 = vector.load %arg3[%c6_63, %c0_64, %c0_65] : memref<24x32x8xf32, #tpu.memory_space<vmem>>, vector<1x32x8xf32>
    %88 = vector.shape_cast %87 : vector<1x32x8xf32> to vector<32x8xf32>
    %c10 = arith.constant 10 : index
    %c0_66 = arith.constant 0 : index
    %c0_67 = arith.constant 0 : index
    %89 = vector.load %arg3[%c10, %c0_66, %c0_67] : memref<24x32x8xf32, #tpu.memory_space<vmem>>, vector<1x32x8xf32>
    %90 = vector.shape_cast %89 : vector<1x32x8xf32> to vector<32x8xf32>
    %c2_68 = arith.constant 2 : index
    %c0_69 = arith.constant 0 : index
    %c0_70 = arith.constant 0 : index
    %91 = vector.load %arg4[%c2_68, %c0_69, %c0_70] : memref<8x1x8xf32, #tpu.memory_space<vmem>>, vector<1x1x8xf32>
    %92 = vector.shape_cast %91 : vector<1x1x8xf32> to vector<1x8xf32>
    %cst_71 = arith.constant dense<0.000000e+00> : vector<32x8xf32>
    %93 = tpu.matmul %6, %86, %cst_71 {dimension_numbers = #tpu.dot_dimension_numbers<[1], [0], [0], [1], [0, 0, 1, 1], [], []>} : vector<32x32xf32>, vector<32x8xf32>, vector<32x8xf32> -> vector<32x8xf32>
    %94 = vector.broadcast %92 : vector<1x8xf32> to vector<32x8xf32>
    %95 = arith.addf %93, %94 : vector<32x8xf32>
    %cst_72 = arith.constant 0.353553385 : f32
    %96 = vector.broadcast %cst_72 : f32 to vector<32x8xf32>
    %97 = arith.mulf %95, %96 : vector<32x8xf32>
    %cst_73 = arith.constant dense<0.000000e+00> : vector<32x8xf32>
    %98 = tpu.matmul %6, %88, %cst_73 {dimension_numbers = #tpu.dot_dimension_numbers<[1], [0], [0], [1], [0, 0, 1, 1], [], []>} : vector<32x32xf32>, vector<32x8xf32>, vector<32x8xf32> -> vector<32x8xf32>
    %cst_74 = arith.constant dense<0.000000e+00> : vector<32x8xf32>
    %99 = tpu.matmul %6, %90, %cst_74 {dimension_numbers = #tpu.dot_dimension_numbers<[1], [0], [0], [1], [0, 0, 1, 1], [], []>} : vector<32x32xf32>, vector<32x8xf32>, vector<32x8xf32> -> vector<32x8xf32>
    %100 = vector.shape_cast %97 : vector<32x8xf32> to vector<4x8x8xf32>
    %101 = vector.shape_cast %98 : vector<32x8xf32> to vector<4x8x8xf32>
    %102 = vector.shape_cast %99 : vector<32x8xf32> to vector<4x8x8xf32>
    "tpu.trace_start"() <{level = 10 : i32, message = "bqd,bkd->bqk"}> : () -> ()
    %cst_75 = arith.constant dense<0.000000e+00> : vector<4x8x8xf32>
    %103 = tpu.matmul %100, %101, %cst_75 {dimension_numbers = #tpu.dot_dimension_numbers<[2], [2], [1], [1], [0, 0, 0, 1, 1, 1], [0], [0]>} : vector<4x8x8xf32>, vector<4x8x8xf32>, vector<4x8x8xf32> -> vector<4x8x8xf32>
    "tpu.trace_stop"() : () -> ()
    %cst_76 = arith.constant dense<0xFF800000> : vector<4x8xf32>
    %104 = vector.multi_reduction <maximumf>, %103, %cst_76 [2] : vector<4x8x8xf32> to vector<4x8xf32>
    %105 = vector.shape_cast %104 : vector<4x8xf32> to vector<4x8x1xf32>
    %106 = vector.broadcast %105 : vector<4x8x1xf32> to vector<4x8x8xf32>
    %107 = arith.subf %103, %106 : vector<4x8x8xf32>
    %108 = math.exp %107 : vector<4x8x8xf32>
    %cst_77 = arith.constant dense<0.000000e+00> : vector<4x8xf32>
    %109 = vector.multi_reduction <add>, %108, %cst_77 [2] : vector<4x8x8xf32> to vector<4x8xf32>
    %110 = vector.shape_cast %109 : vector<4x8xf32> to vector<4x8x1xf32>
    %111 = tpu.reciprocal %110 {approx = true} : vector<4x8x1xf32> -> vector<4x8x1xf32>
    %112 = vector.broadcast %111 : vector<4x8x1xf32> to vector<4x8x8xf32>
    %113 = arith.mulf %108, %112 : vector<4x8x8xf32>
    "tpu.trace_start"() <{level = 10 : i32, message = "bqk,bkd->bqd"}> : () -> ()
    %cst_78 = arith.constant dense<0.000000e+00> : vector<4x8x8xf32>
    %114 = tpu.matmul %113, %102, %cst_78 {dimension_numbers = #tpu.dot_dimension_numbers<[2], [1], [1], [2], [0, 0, 0, 1, 1, 2], [0], [0]>} : vector<4x8x8xf32>, vector<4x8x8xf32>, vector<4x8x8xf32> -> vector<4x8x8xf32>
    "tpu.trace_stop"() : () -> ()
    %115 = vector.shape_cast %114 : vector<4x8x8xf32> to vector<32x8xf32>
    %c2_79 = arith.constant 2 : index
    %c0_80 = arith.constant 0 : index
    %c0_81 = arith.constant 0 : index
    %116 = vector.load %arg5[%c2_79, %c0_80, %c0_81] : memref<8x8x32xf32, #tpu.memory_space<vmem>>, vector<1x8x32xf32>
    %117 = vector.shape_cast %116 : vector<1x8x32xf32> to vector<8x32xf32>
    %cst_82 = arith.constant dense<0.000000e+00> : vector<32x32xf32>
    %118 = tpu.matmul %115, %117, %cst_82 {dimension_numbers = #tpu.dot_dimension_numbers<[1], [0], [0], [1], [0, 0, 1, 1], [], []>} : vector<32x8xf32>, vector<8x32xf32>, vector<32x32xf32> -> vector<32x32xf32>
    %119 = arith.addf %84, %118 : vector<32x32xf32>
    %c3_83 = arith.constant 3 : index
    %c0_84 = arith.constant 0 : index
    %c0_85 = arith.constant 0 : index
    %120 = vector.load %arg3[%c3_83, %c0_84, %c0_85] : memref<24x32x8xf32, #tpu.memory_space<vmem>>, vector<1x32x8xf32>
    %121 = vector.shape_cast %120 : vector<1x32x8xf32> to vector<32x8xf32>
    %c7_86 = arith.constant 7 : index
    %c0_87 = arith.constant 0 : index
    %c0_88 = arith.constant 0 : index
    %122 = vector.load %arg3[%c7_86, %c0_87, %c0_88] : memref<24x32x8xf32, #tpu.memory_space<vmem>>, vector<1x32x8xf32>
    %123 = vector.shape_cast %122 : vector<1x32x8xf32> to vector<32x8xf32>
    %c11 = arith.constant 11 : index
    %c0_89 = arith.constant 0 : index
    %c0_90 = arith.constant 0 : index
    %124 = vector.load %arg3[%c11, %c0_89, %c0_90] : memref<24x32x8xf32, #tpu.memory_space<vmem>>, vector<1x32x8xf32>
    %125 = vector.shape_cast %124 : vector<1x32x8xf32> to vector<32x8xf32>
    %c3_91 = arith.constant 3 : index
    %c0_92 = arith.constant 0 : index
    %c0_93 = arith.constant 0 : index
    %126 = vector.load %arg4[%c3_91, %c0_92, %c0_93] : memref<8x1x8xf32, #tpu.memory_space<vmem>>, vector<1x1x8xf32>
    %127 = vector.shape_cast %126 : vector<1x1x8xf32> to vector<1x8xf32>
    %cst_94 = arith.constant dense<0.000000e+00> : vector<32x8xf32>
    %128 = tpu.matmul %6, %121, %cst_94 {dimension_numbers = #tpu.dot_dimension_numbers<[1], [0], [0], [1], [0, 0, 1, 1], [], []>} : vector<32x32xf32>, vector<32x8xf32>, vector<32x8xf32> -> vector<32x8xf32>
    %129 = vector.broadcast %127 : vector<1x8xf32> to vector<32x8xf32>
    %130 = arith.addf %128, %129 : vector<32x8xf32>
    %cst_95 = arith.constant 0.353553385 : f32
    %131 = vector.broadcast %cst_95 : f32 to vector<32x8xf32>
    %132 = arith.mulf %130, %131 : vector<32x8xf32>
    %cst_96 = arith.constant dense<0.000000e+00> : vector<32x8xf32>
    %133 = tpu.matmul %6, %123, %cst_96 {dimension_numbers = #tpu.dot_dimension_numbers<[1], [0], [0], [1], [0, 0, 1, 1], [], []>} : vector<32x32xf32>, vector<32x8xf32>, vector<32x8xf32> -> vector<32x8xf32>
    %cst_97 = arith.constant dense<0.000000e+00> : vector<32x8xf32>
    %134 = tpu.matmul %6, %125, %cst_97 {dimension_numbers = #tpu.dot_dimension_numbers<[1], [0], [0], [1], [0, 0, 1, 1], [], []>} : vector<32x32xf32>, vector<32x8xf32>, vector<32x8xf32> -> vector<32x8xf32>
    %135 = vector.shape_cast %132 : vector<32x8xf32> to vector<4x8x8xf32>
    %136 = vector.shape_cast %133 : vector<32x8xf32> to vector<4x8x8xf32>
    %137 = vector.shape_cast %134 : vector<32x8xf32> to vector<4x8x8xf32>
    "tpu.trace_start"() <{level = 10 : i32, message = "bqd,bkd->bqk"}> : () -> ()
    %cst_98 = arith.constant dense<0.000000e+00> : vector<4x8x8xf32>
    %138 = tpu.matmul %135, %136, %cst_98 {dimension_numbers = #tpu.dot_dimension_numbers<[2], [2], [1], [1], [0, 0, 0, 1, 1, 1], [0], [0]>} : vector<4x8x8xf32>, vector<4x8x8xf32>, vector<4x8x8xf32> -> vector<4x8x8xf32>
    "tpu.trace_stop"() : () -> ()
    %cst_99 = arith.constant dense<0xFF800000> : vector<4x8xf32>
    %139 = vector.multi_reduction <maximumf>, %138, %cst_99 [2] : vector<4x8x8xf32> to vector<4x8xf32>
    %140 = vector.shape_cast %139 : vector<4x8xf32> to vector<4x8x1xf32>
    %141 = vector.broadcast %140 : vector<4x8x1xf32> to vector<4x8x8xf32>
    %142 = arith.subf %138, %141 : vector<4x8x8xf32>
    %143 = math.exp %142 : vector<4x8x8xf32>
    %cst_100 = arith.constant dense<0.000000e+00> : vector<4x8xf32>
    %144 = vector.multi_reduction <add>, %143, %cst_100 [2] : vector<4x8x8xf32> to vector<4x8xf32>
    %145 = vector.shape_cast %144 : vector<4x8xf32> to vector<4x8x1xf32>
    %146 = tpu.reciprocal %145 {approx = true} : vector<4x8x1xf32> -> vector<4x8x1xf32>
    %147 = vector.broadcast %146 : vector<4x8x1xf32> to vector<4x8x8xf32>
    %148 = arith.mulf %143, %147 : vector<4x8x8xf32>
    "tpu.trace_start"() <{level = 10 : i32, message = "bqk,bkd->bqd"}> : () -> ()
    %cst_101 = arith.constant dense<0.000000e+00> : vector<4x8x8xf32>
    %149 = tpu.matmul %148, %137, %cst_101 {dimension_numbers = #tpu.dot_dimension_numbers<[2], [1], [1], [2], [0, 0, 0, 1, 1, 2], [0], [0]>} : vector<4x8x8xf32>, vector<4x8x8xf32>, vector<4x8x8xf32> -> vector<4x8x8xf32>
    "tpu.trace_stop"() : () -> ()
    %150 = vector.shape_cast %149 : vector<4x8x8xf32> to vector<32x8xf32>
    %c3_102 = arith.constant 3 : index
    %c0_103 = arith.constant 0 : index
    %c0_104 = arith.constant 0 : index
    %151 = vector.load %arg5[%c3_102, %c0_103, %c0_104] : memref<8x8x32xf32, #tpu.memory_space<vmem>>, vector<1x8x32xf32>
    %152 = vector.shape_cast %151 : vector<1x8x32xf32> to vector<8x32xf32>
    %cst_105 = arith.constant dense<0.000000e+00> : vector<32x32xf32>
    %153 = tpu.matmul %150, %152, %cst_105 {dimension_numbers = #tpu.dot_dimension_numbers<[1], [0], [0], [1], [0, 0, 1, 1], [], []>} : vector<32x8xf32>, vector<8x32xf32>, vector<32x32xf32> -> vector<32x32xf32>
    %154 = arith.addf %119, %153 : vector<32x32xf32>
    %155 = vector.broadcast %7 : vector<1x32xf32> to vector<32x32xf32>
    %156 = arith.addf %154, %155 : vector<32x32xf32>
    %157 = arith.addf %6, %156 : vector<32x32xf32>
    %cst_106 = arith.constant dense<0.000000e+00> : vector<32xf32>
    %158 = vector.multi_reduction <add>, %157, %cst_106 [1] : vector<32x32xf32> to vector<32xf32>
    %159 = vector.shape_cast %158 : vector<32xf32> to vector<32x1xf32>
    %cst_107 = arith.constant 3.200000e+01 : f32
    %160 = vector.broadcast %cst_107 : f32 to vector<32x1xf32>
    %161 = arith.divf %159, %160 : vector<32x1xf32>
    %162 = vector.broadcast %161 : vector<32x1xf32> to vector<32x32xf32>
    %163 = arith.subf %157, %162 : vector<32x32xf32>
    %164 = arith.mulf %163, %163 : vector<32x32xf32>
    %cst_108 = arith.constant dense<0.000000e+00> : vector<32xf32>
    %165 = vector.multi_reduction <add>, %164, %cst_108 [1] : vector<32x32xf32> to vector<32xf32>
    %166 = vector.shape_cast %165 : vector<32xf32> to vector<32x1xf32>
    %cst_109 = arith.constant 3.200000e+01 : f32
    %167 = vector.broadcast %cst_109 : f32 to vector<32x1xf32>
    %168 = arith.divf %166, %167 : vector<32x1xf32>
    %169 = vector.broadcast %161 : vector<32x1xf32> to vector<32x32xf32>
    %170 = arith.subf %157, %169 : vector<32x32xf32>
    %cst_110 = arith.constant 9.99999974E-6 : f32
    %171 = vector.broadcast %cst_110 : f32 to vector<32x1xf32>
    %172 = arith.addf %168, %171 : vector<32x1xf32>
    %173 = math.rsqrt %172 : vector<32x1xf32>
    %174 = vector.broadcast %173 : vector<32x1xf32> to vector<32x32xf32>
    %175 = arith.mulf %170, %174 : vector<32x32xf32>
    %176 = vector.broadcast %8 : vector<1x32xf32> to vector<32x32xf32>
    %177 = arith.mulf %175, %176 : vector<32x32xf32>
    %178 = vector.broadcast %9 : vector<1x32xf32> to vector<32x32xf32>
    %179 = arith.addf %177, %178 : vector<32x32xf32>
    %c0_111 = arith.constant 0 : index
    %c0_112 = arith.constant 0 : index
    %c0_113 = arith.constant 0 : index
    %180 = vector.load %arg6[%c0_111, %c0_112, %c0_113] : memref<2x32x64xf32, #tpu.memory_space<vmem>>, vector<1x32x64xf32>
    %181 = vector.shape_cast %180 : vector<1x32x64xf32> to vector<32x64xf32>
    %cst_114 = arith.constant dense<0.000000e+00> : vector<32x64xf32>
    %182 = tpu.matmul %179, %181, %cst_114 {dimension_numbers = #tpu.dot_dimension_numbers<[1], [0], [0], [1], [0, 0, 1, 1], [], []>} : vector<32x32xf32>, vector<32x64xf32>, vector<32x64xf32> -> vector<32x64xf32>
    %183 = vector.broadcast %10 : vector<1x64xf32> to vector<32x64xf32>
    %184 = arith.addf %182, %183 : vector<32x64xf32>
    %cst_115 = arith.constant 0.000000e+00 : f32
    %185 = vector.broadcast %cst_115 : f32 to vector<32x64xf32>
    %186 = arith.maximumf %184, %185 : vector<32x64xf32>
    %c0_116 = arith.constant 0 : index
    %c0_117 = arith.constant 0 : index
    %c0_118 = arith.constant 0 : index
    %187 = vector.load %arg7[%c0_116, %c0_117, %c0_118] : memref<2x64x32xf32, #tpu.memory_space<vmem>>, vector<1x64x32xf32>
    %188 = vector.shape_cast %187 : vector<1x64x32xf32> to vector<64x32xf32>
    %cst_119 = arith.constant dense<0.000000e+00> : vector<32x32xf32>
    %189 = tpu.matmul %186, %188, %cst_119 {dimension_numbers = #tpu.dot_dimension_numbers<[1], [0], [0], [1], [0, 0, 1, 1], [], []>} : vector<32x64xf32>, vector<64x32xf32>, vector<32x32xf32> -> vector<32x32xf32>
    %190 = vector.broadcast %11 : vector<1x32xf32> to vector<32x32xf32>
    %191 = arith.addf %189, %190 : vector<32x32xf32>
    %192 = arith.addf %179, %191 : vector<32x32xf32>
    %cst_120 = arith.constant dense<0.000000e+00> : vector<32xf32>
    %193 = vector.multi_reduction <add>, %192, %cst_120 [1] : vector<32x32xf32> to vector<32xf32>
    %194 = vector.shape_cast %193 : vector<32xf32> to vector<32x1xf32>
    %cst_121 = arith.constant 3.200000e+01 : f32
    %195 = vector.broadcast %cst_121 : f32 to vector<32x1xf32>
    %196 = arith.divf %194, %195 : vector<32x1xf32>
    %197 = vector.broadcast %196 : vector<32x1xf32> to vector<32x32xf32>
    %198 = arith.subf %192, %197 : vector<32x32xf32>
    %199 = arith.mulf %198, %198 : vector<32x32xf32>
    %cst_122 = arith.constant dense<0.000000e+00> : vector<32xf32>
    %200 = vector.multi_reduction <add>, %199, %cst_122 [1] : vector<32x32xf32> to vector<32xf32>
    %201 = vector.shape_cast %200 : vector<32xf32> to vector<32x1xf32>
    %cst_123 = arith.constant 3.200000e+01 : f32
    %202 = vector.broadcast %cst_123 : f32 to vector<32x1xf32>
    %203 = arith.divf %201, %202 : vector<32x1xf32>
    %204 = vector.broadcast %196 : vector<32x1xf32> to vector<32x32xf32>
    %205 = arith.subf %192, %204 : vector<32x32xf32>
    %cst_124 = arith.constant 9.99999974E-6 : f32
    %206 = vector.broadcast %cst_124 : f32 to vector<32x1xf32>
    %207 = arith.addf %203, %206 : vector<32x1xf32>
    %208 = math.rsqrt %207 : vector<32x1xf32>
    %209 = vector.broadcast %208 : vector<32x1xf32> to vector<32x32xf32>
    %210 = arith.mulf %205, %209 : vector<32x32xf32>
    %211 = vector.broadcast %12 : vector<1x32xf32> to vector<32x32xf32>
    %212 = arith.mulf %210, %211 : vector<32x32xf32>
    %213 = vector.broadcast %13 : vector<1x32xf32> to vector<32x32xf32>
    %214 = arith.addf %212, %213 : vector<32x32xf32>
    %c8_125 = arith.constant 8 : index
    %c0_126 = arith.constant 0 : index
    %215 = vector.load %arg8[%c8_125, %c0_126] : memref<19x64xf32, #tpu.memory_space<vmem>>, vector<1x32xf32>
    %c9_127 = arith.constant 9 : index
    %c0_128 = arith.constant 0 : index
    %216 = vector.load %arg8[%c9_127, %c0_128] : memref<19x64xf32, #tpu.memory_space<vmem>>, vector<1x32xf32>
    %c10_129 = arith.constant 10 : index
    %c0_130 = arith.constant 0 : index
    %217 = vector.load %arg8[%c10_129, %c0_130] : memref<19x64xf32, #tpu.memory_space<vmem>>, vector<1x32xf32>
    %c11_131 = arith.constant 11 : index
    %c0_132 = arith.constant 0 : index
    %218 = vector.load %arg8[%c11_131, %c0_132] : memref<19x64xf32, #tpu.memory_space<vmem>>, vector<1x64xf32>
    %c12 = arith.constant 12 : index
    %c0_133 = arith.constant 0 : index
    %219 = vector.load %arg8[%c12, %c0_133] : memref<19x64xf32, #tpu.memory_space<vmem>>, vector<1x32xf32>
    %c13 = arith.constant 13 : index
    %c0_134 = arith.constant 0 : index
    %220 = vector.load %arg8[%c13, %c0_134] : memref<19x64xf32, #tpu.memory_space<vmem>>, vector<1x32xf32>
    %c14 = arith.constant 14 : index
    %c0_135 = arith.constant 0 : index
    %221 = vector.load %arg8[%c14, %c0_135] : memref<19x64xf32, #tpu.memory_space<vmem>>, vector<1x32xf32>
    %cst_136 = arith.constant 0.000000e+00 : f32
    %222 = vector.broadcast %cst_136 : f32 to vector<32x32xf32>
    %c12_137 = arith.constant 12 : index
    %c0_138 = arith.constant 0 : index
    %c0_139 = arith.constant 0 : index
    %223 = vector.load %arg3[%c12_137, %c0_138, %c0_139] : memref<24x32x8xf32, #tpu.memory_space<vmem>>, vector<1x32x8xf32>
    %224 = vector.shape_cast %223 : vector<1x32x8xf32> to vector<32x8xf32>
    %c16 = arith.constant 16 : index
    %c0_140 = arith.constant 0 : index
    %c0_141 = arith.constant 0 : index
    %225 = vector.load %arg3[%c16, %c0_140, %c0_141] : memref<24x32x8xf32, #tpu.memory_space<vmem>>, vector<1x32x8xf32>
    %226 = vector.shape_cast %225 : vector<1x32x8xf32> to vector<32x8xf32>
    %c20 = arith.constant 20 : index
    %c0_142 = arith.constant 0 : index
    %c0_143 = arith.constant 0 : index
    %227 = vector.load %arg3[%c20, %c0_142, %c0_143] : memref<24x32x8xf32, #tpu.memory_space<vmem>>, vector<1x32x8xf32>
    %228 = vector.shape_cast %227 : vector<1x32x8xf32> to vector<32x8xf32>
    %c4_144 = arith.constant 4 : index
    %c0_145 = arith.constant 0 : index
    %c0_146 = arith.constant 0 : index
    %229 = vector.load %arg4[%c4_144, %c0_145, %c0_146] : memref<8x1x8xf32, #tpu.memory_space<vmem>>, vector<1x1x8xf32>
    %230 = vector.shape_cast %229 : vector<1x1x8xf32> to vector<1x8xf32>
    %cst_147 = arith.constant dense<0.000000e+00> : vector<32x8xf32>
    %231 = tpu.matmul %214, %224, %cst_147 {dimension_numbers = #tpu.dot_dimension_numbers<[1], [0], [0], [1], [0, 0, 1, 1], [], []>} : vector<32x32xf32>, vector<32x8xf32>, vector<32x8xf32> -> vector<32x8xf32>
    %232 = vector.broadcast %230 : vector<1x8xf32> to vector<32x8xf32>
    %233 = arith.addf %231, %232 : vector<32x8xf32>
    %cst_148 = arith.constant 0.353553385 : f32
    %234 = vector.broadcast %cst_148 : f32 to vector<32x8xf32>
    %235 = arith.mulf %233, %234 : vector<32x8xf32>
    %cst_149 = arith.constant dense<0.000000e+00> : vector<32x8xf32>
    %236 = tpu.matmul %214, %226, %cst_149 {dimension_numbers = #tpu.dot_dimension_numbers<[1], [0], [0], [1], [0, 0, 1, 1], [], []>} : vector<32x32xf32>, vector<32x8xf32>, vector<32x8xf32> -> vector<32x8xf32>
    %cst_150 = arith.constant dense<0.000000e+00> : vector<32x8xf32>
    %237 = tpu.matmul %214, %228, %cst_150 {dimension_numbers = #tpu.dot_dimension_numbers<[1], [0], [0], [1], [0, 0, 1, 1], [], []>} : vector<32x32xf32>, vector<32x8xf32>, vector<32x8xf32> -> vector<32x8xf32>
    %238 = vector.shape_cast %235 : vector<32x8xf32> to vector<4x8x8xf32>
    %239 = vector.shape_cast %236 : vector<32x8xf32> to vector<4x8x8xf32>
    %240 = vector.shape_cast %237 : vector<32x8xf32> to vector<4x8x8xf32>
    "tpu.trace_start"() <{level = 10 : i32, message = "bqd,bkd->bqk"}> : () -> ()
    %cst_151 = arith.constant dense<0.000000e+00> : vector<4x8x8xf32>
    %241 = tpu.matmul %238, %239, %cst_151 {dimension_numbers = #tpu.dot_dimension_numbers<[2], [2], [1], [1], [0, 0, 0, 1, 1, 1], [0], [0]>} : vector<4x8x8xf32>, vector<4x8x8xf32>, vector<4x8x8xf32> -> vector<4x8x8xf32>
    "tpu.trace_stop"() : () -> ()
    %cst_152 = arith.constant dense<0xFF800000> : vector<4x8xf32>
    %242 = vector.multi_reduction <maximumf>, %241, %cst_152 [2] : vector<4x8x8xf32> to vector<4x8xf32>
    %243 = vector.shape_cast %242 : vector<4x8xf32> to vector<4x8x1xf32>
    %244 = vector.broadcast %243 : vector<4x8x1xf32> to vector<4x8x8xf32>
    %245 = arith.subf %241, %244 : vector<4x8x8xf32>
    %246 = math.exp %245 : vector<4x8x8xf32>
    %cst_153 = arith.constant dense<0.000000e+00> : vector<4x8xf32>
    %247 = vector.multi_reduction <add>, %246, %cst_153 [2] : vector<4x8x8xf32> to vector<4x8xf32>
    %248 = vector.shape_cast %247 : vector<4x8xf32> to vector<4x8x1xf32>
    %249 = tpu.reciprocal %248 {approx = true} : vector<4x8x1xf32> -> vector<4x8x1xf32>
    %250 = vector.broadcast %249 : vector<4x8x1xf32> to vector<4x8x8xf32>
    %251 = arith.mulf %246, %250 : vector<4x8x8xf32>
    "tpu.trace_start"() <{level = 10 : i32, message = "bqk,bkd->bqd"}> : () -> ()
    %cst_154 = arith.constant dense<0.000000e+00> : vector<4x8x8xf32>
    %252 = tpu.matmul %251, %240, %cst_154 {dimension_numbers = #tpu.dot_dimension_numbers<[2], [1], [1], [2], [0, 0, 0, 1, 1, 2], [0], [0]>} : vector<4x8x8xf32>, vector<4x8x8xf32>, vector<4x8x8xf32> -> vector<4x8x8xf32>
    "tpu.trace_stop"() : () -> ()
    %253 = vector.shape_cast %252 : vector<4x8x8xf32> to vector<32x8xf32>
    %c4_155 = arith.constant 4 : index
    %c0_156 = arith.constant 0 : index
    %c0_157 = arith.constant 0 : index
    %254 = vector.load %arg5[%c4_155, %c0_156, %c0_157] : memref<8x8x32xf32, #tpu.memory_space<vmem>>, vector<1x8x32xf32>
    %255 = vector.shape_cast %254 : vector<1x8x32xf32> to vector<8x32xf32>
    %cst_158 = arith.constant dense<0.000000e+00> : vector<32x32xf32>
    %256 = tpu.matmul %253, %255, %cst_158 {dimension_numbers = #tpu.dot_dimension_numbers<[1], [0], [0], [1], [0, 0, 1, 1], [], []>} : vector<32x8xf32>, vector<8x32xf32>, vector<32x32xf32> -> vector<32x32xf32>
    %257 = arith.addf %222, %256 : vector<32x32xf32>
    %c13_159 = arith.constant 13 : index
    %c0_160 = arith.constant 0 : index
    %c0_161 = arith.constant 0 : index
    %258 = vector.load %arg3[%c13_159, %c0_160, %c0_161] : memref<24x32x8xf32, #tpu.memory_space<vmem>>, vector<1x32x8xf32>
    %259 = vector.shape_cast %258 : vector<1x32x8xf32> to vector<32x8xf32>
    %c17 = arith.constant 17 : index
    %c0_162 = arith.constant 0 : index
    %c0_163 = arith.constant 0 : index
    %260 = vector.load %arg3[%c17, %c0_162, %c0_163] : memref<24x32x8xf32, #tpu.memory_space<vmem>>, vector<1x32x8xf32>
    %261 = vector.shape_cast %260 : vector<1x32x8xf32> to vector<32x8xf32>
    %c21 = arith.constant 21 : index
    %c0_164 = arith.constant 0 : index
    %c0_165 = arith.constant 0 : index
    %262 = vector.load %arg3[%c21, %c0_164, %c0_165] : memref<24x32x8xf32, #tpu.memory_space<vmem>>, vector<1x32x8xf32>
    %263 = vector.shape_cast %262 : vector<1x32x8xf32> to vector<32x8xf32>
    %c5_166 = arith.constant 5 : index
    %c0_167 = arith.constant 0 : index
    %c0_168 = arith.constant 0 : index
    %264 = vector.load %arg4[%c5_166, %c0_167, %c0_168] : memref<8x1x8xf32, #tpu.memory_space<vmem>>, vector<1x1x8xf32>
    %265 = vector.shape_cast %264 : vector<1x1x8xf32> to vector<1x8xf32>
    %cst_169 = arith.constant dense<0.000000e+00> : vector<32x8xf32>
    %266 = tpu.matmul %214, %259, %cst_169 {dimension_numbers = #tpu.dot_dimension_numbers<[1], [0], [0], [1], [0, 0, 1, 1], [], []>} : vector<32x32xf32>, vector<32x8xf32>, vector<32x8xf32> -> vector<32x8xf32>
    %267 = vector.broadcast %265 : vector<1x8xf32> to vector<32x8xf32>
    %268 = arith.addf %266, %267 : vector<32x8xf32>
    %cst_170 = arith.constant 0.353553385 : f32
    %269 = vector.broadcast %cst_170 : f32 to vector<32x8xf32>
    %270 = arith.mulf %268, %269 : vector<32x8xf32>
    %cst_171 = arith.constant dense<0.000000e+00> : vector<32x8xf32>
    %271 = tpu.matmul %214, %261, %cst_171 {dimension_numbers = #tpu.dot_dimension_numbers<[1], [0], [0], [1], [0, 0, 1, 1], [], []>} : vector<32x32xf32>, vector<32x8xf32>, vector<32x8xf32> -> vector<32x8xf32>
    %cst_172 = arith.constant dense<0.000000e+00> : vector<32x8xf32>
    %272 = tpu.matmul %214, %263, %cst_172 {dimension_numbers = #tpu.dot_dimension_numbers<[1], [0], [0], [1], [0, 0, 1, 1], [], []>} : vector<32x32xf32>, vector<32x8xf32>, vector<32x8xf32> -> vector<32x8xf32>
    %273 = vector.shape_cast %270 : vector<32x8xf32> to vector<4x8x8xf32>
    %274 = vector.shape_cast %271 : vector<32x8xf32> to vector<4x8x8xf32>
    %275 = vector.shape_cast %272 : vector<32x8xf32> to vector<4x8x8xf32>
    "tpu.trace_start"() <{level = 10 : i32, message = "bqd,bkd->bqk"}> : () -> ()
    %cst_173 = arith.constant dense<0.000000e+00> : vector<4x8x8xf32>
    %276 = tpu.matmul %273, %274, %cst_173 {dimension_numbers = #tpu.dot_dimension_numbers<[2], [2], [1], [1], [0, 0, 0, 1, 1, 1], [0], [0]>} : vector<4x8x8xf32>, vector<4x8x8xf32>, vector<4x8x8xf32> -> vector<4x8x8xf32>
    "tpu.trace_stop"() : () -> ()
    %cst_174 = arith.constant dense<0xFF800000> : vector<4x8xf32>
    %277 = vector.multi_reduction <maximumf>, %276, %cst_174 [2] : vector<4x8x8xf32> to vector<4x8xf32>
    %278 = vector.shape_cast %277 : vector<4x8xf32> to vector<4x8x1xf32>
    %279 = vector.broadcast %278 : vector<4x8x1xf32> to vector<4x8x8xf32>
    %280 = arith.subf %276, %279 : vector<4x8x8xf32>
    %281 = math.exp %280 : vector<4x8x8xf32>
    %cst_175 = arith.constant dense<0.000000e+00> : vector<4x8xf32>
    %282 = vector.multi_reduction <add>, %281, %cst_175 [2] : vector<4x8x8xf32> to vector<4x8xf32>
    %283 = vector.shape_cast %282 : vector<4x8xf32> to vector<4x8x1xf32>
    %284 = tpu.reciprocal %283 {approx = true} : vector<4x8x1xf32> -> vector<4x8x1xf32>
    %285 = vector.broadcast %284 : vector<4x8x1xf32> to vector<4x8x8xf32>
    %286 = arith.mulf %281, %285 : vector<4x8x8xf32>
    "tpu.trace_start"() <{level = 10 : i32, message = "bqk,bkd->bqd"}> : () -> ()
    %cst_176 = arith.constant dense<0.000000e+00> : vector<4x8x8xf32>
    %287 = tpu.matmul %286, %275, %cst_176 {dimension_numbers = #tpu.dot_dimension_numbers<[2], [1], [1], [2], [0, 0, 0, 1, 1, 2], [0], [0]>} : vector<4x8x8xf32>, vector<4x8x8xf32>, vector<4x8x8xf32> -> vector<4x8x8xf32>
    "tpu.trace_stop"() : () -> ()
    %288 = vector.shape_cast %287 : vector<4x8x8xf32> to vector<32x8xf32>
    %c5_177 = arith.constant 5 : index
    %c0_178 = arith.constant 0 : index
    %c0_179 = arith.constant 0 : index
    %289 = vector.load %arg5[%c5_177, %c0_178, %c0_179] : memref<8x8x32xf32, #tpu.memory_space<vmem>>, vector<1x8x32xf32>
    %290 = vector.shape_cast %289 : vector<1x8x32xf32> to vector<8x32xf32>
    %cst_180 = arith.constant dense<0.000000e+00> : vector<32x32xf32>
    %291 = tpu.matmul %288, %290, %cst_180 {dimension_numbers = #tpu.dot_dimension_numbers<[1], [0], [0], [1], [0, 0, 1, 1], [], []>} : vector<32x8xf32>, vector<8x32xf32>, vector<32x32xf32> -> vector<32x32xf32>
    %292 = arith.addf %257, %291 : vector<32x32xf32>
    %c14_181 = arith.constant 14 : index
    %c0_182 = arith.constant 0 : index
    %c0_183 = arith.constant 0 : index
    %293 = vector.load %arg3[%c14_181, %c0_182, %c0_183] : memref<24x32x8xf32, #tpu.memory_space<vmem>>, vector<1x32x8xf32>
    %294 = vector.shape_cast %293 : vector<1x32x8xf32> to vector<32x8xf32>
    %c18 = arith.constant 18 : index
    %c0_184 = arith.constant 0 : index
    %c0_185 = arith.constant 0 : index
    %295 = vector.load %arg3[%c18, %c0_184, %c0_185] : memref<24x32x8xf32, #tpu.memory_space<vmem>>, vector<1x32x8xf32>
    %296 = vector.shape_cast %295 : vector<1x32x8xf32> to vector<32x8xf32>
    %c22 = arith.constant 22 : index
    %c0_186 = arith.constant 0 : index
    %c0_187 = arith.constant 0 : index
    %297 = vector.load %arg3[%c22, %c0_186, %c0_187] : memref<24x32x8xf32, #tpu.memory_space<vmem>>, vector<1x32x8xf32>
    %298 = vector.shape_cast %297 : vector<1x32x8xf32> to vector<32x8xf32>
    %c6_188 = arith.constant 6 : index
    %c0_189 = arith.constant 0 : index
    %c0_190 = arith.constant 0 : index
    %299 = vector.load %arg4[%c6_188, %c0_189, %c0_190] : memref<8x1x8xf32, #tpu.memory_space<vmem>>, vector<1x1x8xf32>
    %300 = vector.shape_cast %299 : vector<1x1x8xf32> to vector<1x8xf32>
    %cst_191 = arith.constant dense<0.000000e+00> : vector<32x8xf32>
    %301 = tpu.matmul %214, %294, %cst_191 {dimension_numbers = #tpu.dot_dimension_numbers<[1], [0], [0], [1], [0, 0, 1, 1], [], []>} : vector<32x32xf32>, vector<32x8xf32>, vector<32x8xf32> -> vector<32x8xf32>
    %302 = vector.broadcast %300 : vector<1x8xf32> to vector<32x8xf32>
    %303 = arith.addf %301, %302 : vector<32x8xf32>
    %cst_192 = arith.constant 0.353553385 : f32
    %304 = vector.broadcast %cst_192 : f32 to vector<32x8xf32>
    %305 = arith.mulf %303, %304 : vector<32x8xf32>
    %cst_193 = arith.constant dense<0.000000e+00> : vector<32x8xf32>
    %306 = tpu.matmul %214, %296, %cst_193 {dimension_numbers = #tpu.dot_dimension_numbers<[1], [0], [0], [1], [0, 0, 1, 1], [], []>} : vector<32x32xf32>, vector<32x8xf32>, vector<32x8xf32> -> vector<32x8xf32>
    %cst_194 = arith.constant dense<0.000000e+00> : vector<32x8xf32>
    %307 = tpu.matmul %214, %298, %cst_194 {dimension_numbers = #tpu.dot_dimension_numbers<[1], [0], [0], [1], [0, 0, 1, 1], [], []>} : vector<32x32xf32>, vector<32x8xf32>, vector<32x8xf32> -> vector<32x8xf32>
    %308 = vector.shape_cast %305 : vector<32x8xf32> to vector<4x8x8xf32>
    %309 = vector.shape_cast %306 : vector<32x8xf32> to vector<4x8x8xf32>
    %310 = vector.shape_cast %307 : vector<32x8xf32> to vector<4x8x8xf32>
    "tpu.trace_start"() <{level = 10 : i32, message = "bqd,bkd->bqk"}> : () -> ()
    %cst_195 = arith.constant dense<0.000000e+00> : vector<4x8x8xf32>
    %311 = tpu.matmul %308, %309, %cst_195 {dimension_numbers = #tpu.dot_dimension_numbers<[2], [2], [1], [1], [0, 0, 0, 1, 1, 1], [0], [0]>} : vector<4x8x8xf32>, vector<4x8x8xf32>, vector<4x8x8xf32> -> vector<4x8x8xf32>
    "tpu.trace_stop"() : () -> ()
    %cst_196 = arith.constant dense<0xFF800000> : vector<4x8xf32>
    %312 = vector.multi_reduction <maximumf>, %311, %cst_196 [2] : vector<4x8x8xf32> to vector<4x8xf32>
    %313 = vector.shape_cast %312 : vector<4x8xf32> to vector<4x8x1xf32>
    %314 = vector.broadcast %313 : vector<4x8x1xf32> to vector<4x8x8xf32>
    %315 = arith.subf %311, %314 : vector<4x8x8xf32>
    %316 = math.exp %315 : vector<4x8x8xf32>
    %cst_197 = arith.constant dense<0.000000e+00> : vector<4x8xf32>
    %317 = vector.multi_reduction <add>, %316, %cst_197 [2] : vector<4x8x8xf32> to vector<4x8xf32>
    %318 = vector.shape_cast %317 : vector<4x8xf32> to vector<4x8x1xf32>
    %319 = tpu.reciprocal %318 {approx = true} : vector<4x8x1xf32> -> vector<4x8x1xf32>
    %320 = vector.broadcast %319 : vector<4x8x1xf32> to vector<4x8x8xf32>
    %321 = arith.mulf %316, %320 : vector<4x8x8xf32>
    "tpu.trace_start"() <{level = 10 : i32, message = "bqk,bkd->bqd"}> : () -> ()
    %cst_198 = arith.constant dense<0.000000e+00> : vector<4x8x8xf32>
    %322 = tpu.matmul %321, %310, %cst_198 {dimension_numbers = #tpu.dot_dimension_numbers<[2], [1], [1], [2], [0, 0, 0, 1, 1, 2], [0], [0]>} : vector<4x8x8xf32>, vector<4x8x8xf32>, vector<4x8x8xf32> -> vector<4x8x8xf32>
    "tpu.trace_stop"() : () -> ()
    %323 = vector.shape_cast %322 : vector<4x8x8xf32> to vector<32x8xf32>
    %c6_199 = arith.constant 6 : index
    %c0_200 = arith.constant 0 : index
    %c0_201 = arith.constant 0 : index
    %324 = vector.load %arg5[%c6_199, %c0_200, %c0_201] : memref<8x8x32xf32, #tpu.memory_space<vmem>>, vector<1x8x32xf32>
    %325 = vector.shape_cast %324 : vector<1x8x32xf32> to vector<8x32xf32>
    %cst_202 = arith.constant dense<0.000000e+00> : vector<32x32xf32>
    %326 = tpu.matmul %323, %325, %cst_202 {dimension_numbers = #tpu.dot_dimension_numbers<[1], [0], [0], [1], [0, 0, 1, 1], [], []>} : vector<32x8xf32>, vector<8x32xf32>, vector<32x32xf32> -> vector<32x32xf32>
    %327 = arith.addf %292, %326 : vector<32x32xf32>
    %c15 = arith.constant 15 : index
    %c0_203 = arith.constant 0 : index
    %c0_204 = arith.constant 0 : index
    %328 = vector.load %arg3[%c15, %c0_203, %c0_204] : memref<24x32x8xf32, #tpu.memory_space<vmem>>, vector<1x32x8xf32>
    %329 = vector.shape_cast %328 : vector<1x32x8xf32> to vector<32x8xf32>
    %c19 = arith.constant 19 : index
    %c0_205 = arith.constant 0 : index
    %c0_206 = arith.constant 0 : index
    %330 = vector.load %arg3[%c19, %c0_205, %c0_206] : memref<24x32x8xf32, #tpu.memory_space<vmem>>, vector<1x32x8xf32>
    %331 = vector.shape_cast %330 : vector<1x32x8xf32> to vector<32x8xf32>
    %c23 = arith.constant 23 : index
    %c0_207 = arith.constant 0 : index
    %c0_208 = arith.constant 0 : index
    %332 = vector.load %arg3[%c23, %c0_207, %c0_208] : memref<24x32x8xf32, #tpu.memory_space<vmem>>, vector<1x32x8xf32>
    %333 = vector.shape_cast %332 : vector<1x32x8xf32> to vector<32x8xf32>
    %c7_209 = arith.constant 7 : index
    %c0_210 = arith.constant 0 : index
    %c0_211 = arith.constant 0 : index
    %334 = vector.load %arg4[%c7_209, %c0_210, %c0_211] : memref<8x1x8xf32, #tpu.memory_space<vmem>>, vector<1x1x8xf32>
    %335 = vector.shape_cast %334 : vector<1x1x8xf32> to vector<1x8xf32>
    %cst_212 = arith.constant dense<0.000000e+00> : vector<32x8xf32>
    %336 = tpu.matmul %214, %329, %cst_212 {dimension_numbers = #tpu.dot_dimension_numbers<[1], [0], [0], [1], [0, 0, 1, 1], [], []>} : vector<32x32xf32>, vector<32x8xf32>, vector<32x8xf32> -> vector<32x8xf32>
    %337 = vector.broadcast %335 : vector<1x8xf32> to vector<32x8xf32>
    %338 = arith.addf %336, %337 : vector<32x8xf32>
    %cst_213 = arith.constant 0.353553385 : f32
    %339 = vector.broadcast %cst_213 : f32 to vector<32x8xf32>
    %340 = arith.mulf %338, %339 : vector<32x8xf32>
    %cst_214 = arith.constant dense<0.000000e+00> : vector<32x8xf32>
    %341 = tpu.matmul %214, %331, %cst_214 {dimension_numbers = #tpu.dot_dimension_numbers<[1], [0], [0], [1], [0, 0, 1, 1], [], []>} : vector<32x32xf32>, vector<32x8xf32>, vector<32x8xf32> -> vector<32x8xf32>
    %cst_215 = arith.constant dense<0.000000e+00> : vector<32x8xf32>
    %342 = tpu.matmul %214, %333, %cst_215 {dimension_numbers = #tpu.dot_dimension_numbers<[1], [0], [0], [1], [0, 0, 1, 1], [], []>} : vector<32x32xf32>, vector<32x8xf32>, vector<32x8xf32> -> vector<32x8xf32>
    %343 = vector.shape_cast %340 : vector<32x8xf32> to vector<4x8x8xf32>
    %344 = vector.shape_cast %341 : vector<32x8xf32> to vector<4x8x8xf32>
    %345 = vector.shape_cast %342 : vector<32x8xf32> to vector<4x8x8xf32>
    "tpu.trace_start"() <{level = 10 : i32, message = "bqd,bkd->bqk"}> : () -> ()
    %cst_216 = arith.constant dense<0.000000e+00> : vector<4x8x8xf32>
    %346 = tpu.matmul %343, %344, %cst_216 {dimension_numbers = #tpu.dot_dimension_numbers<[2], [2], [1], [1], [0, 0, 0, 1, 1, 1], [0], [0]>} : vector<4x8x8xf32>, vector<4x8x8xf32>, vector<4x8x8xf32> -> vector<4x8x8xf32>
    "tpu.trace_stop"() : () -> ()
    %cst_217 = arith.constant dense<0xFF800000> : vector<4x8xf32>
    %347 = vector.multi_reduction <maximumf>, %346, %cst_217 [2] : vector<4x8x8xf32> to vector<4x8xf32>
    %348 = vector.shape_cast %347 : vector<4x8xf32> to vector<4x8x1xf32>
    %349 = vector.broadcast %348 : vector<4x8x1xf32> to vector<4x8x8xf32>
    %350 = arith.subf %346, %349 : vector<4x8x8xf32>
    %351 = math.exp %350 : vector<4x8x8xf32>
    %cst_218 = arith.constant dense<0.000000e+00> : vector<4x8xf32>
    %352 = vector.multi_reduction <add>, %351, %cst_218 [2] : vector<4x8x8xf32> to vector<4x8xf32>
    %353 = vector.shape_cast %352 : vector<4x8xf32> to vector<4x8x1xf32>
    %354 = tpu.reciprocal %353 {approx = true} : vector<4x8x1xf32> -> vector<4x8x1xf32>
    %355 = vector.broadcast %354 : vector<4x8x1xf32> to vector<4x8x8xf32>
    %356 = arith.mulf %351, %355 : vector<4x8x8xf32>
    "tpu.trace_start"() <{level = 10 : i32, message = "bqk,bkd->bqd"}> : () -> ()
    %cst_219 = arith.constant dense<0.000000e+00> : vector<4x8x8xf32>
    %357 = tpu.matmul %356, %345, %cst_219 {dimension_numbers = #tpu.dot_dimension_numbers<[2], [1], [1], [2], [0, 0, 0, 1, 1, 2], [0], [0]>} : vector<4x8x8xf32>, vector<4x8x8xf32>, vector<4x8x8xf32> -> vector<4x8x8xf32>
    "tpu.trace_stop"() : () -> ()
    %358 = vector.shape_cast %357 : vector<4x8x8xf32> to vector<32x8xf32>
    %c7_220 = arith.constant 7 : index
    %c0_221 = arith.constant 0 : index
    %c0_222 = arith.constant 0 : index
    %359 = vector.load %arg5[%c7_220, %c0_221, %c0_222] : memref<8x8x32xf32, #tpu.memory_space<vmem>>, vector<1x8x32xf32>
    %360 = vector.shape_cast %359 : vector<1x8x32xf32> to vector<8x32xf32>
    %cst_223 = arith.constant dense<0.000000e+00> : vector<32x32xf32>
    %361 = tpu.matmul %358, %360, %cst_223 {dimension_numbers = #tpu.dot_dimension_numbers<[1], [0], [0], [1], [0, 0, 1, 1], [], []>} : vector<32x8xf32>, vector<8x32xf32>, vector<32x32xf32> -> vector<32x32xf32>
    %362 = arith.addf %327, %361 : vector<32x32xf32>
    %363 = vector.broadcast %215 : vector<1x32xf32> to vector<32x32xf32>
    %364 = arith.addf %362, %363 : vector<32x32xf32>
    %365 = arith.addf %214, %364 : vector<32x32xf32>
    %cst_224 = arith.constant dense<0.000000e+00> : vector<32xf32>
    %366 = vector.multi_reduction <add>, %365, %cst_224 [1] : vector<32x32xf32> to vector<32xf32>
    %367 = vector.shape_cast %366 : vector<32xf32> to vector<32x1xf32>
    %cst_225 = arith.constant 3.200000e+01 : f32
    %368 = vector.broadcast %cst_225 : f32 to vector<32x1xf32>
    %369 = arith.divf %367, %368 : vector<32x1xf32>
    %370 = vector.broadcast %369 : vector<32x1xf32> to vector<32x32xf32>
    %371 = arith.subf %365, %370 : vector<32x32xf32>
    %372 = arith.mulf %371, %371 : vector<32x32xf32>
    %cst_226 = arith.constant dense<0.000000e+00> : vector<32xf32>
    %373 = vector.multi_reduction <add>, %372, %cst_226 [1] : vector<32x32xf32> to vector<32xf32>
    %374 = vector.shape_cast %373 : vector<32xf32> to vector<32x1xf32>
    %cst_227 = arith.constant 3.200000e+01 : f32
    %375 = vector.broadcast %cst_227 : f32 to vector<32x1xf32>
    %376 = arith.divf %374, %375 : vector<32x1xf32>
    %377 = vector.broadcast %369 : vector<32x1xf32> to vector<32x32xf32>
    %378 = arith.subf %365, %377 : vector<32x32xf32>
    %cst_228 = arith.constant 9.99999974E-6 : f32
    %379 = vector.broadcast %cst_228 : f32 to vector<32x1xf32>
    %380 = arith.addf %376, %379 : vector<32x1xf32>
    %381 = math.rsqrt %380 : vector<32x1xf32>
    %382 = vector.broadcast %381 : vector<32x1xf32> to vector<32x32xf32>
    %383 = arith.mulf %378, %382 : vector<32x32xf32>
    %384 = vector.broadcast %216 : vector<1x32xf32> to vector<32x32xf32>
    %385 = arith.mulf %383, %384 : vector<32x32xf32>
    %386 = vector.broadcast %217 : vector<1x32xf32> to vector<32x32xf32>
    %387 = arith.addf %385, %386 : vector<32x32xf32>
    %c1_229 = arith.constant 1 : index
    %c0_230 = arith.constant 0 : index
    %c0_231 = arith.constant 0 : index
    %388 = vector.load %arg6[%c1_229, %c0_230, %c0_231] : memref<2x32x64xf32, #tpu.memory_space<vmem>>, vector<1x32x64xf32>
    %389 = vector.shape_cast %388 : vector<1x32x64xf32> to vector<32x64xf32>
    %cst_232 = arith.constant dense<0.000000e+00> : vector<32x64xf32>
    %390 = tpu.matmul %387, %389, %cst_232 {dimension_numbers = #tpu.dot_dimension_numbers<[1], [0], [0], [1], [0, 0, 1, 1], [], []>} : vector<32x32xf32>, vector<32x64xf32>, vector<32x64xf32> -> vector<32x64xf32>
    %391 = vector.broadcast %218 : vector<1x64xf32> to vector<32x64xf32>
    %392 = arith.addf %390, %391 : vector<32x64xf32>
    %cst_233 = arith.constant 0.000000e+00 : f32
    %393 = vector.broadcast %cst_233 : f32 to vector<32x64xf32>
    %394 = arith.maximumf %392, %393 : vector<32x64xf32>
    %c1_234 = arith.constant 1 : index
    %c0_235 = arith.constant 0 : index
    %c0_236 = arith.constant 0 : index
    %395 = vector.load %arg7[%c1_234, %c0_235, %c0_236] : memref<2x64x32xf32, #tpu.memory_space<vmem>>, vector<1x64x32xf32>
    %396 = vector.shape_cast %395 : vector<1x64x32xf32> to vector<64x32xf32>
    %cst_237 = arith.constant dense<0.000000e+00> : vector<32x32xf32>
    %397 = tpu.matmul %394, %396, %cst_237 {dimension_numbers = #tpu.dot_dimension_numbers<[1], [0], [0], [1], [0, 0, 1, 1], [], []>} : vector<32x64xf32>, vector<64x32xf32>, vector<32x32xf32> -> vector<32x32xf32>
    %398 = vector.broadcast %219 : vector<1x32xf32> to vector<32x32xf32>
    %399 = arith.addf %397, %398 : vector<32x32xf32>
    %400 = arith.addf %387, %399 : vector<32x32xf32>
    %cst_238 = arith.constant dense<0.000000e+00> : vector<32xf32>
    %401 = vector.multi_reduction <add>, %400, %cst_238 [1] : vector<32x32xf32> to vector<32xf32>
    %402 = vector.shape_cast %401 : vector<32xf32> to vector<32x1xf32>
    %cst_239 = arith.constant 3.200000e+01 : f32
    %403 = vector.broadcast %cst_239 : f32 to vector<32x1xf32>
    %404 = arith.divf %402, %403 : vector<32x1xf32>
    %405 = vector.broadcast %404 : vector<32x1xf32> to vector<32x32xf32>
    %406 = arith.subf %400, %405 : vector<32x32xf32>
    %407 = arith.mulf %406, %406 : vector<32x32xf32>
    %cst_240 = arith.constant dense<0.000000e+00> : vector<32xf32>
    %408 = vector.multi_reduction <add>, %407, %cst_240 [1] : vector<32x32xf32> to vector<32xf32>
    %409 = vector.shape_cast %408 : vector<32xf32> to vector<32x1xf32>
    %cst_241 = arith.constant 3.200000e+01 : f32
    %410 = vector.broadcast %cst_241 : f32 to vector<32x1xf32>
    %411 = arith.divf %409, %410 : vector<32x1xf32>
    %412 = vector.broadcast %404 : vector<32x1xf32> to vector<32x32xf32>
    %413 = arith.subf %400, %412 : vector<32x32xf32>
    %cst_242 = arith.constant 9.99999974E-6 : f32
    %414 = vector.broadcast %cst_242 : f32 to vector<32x1xf32>
    %415 = arith.addf %411, %414 : vector<32x1xf32>
    %416 = math.rsqrt %415 : vector<32x1xf32>
    %417 = vector.broadcast %416 : vector<32x1xf32> to vector<32x32xf32>
    %418 = arith.mulf %413, %417 : vector<32x32xf32>
    %419 = vector.broadcast %220 : vector<1x32xf32> to vector<32x32xf32>
    %420 = arith.mulf %418, %419 : vector<32x32xf32>
    %421 = vector.broadcast %221 : vector<1x32xf32> to vector<32x32xf32>
    %422 = arith.addf %420, %421 : vector<32x32xf32>
    %c15_243 = arith.constant 15 : index
    %c0_244 = arith.constant 0 : index
    %423 = vector.load %arg8[%c15_243, %c0_244] : memref<19x64xf32, #tpu.memory_space<vmem>>, vector<1x32xf32>
    %c16_245 = arith.constant 16 : index
    %c0_246 = arith.constant 0 : index
    %424 = vector.load %arg8[%c16_245, %c0_246] : memref<19x64xf32, #tpu.memory_space<vmem>>, vector<1x32xf32>
    %cst_247 = arith.constant dense<0.000000e+00> : vector<32xf32>
    %425 = vector.multi_reduction <add>, %422, %cst_247 [1] : vector<32x32xf32> to vector<32xf32>
    %426 = vector.shape_cast %425 : vector<32xf32> to vector<32x1xf32>
    %cst_248 = arith.constant 3.200000e+01 : f32
    %427 = vector.broadcast %cst_248 : f32 to vector<32x1xf32>
    %428 = arith.divf %426, %427 : vector<32x1xf32>
    %429 = vector.broadcast %428 : vector<32x1xf32> to vector<32x32xf32>
    %430 = arith.subf %422, %429 : vector<32x32xf32>
    %431 = arith.mulf %430, %430 : vector<32x32xf32>
    %cst_249 = arith.constant dense<0.000000e+00> : vector<32xf32>
    %432 = vector.multi_reduction <add>, %431, %cst_249 [1] : vector<32x32xf32> to vector<32xf32>
    %433 = vector.shape_cast %432 : vector<32xf32> to vector<32x1xf32>
    %cst_250 = arith.constant 3.200000e+01 : f32
    %434 = vector.broadcast %cst_250 : f32 to vector<32x1xf32>
    %435 = arith.divf %433, %434 : vector<32x1xf32>
    %436 = vector.broadcast %428 : vector<32x1xf32> to vector<32x32xf32>
    %437 = arith.subf %422, %436 : vector<32x32xf32>
    %cst_251 = arith.constant 9.99999974E-6 : f32
    %438 = vector.broadcast %cst_251 : f32 to vector<32x1xf32>
    %439 = arith.addf %435, %438 : vector<32x1xf32>
    %440 = math.rsqrt %439 : vector<32x1xf32>
    %441 = vector.broadcast %440 : vector<32x1xf32> to vector<32x32xf32>
    %442 = arith.mulf %437, %441 : vector<32x32xf32>
    %443 = vector.broadcast %423 : vector<1x32xf32> to vector<32x32xf32>
    %444 = arith.mulf %442, %443 : vector<32x32xf32>
    %445 = vector.broadcast %424 : vector<1x32xf32> to vector<32x32xf32>
    %446 = arith.addf %444, %445 : vector<32x32xf32>
    %447 = vector.shape_cast %446 : vector<32x32xf32> to vector<4x8x32xf32>
    %448 = vector.extract_strided_slice %447 {offsets = [0, 7, 0], sizes = [4, 1, 32], strides = [1, 1, 1]} : vector<4x8x32xf32> to vector<4x1x32xf32>
    %449 = vector.shape_cast %448 : vector<4x1x32xf32> to vector<4x32xf32>
    %c18_252 = arith.constant 18 : index
    %c0_253 = arith.constant 0 : index
    %450 = vector.load %arg8[%c18_252, %c0_253] : memref<19x64xf32, #tpu.memory_space<vmem>>, vector<1x1xf32>
    %c17_254 = arith.constant 17 : index
    %c0_255 = arith.constant 0 : index
    %451 = vector.load %arg8[%c17_254, %c0_255] : memref<19x64xf32, #tpu.memory_space<vmem>>, vector<1x32xf32>
    %452 = vector.broadcast %451 : vector<1x32xf32> to vector<4x32xf32>
    %453 = arith.mulf %449, %452 : vector<4x32xf32>
    %cst_256 = arith.constant dense<0.000000e+00> : vector<4xf32>
    %454 = vector.multi_reduction <add>, %453, %cst_256 [1] : vector<4x32xf32> to vector<4xf32>
    %455 = vector.shape_cast %454 : vector<4xf32> to vector<4x1xf32>
    %456 = vector.broadcast %450 : vector<1x1xf32> to vector<4x1xf32>
    %457 = arith.addf %455, %456 : vector<4x1xf32>
    %458 = math.tanh %457 : vector<4x1xf32>
    %459 = arith.subf %457, %458 : vector<4x1xf32>
    %c0_257 = arith.constant 0 : index
    %c0_258 = arith.constant 0 : index
    %c0_259 = arith.constant 0 : index
    %460 = vector.load %arg9[%c0_257, %c0_258, %c0_259] : memref<1x4x1xf32, #tpu.memory_space<vmem>>, vector<1x4x1xf32>
    %461 = vector.shape_cast %460 : vector<1x4x1xf32> to vector<4x1xf32>
    %462 = vector.shape_cast %459 : vector<4x1xf32> to vector<1x4x1xf32>
    tpu.vector_store %arg9[%c0_257, %c0_258, %c0_259], %462 {strides = array<i32>} : memref<1x4x1xf32, #tpu.memory_space<vmem>>, vector<1x4x1xf32>,
    return
  }
  func.func @transform_0(%arg0: i32) -> (i32, i32, i32) {
    %c0_i32 = arith.constant 0 : i32
    %c0_i32_0 = arith.constant 0 : i32
    %c0_i32_1 = arith.constant 0 : i32
    return %arg0, %c0_i32, %c0_i32_0 : i32, i32, i32
  }
  func.func @transform_1(%arg0: i32) -> (i32, i32) {
    %c0_i32 = arith.constant 0 : i32
    %c0_i32_0 = arith.constant 0 : i32
    %c0_i32_1 = arith.constant 0 : i32
    return %c0_i32, %c0_i32_0 : i32, i32
  }
  func.func @transform_2(%arg0: i32) -> (i32, i32, i32) {
    %c0_i32 = arith.constant 0 : i32
    %c0_i32_0 = arith.constant 0 : i32
    %c0_i32_1 = arith.constant 0 : i32
    %c0_i32_2 = arith.constant 0 : i32
    return %c0_i32, %c0_i32_0, %c0_i32_1 : i32, i32, i32
  }
  func.func @transform_3(%arg0: i32) -> (i32, i32, i32) {
    %c0_i32 = arith.constant 0 : i32
    %c0_i32_0 = arith.constant 0 : i32
    %c0_i32_1 = arith.constant 0 : i32
    %c0_i32_2 = arith.constant 0 : i32
    return %c0_i32, %c0_i32_0, %c0_i32_1 : i32, i32, i32
  }
  func.func @transform_4(%arg0: i32) -> (i32, i32, i32) {
    %c0_i32 = arith.constant 0 : i32
    %c0_i32_0 = arith.constant 0 : i32
    %c0_i32_1 = arith.constant 0 : i32
    %c0_i32_2 = arith.constant 0 : i32
    return %c0_i32, %c0_i32_0, %c0_i32_1 : i32, i32, i32
  }
  func.func @transform_5(%arg0: i32) -> (i32, i32, i32) {
    %c0_i32 = arith.constant 0 : i32
    %c0_i32_0 = arith.constant 0 : i32
    %c0_i32_1 = arith.constant 0 : i32
    %c0_i32_2 = arith.constant 0 : i32
    return %c0_i32, %c0_i32_0, %c0_i32_1 : i32, i32, i32
  }
  func.func @transform_6(%arg0: i32) -> (i32, i32, i32) {
    %c0_i32 = arith.constant 0 : i32
    %c0_i32_0 = arith.constant 0 : i32
    %c0_i32_1 = arith.constant 0 : i32
    %c0_i32_2 = arith.constant 0 : i32
    return %c0_i32, %c0_i32_0, %c0_i32_1 : i32, i32, i32
  }
  func.func @transform_7(%arg0: i32) -> (i32, i32) {
    %c0_i32 = arith.constant 0 : i32
    %c0_i32_0 = arith.constant 0 : i32
    %c0_i32_1 = arith.constant 0 : i32
    return %c0_i32, %c0_i32_0 : i32, i32
  }
  func.func @transform_8(%arg0: i32) -> (i32, i32, i32) {
    %c0_i32 = arith.constant 0 : i32
    %c0_i32_0 = arith.constant 0 : i32
    %c0_i32_1 = arith.constant 0 : i32
    return %arg0, %c0_i32, %c0_i32_0 : i32, i32, i32
  }
}

</mosaic_0001>

<llo_original>
// kernel: transformer_forward.1
$region0: #{transformer_forward.1}
  #allocation0 [shape = 'u32[]', space=smem, size = 0x4, offset = 0x4, fixed_abs, tag = 'smem constant byte address 0x4 - core index']
  #allocation1 [shape = 'u32[144,128]{1,0:T(1,128)}', space=vmem, size = 0x12000, scoped, tag = 'internal scratch']
  %s0 = inlined_call_operand.vmem [shape: f32[2,32,4], index: 0, kind: input, shape index: {}]
  %s1 = inlined_call_operand.vmem [shape: f32[4,32], index: 1, kind: input, shape index: {}]
  %s2 = inlined_call_operand.vmem [shape: f32[24,32,8], index: 2, kind: input, shape index: {}]
  %s3 = inlined_call_operand.vmem [shape: f32[8,1,8], index: 3, kind: input, shape index: {}]
  %s4 = inlined_call_operand.vmem [shape: f32[8,8,32], index: 4, kind: input, shape index: {}]
  %s5 = inlined_call_operand.vmem [shape: f32[2,32,64], index: 5, kind: input, shape index: {}]
  %s6 = inlined_call_operand.vmem [shape: f32[2,64,32], index: 6, kind: input, shape index: {}]
  %s7 = inlined_call_operand.vmem [shape: f32[19,64], index: 7, kind: input, shape index: {}]
  %s8 = inlined_call_operand.vmem [shape: f32[2,4,1], index: 8, kind: output, shape index: {}]
  %s9 = sld [smem:[#allocation0]]
  $region65: #{transformer_forward.1} parent=0
    _
  %s11 = ssub.s32 1, %s9
  %s12 = scalar_select 0, %s11, %s9
  loop: start=0, step=1, limit=4
  $region2: #{transformer_forward.1} parent=0 // loop_pre_header
    _
  $region3: #{transformer_forward.1} parent=0 // loop_header
    %s14 = sphi 0, %s18
    %p15 = scmp.ge.s32.totalorder %s14, 4
    %s24 = sphi 0, %s26
    %s27 = sphi 0, %s24
    %s28 = sphi 0, %s27
    %s44 = sphi 0, %s28
    %s48 = sphi 0, %s48
    %s50 = sphi 0, %s48
    %s51 = sphi 0, %s50
    %s65 = sphi 0, %s51
    %s69 = sphi 0, %s69
    %s71 = sphi 0, %s69
    %s72 = sphi 0, %s71
    %s86 = sphi 0, %s72
    %s90 = sphi 0, %s90
    %s92 = sphi 0, %s90
    %s93 = sphi 0, %s92
    %s107 = sphi 0, %s93
    %s111 = sphi 0, %s111
    %s113 = sphi 0, %s111
    %s114 = sphi 0, %s113
    %s128 = sphi 0, %s114
    %s132 = sphi 0, %s132
    %s134 = sphi 0, %s132
    %s135 = sphi 0, %s134
    %s149 = sphi 0, %s135
    %s153 = sphi 0, %s153
    %s155 = sphi 0, %s153
    %s156 = sphi 0, %s155
    %s170 = sphi 0, %s156
    %s174 = sphi 0, %s174
    %s176 = sphi 0, %s174
    %s177 = sphi 0, %s176
    %s191 = sphi 0, %s177
    %s197 = sphi 0, %s199
    %s200 = sphi 0, %s197
    %s201 = sphi 0, %s200
    %s217 = sphi 0, %s201
  $region4: #{transformer_forward.1} parent=0 // loop_header_branch
    %17 = sbr.rel (%p15) target = $region8
  $region5: #{transformer_forward.1} parent=0 // loop_body
    %s19 = ssub.s32 %s14, 1
    %s20 = ssub.s32 %s14, 2
    %s21 = sadd.s32 %s14, 1
    %s22 = ssub.s32 %s14, %s21
    %p23 = scmp.eq.s32.totalorder %s22, 0
    %s25 = sadd.s32 %s24, 1
    %s26 = scalar_select %p23, %s24, %s25
    %p29 = pneg %p23
    %p30 = scmp.eq.s32.totalorder %s14, 1
    %p31 = por %p29, %p30
    %p32 = scmp.ne.s32.totalorder %s24, %s27
    %p33 = scmp.eq.s32.totalorder %s14, 0
    %p34 = por %p32, %p33
    %p35 = scmp.ne.s32.totalorder %s24, %s27
    %p36 = scmp.eq.s32.totalorder %s19, 1
    %p37 = por %p35, %p36
    %p38 = scmp.ne.s32.totalorder %s27, %s28
    %p39 = scmp.eq.s32.totalorder %s19, 0
    %p40 = por %p38, %p39
    %p41 = scmp.ne.s32.totalorder %s27, %s28
    %p42 = scmp.eq.s32.totalorder %s20, 1
    %p43 = por %p41, %p42
    %p45 = scmp.ne.s32.totalorder %s28, %s44
    %p46 = scmp.eq.s32.totalorder %s20, 0
    %p47 = por %p45, %p46
    %s49 = sadd.s32 %s48, 1
    %p52 = scmp.eq.s32.totalorder %s14, 1
    %p53 = scmp.ne.s32.totalorder %s48, %s50
    %p54 = scmp.eq.s32.totalorder %s14, 0
    %p55 = por %p53, %p54
    %p56 = scmp.ne.s32.totalorder %s48, %s50
    %p57 = scmp.eq.s32.totalorder %s19, 1
    %p58 = por %p56, %p57
    %p59 = scmp.ne.s32.totalorder %s50, %s51
    %p60 = scmp.eq.s32.totalorder %s19, 0
    %p61 = por %p59, %p60
    %p62 = scmp.ne.s32.totalorder %s50, %s51
    %p63 = scmp.eq.s32.totalorder %s20, 1
    %p64 = por %p62, %p63
    %p66 = scmp.ne.s32.totalorder %s51, %s65
    %p67 = scmp.eq.s32.totalorder %s20, 0
    %p68 = por %p66, %p67
    %s70 = sadd.s32 %s69, 1
    %p73 = scmp.eq.s32.totalorder %s14, 1
    %p74 = scmp.ne.s32.totalorder %s69, %s71
    %p75 = scmp.eq.s32.totalorder %s14, 0
    %p76 = por %p74, %p75
    %p77 = scmp.ne.s32.totalorder %s69, %s71
    %p78 = scmp.eq.s32.totalorder %s19, 1
    %p79 = por %p77, %p78
    %p80 = scmp.ne.s32.totalorder %s71, %s72
    %p81 = scmp.eq.s32.totalorder %s19, 0
    %p82 = por %p80, %p81
    %p83 = scmp.ne.s32.totalorder %s71, %s72
    %p84 = scmp.eq.s32.totalorder %s20, 1
    %p85 = por %p83, %p84
    %p87 = scmp.ne.s32.totalorder %s72, %s86
    %p88 = scmp.eq.s32.totalorder %s20, 0
    %p89 = por %p87, %p88
    %s91 = sadd.s32 %s90, 1
    %p94 = scmp.eq.s32.totalorder %s14, 1
    %p95 = scmp.ne.s32.totalorder %s90, %s92
    %p96 = scmp.eq.s32.totalorder %s14, 0
    %p97 = por %p95, %p96
    %p98 = scmp.ne.s32.totalorder %s90, %s92
    %p99 = scmp.eq.s32.totalorder %s19, 1
    %p100 = por %p98, %p99
    %p101 = scmp.ne.s32.totalorder %s92, %s93
    %p102 = scmp.eq.s32.totalorder %s19, 0
    %p103 = por %p101, %p102
    %p104 = scmp.ne.s32.totalorder %s92, %s93
    %p105 = scmp.eq.s32.totalorder %s20, 1
    %p106 = por %p104, %p105
    %p108 = scmp.ne.s32.totalorder %s93, %s107
    %p109 = scmp.eq.s32.totalorder %s20, 0
    %p110 = por %p108, %p109
    %s112 = sadd.s32 %s111, 1
    %p115 = scmp.eq.s32.totalorder %s14, 1
    %p116 = scmp.ne.s32.totalorder %s111, %s113
    %p117 = scmp.eq.s32.totalorder %s14, 0
    %p118 = por %p116, %p117
    %p119 = scmp.ne.s32.totalorder %s111, %s113
    %p120 = scmp.eq.s32.totalorder %s19, 1
    %p121 = por %p119, %p120
    %p122 = scmp.ne.s32.totalorder %s113, %s114
    %p123 = scmp.eq.s32.totalorder %s19, 0
    %p124 = por %p122, %p123
    %p125 = scmp.ne.s32.totalorder %s113, %s114
    %p126 = scmp.eq.s32.totalorder %s20, 1
    %p127 = por %p125, %p126
    %p129 = scmp.ne.s32.totalorder %s114, %s128
    %p130 = scmp.eq.s32.totalorder %s20, 0
    %p131 = por %p129, %p130
    %s133 = sadd.s32 %s132, 1
    %p136 = scmp.eq.s32.totalorder %s14, 1
    %p137 = scmp.ne.s32.totalorder %s132, %s134
    %p138 = scmp.eq.s32.totalorder %s14, 0
    %p139 = por %p137, %p138
    %p140 = scmp.ne.s32.totalorder %s132, %s134
    %p141 = scmp.eq.s32.totalorder %s19, 1
    %p142 = por %p140, %p141
    %p143 = scmp.ne.s32.totalorder %s134, %s135
    %p144 = scmp.eq.s32.totalorder %s19, 0
    %p145 = por %p143, %p144
    %p146 = scmp.ne.s32.totalorder %s134, %s135
    %p147 = scmp.eq.s32.totalorder %s20, 1
    %p148 = por %p146, %p147
    %p150 = scmp.ne.s32.totalorder %s135, %s149
    %p151 = scmp.eq.s32.totalorder %s20, 0
    %p152 = por %p150, %p151
    %s154 = sadd.s32 %s153, 1
    %p157 = scmp.eq.s32.totalorder %s14, 1
    %p158 = scmp.ne.s32.totalorder %s153, %s155
    %p159 = scmp.eq.s32.totalorder %s14, 0
    %p160 = por %p158, %p159
    %p161 = scmp.ne.s32.totalorder %s153, %s155
    %p162 = scmp.eq.s32.totalorder %s19, 1
    %p163 = por %p161, %p162
    %p164 = scmp.ne.s32.totalorder %s155, %s156
    %p165 = scmp.eq.s32.totalorder %s19, 0
    %p166 = por %p164, %p165
    %p167 = scmp.ne.s32.totalorder %s155, %s156
    %p168 = scmp.eq.s32.totalorder %s20, 1
    %p169 = por %p167, %p168
    %p171 = scmp.ne.s32.totalorder %s156, %s170
    %p172 = scmp.eq.s32.totalorder %s20, 0
    %p173 = por %p171, %p172
    %s175 = sadd.s32 %s174, 1
    %p178 = scmp.eq.s32.totalorder %s14, 1
    %p179 = scmp.ne.s32.totalorder %s174, %s176
    %p180 = scmp.eq.s32.totalorder %s14, 0
    %p181 = por %p179, %p180
    %p182 = scmp.ne.s32.totalorder %s174, %s176
    %p183 = scmp.eq.s32.totalorder %s19, 1
    %p184 = por %p182, %p183
    %p185 = scmp.ne.s32.totalorder %s176, %s177
    %p186 = scmp.eq.s32.totalorder %s19, 0
    %p187 = por %p185, %p186
    %p188 = scmp.ne.s32.totalorder %s176, %s177
    %p189 = scmp.eq.s32.totalorder %s20, 1
    %p190 = por %p188, %p189
    %p192 = scmp.ne.s32.totalorder %s177, %s191
    %p193 = scmp.eq.s32.totalorder %s20, 0
    %p194 = por %p192, %p193
    %s195 = ssub.s32 %s14, %s21
    %p196 = scmp.eq.s32.totalorder %s195, 0
    %s198 = sadd.s32 %s197, 1
    %s199 = scalar_select %p196, %s197, %s198
    %p202 = pneg %p196
    %p203 = scmp.eq.s32.totalorder %s14, 1
    %p204 = por %p202, %p203
    %p205 = scmp.ne.s32.totalorder %s197, %s200
    %p206 = scmp.eq.s32.totalorder %s14, 0
    %p207 = por %p205, %p206
    %p208 = scmp.ne.s32.totalorder %s197, %s200
    %p209 = scmp.eq.s32.totalorder %s19, 1
    %p210 = por %p208, %p209
    %p211 = scmp.ne.s32.totalorder %s200, %s201
    %p212 = scmp.eq.s32.totalorder %s19, 0
    %p213 = por %p211, %p212
    %p214 = scmp.ne.s32.totalorder %s200, %s201
    %p215 = scmp.eq.s32.totalorder %s20, 1
    %p216 = por %p214, %p215
    %p218 = scmp.ne.s32.totalorder %s201, %s217
    %p219 = scmp.eq.s32.totalorder %s20, 0
    %p220 = por %p218, %p219
    %p221 = scmp.le.s32.totalorder 1, %s14
    %p222 = scmp.lt.s32.totalorder %s14, 3
    %p223 = pnand %p221, %p222
    %p224 = pneg %p223
    // Predicated region
    $region9: #{transformer_forward.1} parent=5 // pred_check
      _
    $region10: #{transformer_forward.1} parent=5 // pred_check_branch
      %226 = sbr.rel (%p223) target = $region12
    $region11: #{transformer_forward.1} parent=5 // pred_region
      %s227 = ssub.s32 %s14, 1
      // Predicated region
      $region13: #{transformer_forward.1} parent=11 // pred_check
        %p228 = pneg %p61
      $region14: #{transformer_forward.1} parent=11 // pred_check_branch
        %230 = sbr.rel (%p228) target = $region16
      $region15: #{transformer_forward.1} parent=11 // pred_region
        _
      $region16: #{transformer_forward.1} parent=11 // pred_fallthru
        _
      // Predicated region
      $region17: #{transformer_forward.1} parent=11 // pred_check
        %p231 = pneg %p82
      $region18: #{transformer_forward.1} parent=11 // pred_check_branch
        %233 = sbr.rel (%p231) target = $region20
      $region19: #{transformer_forward.1} parent=11 // pred_region
        _
      $region20: #{transformer_forward.1} parent=11 // pred_fallthru
        _
      // Predicated region
      $region21: #{transformer_forward.1} parent=11 // pred_check
        %p234 = pneg %p103
      $region22: #{transformer_forward.1} parent=11 // pred_check_branch
        %236 = sbr.rel (%p234) target = $region24
      $region23: #{transformer_forward.1} parent=11 // pred_region
        _
      $region24: #{transformer_forward.1} parent=11 // pred_fallthru
        _
      // Predicated region
      $region25: #{transformer_forward.1} parent=11 // pred_check
        %p237 = pneg %p124
      $region26: #{transformer_forward.1} parent=11 // pred_check_branch
        %239 = sbr.rel (%p237) target = $region28
      $region27: #{transformer_forward.1} parent=11 // pred_region
        _
      $region28: #{transformer_forward.1} parent=11 // pred_fallthru
        _
      // Predicated region
      $region29: #{transformer_forward.1} parent=11 // pred_check
        %p240 = pneg %p145
      $region30: #{transformer_forward.1} parent=11 // pred_check_branch
        %242 = sbr.rel (%p240) target = $region32
      $region31: #{transformer_forward.1} parent=11 // pred_region
        _
      $region32: #{transformer_forward.1} parent=11 // pred_fallthru
        _
      // Predicated region
      $region33: #{transformer_forward.1} parent=11 // pred_check
        %p243 = pneg %p166
      $region34: #{transformer_forward.1} parent=11 // pred_check_branch
        %245 = sbr.rel (%p243) target = $region36
      $region35: #{transformer_forward.1} parent=11 // pred_region
        _
      $region36: #{transformer_forward.1} parent=11 // pred_fallthru
        _
      // Predicated region
      $region37: #{transformer_forward.1} parent=11 // pred_check
        %p246 = pneg %p187
      $region38: #{transformer_forward.1} parent=11 // pred_check_branch
        %248 = sbr.rel (%p246) target = $region40
      $region39: #{transformer_forward.1} parent=11 // pred_region
        _
      $region40: #{transformer_forward.1} parent=11 // pred_fallthru
        _
    $region12: #{transformer_forward.1} parent=5 // pred_fallthru
      _
    %p249 = scmp.lt.s32.totalorder %s14, 2
    // Predicated region
    $region41: #{transformer_forward.1} parent=5 // pred_check
      %p250 = pneg %p249
    $region42: #{transformer_forward.1} parent=5 // pred_check_branch
      %252 = sbr.rel (%p250) target = $region44
    $region43: #{transformer_forward.1} parent=5 // pred_region
      // Predicated region
      $region45: #{transformer_forward.1} parent=43 // pred_check
        %p253 = pneg %p34
      $region46: #{transformer_forward.1} parent=43 // pred_check_branch
        %255 = sbr.rel (%p253) target = $region48
      $region47: #{transformer_forward.1} parent=43 // pred_region
        %p256 = scmp.lt.s32.totalorder %s14, 1
        %s257 = scalar_select %p256, %s14, 1
        %s258 = smul.addr %s257, 4
        %s259 = smul.addr %s258, 8
        %s260 = scalar_lea.vmem %s0, %s259
      $region48: #{transformer_forward.1} parent=43 // pred_fallthru
        _
    $region44: #{transformer_forward.1} parent=5 // pred_fallthru
      _
    %p261 = scmp.le.s32.totalorder 1, %s14
    %p262 = scmp.lt.s32.totalorder %s14, 3
    %p263 = pnand %p261, %p262
    %p264 = pneg %p263
    // Predicated region
    $region49: #{transformer_forward.1} parent=5 // pred_check
      _
    $region50: #{transformer_forward.1} parent=5 // pred_check_branch
      %266 = sbr.rel (%p263) target = $region52
    $region51: #{transformer_forward.1} parent=5 // pred_region
      %s267 = ssub.s32 %s14, 1
      %p268 = scmp.lt.s32.totalorder %s19, 1
      %s269 = scalar_select %p268, %s19, 1
      %s270 = smul.addr %s269, 4
      %s271 = smul.addr %s270, 8
      %s272 = scalar_lea.vmem %s0, %s271
      %p273 = pneg %p40
      %p274 = pneg %p37
      %p275 = pneg %p61
      %p276 = pneg %p58
      %p277 = pneg %p82
      %p278 = pneg %p79
      %p279 = pneg %p103
      %p280 = pneg %p100
      %p281 = pneg %p124
      %p282 = pneg %p121
      %p283 = pneg %p145
      %p284 = pneg %p142
      %p285 = pneg %p166
      %p286 = pneg %p163
      %p287 = pneg %p187
      %p288 = pneg %p184
      %p289 = pneg %p213
      %p290 = pneg %p210
      %p291 = scmp.lt.s32.totalorder %s19, 1
      %s292 = scalar_select %p291, %s19, 1
      %s293 = smul.addr %s292, 4
      %s294 = scalar_lea.vmem %s8, %s293
      %p295 = scmp.lt.s32.totalorder %s19, 1
      %s296 = scalar_select %p295, %s19, 1
      %s297 = smul.addr %s296, 4
      %s298 = smul.addr %s297, 8
      %s299 = scalar_lea.vmem %s0, %s298
      %p300 = scmp.lt.s32.totalorder %s19, 1
      %s301 = scalar_select %p300, %s19, 1
      %s302 = smul.addr %s301, 4
      %s303 = scalar_lea.vmem %s8, %s302
      %v304 = vld [vmem:[%s299] sm:$0xff]
      %v305 = vld [vmem:[%s299 + $0x8] sm:$0xff]
      %v306 = vld [vmem:[%s299 + $0x10] sm:$0xff]
      %v307 = vld [vmem:[%s299 + $0x18] sm:$0xff]
      %v308 = vld [vmem:[%s1] sm:$0xf]
      %v309 = vld [vmem:[%s7] sm:$0x1]
      %v310 = vlaneseq
      %v311 = vshrl.u32 %v310, 7
      %v312 = vsub.s32 0, %v311
      %v313 = vrot.slane %v309, %v312
      %vm314 = vcmask 31744
      %v316 = vsel %vm314, %v304, 0
      %v319 = vsel %vm314, %v305, 0
      %v322 = vsel %vm314, %v306, 0
      %v325 = vsel %vm314, %v307, 0
      %vm327 = vcmask 1043456
      %v329 = vsel %vm327, %v308, 0
      %331 = vmatprep.subr.mxu0 0.0
      %332 = vmatpush1.msra.mxu0 0.0
      %333 = vmatprep.subr.mxu0 0.0
      %334 = vmatpush1.msra.mxu0 0.0
      %335 = vmatprep.subr.mxu0 0.0
      %336 = vmatpush1.msra.mxu0 0.0
      %337 = vmatprep.subr.mxu0 0.0
      %338 = vmatpush1.msra.mxu0 0.0
      %339 = vmatprep.subr.mxu0 0.0
      %340 = vmatpush1.msra.mxu0 0.0
      %341 = vmatprep.subr.mxu0 0.0
      %342 = vmatpush1.msra.mxu0 0.0
      %343 = vmatprep.subr.mxu0 0.0
      %344 = vmatpush1.msra.mxu0 0.0
      %345 = vmatprep.subr.mxu0 0.0
      %346 = vmatpush1.msra.mxu0 0.0
      %347 = vmatprep.subr.mxu0 0.0
      %348 = vmatpush1.msra.mxu0 0.0
      %349 = vmatprep.subr.mxu0 0.0
      %350 = vmatpush1.msra.mxu0 0.0
      %351 = vmatprep.subr.mxu0 0.0
      %352 = vmatpush1.msra.mxu0 0.0
      %353 = vmatprep.subr.mxu0 0.0
      %354 = vmatpush1.msra.mxu0 0.0
      %355 = vmatprep.subr.mxu0 0.0
      %356 = vmatpush1.msra.mxu0 0.0
      %357 = vmatprep.subr.mxu0 0.0
      %358 = vmatpush1.msra.mxu0 0.0
      %359 = vmatprep.subr.mxu0 0.0
      %360 = vmatpush1.msra.mxu0 0.0
      %361 = vmatprep.subr.mxu0 0.0
      %362 = vmatpush1.msra.mxu0 %v329
      %363 = vmatprep.subr.mxu0 0.0
      %364 = vmatpush2.msra.mxu0 0.0
      %365 = vmatprep.subr.mxu0 0.0
      %366 = vmatpush2.msra.mxu0 0.0
      %367 = vmatprep.subr.mxu0 0.0
      %368 = vmatpush2.msra.mxu0 0.0
      %369 = vmatprep.subr.mxu0 0.0
      %370 = vmatpush2.msra.mxu0 0.0
      %371 = vmatprep.subr.mxu0 0.0
      %372 = vmatpush2.msra.mxu0 0.0
      %373 = vmatprep.subr.mxu0 0.0
      %374 = vmatpush2.msra.mxu0 0.0
      %375 = vmatprep.subr.mxu0 0.0
      %376 = vmatpush2.msra.mxu0 0.0
      %377 = vmatprep.subr.mxu0 0.0
      %378 = vmatpush2.msra.mxu0 0.0
      %379 = vmatprep.subr.mxu0 0.0
      %380 = vmatpush2.msra.mxu0 0.0
      %381 = vmatprep.subr.mxu0 0.0
      %382 = vmatpush2.msra.mxu0 0.0
      %383 = vmatprep.subr.mxu0 0.0
      %384 = vmatpush2.msra.mxu0 0.0
      %385 = vmatprep.subr.mxu0 0.0
      %386 = vmatpush2.msra.mxu0 0.0
      %387 = vmatprep.subr.mxu0 0.0
      %388 = vmatpush2.msra.mxu0 0.0
      %389 = vmatprep.subr.mxu0 0.0
      %390 = vmatpush2.msra.mxu0 0.0
      %391 = vmatprep.subr.mxu0 0.0
      %392 = vmatpush2.msra.mxu0 0.0
      %393 = vmatprep.subr.mxu0 0.0
      %394 = vmatpush2.msra.mxu0 0.0
      %395 = vmatprep.mubr.f32.mxu0 0.0
      %396 = vmatmul.mubr.f32.gmra.mxu0 %v316
      %v397 = vpop.f32.mrf.mxu0
      %v398 = vadd.f32 %v313, %v397
      %v399 = vpop.f32.mrf.mxu0
      %400 = vmatprep.mubr.f32.mxu0 0.0
      %401 = vmatmul.mubr.f32.gmra.mxu0 %v319
      %v402 = vpop.f32.mrf.mxu0
      %v403 = vadd.f32 %v313, %v402
      %v404 = vpop.f32.mrf.mxu0
      %405 = vmatprep.mubr.f32.mxu0 0.0
      %406 = vmatmul.mubr.f32.gmra.mxu0 %v322
      %v407 = vpop.f32.mrf.mxu0
      %v408 = vadd.f32 %v313, %v407
      %v409 = vpop.f32.mrf.mxu0
      %410 = vmatprep.mubr.f32.mxu0 0.0
      %411 = vmatmul.mubr.f32.gmra.mxu0 %v325
      %v412 = vpop.f32.mrf.mxu0
      %v413 = vadd.f32 %v313, %v412
      %v414 = vpop.f32.mrf.mxu0
      %415 = vdwg.mxu0
      %v416 = vld [vmem:[%s7 + $0x1] sm:$0x1]
      %v417 = vld [vmem:[%s7 + $0x2] sm:$0x1]
      %v418 = vld [vmem:[%s7 + $0x3] sm:$0x1]
      %v419 = vld [vmem:[%s7 + $0x4] sm:$0x1]
      %v420 = vld [vmem:[%s7 + $0x5] sm:$0x1]
      %v421 = vld [vmem:[%s7 + $0x6] sm:$0x1]
      %v422 = vld [vmem:[%s7 + $0x7] sm:$0x1]
      %v423 = vld [vmem:[%s2] sm:$0xff]
      %v424 = vld [vmem:[%s2 + $0x8] sm:$0xff]
      %v425 = vld [vmem:[%s2 + $0x10] sm:$0xff]
      %v426 = vld [vmem:[%s2 + $0x18] sm:$0xff]
      %s427 = scalar_lea.vmem %s2, 128
      %v428 = vld [vmem:[%s427] sm:$0xff]
      %v429 = vld [vmem:[%s427 + $0x8] sm:$0xff]
      %v430 = vld [vmem:[%s427 + $0x10] sm:$0xff]
      %v431 = vld [vmem:[%s427 + $0x18] sm:$0xff]
      %s432 = scalar_lea.vmem %s2, 256
      %v433 = vld [vmem:[%s432] sm:$0xff]
      %v434 = vld [vmem:[%s432 + $0x8] sm:$0xff]
      %v435 = vld [vmem:[%s432 + $0x10] sm:$0xff]
      %v436 = vld [vmem:[%s432 + $0x18] sm:$0xff]
      %v437 = vld [vmem:[%s3] sm:$0x1]
      %v439 = vlaneseq
      %v440 = vshrl.u32 %v439, 7
      %v441 = vsub.s32 0, %v440
      %v442 = vrot.slane %v437, %v441
      %vm444 = vcmask 261120
      %v446 = vsel %vm444, %v398, 0
      %v449 = vsel %vm444, %v403, 0
      %v452 = vsel %vm444, %v408, 0
      %v455 = vsel %vm444, %v413, 0
      %457 = vmatprep.subr.mxu0 0.0
      %458 = vmatpush1.msra.mxu0 0.0
      %459 = vmatprep.subr.mxu0 0.0
      %460 = vmatpush1.msra.mxu0 0.0
      %461 = vmatprep.subr.mxu0 0.0
      %462 = vmatpush1.msra.mxu0 0.0
      %463 = vmatprep.subr.mxu0 0.0
      %464 = vmatpush1.msra.mxu0 0.0
      %465 = vmatprep.subr.mxu0 0.0
      %466 = vmatpush1.msra.mxu0 0.0
      %467 = vmatprep.subr.mxu0 0.0
      %468 = vmatpush1.msra.mxu0 0.0
      %469 = vmatprep.subr.mxu0 0.0
      %470 = vmatpush1.msra.mxu0 0.0
      %471 = vmatprep.subr.mxu0 0.0
      %472 = vmatpush1.msra.mxu0 0.0
      %473 = vmatprep.subr.mxu0 0.0
      %474 = vmatpush1.msra.mxu0 0.0
      %475 = vmatprep.subr.mxu0 0.0
      %476 = vmatpush1.msra.mxu0 0.0
      %477 = vmatprep.subr.mxu0 0.0
      %478 = vmatpush1.msra.mxu0 0.0
      %479 = vmatprep.subr.mxu0 0.0
      %480 = vmatpush1.msra.mxu0 0.0
      %481 = vmatprep.subr.mxu0 0.0
      %482 = vmatpush1.msra.mxu0 %v426
      %483 = vmatprep.subr.mxu0 0.0
      %484 = vmatpush1.msra.mxu0 %v425
      %485 = vmatprep.subr.mxu0 0.0
      %486 = vmatpush1.msra.mxu0 %v424
      %487 = vmatprep.subr.mxu0 0.0
      %488 = vmatpush1.msra.mxu0 %v423
      %489 = vmatprep.subr.mxu0 0.0
      %490 = vmatpush2.msra.mxu0 0.0
      %491 = vmatprep.subr.mxu0 0.0
      %492 = vmatpush2.msra.mxu0 0.0
      %493 = vmatprep.subr.mxu0 0.0
      %494 = vmatpush2.msra.mxu0 0.0
      %495 = vmatprep.subr.mxu0 0.0
      %496 = vmatpush2.msra.mxu0 0.0
      %497 = vmatprep.subr.mxu0 0.0
      %498 = vmatpush2.msra.mxu0 0.0
      %499 = vmatprep.subr.mxu0 0.0
      %500 = vmatpush2.msra.mxu0 0.0
      %501 = vmatprep.subr.mxu0 0.0
      %502 = vmatpush2.msra.mxu0 0.0
      %503 = vmatprep.subr.mxu0 0.0
      %504 = vmatpush2.msra.mxu0 0.0
      %505 = vmatprep.subr.mxu0 0.0
      %506 = vmatpush2.msra.mxu0 0.0
      %507 = vmatprep.subr.mxu0 0.0
      %508 = vmatpush2.msra.mxu0 0.0
      %509 = vmatprep.subr.mxu0 0.0
      %510 = vmatpush2.msra.mxu0 0.0
      %511 = vmatprep.subr.mxu0 0.0
      %512 = vmatpush2.msra.mxu0 0.0
      %513 = vmatprep.subr.mxu0 0.0
      %514 = vmatpush2.msra.mxu0 0.0
      %515 = vmatprep.subr.mxu0 0.0
      %516 = vmatpush2.msra.mxu0 0.0
      %517 = vmatprep.subr.mxu0 0.0
      %518 = vmatpush2.msra.mxu0 0.0
      %519 = vmatprep.subr.mxu0 0.0
      %520 = vmatpush2.msra.mxu0 0.0
      %521 = vmatprep.mubr.f32.mxu0 0.0
      %522 = vmatmul.mubr.f32.gmra.mxu0 %v446
      %v523 = vpop.f32.mrf.mxu0
      %v524 = vadd.f32 %v442, %v523
      %v525 = vpop.f32.mrf.mxu0
      %526 = vmatprep.mubr.f32.mxu0 0.0
      %527 = vmatmul.mubr.f32.gmra.mxu0 %v449
      %v528 = vpop.f32.mrf.mxu0
      %v529 = vadd.f32 %v442, %v528
      %v530 = vpop.f32.mrf.mxu0
      %531 = vmatprep.mubr.f32.mxu0 0.0
      %532 = vmatmul.mubr.f32.gmra.mxu0 %v452
      %v533 = vpop.f32.mrf.mxu0
      %v534 = vadd.f32 %v442, %v533
      %v535 = vpop.f32.mrf.mxu0
      %536 = vmatprep.mubr.f32.mxu0 0.0
      %537 = vmatmul.mubr.f32.gmra.mxu0 %v455
      %v538 = vpop.f32.mrf.mxu0
      %v539 = vadd.f32 %v442, %v538
      %v540 = vpop.f32.mrf.mxu0
      %541 = vdwg.mxu0
      %v542 = vmul.f32 %v524, 0.35355338
      %v543 = vmul.f32 %v529, 0.35355338
      %v544 = vmul.f32 %v534, 0.35355338
      %v545 = vmul.f32 %v539, 0.35355338
      %546 = vmatprep.subr.mxu0 0.0
      %547 = vmatpush1.msra.mxu0 0.0
      %548 = vmatprep.subr.mxu0 0.0
      %549 = vmatpush1.msra.mxu0 0.0
      %550 = vmatprep.subr.mxu0 0.0
      %551 = vmatpush1.msra.mxu0 0.0
      %552 = vmatprep.subr.mxu0 0.0
      %553 = vmatpush1.msra.mxu0 0.0
      %554 = vmatprep.subr.mxu0 0.0
      %555 = vmatpush1.msra.mxu0 0.0
      %556 = vmatprep.subr.mxu0 0.0
      %557 = vmatpush1.msra.mxu0 0.0
      %558 = vmatprep.subr.mxu0 0.0
      %559 = vmatpush1.msra.mxu0 0.0
      %560 = vmatprep.subr.mxu0 0.0
      %561 = vmatpush1.msra.mxu0 0.0
      %562 = vmatprep.subr.mxu0 0.0
      %563 = vmatpush1.msra.mxu0 0.0
      %564 = vmatprep.subr.mxu0 0.0
      %565 = vmatpush1.msra.mxu0 0.0
      %566 = vmatprep.subr.mxu0 0.0
      %567 = vmatpush1.msra.mxu0 0.0
      %568 = vmatprep.subr.mxu0 0.0
      %569 = vmatpush1.msra.mxu0 0.0
      %570 = vmatprep.subr.mxu0 0.0
      %571 = vmatpush1.msra.mxu0 %v431
      %572 = vmatprep.subr.mxu0 0.0
      %573 = vmatpush1.msra.mxu0 %v430
      %574 = vmatprep.subr.mxu0 0.0
      %575 = vmatpush1.msra.mxu0 %v429
      %576 = vmatprep.subr.mxu0 0.0
      %577 = vmatpush1.msra.mxu0 %v428
      %578 = vmatprep.subr.mxu0 0.0
      %579 = vmatpush2.msra.mxu0 0.0
      %580 = vmatprep.subr.mxu0 0.0
      %581 = vmatpush2.msra.mxu0 0.0
      %582 = vmatprep.subr.mxu0 0.0
      %583 = vmatpush2.msra.mxu0 0.0
      %584 = vmatprep.subr.mxu0 0.0
      %585 = vmatpush2.msra.mxu0 0.0
      %586 = vmatprep.subr.mxu0 0.0
      %587 = vmatpush2.msra.mxu0 0.0
      %588 = vmatprep.subr.mxu0 0.0
      %589 = vmatpush2.msra.mxu0 0.0
      %590 = vmatprep.subr.mxu0 0.0
      %591 = vmatpush2.msra.mxu0 0.0
      %592 = vmatprep.subr.mxu0 0.0
      %593 = vmatpush2.msra.mxu0 0.0
      %594 = vmatprep.subr.mxu0 0.0
      %595 = vmatpush2.msra.mxu0 0.0
      %596 = vmatprep.subr.mxu0 0.0
      %597 = vmatpush2.msra.mxu0 0.0
      %598 = vmatprep.subr.mxu0 0.0
      %599 = vmatpush2.msra.mxu0 0.0
      %600 = vmatprep.subr.mxu0 0.0
      %601 = vmatpush2.msra.mxu0 0.0
      %602 = vmatprep.subr.mxu0 0.0
      %603 = vmatpush2.msra.mxu0 0.0
      %604 = vmatprep.subr.mxu0 0.0
      %605 = vmatpush2.msra.mxu0 0.0
      %606 = vmatprep.subr.mxu0 0.0
      %607 = vmatpush2.msra.mxu0 0.0
      %608 = vmatprep.subr.mxu0 0.0
      %609 = vmatpush2.msra.mxu0 0.0
      %610 = vmatprep.mubr.f32.mxu0 0.0
      %611 = vmatmul.mubr.f32.gmra.mxu0 %v446
      %v612 = vpop.f32.mrf.mxu0
      %v613 = vadd.f32 0.0, %v612
      %v614 = vpop.f32.mrf.mxu0
      %615 = vmatprep.mubr.f32.mxu0 0.0
      %616 = vmatmul.mubr.f32.gmra.mxu0 %v449
      %v617 = vpop.f32.mrf.mxu0
      %v618 = vadd.f32 0.0, %v617
      %v619 = vpop.f32.mrf.mxu0
      %620 = vmatprep.mubr.f32.mxu0 0.0
      %621 = vmatmul.mubr.f32.gmra.mxu0 %v452
      %v622 = vpop.f32.mrf.mxu0
      %v623 = vadd.f32 0.0, %v622
      %v624 = vpop.f32.mrf.mxu0
      %625 = vmatprep.mubr.f32.mxu0 0.0
      %626 = vmatmul.mubr.f32.gmra.mxu0 %v455
      %v627 = vpop.f32.mrf.mxu0
      %v628 = vadd.f32 0.0, %v627
      %v629 = vpop.f32.mrf.mxu0
      %630 = vdwg.mxu0
      %631 = vmatprep.subr.mxu0 0.0
      %632 = vmatpush1.msra.mxu0 0.0
      %633 = vmatprep.subr.mxu0 0.0
      %634 = vmatpush1.msra.mxu0 0.0
      %635 = vmatprep.subr.mxu0 0.0
      %636 = vmatpush1.msra.mxu0 0.0
      %637 = vmatprep.subr.mxu0 0.0
      %638 = vmatpush1.msra.mxu0 0.0
      %639 = vmatprep.subr.mxu0 0.0
      %640 = vmatpush1.msra.mxu0 0.0
      %641 = vmatprep.subr.mxu0 0.0
      %642 = vmatpush1.msra.mxu0 0.0
      %643 = vmatprep.subr.mxu0 0.0
      %644 = vmatpush1.msra.mxu0 0.0
      %645 = vmatprep.subr.mxu0 0.0
      %646 = vmatpush1.msra.mxu0 0.0
      %647 = vmatprep.subr.mxu0 0.0
      %648 = vmatpush1.msra.mxu0 0.0
      %649 = vmatprep.subr.mxu0 0.0
      %650 = vmatpush1.msra.mxu0 0.0
      %651 = vmatprep.subr.mxu0 0.0
      %652 = vmatpush1.msra.mxu0 0.0
      %653 = vmatprep.subr.mxu0 0.0
      %654 = vmatpush1.msra.mxu0 0.0
      %655 = vmatprep.subr.mxu0 0.0
      %656 = vmatpush1.msra.mxu0 %v436
      %657 = vmatprep.subr.mxu0 0.0
      %658 = vmatpush1.msra.mxu0 %v435
      %659 = vmatprep.subr.mxu0 0.0
      %660 = vmatpush1.msra.mxu0 %v434
      %661 = vmatprep.subr.mxu0 0.0
      %662 = vmatpush1.msra.mxu0 %v433
      %663 = vmatprep.subr.mxu0 0.0
      %664 = vmatpush2.msra.mxu0 0.0
      %665 = vmatprep.subr.mxu0 0.0
      %666 = vmatpush2.msra.mxu0 0.0
      %667 = vmatprep.subr.mxu0 0.0
      %668 = vmatpush2.msra.mxu0 0.0
      %669 = vmatprep.subr.mxu0 0.0
      %670 = vmatpush2.msra.mxu0 0.0
      %671 = vmatprep.subr.mxu0 0.0
      %672 = vmatpush2.msra.mxu0 0.0
      %673 = vmatprep.subr.mxu0 0.0
      %674 = vmatpush2.msra.mxu0 0.0
      %675 = vmatprep.subr.mxu0 0.0
      %676 = vmatpush2.msra.mxu0 0.0
      %677 = vmatprep.subr.mxu0 0.0
      %678 = vmatpush2.msra.mxu0 0.0
      %679 = vmatprep.subr.mxu0 0.0
      %680 = vmatpush2.msra.mxu0 0.0
      %681 = vmatprep.subr.mxu0 0.0
      %682 = vmatpush2.msra.mxu0 0.0
      %683 = vmatprep.subr.mxu0 0.0
      %684 = vmatpush2.msra.mxu0 0.0
      %685 = vmatprep.subr.mxu0 0.0
      %686 = vmatpush2.msra.mxu0 0.0
      %687 = vmatprep.subr.mxu0 0.0
      %688 = vmatpush2.msra.mxu0 0.0
      %689 = vmatprep.subr.mxu0 0.0
      %690 = vmatpush2.msra.mxu0 0.0
      %691 = vmatprep.subr.mxu0 0.0
      %692 = vmatpush2.msra.mxu0 0.0
      %693 = vmatprep.subr.mxu0 0.0
      %694 = vmatpush2.msra.mxu0 0.0
      %695 = vmatprep.mubr.f32.mxu0 0.0
      %696 = vmatmul.mubr.f32.gmra.mxu0 %v446
      %v697 = vpop.f32.mrf.mxu0
      %v698 = vadd.f32 0.0, %v697
      %v699 = vpop.f32.mrf.mxu0
      %700 = vmatprep.mubr.f32.mxu0 0.0
      %701 = vmatmul.mubr.f32.gmra.mxu0 %v449
      %v702 = vpop.f32.mrf.mxu0
      %v703 = vadd.f32 0.0, %v702
      %v704 = vpop.f32.mrf.mxu0
      %705 = vmatprep.mubr.f32.mxu0 0.0
      %706 = vmatmul.mubr.f32.gmra.mxu0 %v452
      %v707 = vpop.f32.mrf.mxu0
      %v708 = vadd.f32 0.0, %v707
      %v709 = vpop.f32.mrf.mxu0
      %710 = vmatprep.mubr.f32.mxu0 0.0
      %711 = vmatmul.mubr.f32.gmra.mxu0 %v455
      %v712 = vpop.f32.mrf.mxu0
      %v713 = vadd.f32 0.0, %v712
      %v714 = vpop.f32.mrf.mxu0
      %715 = vdwg.mxu0
      %vm716 = vcmask 64512
      %v718 = vsel %vm716, %v542, 0
      %v721 = vsel %vm716, %v613, 0
      %723 = vmatprep.subr.mxu0 0.0
      %724 = vmatpush1.xpose.msra.mxu0 0.0
      %725 = vmatprep.subr.mxu0 0.0
      %726 = vmatpush1.xpose.msra.mxu0 0.0
      %727 = vmatprep.subr.mxu0 0.0
      %728 = vmatpush1.xpose.msra.mxu0 0.0
      %729 = vmatprep.subr.mxu0 0.0
      %730 = vmatpush1.xpose.msra.mxu0 0.0
      %731 = vmatprep.subr.mxu0 0.0
      %732 = vmatpush1.xpose.msra.mxu0 0.0
      %733 = vmatprep.subr.mxu0 0.0
      %734 = vmatpush1.xpose.msra.mxu0 0.0
      %735 = vmatprep.subr.mxu0 0.0
      %736 = vmatpush1.xpose.msra.mxu0 0.0
      %737 = vmatprep.subr.mxu0 0.0
      %738 = vmatpush1.xpose.msra.mxu0 0.0
      %739 = vmatprep.subr.mxu0 0.0
      %740 = vmatpush1.xpose.msra.mxu0 0.0
      %741 = vmatprep.subr.mxu0 0.0
      %742 = vmatpush1.xpose.msra.mxu0 0.0
      %743 = vmatprep.subr.mxu0 0.0
      %744 = vmatpush1.xpose.msra.mxu0 0.0
      %745 = vmatprep.subr.mxu0 0.0
      %746 = vmatpush1.xpose.msra.mxu0 0.0
      %747 = vmatprep.subr.mxu0 0.0
      %748 = vmatpush1.xpose.msra.mxu0 0.0
      %749 = vmatprep.subr.mxu0 0.0
      %750 = vmatpush1.xpose.msra.mxu0 0.0
      %751 = vmatprep.subr.mxu0 0.0
      %752 = vmatpush1.xpose.msra.mxu0 0.0
      %753 = vmatprep.subr.mxu0 0.0
      %754 = vmatpush1.xpose.msra.mxu0 %v721
      %755 = vmatprep.subr.mxu0 0.0
      %756 = vmatpush2.xpose.msra.mxu0 0.0
      %757 = vmatprep.subr.mxu0 0.0
      %758 = vmatpush2.xpose.msra.mxu0 0.0
      %759 = vmatprep.subr.mxu0 0.0
      %760 = vmatpush2.xpose.msra.mxu0 0.0
      %761 = vmatprep.subr.mxu0 0.0
      %762 = vmatpush2.xpose.msra.mxu0 0.0
      %763 = vmatprep.subr.mxu0 0.0
      %764 = vmatpush2.xpose.msra.mxu0 0.0
      %765 = vmatprep.subr.mxu0 0.0
      %766 = vmatpush2.xpose.msra.mxu0 0.0
      %767 = vmatprep.subr.mxu0 0.0
      %768 = vmatpush2.xpose.msra.mxu0 0.0
      %769 = vmatprep.subr.mxu0 0.0
      %770 = vmatpush2.xpose.msra.mxu0 0.0
      %771 = vmatprep.subr.mxu0 0.0
      %772 = vmatpush2.xpose.msra.mxu0 0.0
      %773 = vmatprep.subr.mxu0 0.0
      %774 = vmatpush2.xpose.msra.mxu0 0.0
      %775 = vmatprep.subr.mxu0 0.0
      %776 = vmatpush2.xpose.msra.mxu0 0.0
      %777 = vmatprep.subr.mxu0 0.0
      %778 = vmatpush2.xpose.msra.mxu0 0.0
      %779 = vmatprep.subr.mxu0 0.0
      %780 = vmatpush2.xpose.msra.mxu0 0.0
      %781 = vmatprep.subr.mxu0 0.0
      %782 = vmatpush2.xpose.msra.mxu0 0.0
      %783 = vmatprep.subr.mxu0 0.0
      %784 = vmatpush2.xpose.msra.mxu0 0.0
      %785 = vmatprep.subr.mxu0 0.0
      %786 = vmatpush2.xpose.msra.mxu0 0.0
      %787 = vmatprep.mubr.f32.mxu0 0.0
      %788 = vmatmul.mubr.f32.gmra.mxu0 %v718
      %v789 = vpop.f32.mrf.mxu0
      %v790 = vadd.f32 0.0, %v789
      %v791 = vpop.f32.mrf.mxu0
      %792 = vdwg.mxu0
      %v794 = vsel %vm716, %v543, 0
      %v797 = vsel %vm716, %v618, 0
      %799 = vmatprep.subr.mxu0 0.0
      %800 = vmatpush1.xpose.msra.mxu0 0.0
      %801 = vmatprep.subr.mxu0 0.0
      %802 = vmatpush1.xpose.msra.mxu0 0.0
      %803 = vmatprep.subr.mxu0 0.0
      %804 = vmatpush1.xpose.msra.mxu0 0.0
      %805 = vmatprep.subr.mxu0 0.0
      %806 = vmatpush1.xpose.msra.mxu0 0.0
      %807 = vmatprep.subr.mxu0 0.0
      %808 = vmatpush1.xpose.msra.mxu0 0.0
      %809 = vmatprep.subr.mxu0 0.0
      %810 = vmatpush1.xpose.msra.mxu0 0.0
      %811 = vmatprep.subr.mxu0 0.0
      %812 = vmatpush1.xpose.msra.mxu0 0.0
      %813 = vmatprep.subr.mxu0 0.0
      %814 = vmatpush1.xpose.msra.mxu0 0.0
      %815 = vmatprep.subr.mxu0 0.0
      %816 = vmatpush1.xpose.msra.mxu0 0.0
      %817 = vmatprep.subr.mxu0 0.0
      %818 = vmatpush1.xpose.msra.mxu0 0.0
      %819 = vmatprep.subr.mxu0 0.0
      %820 = vmatpush1.xpose.msra.mxu0 0.0
      %821 = vmatprep.subr.mxu0 0.0
      %822 = vmatpush1.xpose.msra.mxu0 0.0
      %823 = vmatprep.subr.mxu0 0.0
      %824 = vmatpush1.xpose.msra.mxu0 0.0
      %825 = vmatprep.subr.mxu0 0.0
      %826 = vmatpush1.xpose.msra.mxu0 0.0
      %827 = vmatprep.subr.mxu0 0.0
      %828 = vmatpush1.xpose.msra.mxu0 0.0
      %829 = vmatprep.subr.mxu0 0.0
      %830 = vmatpush1.xpose.msra.mxu0 %v797
      %831 = vmatprep.subr.mxu0 0.0
      %832 = vmatpush2.xpose.msra.mxu0 0.0
      %833 = vmatprep.subr.mxu0 0.0
      %834 = vmatpush2.xpose.msra.mxu0 0.0
      %835 = vmatprep.subr.mxu0 0.0
      %836 = vmatpush2.xpose.msra.mxu0 0.0
      %837 = vmatprep.subr.mxu0 0.0
      %838 = vmatpush2.xpose.msra.mxu0 0.0
      %839 = vmatprep.subr.mxu0 0.0
      %840 = vmatpush2.xpose.msra.mxu0 0.0
      %841 = vmatprep.subr.mxu0 0.0
      %842 = vmatpush2.xpose.msra.mxu0 0.0
      %843 = vmatprep.subr.mxu0 0.0
      %844 = vmatpush2.xpose.msra.mxu0 0.0
      %845 = vmatprep.subr.mxu0 0.0
      %846 = vmatpush2.xpose.msra.mxu0 0.0
      %847 = vmatprep.subr.mxu0 0.0
      %848 = vmatpush2.xpose.msra.mxu0 0.0
      %849 = vmatprep.subr.mxu0 0.0
      %850 = vmatpush2.xpose.msra.mxu0 0.0
      %851 = vmatprep.subr.mxu0 0.0
      %852 = vmatpush2.xpose.msra.mxu0 0.0
      %853 = vmatprep.subr.mxu0 0.0
      %854 = vmatpush2.xpose.msra.mxu0 0.0
      %855 = vmatprep.subr.mxu0 0.0
      %856 = vmatpush2.xpose.msra.mxu0 0.0
      %857 = vmatprep.subr.mxu0 0.0
      %858 = vmatpush2.xpose.msra.mxu0 0.0
      %859 = vmatprep.subr.mxu0 0.0
      %860 = vmatpush2.xpose.msra.mxu0 0.0
      %861 = vmatprep.subr.mxu0 0.0
      %862 = vmatpush2.xpose.msra.mxu0 0.0
      %863 = vmatprep.mubr.f32.mxu0 0.0
      %864 = vmatmul.mubr.f32.gmra.mxu0 %v794
      %v865 = vpop.f32.mrf.mxu0
      %v866 = vadd.f32 0.0, %v865
      %v867 = vpop.f32.mrf.mxu0
      %868 = vdwg.mxu0
      %v870 = vsel %vm716, %v544, 0
      %v873 = vsel %vm716, %v623, 0
      %875 = vmatprep.subr.mxu0 0.0
      %876 = vmatpush1.xpose.msra.mxu0 0.0
      %877 = vmatprep.subr.mxu0 0.0
      %878 = vmatpush1.xpose.msra.mxu0 0.0
      %879 = vmatprep.subr.mxu0 0.0
      %880 = vmatpush1.xpose.msra.mxu0 0.0
      %881 = vmatprep.subr.mxu0 0.0
      %882 = vmatpush1.xpose.msra.mxu0 0.0
      %883 = vmatprep.subr.mxu0 0.0
      %884 = vmatpush1.xpose.msra.mxu0 0.0
      %885 = vmatprep.subr.mxu0 0.0
      %886 = vmatpush1.xpose.msra.mxu0 0.0
      %887 = vmatprep.subr.mxu0 0.0
      %888 = vmatpush1.xpose.msra.mxu0 0.0
      %889 = vmatprep.subr.mxu0 0.0
      %890 = vmatpush1.xpose.msra.mxu0 0.0
      %891 = vmatprep.subr.mxu0 0.0
      %892 = vmatpush1.xpose.msra.mxu0 0.0
      %893 = vmatprep.subr.mxu0 0.0
      %894 = vmatpush1.xpose.msra.mxu0 0.0
      %895 = vmatprep.subr.mxu0 0.0
      %896 = vmatpush1.xpose.msra.mxu0 0.0
      %897 = vmatprep.subr.mxu0 0.0
      %898 = vmatpush1.xpose.msra.mxu0 0.0
      %899 = vmatprep.subr.mxu0 0.0
      %900 = vmatpush1.xpose.msra.mxu0 0.0
      %901 = vmatprep.subr.mxu0 0.0
      %902 = vmatpush1.xpose.msra.mxu0 0.0
      %903 = vmatprep.subr.mxu0 0.0
      %904 = vmatpush1.xpose.msra.mxu0 0.0
      %905 = vmatprep.subr.mxu0 0.0
      %906 = vmatpush1.xpose.msra.mxu0 %v873
      %907 = vmatprep.subr.mxu0 0.0
      %908 = vmatpush2.xpose.msra.mxu0 0.0
      %909 = vmatprep.subr.mxu0 0.0
      %910 = vmatpush2.xpose.msra.mxu0 0.0
      %911 = vmatprep.subr.mxu0 0.0
      %912 = vmatpush2.xpose.msra.mxu0 0.0
      %913 = vmatprep.subr.mxu0 0.0
      %914 = vmatpush2.xpose.msra.mxu0 0.0
      %915 = vmatprep.subr.mxu0 0.0
      %916 = vmatpush2.xpose.msra.mxu0 0.0
      %917 = vmatprep.subr.mxu0 0.0
      %918 = vmatpush2.xpose.msra.mxu0 0.0
      %919 = vmatprep.subr.mxu0 0.0
      %920 = vmatpush2.xpose.msra.mxu0 0.0
      %921 = vmatprep.subr.mxu0 0.0
      %922 = vmatpush2.xpose.msra.mxu0 0.0
      %923 = vmatprep.subr.mxu0 0.0
      %924 = vmatpush2.xpose.msra.mxu0 0.0
      %925 = vmatprep.subr.mxu0 0.0
      %926 = vmatpush2.xpose.msra.mxu0 0.0
      %927 = vmatprep.subr.mxu0 0.0
      %928 = vmatpush2.xpose.msra.mxu0 0.0
      %929 = vmatprep.subr.mxu0 0.0
      %930 = vmatpush2.xpose.msra.mxu0 0.0
      %931 = vmatprep.subr.mxu0 0.0
      %932 = vmatpush2.xpose.msra.mxu0 0.0
      %933 = vmatprep.subr.mxu0 0.0
      %934 = vmatpush2.xpose.msra.mxu0 0.0
      %935 = vmatprep.subr.mxu0 0.0
      %936 = vmatpush2.xpose.msra.mxu0 0.0
      %937 = vmatprep.subr.mxu0 0.0
      %938 = vmatpush2.xpose.msra.mxu0 0.0
      %939 = vmatprep.mubr.f32.mxu0 0.0
      %940 = vmatmul.mubr.f32.gmra.mxu0 %v870
      %v941 = vpop.f32.mrf.mxu0
      %v942 = vadd.f32 0.0, %v941
      %v943 = vpop.f32.mrf.mxu0
      %944 = vdwg.mxu0
      %v946 = vsel %vm716, %v545, 0
      %v949 = vsel %vm716, %v628, 0
      %951 = vmatprep.subr.mxu0 0.0
      %952 = vmatpush1.xpose.msra.mxu0 0.0
      %953 = vmatprep.subr.mxu0 0.0
      %954 = vmatpush1.xpose.msra.mxu0 0.0
      %955 = vmatprep.subr.mxu0 0.0
      %956 = vmatpush1.xpose.msra.mxu0 0.0
      %957 = vmatprep.subr.mxu0 0.0
      %958 = vmatpush1.xpose.msra.mxu0 0.0
      %959 = vmatprep.subr.mxu0 0.0
      %960 = vmatpush1.xpose.msra.mxu0 0.0
      %961 = vmatprep.subr.mxu0 0.0
      %962 = vmatpush1.xpose.msra.mxu0 0.0
      %963 = vmatprep.subr.mxu0 0.0
      %964 = vmatpush1.xpose.msra.mxu0 0.0
      %965 = vmatprep.subr.mxu0 0.0
      %966 = vmatpush1.xpose.msra.mxu0 0.0
      %967 = vmatprep.subr.mxu0 0.0
      %968 = vmatpush1.xpose.msra.mxu0 0.0
      %969 = vmatprep.subr.mxu0 0.0
      %970 = vmatpush1.xpose.msra.mxu0 0.0
      %971 = vmatprep.subr.mxu0 0.0
      %972 = vmatpush1.xpose.msra.mxu0 0.0
      %973 = vmatprep.subr.mxu0 0.0
      %974 = vmatpush1.xpose.msra.mxu0 0.0
      %975 = vmatprep.subr.mxu0 0.0
      %976 = vmatpush1.xpose.msra.mxu0 0.0
      %977 = vmatprep.subr.mxu0 0.0
      %978 = vmatpush1.xpose.msra.mxu0 0.0
      %979 = vmatprep.subr.mxu0 0.0
      %980 = vmatpush1.xpose.msra.mxu0 0.0
      %981 = vmatprep.subr.mxu0 0.0
      %982 = vmatpush1.xpose.msra.mxu0 %v949
      %983 = vmatprep.subr.mxu0 0.0
      %984 = vmatpush2.xpose.msra.mxu0 0.0
      %985 = vmatprep.subr.mxu0 0.0
      %986 = vmatpush2.xpose.msra.mxu0 0.0
      %987 = vmatprep.subr.mxu0 0.0
      %988 = vmatpush2.xpose.msra.mxu0 0.0
      %989 = vmatprep.subr.mxu0 0.0
      %990 = vmatpush2.xpose.msra.mxu0 0.0
      %991 = vmatprep.subr.mxu0 0.0
      %992 = vmatpush2.xpose.msra.mxu0 0.0
      %993 = vmatprep.subr.mxu0 0.0
      %994 = vmatpush2.xpose.msra.mxu0 0.0
      %995 = vmatprep.subr.mxu0 0.0
      %996 = vmatpush2.xpose.msra.mxu0 0.0
      %997 = vmatprep.subr.mxu0 0.0
      %998 = vmatpush2.xpose.msra.mxu0 0.0
      %999 = vmatprep.subr.mxu0 0.0
      %1000 = vmatpush2.xpose.msra.mxu0 0.0
      %1001 = vmatprep.subr.mxu0 0.0
      %1002 = vmatpush2.xpose.msra.mxu0 0.0
      %1003 = vmatprep.subr.mxu0 0.0
      %1004 = vmatpush2.xpose.msra.mxu0 0.0
      %1005 = vmatprep.subr.mxu0 0.0
      %1006 = vmatpush2.xpose.msra.mxu0 0.0
      %1007 = vmatprep.subr.mxu0 0.0
      %1008 = vmatpush2.xpose.msra.mxu0 0.0
      %1009 = vmatprep.subr.mxu0 0.0
      %1010 = vmatpush2.xpose.msra.mxu0 0.0
      %1011 = vmatprep.subr.mxu0 0.0
      %1012 = vmatpush2.xpose.msra.mxu0 0.0
      %1013 = vmatprep.subr.mxu0 0.0
      %1014 = vmatpush2.xpose.msra.mxu0 0.0
      %1015 = vmatprep.mubr.f32.mxu0 0.0
      %1016 = vmatmul.mubr.f32.gmra.mxu0 %v946
      %v1017 = vpop.f32.mrf.mxu0
      %v1018 = vadd.f32 0.0, %v1017
      %v1019 = vpop.f32.mrf.mxu0
      %1020 = vdwg.mxu0
      %v1021 = vsel %vm716, %v790, -inf
      %1022 = vmax.xlane.f32.xlu0 %v1021
      %v1023 = vpop.xlane.xlu0 %1022
      %v1024 = vsel %vm716, %v866, -inf
      %1025 = vmax.xlane.f32.xlu0 %v1024
      %v1026 = vpop.xlane.xlu0 %1025
      %v1027 = vsel %vm716, %v942, -inf
      %1028 = vmax.xlane.f32.xlu0 %v1027
      %v1029 = vpop.xlane.xlu0 %1028
      %v1030 = vsel %vm716, %v1018, -inf
      %1031 = vmax.xlane.f32.xlu0 %v1030
      %v1032 = vpop.xlane.xlu0 %1031
      %v1033 = vsub.f32 %v790, %v1023
      %v1034 = vsub.f32 %v866, %v1026
      %v1035 = vsub.f32 %v942, %v1029
      %v1036 = vsub.f32 %v1018, %v1032
      %v1037 = vmul.f32 %v1033, 1.442695
      %v1038 = vpow.pop %v1037
      %v1039 = vmul.f32 %v1034, 1.442695
      %v1040 = vpow.pop %v1039
      %v1041 = vmul.f32 %v1035, 1.442695
      %v1042 = vpow.pop %v1041
      %v1043 = vmul.f32 %v1036, 1.442695
      %v1044 = vpow.pop %v1043
      %v1045 = vsel %vm716, %v1038, 0.0
      %1046 = vadd.xlane.f32.xlu0 %v1045
      %v1047 = vpop.xlane.xlu0 %1046
      %v1048 = vsel %vm716, %v1040, 0.0
      %1049 = vadd.xlane.f32.xlu0 %v1048
      %v1050 = vpop.xlane.xlu0 %1049
      %v1051 = vsel %vm716, %v1042, 0.0
      %1052 = vadd.xlane.f32.xlu0 %v1051
      %v1053 = vpop.xlane.xlu0 %1052
      %v1054 = vsel %vm716, %v1044, 0.0
      %1055 = vadd.xlane.f32.xlu0 %v1054
      %v1056 = vpop.xlane.xlu0 %1055
      %v1057 = vrcp.pop %v1047
      %v1058 = vrcp.pop %v1050
      %v1059 = vrcp.pop %v1053
      %v1060 = vrcp.pop %v1056
      %v1061 = vmul.f32 %v1038, %v1057
      %v1062 = vmul.f32 %v1040, %v1058
      %v1063 = vmul.f32 %v1042, %v1059
      %v1064 = vmul.f32 %v1044, %v1060
      %v1066 = vsel %vm716, %v1061, 0
      %1068 = vmatprep.subr.mxu0 0.0
      %1069 = vmatpush1.msra.mxu0 0.0
      %1070 = vmatprep.subr.mxu0 0.0
      %1071 = vmatpush1.msra.mxu0 0.0
      %1072 = vmatprep.subr.mxu0 0.0
      %1073 = vmatpush1.msra.mxu0 0.0
      %1074 = vmatprep.subr.mxu0 0.0
      %1075 = vmatpush1.msra.mxu0 0.0
      %1076 = vmatprep.subr.mxu0 0.0
      %1077 = vmatpush1.msra.mxu0 0.0
      %1078 = vmatprep.subr.mxu0 0.0
      %1079 = vmatpush1.msra.mxu0 0.0
      %1080 = vmatprep.subr.mxu0 0.0
      %1081 = vmatpush1.msra.mxu0 0.0
      %1082 = vmatprep.subr.mxu0 0.0
      %1083 = vmatpush1.msra.mxu0 0.0
      %1084 = vmatprep.subr.mxu0 0.0
      %1085 = vmatpush1.msra.mxu0 0.0
      %1086 = vmatprep.subr.mxu0 0.0
      %1087 = vmatpush1.msra.mxu0 0.0
      %1088 = vmatprep.subr.mxu0 0.0
      %1089 = vmatpush1.msra.mxu0 0.0
      %1090 = vmatprep.subr.mxu0 0.0
      %1091 = vmatpush1.msra.mxu0 0.0
      %1092 = vmatprep.subr.mxu0 0.0
      %1093 = vmatpush1.msra.mxu0 0.0
      %1094 = vmatprep.subr.mxu0 0.0
      %1095 = vmatpush1.msra.mxu0 0.0
      %1096 = vmatprep.subr.mxu0 0.0
      %1097 = vmatpush1.msra.mxu0 0.0
      %1098 = vmatprep.subr.mxu0 0.0
      %1099 = vmatpush1.msra.mxu0 %v698
      %1100 = vmatprep.subr.mxu0 0.0
      %1101 = vmatpush2.msra.mxu0 0.0
      %1102 = vmatprep.subr.mxu0 0.0
      %1103 = vmatpush2.msra.mxu0 0.0
      %1104 = vmatprep.subr.mxu0 0.0
      %1105 = vmatpush2.msra.mxu0 0.0
      %1106 = vmatprep.subr.mxu0 0.0
      %1107 = vmatpush2.msra.mxu0 0.0
      %1108 = vmatprep.subr.mxu0 0.0
      %1109 = vmatpush2.msra.mxu0 0.0
      %1110 = vmatprep.subr.mxu0 0.0
      %1111 = vmatpush2.msra.mxu0 0.0
      %1112 = vmatprep.subr.mxu0 0.0
      %1113 = vmatpush2.msra.mxu0 0.0
      %1114 = vmatprep.subr.mxu0 0.0
      %1115 = vmatpush2.msra.mxu0 0.0
      %1116 = vmatprep.subr.mxu0 0.0
      %1117 = vmatpush2.msra.mxu0 0.0
      %1118 = vmatprep.subr.mxu0 0.0
      %1119 = vmatpush2.msra.mxu0 0.0
      %1120 = vmatprep.subr.mxu0 0.0
      %1121 = vmatpush2.msra.mxu0 0.0
      %1122 = vmatprep.subr.mxu0 0.0
      %1123 = vmatpush2.msra.mxu0 0.0
      %1124 = vmatprep.subr.mxu0 0.0
      %1125 = vmatpush2.msra.mxu0 0.0
      %1126 = vmatprep.subr.mxu0 0.0
      %1127 = vmatpush2.msra.mxu0 0.0
      %1128 = vmatprep.subr.mxu0 0.0
      %1129 = vmatpush2.msra.mxu0 0.0
      %1130 = vmatprep.subr.mxu0 0.0
      %1131 = vmatpush2.msra.mxu0 0.0
      %1132 = vmatprep.mubr.f32.mxu0 0.0
      %1133 = vmatmul.mubr.f32.gmra.mxu0 %v1066
      %v1134 = vpop.f32.mrf.mxu0
      %v1135 = vadd.f32 0.0, %v1134
      %v1136 = vpop.f32.mrf.mxu0
      %1137 = vdwg.mxu0
      %v1139 = vsel %vm716, %v1062, 0
      %1141 = vmatprep.subr.mxu0 0.0
      %1142 = vmatpush1.msra.mxu0 0.0
      %1143 = vmatprep.subr.mxu0 0.0
      %1144 = vmatpush1.msra.mxu0 0.0
      %1145 = vmatprep.subr.mxu0 0.0
      %1146 = vmatpush1.msra.mxu0 0.0
      %1147 = vmatprep.subr.mxu0 0.0
      %1148 = vmatpush1.msra.mxu0 0.0
      %1149 = vmatprep.subr.mxu0 0.0
      %1150 = vmatpush1.msra.mxu0 0.0
      %1151 = vmatprep.subr.mxu0 0.0
      %1152 = vmatpush1.msra.mxu0 0.0
      %1153 = vmatprep.subr.mxu0 0.0
      %1154 = vmatpush1.msra.mxu0 0.0
      %1155 = vmatprep.subr.mxu0 0.0
      %1156 = vmatpush1.msra.mxu0 0.0
      %1157 = vmatprep.subr.mxu0 0.0
      %1158 = vmatpush1.msra.mxu0 0.0
      %1159 = vmatprep.subr.mxu0 0.0
      %1160 = vmatpush1.msra.mxu0 0.0
      %1161 = vmatprep.subr.mxu0 0.0
      %1162 = vmatpush1.msra.mxu0 0.0
      %1163 = vmatprep.subr.mxu0 0.0
      %1164 = vmatpush1.msra.mxu0 0.0
      %1165 = vmatprep.subr.mxu0 0.0
      %1166 = vmatpush1.msra.mxu0 0.0
      %1167 = vmatprep.subr.mxu0 0.0
      %1168 = vmatpush1.msra.mxu0 0.0
      %1169 = vmatprep.subr.mxu0 0.0
      %1170 = vmatpush1.msra.mxu0 0.0
      %1171 = vmatprep.subr.mxu0 0.0
      %1172 = vmatpush1.msra.mxu0 %v703
      %1173 = vmatprep.subr.mxu0 0.0
      %1174 = vmatpush2.msra.mxu0 0.0
      %1175 = vmatprep.subr.mxu0 0.0
      %1176 = vmatpush2.msra.mxu0 0.0
      %1177 = vmatprep.subr.mxu0 0.0
      %1178 = vmatpush2.msra.mxu0 0.0
      %1179 = vmatprep.subr.mxu0 0.0
      %1180 = vmatpush2.msra.mxu0 0.0
      %1181 = vmatprep.subr.mxu0 0.0
      %1182 = vmatpush2.msra.mxu0 0.0
      %1183 = vmatprep.subr.mxu0 0.0
      %1184 = vmatpush2.msra.mxu0 0.0
      %1185 = vmatprep.subr.mxu0 0.0
      %1186 = vmatpush2.msra.mxu0 0.0
      %1187 = vmatprep.subr.mxu0 0.0
      %1188 = vmatpush2.msra.mxu0 0.0
      %1189 = vmatprep.subr.mxu0 0.0
      %1190 = vmatpush2.msra.mxu0 0.0
      %1191 = vmatprep.subr.mxu0 0.0
      %1192 = vmatpush2.msra.mxu0 0.0
      %1193 = vmatprep.subr.mxu0 0.0
      %1194 = vmatpush2.msra.mxu0 0.0
      %1195 = vmatprep.subr.mxu0 0.0
      %1196 = vmatpush2.msra.mxu0 0.0
      %1197 = vmatprep.subr.mxu0 0.0
      %1198 = vmatpush2.msra.mxu0 0.0
      %1199 = vmatprep.subr.mxu0 0.0
      %1200 = vmatpush2.msra.mxu0 0.0
      %1201 = vmatprep.subr.mxu0 0.0
      %1202 = vmatpush2.msra.mxu0 0.0
      %1203 = vmatprep.subr.mxu0 0.0
      %1204 = vmatpush2.msra.mxu0 0.0
      %1205 = vmatprep.mubr.f32.mxu0 0.0
      %1206 = vmatmul.mubr.f32.gmra.mxu0 %v1139
      %v1207 = vpop.f32.mrf.mxu0
      %v1208 = vadd.f32 0.0, %v1207
      %v1209 = vpop.f32.mrf.mxu0
      %1210 = vdwg.mxu0
      %v1212 = vsel %vm716, %v1063, 0
      %1214 = vmatprep.subr.mxu0 0.0
      %1215 = vmatpush1.msra.mxu0 0.0
      %1216 = vmatprep.subr.mxu0 0.0
      %1217 = vmatpush1.msra.mxu0 0.0
      %1218 = vmatprep.subr.mxu0 0.0
      %1219 = vmatpush1.msra.mxu0 0.0
      %1220 = vmatprep.subr.mxu0 0.0
      %1221 = vmatpush1.msra.mxu0 0.0
      %1222 = vmatprep.subr.mxu0 0.0
      %1223 = vmatpush1.msra.mxu0 0.0
      %1224 = vmatprep.subr.mxu0 0.0
      %1225 = vmatpush1.msra.mxu0 0.0
      %1226 = vmatprep.subr.mxu0 0.0
      %1227 = vmatpush1.msra.mxu0 0.0
      %1228 = vmatprep.subr.mxu0 0.0
      %1229 = vmatpush1.msra.mxu0 0.0
      %1230 = vmatprep.subr.mxu0 0.0
      %1231 = vmatpush1.msra.mxu0 0.0
      %1232 = vmatprep.subr.mxu0 0.0
      %1233 = vmatpush1.msra.mxu0 0.0
      %1234 = vmatprep.subr.mxu0 0.0
      %1235 = vmatpush1.msra.mxu0 0.0
      %1236 = vmatprep.subr.mxu0 0.0
      %1237 = vmatpush1.msra.mxu0 0.0
      %1238 = vmatprep.subr.mxu0 0.0
      %1239 = vmatpush1.msra.mxu0 0.0
      %1240 = vmatprep.subr.mxu0 0.0
      %1241 = vmatpush1.msra.mxu0 0.0
      %1242 = vmatprep.subr.mxu0 0.0
      %1243 = vmatpush1.msra.mxu0 0.0
      %1244 = vmatprep.subr.mxu0 0.0
      %1245 = vmatpush1.msra.mxu0 %v708
      %1246 = vmatprep.subr.mxu0 0.0
      %1247 = vmatpush2.msra.mxu0 0.0
      %1248 = vmatprep.subr.mxu0 0.0
      %1249 = vmatpush2.msra.mxu0 0.0
      %1250 = vmatprep.subr.mxu0 0.0
      %1251 = vmatpush2.msra.mxu0 0.0
      %1252 = vmatprep.subr.mxu0 0.0
      %1253 = vmatpush2.msra.mxu0 0.0
      %1254 = vmatprep.subr.mxu0 0.0
      %1255 = vmatpush2.msra.mxu0 0.0
      %1256 = vmatprep.subr.mxu0 0.0
      %1257 = vmatpush2.msra.mxu0 0.0
      %1258 = vmatprep.subr.mxu0 0.0
      %1259 = vmatpush2.msra.mxu0 0.0
      %1260 = vmatprep.subr.mxu0 0.0
      %1261 = vmatpush2.msra.mxu0 0.0
      %1262 = vmatprep.subr.mxu0 0.0
      %1263 = vmatpush2.msra.mxu0 0.0
      %1264 = vmatprep.subr.mxu0 0.0
      %1265 = vmatpush2.msra.mxu0 0.0
      %1266 = vmatprep.subr.mxu0 0.0
      %1267 = vmatpush2.msra.mxu0 0.0
      %1268 = vmatprep.subr.mxu0 0.0
      %1269 = vmatpush2.msra.mxu0 0.0
      %1270 = vmatprep.subr.mxu0 0.0
      %1271 = vmatpush2.msra.mxu0 0.0
      %1272 = vmatprep.subr.mxu0 0.0
      %1273 = vmatpush2.msra.mxu0 0.0
      %1274 = vmatprep.subr.mxu0 0.0
      %1275 = vmatpush2.msra.mxu0 0.0
      %1276 = vmatprep.subr.mxu0 0.0
      %1277 = vmatpush2.msra.mxu0 0.0
      %1278 = vmatprep.mubr.f32.mxu0 0.0
      %1279 = vmatmul.mubr.f32.gmra.mxu0 %v1212
      %v1280 = vpop.f32.mrf.mxu0
      %v1281 = vadd.f32 0.0, %v1280
      %v1282 = vpop.f32.mrf.mxu0
      %1283 = vdwg.mxu0
      %v1285 = vsel %vm716, %v1064, 0
      %1287 = vmatprep.subr.mxu0 0.0
      %1288 = vmatpush1.msra.mxu0 0.0
      %1289 = vmatprep.subr.mxu0 0.0
      %1290 = vmatpush1.msra.mxu0 0.0
      %1291 = vmatprep.subr.mxu0 0.0
      %1292 = vmatpush1.msra.mxu0 0.0
      %1293 = vmatprep.subr.mxu0 0.0
      %1294 = vmatpush1.msra.mxu0 0.0
      %1295 = vmatprep.subr.mxu0 0.0
      %1296 = vmatpush1.msra.mxu0 0.0
      %1297 = vmatprep.subr.mxu0 0.0
      %1298 = vmatpush1.msra.mxu0 0.0
      %1299 = vmatprep.subr.mxu0 0.0
      %1300 = vmatpush1.msra.mxu0 0.0
      %1301 = vmatprep.subr.mxu0 0.0
      %1302 = vmatpush1.msra.mxu0 0.0
      %1303 = vmatprep.subr.mxu0 0.0
      %1304 = vmatpush1.msra.mxu0 0.0
      %1305 = vmatprep.subr.mxu0 0.0
      %1306 = vmatpush1.msra.mxu0 0.0
      %1307 = vmatprep.subr.mxu0 0.0
      %1308 = vmatpush1.msra.mxu0 0.0
      %1309 = vmatprep.subr.mxu0 0.0
      %1310 = vmatpush1.msra.mxu0 0.0
      %1311 = vmatprep.subr.mxu0 0.0
      %1312 = vmatpush1.msra.mxu0 0.0
      %1313 = vmatprep.subr.mxu0 0.0
      %1314 = vmatpush1.msra.mxu0 0.0
      %1315 = vmatprep.subr.mxu0 0.0
      %1316 = vmatpush1.msra.mxu0 0.0
      %1317 = vmatprep.subr.mxu0 0.0
      %1318 = vmatpush1.msra.mxu0 %v713
      %1319 = vmatprep.subr.mxu0 0.0
      %1320 = vmatpush2.msra.mxu0 0.0
      %1321 = vmatprep.subr.mxu0 0.0
      %1322 = vmatpush2.msra.mxu0 0.0
      %1323 = vmatprep.subr.mxu0 0.0
      %1324 = vmatpush2.msra.mxu0 0.0
      %1325 = vmatprep.subr.mxu0 0.0
      %1326 = vmatpush2.msra.mxu0 0.0
      %1327 = vmatprep.subr.mxu0 0.0
      %1328 = vmatpush2.msra.mxu0 0.0
      %1329 = vmatprep.subr.mxu0 0.0
      %1330 = vmatpush2.msra.mxu0 0.0
      %1331 = vmatprep.subr.mxu0 0.0
      %1332 = vmatpush2.msra.mxu0 0.0
      %1333 = vmatprep.subr.mxu0 0.0
      %1334 = vmatpush2.msra.mxu0 0.0
      %1335 = vmatprep.subr.mxu0 0.0
      %1336 = vmatpush2.msra.mxu0 0.0
      %1337 = vmatprep.subr.mxu0 0.0
      %1338 = vmatpush2.msra.mxu0 0.0
      %1339 = vmatprep.subr.mxu0 0.0
      %1340 = vmatpush2.msra.mxu0 0.0
      %1341 = vmatprep.subr.mxu0 0.0
      %1342 = vmatpush2.msra.mxu0 0.0
      %1343 = vmatprep.subr.mxu0 0.0
      %1344 = vmatpush2.msra.mxu0 0.0
      %1345 = vmatprep.subr.mxu0 0.0
      %1346 = vmatpush2.msra.mxu0 0.0
      %1347 = vmatprep.subr.mxu0 0.0
      %1348 = vmatpush2.msra.mxu0 0.0
      %1349 = vmatprep.subr.mxu0 0.0
      %1350 = vmatpush2.msra.mxu0 0.0
      %1351 = vmatprep.mubr.f32.mxu0 0.0
      %1352 = vmatmul.mubr.f32.gmra.mxu0 %v1285
      %v1353 = vpop.f32.mrf.mxu0
      %v1354 = vadd.f32 0.0, %v1353
      %v1355 = vpop.f32.mrf.mxu0
      %1356 = vdwg.mxu0
      %v1357 = vld [vmem:[%s4] sm:$0xff]
      %s1358 = scalar_lea.vmem %s2, 32
      %v1359 = vld [vmem:[%s1358] sm:$0xff]
      %v1360 = vld [vmem:[%s1358 + $0x8] sm:$0xff]
      %v1361 = vld [vmem:[%s1358 + $0x10] sm:$0xff]
      %v1362 = vld [vmem:[%s1358 + $0x18] sm:$0xff]
      %s1363 = scalar_lea.vmem %s2, 160
      %v1364 = vld [vmem:[%s1363] sm:$0xff]
      %v1365 = vld [vmem:[%s1363 + $0x8] sm:$0xff]
      %v1366 = vld [vmem:[%s1363 + $0x10] sm:$0xff]
      %v1367 = vld [vmem:[%s1363 + $0x18] sm:$0xff]
      %s1368 = scalar_lea.vmem %s2, 288
      %v1369 = vld [vmem:[%s1368] sm:$0xff]
      %v1370 = vld [vmem:[%s1368 + $0x8] sm:$0xff]
      %v1371 = vld [vmem:[%s1368 + $0x10] sm:$0xff]
      %v1372 = vld [vmem:[%s1368 + $0x18] sm:$0xff]
      %s1373 = scalar_lea.vmem %s3, 1
      %v1374 = vld [vmem:[%s1373] sm:$0x1]
      %v1376 = vlaneseq
      %v1377 = vshrl.u32 %v1376, 7
      %v1378 = vsub.s32 0, %v1377
      %v1379 = vrot.slane %v1374, %v1378
      %1381 = vmatprep.subr.mxu0 0.0
      %1382 = vmatpush1.msra.mxu0 0.0
      %1383 = vmatprep.subr.mxu0 0.0
      %1384 = vmatpush1.msra.mxu0 0.0
      %1385 = vmatprep.subr.mxu0 0.0
      %1386 = vmatpush1.msra.mxu0 0.0
      %1387 = vmatprep.subr.mxu0 0.0
      %1388 = vmatpush1.msra.mxu0 0.0
      %1389 = vmatprep.subr.mxu0 0.0
      %1390 = vmatpush1.msra.mxu0 0.0
      %1391 = vmatprep.subr.mxu0 0.0
      %1392 = vmatpush1.msra.mxu0 0.0
      %1393 = vmatprep.subr.mxu0 0.0
      %1394 = vmatpush1.msra.mxu0 0.0
      %1395 = vmatprep.subr.mxu0 0.0
      %1396 = vmatpush1.msra.mxu0 0.0
      %1397 = vmatprep.subr.mxu0 0.0
      %1398 = vmatpush1.msra.mxu0 0.0
      %1399 = vmatprep.subr.mxu0 0.0
      %1400 = vmatpush1.msra.mxu0 0.0
      %1401 = vmatprep.subr.mxu0 0.0
      %1402 = vmatpush1.msra.mxu0 0.0
      %1403 = vmatprep.subr.mxu0 0.0
      %1404 = vmatpush1.msra.mxu0 0.0
      %1405 = vmatprep.subr.mxu0 0.0
      %1406 = vmatpush1.msra.mxu0 %v1362
      %1407 = vmatprep.subr.mxu0 0.0
      %1408 = vmatpush1.msra.mxu0 %v1361
      %1409 = vmatprep.subr.mxu0 0.0
      %1410 = vmatpush1.msra.mxu0 %v1360
      %1411 = vmatprep.subr.mxu0 0.0
      %1412 = vmatpush1.msra.mxu0 %v1359
      %1413 = vmatprep.subr.mxu0 0.0
      %1414 = vmatpush2.msra.mxu0 0.0
      %1415 = vmatprep.subr.mxu0 0.0
      %1416 = vmatpush2.msra.mxu0 0.0
      %1417 = vmatprep.subr.mxu0 0.0
      %1418 = vmatpush2.msra.mxu0 0.0
      %1419 = vmatprep.subr.mxu0 0.0
      %1420 = vmatpush2.msra.mxu0 0.0
      %1421 = vmatprep.subr.mxu0 0.0
      %1422 = vmatpush2.msra.mxu0 0.0
      %1423 = vmatprep.subr.mxu0 0.0
      %1424 = vmatpush2.msra.mxu0 0.0
      %1425 = vmatprep.subr.mxu0 0.0
      %1426 = vmatpush2.msra.mxu0 0.0
      %1427 = vmatprep.subr.mxu0 0.0
      %1428 = vmatpush2.msra.mxu0 0.0
      %1429 = vmatprep.subr.mxu0 0.0
      %1430 = vmatpush2.msra.mxu0 0.0
      %1431 = vmatprep.subr.mxu0 0.0
      %1432 = vmatpush2.msra.mxu0 0.0
      %1433 = vmatprep.subr.mxu0 0.0
      %1434 = vmatpush2.msra.mxu0 0.0
      %1435 = vmatprep.subr.mxu0 0.0
      %1436 = vmatpush2.msra.mxu0 0.0
      %1437 = vmatprep.subr.mxu0 0.0
      %1438 = vmatpush2.msra.mxu0 0.0
      %1439 = vmatprep.subr.mxu0 0.0
      %1440 = vmatpush2.msra.mxu0 0.0
      %1441 = vmatprep.subr.mxu0 0.0
      %1442 = vmatpush2.msra.mxu0 0.0
      %1443 = vmatprep.subr.mxu0 0.0
      %1444 = vmatpush2.msra.mxu0 0.0
      %1445 = vmatprep.mubr.f32.mxu0 0.0
      %1446 = vmatmul.mubr.f32.gmra.mxu0 %v446
      %v1447 = vpop.f32.mrf.mxu0
      %v1448 = vadd.f32 %v1379, %v1447
      %v1449 = vpop.f32.mrf.mxu0
      %1450 = vmatprep.mubr.f32.mxu0 0.0
      %1451 = vmatmul.mubr.f32.gmra.mxu0 %v449
      %v1452 = vpop.f32.mrf.mxu0
      %v1453 = vadd.f32 %v1379, %v1452
      %v1454 = vpop.f32.mrf.mxu0
      %1455 = vmatprep.mubr.f32.mxu0 0.0
      %1456 = vmatmul.mubr.f32.gmra.mxu0 %v452
      %v1457 = vpop.f32.mrf.mxu0
      %v1458 = vadd.f32 %v1379, %v1457
      %v1459 = vpop.f32.mrf.mxu0
      %1460 = vmatprep.mubr.f32.mxu0 0.0
      %1461 = vmatmul.mubr.f32.gmra.mxu0 %v455
      %v1462 = vpop.f32.mrf.mxu0
      %v1463 = vadd.f32 %v1379, %v1462
      %v1464 = vpop.f32.mrf.mxu0
      %1465 = vdwg.mxu0
      %v1466 = vmul.f32 %v1448, 0.35355338
      %v1467 = vmul.f32 %v1453, 0.35355338
      %v1468 = vmul.f32 %v1458, 0.35355338
      %v1469 = vmul.f32 %v1463, 0.35355338
      %1470 = vmatprep.subr.mxu0 0.0
      %1471 = vmatpush1.msra.mxu0 0.0
      %1472 = vmatprep.subr.mxu0 0.0
      %1473 = vmatpush1.msra.mxu0 0.0
      %1474 = vmatprep.subr.mxu0 0.0
      %1475 = vmatpush1.msra.mxu0 0.0
      %1476 = vmatprep.subr.mxu0 0.0
      %1477 = vmatpush1.msra.mxu0 0.0
      %1478 = vmatprep.subr.mxu0 0.0
      %1479 = vmatpush1.msra.mxu0 0.0
      %1480 = vmatprep.subr.mxu0 0.0
      %1481 = vmatpush1.msra.mxu0 0.0
      %1482 = vmatprep.subr.mxu0 0.0
      %1483 = vmatpush1.msra.mxu0 0.0
      %1484 = vmatprep.subr.mxu0 0.0
      %1485 = vmatpush1.msra.mxu0 0.0
      %1486 = vmatprep.subr.mxu0 0.0
      %1487 = vmatpush1.msra.mxu0 0.0
      %1488 = vmatprep.subr.mxu0 0.0
      %1489 = vmatpush1.msra.mxu0 0.0
      %1490 = vmatprep.subr.mxu0 0.0
      %1491 = vmatpush1.msra.mxu0 0.0
      %1492 = vmatprep.subr.mxu0 0.0
      %1493 = vmatpush1.msra.mxu0 0.0
      %1494 = vmatprep.subr.mxu0 0.0
      %1495 = vmatpush1.msra.mxu0 %v1367
      %1496 = vmatprep.subr.mxu0 0.0
      %1497 = vmatpush1.msra.mxu0 %v1366
      %1498 = vmatprep.subr.mxu0 0.0
      %1499 = vmatpush1.msra.mxu0 %v1365
      %1500 = vmatprep.subr.mxu0 0.0
      %1501 = vmatpush1.msra.mxu0 %v1364
      %1502 = vmatprep.subr.mxu0 0.0
      %1503 = vmatpush2.msra.mxu0 0.0
      %1504 = vmatprep.subr.mxu0 0.0
      %1505 = vmatpush2.msra.mxu0 0.0
      %1506 = vmatprep.subr.mxu0 0.0
      %1507 = vmatpush2.msra.mxu0 0.0
      %1508 = vmatprep.subr.mxu0 0.0
      %1509 = vmatpush2.msra.mxu0 0.0
      %1510 = vmatprep.subr.mxu0 0.0
      %1511 = vmatpush2.msra.mxu0 0.0
      %1512 = vmatprep.subr.mxu0 0.0
      %1513 = vmatpush2.msra.mxu0 0.0
      %1514 = vmatprep.subr.mxu0 0.0
      %1515 = vmatpush2.msra.mxu0 0.0
      %1516 = vmatprep.subr.mxu0 0.0
      %1517 = vmatpush2.msra.mxu0 0.0
      %1518 = vmatprep.subr.mxu0 0.0
      %1519 = vmatpush2.msra.mxu0 0.0
      %1520 = vmatprep.subr.mxu0 0.0
      %1521 = vmatpush2.msra.mxu0 0.0
      %1522 = vmatprep.subr.mxu0 0.0
      %1523 = vmatpush2.msra.mxu0 0.0
      %1524 = vmatprep.subr.mxu0 0.0
      %1525 = vmatpush2.msra.mxu0 0.0
      %1526 = vmatprep.subr.mxu0 0.0
      %1527 = vmatpush2.msra.mxu0 0.0
      %1528 = vmatprep.subr.mxu0 0.0
      %1529 = vmatpush2.msra.mxu0 0.0
      %1530 = vmatprep.subr.mxu0 0.0
      %1531 = vmatpush2.msra.mxu0 0.0
      %1532 = vmatprep.subr.mxu0 0.0
      %1533 = vmatpush2.msra.mxu0 0.0
      %1534 = vmatprep.mubr.f32.mxu0 0.0
      %1535 = vmatmul.mubr.f32.gmra.mxu0 %v446
      %v1536 = vpop.f32.mrf.mxu0
      %v1537 = vadd.f32 0.0, %v1536
      %v1538 = vpop.f32.mrf.mxu0
      %1539 = vmatprep.mubr.f32.mxu0 0.0
      %1540 = vmatmul.mubr.f32.gmra.mxu0 %v449
      %v1541 = vpop.f32.mrf.mxu0
      %v1542 = vadd.f32 0.0, %v1541
      %v1543 = vpop.f32.mrf.mxu0
      %1544 = vmatprep.mubr.f32.mxu0 0.0
      %1545 = vmatmul.mubr.f32.gmra.mxu0 %v452
      %v1546 = vpop.f32.mrf.mxu0
      %v1547 = vadd.f32 0.0, %v1546
      %v1548 = vpop.f32.mrf.mxu0
      %1549 = vmatprep.mubr.f32.mxu0 0.0
      %1550 = vmatmul.mubr.f32.gmra.mxu0 %v455
      %v1551 = vpop.f32.mrf.mxu0
      %v1552 = vadd.f32 0.0, %v1551
      %v1553 = vpop.f32.mrf.mxu0
      %1554 = vdwg.mxu0
      %1555 = vmatprep.subr.mxu0 0.0
      %1556 = vmatpush1.msra.mxu0 0.0
      %1557 = vmatprep.subr.mxu0 0.0
      %1558 = vmatpush1.msra.mxu0 0.0
      %1559 = vmatprep.subr.mxu0 0.0
      %1560 = vmatpush1.msra.mxu0 0.0
      %1561 = vmatprep.subr.mxu0 0.0
      %1562 = vmatpush1.msra.mxu0 0.0
      %1563 = vmatprep.subr.mxu0 0.0
      %1564 = vmatpush1.msra.mxu0 0.0
      %1565 = vmatprep.subr.mxu0 0.0
      %1566 = vmatpush1.msra.mxu0 0.0
      %1567 = vmatprep.subr.mxu0 0.0
      %1568 = vmatpush1.msra.mxu0 0.0
      %1569 = vmatprep.subr.mxu0 0.0
      %1570 = vmatpush1.msra.mxu0 0.0
      %1571 = vmatprep.subr.mxu0 0.0
      %1572 = vmatpush1.msra.mxu0 0.0
      %1573 = vmatprep.subr.mxu0 0.0
      %1574 = vmatpush1.msra.mxu0 0.0
      %1575 = vmatprep.subr.mxu0 0.0
      %1576 = vmatpush1.msra.mxu0 0.0
      %1577 = vmatprep.subr.mxu0 0.0
      %1578 = vmatpush1.msra.mxu0 0.0
      %1579 = vmatprep.subr.mxu0 0.0
      %1580 = vmatpush1.msra.mxu0 %v1372
      %1581 = vmatprep.subr.mxu0 0.0
      %1582 = vmatpush1.msra.mxu0 %v1371
      %1583 = vmatprep.subr.mxu0 0.0
      %1584 = vmatpush1.msra.mxu0 %v1370
      %1585 = vmatprep.subr.mxu0 0.0
      %1586 = vmatpush1.msra.mxu0 %v1369
      %1587 = vmatprep.subr.mxu0 0.0
      %1588 = vmatpush2.msra.mxu0 0.0
      %1589 = vmatprep.subr.mxu0 0.0
      %1590 = vmatpush2.msra.mxu0 0.0
      %1591 = vmatprep.subr.mxu0 0.0
      %1592 = vmatpush2.msra.mxu0 0.0
      %1593 = vmatprep.subr.mxu0 0.0
      %1594 = vmatpush2.msra.mxu0 0.0
      %1595 = vmatprep.subr.mxu0 0.0
      %1596 = vmatpush2.msra.mxu0 0.0
      %1597 = vmatprep.subr.mxu0 0.0
      %1598 = vmatpush2.msra.mxu0 0.0
      %1599 = vmatprep.subr.mxu0 0.0
      %1600 = vmatpush2.msra.mxu0 0.0
      %1601 = vmatprep.subr.mxu0 0.0
      %1602 = vmatpush2.msra.mxu0 0.0
      %1603 = vmatprep.subr.mxu0 0.0
      %1604 = vmatpush2.msra.mxu0 0.0
      %1605 = vmatprep.subr.mxu0 0.0
      %1606 = vmatpush2.msra.mxu0 0.0
      %1607 = vmatprep.subr.mxu0 0.0
      %1608 = vmatpush2.msra.mxu0 0.0
      %1609 = vmatprep.subr.mxu0 0.0
      %1610 = vmatpush2.msra.mxu0 0.0
      %1611 = vmatprep.subr.mxu0 0.0
      %1612 = vmatpush2.msra.mxu0 0.0
      %1613 = vmatprep.subr.mxu0 0.0
      %1614 = vmatpush2.msra.mxu0 0.0
      %1615 = vmatprep.subr.mxu0 0.0
      %1616 = vmatpush2.msra.mxu0 0.0
      %1617 = vmatprep.subr.mxu0 0.0
      %1618 = vmatpush2.msra.mxu0 0.0
      %1619 = vmatprep.mubr.f32.mxu0 0.0
      %1620 = vmatmul.mubr.f32.gmra.mxu0 %v446
      %v1621 = vpop.f32.mrf.mxu0
      %v1622 = vadd.f32 0.0, %v1621
      %v1623 = vpop.f32.mrf.mxu0
      %1624 = vmatprep.mubr.f32.mxu0 0.0
      %1625 = vmatmul.mubr.f32.gmra.mxu0 %v449
      %v1626 = vpop.f32.mrf.mxu0
      %v1627 = vadd.f32 0.0, %v1626
      %v1628 = vpop.f32.mrf.mxu0
      %1629 = vmatprep.mubr.f32.mxu0 0.0
      %1630 = vmatmul.mubr.f32.gmra.mxu0 %v452
      %v1631 = vpop.f32.mrf.mxu0
      %v1632 = vadd.f32 0.0, %v1631
      %v1633 = vpop.f32.mrf.mxu0
      %1634 = vmatprep.mubr.f32.mxu0 0.0
      %1635 = vmatmul.mubr.f32.gmra.mxu0 %v455
      %v1636 = vpop.f32.mrf.mxu0
      %v1637 = vadd.f32 0.0, %v1636
      %v1638 = vpop.f32.mrf.mxu0
      %1639 = vdwg.mxu0
      %v1641 = vsel %vm716, %v1466, 0
      %v1644 = vsel %vm716, %v1537, 0
      %1646 = vmatprep.subr.mxu0 0.0
      %1647 = vmatpush1.xpose.msra.mxu0 0.0
      %1648 = vmatprep.subr.mxu0 0.0
      %1649 = vmatpush1.xpose.msra.mxu0 0.0
      %1650 = vmatprep.subr.mxu0 0.0
      %1651 = vmatpush1.xpose.msra.mxu0 0.0
      %1652 = vmatprep.subr.mxu0 0.0
      %1653 = vmatpush1.xpose.msra.mxu0 0.0
      %1654 = vmatprep.subr.mxu0 0.0
      %1655 = vmatpush1.xpose.msra.mxu0 0.0
      %1656 = vmatprep.subr.mxu0 0.0
      %1657 = vmatpush1.xpose.msra.mxu0 0.0
      %1658 = vmatprep.subr.mxu0 0.0
      %1659 = vmatpush1.xpose.msra.mxu0 0.0
      %1660 = vmatprep.subr.mxu0 0.0
      %1661 = vmatpush1.xpose.msra.mxu0 0.0
      %1662 = vmatprep.subr.mxu0 0.0
      %1663 = vmatpush1.xpose.msra.mxu0 0.0
      %1664 = vmatprep.subr.mxu0 0.0
      %1665 = vmatpush1.xpose.msra.mxu0 0.0
      %1666 = vmatprep.subr.mxu0 0.0
      %1667 = vmatpush1.xpose.msra.mxu0 0.0
      %1668 = vmatprep.subr.mxu0 0.0
      %1669 = vmatpush1.xpose.msra.mxu0 0.0
      %1670 = vmatprep.subr.mxu0 0.0
      %1671 = vmatpush1.xpose.msra.mxu0 0.0
      %1672 = vmatprep.subr.mxu0 0.0
      %1673 = vmatpush1.xpose.msra.mxu0 0.0
      %1674 = vmatprep.subr.mxu0 0.0
      %1675 = vmatpush1.xpose.msra.mxu0 0.0
      %1676 = vmatprep.subr.mxu0 0.0
      %1677 = vmatpush1.xpose.msra.mxu0 %v1644
      %1678 = vmatprep.subr.mxu0 0.0
      %1679 = vmatpush2.xpose.msra.mxu0 0.0
      %1680 = vmatprep.subr.mxu0 0.0
      %1681 = vmatpush2.xpose.msra.mxu0 0.0
      %1682 = vmatprep.subr.mxu0 0.0
      %1683 = vmatpush2.xpose.msra.mxu0 0.0
      %1684 = vmatprep.subr.mxu0 0.0
      %1685 = vmatpush2.xpose.msra.mxu0 0.0
      %1686 = vmatprep.subr.mxu0 0.0
      %1687 = vmatpush2.xpose.msra.mxu0 0.0
      %1688 = vmatprep.subr.mxu0 0.0
      %1689 = vmatpush2.xpose.msra.mxu0 0.0
      %1690 = vmatprep.subr.mxu0 0.0
      %1691 = vmatpush2.xpose.msra.mxu0 0.0
      %1692 = vmatprep.subr.mxu0 0.0
      %1693 = vmatpush2.xpose.msra.mxu0 0.0
      %1694 = vmatprep.subr.mxu0 0.0
      %1695 = vmatpush2.xpose.msra.mxu0 0.0
      %1696 = vmatprep.subr.mxu0 0.0
      %1697 = vmatpush2.xpose.msra.mxu0 0.0
      %1698 = vmatprep.subr.mxu0 0.0
      %1699 = vmatpush2.xpose.msra.mxu0 0.0
      %1700 = vmatprep.subr.mxu0 0.0
      %1701 = vmatpush2.xpose.msra.mxu0 0.0
      %1702 = vmatprep.subr.mxu0 0.0
      %1703 = vmatpush2.xpose.msra.mxu0 0.0
      %1704 = vmatprep.subr.mxu0 0.0
      %1705 = vmatpush2.xpose.msra.mxu0 0.0
      %1706 = vmatprep.subr.mxu0 0.0
      %1707 = vmatpush2.xpose.msra.mxu0 0.0
      %1708 = vmatprep.subr.mxu0 0.0
      %1709 = vmatpush2.xpose.msra.mxu0 0.0
      %1710 = vmatprep.mubr.f32.mxu0 0.0
      %1711 = vmatmul.mubr.f32.gmra.mxu0 %v1641
      %v1712 = vpop.f32.mrf.mxu0
      %v1713 = vadd.f32 0.0, %v1712
      %v1714 = vpop.f32.mrf.mxu0
      %1715 = vdwg.mxu0
      %v1717 = vsel %vm716, %v1467, 0
      %v1720 = vsel %vm716, %v1542, 0
      %1722 = vmatprep.subr.mxu0 0.0
      %1723 = vmatpush1.xpose.msra.mxu0 0.0
      %1724 = vmatprep.subr.mxu0 0.0
      %1725 = vmatpush1.xpose.msra.mxu0 0.0
      %1726 = vmatprep.subr.mxu0 0.0
      %1727 = vmatpush1.xpose.msra.mxu0 0.0
      %1728 = vmatprep.subr.mxu0 0.0
      %1729 = vmatpush1.xpose.msra.mxu0 0.0
      %1730 = vmatprep.subr.mxu0 0.0
      %1731 = vmatpush1.xpose.msra.mxu0 0.0
      %1732 = vmatprep.subr.mxu0 0.0
      %1733 = vmatpush1.xpose.msra.mxu0 0.0
      %1734 = vmatprep.subr.mxu0 0.0
      %1735 = vmatpush1.xpose.msra.mxu0 0.0
      %1736 = vmatprep.subr.mxu0 0.0
      %1737 = vmatpush1.xpose.msra.mxu0 0.0
      %1738 = vmatprep.subr.mxu0 0.0
      %1739 = vmatpush1.xpose.msra.mxu0 0.0
      %1740 = vmatprep.subr.mxu0 0.0
      %1741 = vmatpush1.xpose.msra.mxu0 0.0
      %1742 = vmatprep.subr.mxu0 0.0
      %1743 = vmatpush1.xpose.msra.mxu0 0.0
      %1744 = vmatprep.subr.mxu0 0.0
      %1745 = vmatpush1.xpose.msra.mxu0 0.0
      %1746 = vmatprep.subr.mxu0 0.0
      %1747 = vmatpush1.xpose.msra.mxu0 0.0
      %1748 = vmatprep.subr.mxu0 0.0
      %1749 = vmatpush1.xpose.msra.mxu0 0.0
      %1750 = vmatprep.subr.mxu0 0.0
      %1751 = vmatpush1.xpose.msra.mxu0 0.0
      %1752 = vmatprep.subr.mxu0 0.0
      %1753 = vmatpush1.xpose.msra.mxu0 %v1720
      %1754 = vmatprep.subr.mxu0 0.0
      %1755 = vmatpush2.xpose.msra.mxu0 0.0
      %1756 = vmatprep.subr.mxu0 0.0
      %1757 = vmatpush2.xpose.msra.mxu0 0.0
      %1758 = vmatprep.subr.mxu0 0.0
      %1759 = vmatpush2.xpose.msra.mxu0 0.0
      %1760 = vmatprep.subr.mxu0 0.0
      %1761 = vmatpush2.xpose.msra.mxu0 0.0
      %1762 = vmatprep.subr.mxu0 0.0
      %1763 = vmatpush2.xpose.msra.mxu0 0.0
      %1764 = vmatprep.subr.mxu0 0.0
      %1765 = vmatpush2.xpose.msra.mxu0 0.0
      %1766 = vmatprep.subr.mxu0 0.0
      %1767 = vmatpush2.xpose.msra.mxu0 0.0
      %1768 = vmatprep.subr.mxu0 0.0
      %1769 = vmatpush2.xpose.msra.mxu0 0.0
      %1770 = vmatprep.subr.mxu0 0.0
      %1771 = vmatpush2.xpose.msra.mxu0 0.0
      %1772 = vmatprep.subr.mxu0 0.0
      %1773 = vmatpush2.xpose.msra.mxu0 0.0
      %1774 = vmatprep.subr.mxu0 0.0
      %1775 = vmatpush2.xpose.msra.mxu0 0.0
      %1776 = vmatprep.subr.mxu0 0.0
      %1777 = vmatpush2.xpose.msra.mxu0 0.0
      %1778 = vmatprep.subr.mxu0 0.0
      %1779 = vmatpush2.xpose.msra.mxu0 0.0
      %1780 = vmatprep.subr.mxu0 0.0
      %1781 = vmatpush2.xpose.msra.mxu0 0.0
      %1782 = vmatprep.subr.mxu0 0.0
      %1783 = vmatpush2.xpose.msra.mxu0 0.0
      %1784 = vmatprep.subr.mxu0 0.0
      %1785 = vmatpush2.xpose.msra.mxu0 0.0
      %1786 = vmatprep.mubr.f32.mxu0 0.0
      %1787 = vmatmul.mubr.f32.gmra.mxu0 %v1717
      %v1788 = vpop.f32.mrf.mxu0
      %v1789 = vadd.f32 0.0, %v1788
      %v1790 = vpop.f32.mrf.mxu0
      %1791 = vdwg.mxu0
      %v1793 = vsel %vm716, %v1468, 0
      %v1796 = vsel %vm716, %v1547, 0
      %1798 = vmatprep.subr.mxu0 0.0
      %1799 = vmatpush1.xpose.msra.mxu0 0.0
      %1800 = vmatprep.subr.mxu0 0.0
      %1801 = vmatpush1.xpose.msra.mxu0 0.0
      %1802 = vmatprep.subr.mxu0 0.0
      %1803 = vmatpush1.xpose.msra.mxu0 0.0
      %1804 = vmatprep.subr.mxu0 0.0
      %1805 = vmatpush1.xpose.msra.mxu0 0.0
      %1806 = vmatprep.subr.mxu0 0.0
      %1807 = vmatpush1.xpose.msra.mxu0 0.0
      %1808 = vmatprep.subr.mxu0 0.0
      %1809 = vmatpush1.xpose.msra.mxu0 0.0
      %1810 = vmatprep.subr.mxu0 0.0
      %1811 = vmatpush1.xpose.msra.mxu0 0.0
      %1812 = vmatprep.subr.mxu0 0.0
      %1813 = vmatpush1.xpose.msra.mxu0 0.0
      %1814 = vmatprep.subr.mxu0 0.0
      %1815 = vmatpush1.xpose.msra.mxu0 0.0
      %1816 = vmatprep.subr.mxu0 0.0
      %1817 = vmatpush1.xpose.msra.mxu0 0.0
      %1818 = vmatprep.subr.mxu0 0.0
      %1819 = vmatpush1.xpose.msra.mxu0 0.0
      %1820 = vmatprep.subr.mxu0 0.0
      %1821 = vmatpush1.xpose.msra.mxu0 0.0
      %1822 = vmatprep.subr.mxu0 0.0
      %1823 = vmatpush1.xpose.msra.mxu0 0.0
      %1824 = vmatprep.subr.mxu0 0.0
      %1825 = vmatpush1.xpose.msra.mxu0 0.0
      %1826 = vmatprep.subr.mxu0 0.0
      %1827 = vmatpush1.xpose.msra.mxu0 0.0
      %1828 = vmatprep.subr.mxu0 0.0
      %1829 = vmatpush1.xpose.msra.mxu0 %v1796
      %1830 = vmatprep.subr.mxu0 0.0
      %1831 = vmatpush2.xpose.msra.mxu0 0.0
      %1832 = vmatprep.subr.mxu0 0.0
      %1833 = vmatpush2.xpose.msra.mxu0 0.0
      %1834 = vmatprep.subr.mxu0 0.0
      %1835 = vmatpush2.xpose.msra.mxu0 0.0
      %1836 = vmatprep.subr.mxu0 0.0
      %1837 = vmatpush2.xpose.msra.mxu0 0.0
      %1838 = vmatprep.subr.mxu0 0.0
      %1839 = vmatpush2.xpose.msra.mxu0 0.0
      %1840 = vmatprep.subr.mxu0 0.0
      %1841 = vmatpush2.xpose.msra.mxu0 0.0
      %1842 = vmatprep.subr.mxu0 0.0
      %1843 = vmatpush2.xpose.msra.mxu0 0.0
      %1844 = vmatprep.subr.mxu0 0.0
      %1845 = vmatpush2.xpose.msra.mxu0 0.0
      %1846 = vmatprep.subr.mxu0 0.0
      %1847 = vmatpush2.xpose.msra.mxu0 0.0
      %1848 = vmatprep.subr.mxu0 0.0
      %1849 = vmatpush2.xpose.msra.mxu0 0.0
      %1850 = vmatprep.subr.mxu0 0.0
      %1851 = vmatpush2.xpose.msra.mxu0 0.0
      %1852 = vmatprep.subr.mxu0 0.0
      %1853 = vmatpush2.xpose.msra.mxu0 0.0
      %1854 = vmatprep.subr.mxu0 0.0
      %1855 = vmatpush2.xpose.msra.mxu0 0.0
      %1856 = vmatprep.subr.mxu0 0.0
      %1857 = vmatpush2.xpose.msra.mxu0 0.0
      %1858 = vmatprep.subr.mxu0 0.0
      %1859 = vmatpush2.xpose.msra.mxu0 0.0
      %1860 = vmatprep.subr.mxu0 0.0
      %1861 = vmatpush2.xpose.msra.mxu0 0.0
      %1862 = vmatprep.mubr.f32.mxu0 0.0
      %1863 = vmatmul.mubr.f32.gmra.mxu0 %v1793
      %v1864 = vpop.f32.mrf.mxu0
      %v1865 = vadd.f32 0.0, %v1864
      %v1866 = vpop.f32.mrf.mxu0
      %1867 = vdwg.mxu0
      %v1869 = vsel %vm716, %v1469, 0
      %v1872 = vsel %vm716, %v1552, 0
      %1874 = vmatprep.subr.mxu0 0.0
      %1875 = vmatpush1.xpose.msra.mxu0 0.0
      %1876 = vmatprep.subr.mxu0 0.0
      %1877 = vmatpush1.xpose.msra.mxu0 0.0
      %1878 = vmatprep.subr.mxu0 0.0
      %1879 = vmatpush1.xpose.msra.mxu0 0.0
      %1880 = vmatprep.subr.mxu0 0.0
      %1881 = vmatpush1.xpose.msra.mxu0 0.0
      %1882 = vmatprep.subr.mxu0 0.0
      %1883 = vmatpush1.xpose.msra.mxu0 0.0
      %1884 = vmatprep.subr.mxu0 0.0
      %1885 = vmatpush1.xpose.msra.mxu0 0.0
      %1886 = vmatprep.subr.mxu0 0.0
      %1887 = vmatpush1.xpose.msra.mxu0 0.0
      %1888 = vmatprep.subr.mxu0 0.0
      %1889 = vmatpush1.xpose.msra.mxu0 0.0
      %1890 = vmatprep.subr.mxu0 0.0
      %1891 = vmatpush1.xpose.msra.mxu0 0.0
      %1892 = vmatprep.subr.mxu0 0.0
      %1893 = vmatpush1.xpose.msra.mxu0 0.0
      %1894 = vmatprep.subr.mxu0 0.0
      %1895 = vmatpush1.xpose.msra.mxu0 0.0
      %1896 = vmatprep.subr.mxu0 0.0
      %1897 = vmatpush1.xpose.msra.mxu0 0.0
      %1898 = vmatprep.subr.mxu0 0.0
      %1899 = vmatpush1.xpose.msra.mxu0 0.0
      %1900 = vmatprep.subr.mxu0 0.0
      %1901 = vmatpush1.xpose.msra.mxu0 0.0
      %1902 = vmatprep.subr.mxu0 0.0
      %1903 = vmatpush1.xpose.msra.mxu0 0.0
      %1904 = vmatprep.subr.mxu0 0.0
      %1905 = vmatpush1.xpose.msra.mxu0 %v1872
      %1906 = vmatprep.subr.mxu0 0.0
      %1907 = vmatpush2.xpose.msra.mxu0 0.0
      %1908 = vmatprep.subr.mxu0 0.0
      %1909 = vmatpush2.xpose.msra.mxu0 0.0
      %1910 = vmatprep.subr.mxu0 0.0
      %1911 = vmatpush2.xpose.msra.mxu0 0.0
      %1912 = vmatprep.subr.mxu0 0.0
      %1913 = vmatpush2.xpose.msra.mxu0 0.0
      %1914 = vmatprep.subr.mxu0 0.0
      %1915 = vmatpush2.xpose.msra.mxu0 0.0
      %1916 = vmatprep.subr.mxu0 0.0
      %1917 = vmatpush2.xpose.msra.mxu0 0.0
      %1918 = vmatprep.subr.mxu0 0.0
      %1919 = vmatpush2.xpose.msra.mxu0 0.0
      %1920 = vmatprep.subr.mxu0 0.0
      %1921 = vmatpush2.xpose.msra.mxu0 0.0
      %1922 = vmatprep.subr.mxu0 0.0
      %1923 = vmatpush2.xpose.msra.mxu0 0.0
      %1924 = vmatprep.subr.mxu0 0.0
      %1925 = vmatpush2.xpose.msra.mxu0 0.0
      %1926 = vmatprep.subr.mxu0 0.0
      %1927 = vmatpush2.xpose.msra.mxu0 0.0
      %1928 = vmatprep.subr.mxu0 0.0
      %1929 = vmatpush2.xpose.msra.mxu0 0.0
      %1930 = vmatprep.subr.mxu0 0.0
      %1931 = vmatpush2.xpose.msra.mxu0 0.0
      %1932 = vmatprep.subr.mxu0 0.0
      %1933 = vmatpush2.xpose.msra.mxu0 0.0
      %1934 = vmatprep.subr.mxu0 0.0
      %1935 = vmatpush2.xpose.msra.mxu0 0.0
      %1936 = vmatprep.subr.mxu0 0.0
      %1937 = vmatpush2.xpose.msra.mxu0 0.0
      %1938 = vmatprep.mubr.f32.mxu0 0.0
      %1939 = vmatmul.mubr.f32.gmra.mxu0 %v1869
      %v1940 = vpop.f32.mrf.mxu0
      %v1941 = vadd.f32 0.0, %v1940
      %v1942 = vpop.f32.mrf.mxu0
      %1943 = vdwg.mxu0
      %v1944 = vsel %vm716, %v1713, -inf
      %1945 = vmax.xlane.f32.xlu0 %v1944
      %v1946 = vpop.xlane.xlu0 %1945
      %v1947 = vsel %vm716, %v1789, -inf
      %1948 = vmax.xlane.f32.xlu0 %v1947
      %v1949 = vpop.xlane.xlu0 %1948
      %v1950 = vsel %vm716, %v1865, -inf
      %1951 = vmax.xlane.f32.xlu0 %v1950
      %v1952 = vpop.xlane.xlu0 %1951
      %v1953 = vsel %vm716, %v1941, -inf
      %1954 = vmax.xlane.f32.xlu0 %v1953
      %v1955 = vpop.xlane.xlu0 %1954
      %v1956 = vsub.f32 %v1713, %v1946
      %v1957 = vsub.f32 %v1789, %v1949
      %v1958 = vsub.f32 %v1865, %v1952
      %v1959 = vsub.f32 %v1941, %v1955
      %v1960 = vmul.f32 %v1956, 1.442695
      %v1961 = vpow.pop %v1960
      %v1962 = vmul.f32 %v1957, 1.442695
      %v1963 = vpow.pop %v1962
      %v1964 = vmul.f32 %v1958, 1.442695
      %v1965 = vpow.pop %v1964
      %v1966 = vmul.f32 %v1959, 1.442695
      %v1967 = vpow.pop %v1966
      %v1968 = vsel %vm716, %v1961, 0.0
      %1969 = vadd.xlane.f32.xlu0 %v1968
      %v1970 = vpop.xlane.xlu0 %1969
      %v1971 = vsel %vm716, %v1963, 0.0
      %1972 = vadd.xlane.f32.xlu0 %v1971
      %v1973 = vpop.xlane.xlu0 %1972
      %v1974 = vsel %vm716, %v1965, 0.0
      %1975 = vadd.xlane.f32.xlu0 %v1974
      %v1976 = vpop.xlane.xlu0 %1975
      %v1977 = vsel %vm716, %v1967, 0.0
      %1978 = vadd.xlane.f32.xlu0 %v1977
      %v1979 = vpop.xlane.xlu0 %1978
      %v1980 = vrcp.pop %v1970
      %v1981 = vrcp.pop %v1973
      %v1982 = vrcp.pop %v1976
      %v1983 = vrcp.pop %v1979
      %v1984 = vmul.f32 %v1961, %v1980
      %v1985 = vmul.f32 %v1963, %v1981
      %v1986 = vmul.f32 %v1965, %v1982
      %v1987 = vmul.f32 %v1967, %v1983
      %v1989 = vsel %vm716, %v1984, 0
      %1991 = vmatprep.subr.mxu0 0.0
      %1992 = vmatpush1.msra.mxu0 0.0
      %1993 = vmatprep.subr.mxu0 0.0
      %1994 = vmatpush1.msra.mxu0 0.0
      %1995 = vmatprep.subr.mxu0 0.0
      %1996 = vmatpush1.msra.mxu0 0.0
      %1997 = vmatprep.subr.mxu0 0.0
      %1998 = vmatpush1.msra.mxu0 0.0
      %1999 = vmatprep.subr.mxu0 0.0
      %2000 = vmatpush1.msra.mxu0 0.0
      %2001 = vmatprep.subr.mxu0 0.0
      %2002 = vmatpush1.msra.mxu0 0.0
      %2003 = vmatprep.subr.mxu0 0.0
      %2004 = vmatpush1.msra.mxu0 0.0
      %2005 = vmatprep.subr.mxu0 0.0
      %2006 = vmatpush1.msra.mxu0 0.0
      %2007 = vmatprep.subr.mxu0 0.0
      %2008 = vmatpush1.msra.mxu0 0.0
      %2009 = vmatprep.subr.mxu0 0.0
      %2010 = vmatpush1.msra.mxu0 0.0
      %2011 = vmatprep.subr.mxu0 0.0
      %2012 = vmatpush1.msra.mxu0 0.0
      %2013 = vmatprep.subr.mxu0 0.0
      %2014 = vmatpush1.msra.mxu0 0.0
      %2015 = vmatprep.subr.mxu0 0.0
      %2016 = vmatpush1.msra.mxu0 0.0
      %2017 = vmatprep.subr.mxu0 0.0
      %2018 = vmatpush1.msra.mxu0 0.0
      %2019 = vmatprep.subr.mxu0 0.0
      %2020 = vmatpush1.msra.mxu0 0.0
      %2021 = vmatprep.subr.mxu0 0.0
      %2022 = vmatpush1.msra.mxu0 %v1622
      %2023 = vmatprep.subr.mxu0 0.0
      %2024 = vmatpush2.msra.mxu0 0.0
      %2025 = vmatprep.subr.mxu0 0.0
      %2026 = vmatpush2.msra.mxu0 0.0
      %2027 = vmatprep.subr.mxu0 0.0
      %2028 = vmatpush2.msra.mxu0 0.0
      %2029 = vmatprep.subr.mxu0 0.0
      %2030 = vmatpush2.msra.mxu0 0.0
      %2031 = vmatprep.subr.mxu0 0.0
      %2032 = vmatpush2.msra.mxu0 0.0
      %2033 = vmatprep.subr.mxu0 0.0
      %2034 = vmatpush2.msra.mxu0 0.0
      %2035 = vmatprep.subr.mxu0 0.0
      %2036 = vmatpush2.msra.mxu0 0.0
      %2037 = vmatprep.subr.mxu0 0.0
      %2038 = vmatpush2.msra.mxu0 0.0
      %2039 = vmatprep.subr.mxu0 0.0
      %2040 = vmatpush2.msra.mxu0 0.0
      %2041 = vmatprep.subr.mxu0 0.0
      %2042 = vmatpush2.msra.mxu0 0.0
      %2043 = vmatprep.subr.mxu0 0.0
      %2044 = vmatpush2.msra.mxu0 0.0
      %2045 = vmatprep.subr.mxu0 0.0
      %2046 = vmatpush2.msra.mxu0 0.0
      %2047 = vmatprep.subr.mxu0 0.0
      %2048 = vmatpush2.msra.mxu0 0.0
      %2049 = vmatprep.subr.mxu0 0.0
      %2050 = vmatpush2.msra.mxu0 0.0
      %2051 = vmatprep.subr.mxu0 0.0
      %2052 = vmatpush2.msra.mxu0 0.0
      %2053 = vmatprep.subr.mxu0 0.0
      %2054 = vmatpush2.msra.mxu0 0.0
      %2055 = vmatprep.mubr.f32.mxu0 0.0
      %2056 = vmatmul.mubr.f32.gmra.mxu0 %v1989
      %v2057 = vpop.f32.mrf.mxu0
      %v2058 = vadd.f32 0.0, %v2057
      %v2059 = vpop.f32.mrf.mxu0
      %2060 = vdwg.mxu0
      %v2062 = vsel %vm716, %v1985, 0
      %2064 = vmatprep.subr.mxu0 0.0
      %2065 = vmatpush1.msra.mxu0 0.0
      %2066 = vmatprep.subr.mxu0 0.0
      %2067 = vmatpush1.msra.mxu0 0.0
      %2068 = vmatprep.subr.mxu0 0.0
      %2069 = vmatpush1.msra.mxu0 0.0
      %2070 = vmatprep.subr.mxu0 0.0
      %2071 = vmatpush1.msra.mxu0 0.0
      %2072 = vmatprep.subr.mxu0 0.0
      %2073 = vmatpush1.msra.mxu0 0.0
      %2074 = vmatprep.subr.mxu0 0.0
      %2075 = vmatpush1.msra.mxu0 0.0
      %2076 = vmatprep.subr.mxu0 0.0
      %2077 = vmatpush1.msra.mxu0 0.0
      %2078 = vmatprep.subr.mxu0 0.0
      %2079 = vmatpush1.msra.mxu0 0.0
      %2080 = vmatprep.subr.mxu0 0.0
      %2081 = vmatpush1.msra.mxu0 0.0
      %2082 = vmatprep.subr.mxu0 0.0
      %2083 = vmatpush1.msra.mxu0 0.0
      %2084 = vmatprep.subr.mxu0 0.0
      %2085 = vmatpush1.msra.mxu0 0.0
      %2086 = vmatprep.subr.mxu0 0.0
      %2087 = vmatpush1.msra.mxu0 0.0
      %2088 = vmatprep.subr.mxu0 0.0
      %2089 = vmatpush1.msra.mxu0 0.0
      %2090 = vmatprep.subr.mxu0 0.0
      %2091 = vmatpush1.msra.mxu0 0.0
      %2092 = vmatprep.subr.mxu0 0.0
      %2093 = vmatpush1.msra.mxu0 0.0
      %2094 = vmatprep.subr.mxu0 0.0
      %2095 = vmatpush1.msra.mxu0 %v1627
      %2096 = vmatprep.subr.mxu0 0.0
      %2097 = vmatpush2.msra.mxu0 0.0
      %2098 = vmatprep.subr.mxu0 0.0
      %2099 = vmatpush2.msra.mxu0 0.0
      %2100 = vmatprep.subr.mxu0 0.0
      %2101 = vmatpush2.msra.mxu0 0.0
      %2102 = vmatprep.subr.mxu0 0.0
      %2103 = vmatpush2.msra.mxu0 0.0
      %2104 = vmatprep.subr.mxu0 0.0
      %2105 = vmatpush2.msra.mxu0 0.0
      %2106 = vmatprep.subr.mxu0 0.0
      %2107 = vmatpush2.msra.mxu0 0.0
      %2108 = vmatprep.subr.mxu0 0.0
      %2109 = vmatpush2.msra.mxu0 0.0
      %2110 = vmatprep.subr.mxu0 0.0
      %2111 = vmatpush2.msra.mxu0 0.0
      %2112 = vmatprep.subr.mxu0 0.0
      %2113 = vmatpush2.msra.mxu0 0.0
      %2114 = vmatprep.subr.mxu0 0.0
      %2115 = vmatpush2.msra.mxu0 0.0
      %2116 = vmatprep.subr.mxu0 0.0
      %2117 = vmatpush2.msra.mxu0 0.0
      %2118 = vmatprep.subr.mxu0 0.0
      %2119 = vmatpush2.msra.mxu0 0.0
      %2120 = vmatprep.subr.mxu0 0.0
      %2121 = vmatpush2.msra.mxu0 0.0
      %2122 = vmatprep.subr.mxu0 0.0
      %2123 = vmatpush2.msra.mxu0 0.0
      %2124 = vmatprep.subr.mxu0 0.0
      %2125 = vmatpush2.msra.mxu0 0.0
      %2126 = vmatprep.subr.mxu0 0.0
      %2127 = vmatpush2.msra.mxu0 0.0
      %2128 = vmatprep.mubr.f32.mxu0 0.0
      %2129 = vmatmul.mubr.f32.gmra.mxu0 %v2062
      %v2130 = vpop.f32.mrf.mxu0
      %v2131 = vadd.f32 0.0, %v2130
      %v2132 = vpop.f32.mrf.mxu0
      %2133 = vdwg.mxu0
      %v2135 = vsel %vm716, %v1986, 0
      %2137 = vmatprep.subr.mxu0 0.0
      %2138 = vmatpush1.msra.mxu0 0.0
      %2139 = vmatprep.subr.mxu0 0.0
      %2140 = vmatpush1.msra.mxu0 0.0
      %2141 = vmatprep.subr.mxu0 0.0
      %2142 = vmatpush1.msra.mxu0 0.0
      %2143 = vmatprep.subr.mxu0 0.0
      %2144 = vmatpush1.msra.mxu0 0.0
      %2145 = vmatprep.subr.mxu0 0.0
      %2146 = vmatpush1.msra.mxu0 0.0
      %2147 = vmatprep.subr.mxu0 0.0
      %2148 = vmatpush1.msra.mxu0 0.0
      %2149 = vmatprep.subr.mxu0 0.0
      %2150 = vmatpush1.msra.mxu0 0.0
      %2151 = vmatprep.subr.mxu0 0.0
      %2152 = vmatpush1.msra.mxu0 0.0
      %2153 = vmatprep.subr.mxu0 0.0
      %2154 = vmatpush1.msra.mxu0 0.0
      %2155 = vmatprep.subr.mxu0 0.0
      %2156 = vmatpush1.msra.mxu0 0.0
      %2157 = vmatprep.subr.mxu0 0.0
      %2158 = vmatpush1.msra.mxu0 0.0
      %2159 = vmatprep.subr.mxu0 0.0
      %2160 = vmatpush1.msra.mxu0 0.0
      %2161 = vmatprep.subr.mxu0 0.0
      %2162 = vmatpush1.msra.mxu0 0.0
      %2163 = vmatprep.subr.mxu0 0.0
      %2164 = vmatpush1.msra.mxu0 0.0
      %2165 = vmatprep.subr.mxu0 0.0
      %2166 = vmatpush1.msra.mxu0 0.0
      %2167 = vmatprep.subr.mxu0 0.0
      %2168 = vmatpush1.msra.mxu0 %v1632
      %2169 = vmatprep.subr.mxu0 0.0
      %2170 = vmatpush2.msra.mxu0 0.0
      %2171 = vmatprep.subr.mxu0 0.0
      %2172 = vmatpush2.msra.mxu0 0.0
      %2173 = vmatprep.subr.mxu0 0.0
      %2174 = vmatpush2.msra.mxu0 0.0
      %2175 = vmatprep.subr.mxu0 0.0
      %2176 = vmatpush2.msra.mxu0 0.0
      %2177 = vmatprep.subr.mxu0 0.0
      %2178 = vmatpush2.msra.mxu0 0.0
      %2179 = vmatprep.subr.mxu0 0.0
      %2180 = vmatpush2.msra.mxu0 0.0
      %2181 = vmatprep.subr.mxu0 0.0
      %2182 = vmatpush2.msra.mxu0 0.0
      %2183 = vmatprep.subr.mxu0 0.0
      %2184 = vmatpush2.msra.mxu0 0.0
      %2185 = vmatprep.subr.mxu0 0.0
      %2186 = vmatpush2.msra.mxu0 0.0
      %2187 = vmatprep.subr.mxu0 0.0
      %2188 = vmatpush2.msra.mxu0 0.0
      %2189 = vmatprep.subr.mxu0 0.0
      %2190 = vmatpush2.msra.mxu0 0.0
      %2191 = vmatprep.subr.mxu0 0.0
      %2192 = vmatpush2.msra.mxu0 0.0
      %2193 = vmatprep.subr.mxu0 0.0
      %2194 = vmatpush2.msra.mxu0 0.0
      %2195 = vmatprep.subr.mxu0 0.0
      %2196 = vmatpush2.msra.mxu0 0.0
      %2197 = vmatprep.subr.mxu0 0.0
      %2198 = vmatpush2.msra.mxu0 0.0
      %2199 = vmatprep.subr.mxu0 0.0
      %2200 = vmatpush2.msra.mxu0 0.0
      %2201 = vmatprep.mubr.f32.mxu0 0.0
      %2202 = vmatmul.mubr.f32.gmra.mxu0 %v2135
      %v2203 = vpop.f32.mrf.mxu0
      %v2204 = vadd.f32 0.0, %v2203
      %v2205 = vpop.f32.mrf.mxu0
      %2206 = vdwg.mxu0
      %v2208 = vsel %vm716, %v1987, 0
      %2210 = vmatprep.subr.mxu0 0.0
      %2211 = vmatpush1.msra.mxu0 0.0
      %2212 = vmatprep.subr.mxu0 0.0
      %2213 = vmatpush1.msra.mxu0 0.0
      %2214 = vmatprep.subr.mxu0 0.0
      %2215 = vmatpush1.msra.mxu0 0.0
      %2216 = vmatprep.subr.mxu0 0.0
      %2217 = vmatpush1.msra.mxu0 0.0
      %2218 = vmatprep.subr.mxu0 0.0
      %2219 = vmatpush1.msra.mxu0 0.0
      %2220 = vmatprep.subr.mxu0 0.0
      %2221 = vmatpush1.msra.mxu0 0.0
      %2222 = vmatprep.subr.mxu0 0.0
      %2223 = vmatpush1.msra.mxu0 0.0
      %2224 = vmatprep.subr.mxu0 0.0
      %2225 = vmatpush1.msra.mxu0 0.0
      %2226 = vmatprep.subr.mxu0 0.0
      %2227 = vmatpush1.msra.mxu0 0.0
      %2228 = vmatprep.subr.mxu0 0.0
      %2229 = vmatpush1.msra.mxu0 0.0
      %2230 = vmatprep.subr.mxu0 0.0
      %2231 = vmatpush1.msra.mxu0 0.0
      %2232 = vmatprep.subr.mxu0 0.0
      %2233 = vmatpush1.msra.mxu0 0.0
      %2234 = vmatprep.subr.mxu0 0.0
      %2235 = vmatpush1.msra.mxu0 0.0
      %2236 = vmatprep.subr.mxu0 0.0
      %2237 = vmatpush1.msra.mxu0 0.0
      %2238 = vmatprep.subr.mxu0 0.0
      %2239 = vmatpush1.msra.mxu0 0.0
      %2240 = vmatprep.subr.mxu0 0.0
      %2241 = vmatpush1.msra.mxu0 %v1637
      %2242 = vmatprep.subr.mxu0 0.0
      %2243 = vmatpush2.msra.mxu0 0.0
      %2244 = vmatprep.subr.mxu0 0.0
      %2245 = vmatpush2.msra.mxu0 0.0
      %2246 = vmatprep.subr.mxu0 0.0
      %2247 = vmatpush2.msra.mxu0 0.0
      %2248 = vmatprep.subr.mxu0 0.0
      %2249 = vmatpush2.msra.mxu0 0.0
      %2250 = vmatprep.subr.mxu0 0.0
      %2251 = vmatpush2.msra.mxu0 0.0
      %2252 = vmatprep.subr.mxu0 0.0
      %2253 = vmatpush2.msra.mxu0 0.0
      %2254 = vmatprep.subr.mxu0 0.0
      %2255 = vmatpush2.msra.mxu0 0.0
      %2256 = vmatprep.subr.mxu0 0.0
      %2257 = vmatpush2.msra.mxu0 0.0
      %2258 = vmatprep.subr.mxu0 0.0
      %2259 = vmatpush2.msra.mxu0 0.0
      %2260 = vmatprep.subr.mxu0 0.0
      %2261 = vmatpush2.msra.mxu0 0.0
      %2262 = vmatprep.subr.mxu0 0.0
      %2263 = vmatpush2.msra.mxu0 0.0
      %2264 = vmatprep.subr.mxu0 0.0
      %2265 = vmatpush2.msra.mxu0 0.0
      %2266 = vmatprep.subr.mxu0 0.0
      %2267 = vmatpush2.msra.mxu0 0.0
      %2268 = vmatprep.subr.mxu0 0.0
      %2269 = vmatpush2.msra.mxu0 0.0
      %2270 = vmatprep.subr.mxu0 0.0
      %2271 = vmatpush2.msra.mxu0 0.0
      %2272 = vmatprep.subr.mxu0 0.0
      %2273 = vmatpush2.msra.mxu0 0.0
      %2274 = vmatprep.mubr.f32.mxu0 0.0
      %2275 = vmatmul.mubr.f32.gmra.mxu0 %v2208
      %v2276 = vpop.f32.mrf.mxu0
      %v2277 = vadd.f32 0.0, %v2276
      %v2278 = vpop.f32.mrf.mxu0
      %2279 = vdwg.mxu0
      %s2280 = scalar_lea.vmem %s4, 8
      %v2281 = vld [vmem:[%s2280] sm:$0xff]
      %v2283 = vsel %vm716, %v2058, 0
      %v2286 = vsel %vm716, %v2131, 0
      %v2289 = vsel %vm716, %v2204, 0
      %v2292 = vsel %vm716, %v2277, 0
      %2294 = vmatprep.subr.mxu0 0.0
      %2295 = vmatpush1.msra.mxu0 0.0
      %2296 = vmatprep.subr.mxu0 0.0
      %2297 = vmatpush1.msra.mxu0 0.0
      %2298 = vmatprep.subr.mxu0 0.0
      %2299 = vmatpush1.msra.mxu0 0.0
      %2300 = vmatprep.subr.mxu0 0.0
      %2301 = vmatpush1.msra.mxu0 0.0
      %2302 = vmatprep.subr.mxu0 0.0
      %2303 = vmatpush1.msra.mxu0 0.0
      %2304 = vmatprep.subr.mxu0 0.0
      %2305 = vmatpush1.msra.mxu0 0.0
      %2306 = vmatprep.subr.mxu0 0.0
      %2307 = vmatpush1.msra.mxu0 0.0
      %2308 = vmatprep.subr.mxu0 0.0
      %2309 = vmatpush1.msra.mxu0 0.0
      %2310 = vmatprep.subr.mxu0 0.0
      %2311 = vmatpush1.msra.mxu0 0.0
      %2312 = vmatprep.subr.mxu0 0.0
      %2313 = vmatpush1.msra.mxu0 0.0
      %2314 = vmatprep.subr.mxu0 0.0
      %2315 = vmatpush1.msra.mxu0 0.0
      %2316 = vmatprep.subr.mxu0 0.0
      %2317 = vmatpush1.msra.mxu0 0.0
      %2318 = vmatprep.subr.mxu0 0.0
      %2319 = vmatpush1.msra.mxu0 0.0
      %2320 = vmatprep.subr.mxu0 0.0
      %2321 = vmatpush1.msra.mxu0 0.0
      %2322 = vmatprep.subr.mxu0 0.0
      %2323 = vmatpush1.msra.mxu0 0.0
      %2324 = vmatprep.subr.mxu0 0.0
      %2325 = vmatpush1.msra.mxu0 %v2281
      %2326 = vmatprep.subr.mxu0 0.0
      %2327 = vmatpush2.msra.mxu0 0.0
      %2328 = vmatprep.subr.mxu0 0.0
      %2329 = vmatpush2.msra.mxu0 0.0
      %2330 = vmatprep.subr.mxu0 0.0
      %2331 = vmatpush2.msra.mxu0 0.0
      %2332 = vmatprep.subr.mxu0 0.0
      %2333 = vmatpush2.msra.mxu0 0.0
      %2334 = vmatprep.subr.mxu0 0.0
      %2335 = vmatpush2.msra.mxu0 0.0
      %2336 = vmatprep.subr.mxu0 0.0
      %2337 = vmatpush2.msra.mxu0 0.0
      %2338 = vmatprep.subr.mxu0 0.0
      %2339 = vmatpush2.msra.mxu0 0.0
      %2340 = vmatprep.subr.mxu0 0.0
      %2341 = vmatpush2.msra.mxu0 0.0
      %2342 = vmatprep.subr.mxu0 0.0
      %2343 = vmatpush2.msra.mxu0 0.0
      %2344 = vmatprep.subr.mxu0 0.0
      %2345 = vmatpush2.msra.mxu0 0.0
      %2346 = vmatprep.subr.mxu0 0.0
      %2347 = vmatpush2.msra.mxu0 0.0
      %2348 = vmatprep.subr.mxu0 0.0
      %2349 = vmatpush2.msra.mxu0 0.0
      %2350 = vmatprep.subr.mxu0 0.0
      %2351 = vmatpush2.msra.mxu0 0.0
      %2352 = vmatprep.subr.mxu0 0.0
      %2353 = vmatpush2.msra.mxu0 0.0
      %2354 = vmatprep.subr.mxu0 0.0
      %2355 = vmatpush2.msra.mxu0 0.0
      %2356 = vmatprep.subr.mxu0 0.0
      %2357 = vmatpush2.msra.mxu0 0.0
      %2358 = vmatprep.mubr.f32.mxu0 0.0
      %2359 = vmatmul.mubr.f32.gmra.mxu0 %v2283
      %v2360 = vpop.f32.mrf.mxu0
      %v2361 = vadd.f32 0.0, %v2360
      %v2362 = vpop.f32.mrf.mxu0
      %2363 = vmatprep.mubr.f32.mxu0 0.0
      %2364 = vmatmul.mubr.f32.gmra.mxu0 %v2286
      %v2365 = vpop.f32.mrf.mxu0
      %v2366 = vadd.f32 0.0, %v2365
      %v2367 = vpop.f32.mrf.mxu0
      %2368 = vmatprep.mubr.f32.mxu0 0.0
      %2369 = vmatmul.mubr.f32.gmra.mxu0 %v2289
      %v2370 = vpop.f32.mrf.mxu0
      %v2371 = vadd.f32 0.0, %v2370
      %v2372 = vpop.f32.mrf.mxu0
      %2373 = vmatprep.mubr.f32.mxu0 0.0
      %2374 = vmatmul.mubr.f32.gmra.mxu0 %v2292
      %v2375 = vpop.f32.mrf.mxu0
      %v2376 = vadd.f32 0.0, %v2375
      %v2377 = vpop.f32.mrf.mxu0
      %2378 = vdwg.mxu0
      %v2380 = vsel %vm716, %v1135, 0
      %v2383 = vsel %vm716, %v1208, 0
      %v2386 = vsel %vm716, %v1281, 0
      %v2389 = vsel %vm716, %v1354, 0
      %2391 = vmatprep.subr.mxu0 0.0
      %2392 = vmatpush1.msra.mxu0 0.0
      %2393 = vmatprep.subr.mxu0 0.0
      %2394 = vmatpush1.msra.mxu0 0.0
      %2395 = vmatprep.subr.mxu0 0.0
      %2396 = vmatpush1.msra.mxu0 0.0
      %2397 = vmatprep.subr.mxu0 0.0
      %2398 = vmatpush1.msra.mxu0 0.0
      %2399 = vmatprep.subr.mxu0 0.0
      %2400 = vmatpush1.msra.mxu0 0.0
      %2401 = vmatprep.subr.mxu0 0.0
      %2402 = vmatpush1.msra.mxu0 0.0
      %2403 = vmatprep.subr.mxu0 0.0
      %2404 = vmatpush1.msra.mxu0 0.0
      %2405 = vmatprep.subr.mxu0 0.0
      %2406 = vmatpush1.msra.mxu0 0.0
      %2407 = vmatprep.subr.mxu0 0.0
      %2408 = vmatpush1.msra.mxu0 0.0
      %2409 = vmatprep.subr.mxu0 0.0
      %2410 = vmatpush1.msra.mxu0 0.0
      %2411 = vmatprep.subr.mxu0 0.0
      %2412 = vmatpush1.msra.mxu0 0.0
      %2413 = vmatprep.subr.mxu0 0.0
      %2414 = vmatpush1.msra.mxu0 0.0
      %2415 = vmatprep.subr.mxu0 0.0
      %2416 = vmatpush1.msra.mxu0 0.0
      %2417 = vmatprep.subr.mxu0 0.0
      %2418 = vmatpush1.msra.mxu0 0.0
      %2419 = vmatprep.subr.mxu0 0.0
      %2420 = vmatpush1.msra.mxu0 0.0
      %2421 = vmatprep.subr.mxu0 0.0
      %2422 = vmatpush1.msra.mxu0 %v1357
      %2423 = vmatprep.subr.mxu0 0.0
      %2424 = vmatpush2.msra.mxu0 0.0
      %2425 = vmatprep.subr.mxu0 0.0
      %2426 = vmatpush2.msra.mxu0 0.0
      %2427 = vmatprep.subr.mxu0 0.0
      %2428 = vmatpush2.msra.mxu0 0.0
      %2429 = vmatprep.subr.mxu0 0.0
      %2430 = vmatpush2.msra.mxu0 0.0
      %2431 = vmatprep.subr.mxu0 0.0
      %2432 = vmatpush2.msra.mxu0 0.0
      %2433 = vmatprep.subr.mxu0 0.0
      %2434 = vmatpush2.msra.mxu0 0.0
      %2435 = vmatprep.subr.mxu0 0.0
      %2436 = vmatpush2.msra.mxu0 0.0
      %2437 = vmatprep.subr.mxu0 0.0
      %2438 = vmatpush2.msra.mxu0 0.0
      %2439 = vmatprep.subr.mxu0 0.0
      %2440 = vmatpush2.msra.mxu0 0.0
      %2441 = vmatprep.subr.mxu0 0.0
      %2442 = vmatpush2.msra.mxu0 0.0
      %2443 = vmatprep.subr.mxu0 0.0
      %2444 = vmatpush2.msra.mxu0 0.0
      %2445 = vmatprep.subr.mxu0 0.0
      %2446 = vmatpush2.msra.mxu0 0.0
      %2447 = vmatprep.subr.mxu0 0.0
      %2448 = vmatpush2.msra.mxu0 0.0
      %2449 = vmatprep.subr.mxu0 0.0
      %2450 = vmatpush2.msra.mxu0 0.0
      %2451 = vmatprep.subr.mxu0 0.0
      %2452 = vmatpush2.msra.mxu0 0.0
      %2453 = vmatprep.subr.mxu0 0.0
      %2454 = vmatpush2.msra.mxu0 0.0
      %2455 = vmatprep.mubr.f32.mxu0 0.0
      %2456 = vmatmul.mubr.f32.gmra.mxu0 %v2380
      %v2457 = vpop.f32.mrf.mxu0
      %v2458 = vadd.f32 %v2361, %v2457
      %v2459 = vpop.f32.mrf.mxu0
      %2460 = vmatprep.mubr.f32.mxu0 0.0
      %2461 = vmatmul.mubr.f32.gmra.mxu0 %v2383
      %v2462 = vpop.f32.mrf.mxu0
      %v2463 = vadd.f32 %v2366, %v2462
      %v2464 = vpop.f32.mrf.mxu0
      %2465 = vmatprep.mubr.f32.mxu0 0.0
      %2466 = vmatmul.mubr.f32.gmra.mxu0 %v2386
      %v2467 = vpop.f32.mrf.mxu0
      %v2468 = vadd.f32 %v2371, %v2467
      %v2469 = vpop.f32.mrf.mxu0
      %2470 = vmatprep.mubr.f32.mxu0 0.0
      %2471 = vmatmul.mubr.f32.gmra.mxu0 %v2389
      %v2472 = vpop.f32.mrf.mxu0
      %v2473 = vadd.f32 %v2376, %v2472
      %v2474 = vpop.f32.mrf.mxu0
      %2475 = vdwg.mxu0
      %s2476 = scalar_lea.vmem %s2, 64
      %v2477 = vld [vmem:[%s2476] sm:$0xff]
      %v2478 = vld [vmem:[%s2476 + $0x8] sm:$0xff]
      %v2479 = vld [vmem:[%s2476 + $0x10] sm:$0xff]
      %v2480 = vld [vmem:[%s2476 + $0x18] sm:$0xff]
      %s2481 = scalar_lea.vmem %s2, 192
      %v2482 = vld [vmem:[%s2481] sm:$0xff]
      %v2483 = vld [vmem:[%s2481 + $0x8] sm:$0xff]
      %v2484 = vld [vmem:[%s2481 + $0x10] sm:$0xff]
      %v2485 = vld [vmem:[%s2481 + $0x18] sm:$0xff]
      %s2486 = scalar_lea.vmem %s2, 320
      %v2487 = vld [vmem:[%s2486] sm:$0xff]
      %v2488 = vld [vmem:[%s2486 + $0x8] sm:$0xff]
      %v2489 = vld [vmem:[%s2486 + $0x10] sm:$0xff]
      %v2490 = vld [vmem:[%s2486 + $0x18] sm:$0xff]
      %s2491 = scalar_lea.vmem %s3, 2
      %v2492 = vld [vmem:[%s2491] sm:$0x1]
      %v2494 = vlaneseq
      %v2495 = vshrl.u32 %v2494, 7
      %v2496 = vsub.s32 0, %v2495
      %v2497 = vrot.slane %v2492, %v2496
      %2499 = vmatprep.subr.mxu0 0.0
      %2500 = vmatpush1.msra.mxu0 0.0
      %2501 = vmatprep.subr.mxu0 0.0
      %2502 = vmatpush1.msra.mxu0 0.0
      %2503 = vmatprep.subr.mxu0 0.0
      %2504 = vmatpush1.msra.mxu0 0.0
      %2505 = vmatprep.subr.mxu0 0.0
      %2506 = vmatpush1.msra.mxu0 0.0
      %2507 = vmatprep.subr.mxu0 0.0
      %2508 = vmatpush1.msra.mxu0 0.0
      %2509 = vmatprep.subr.mxu0 0.0
      %2510 = vmatpush1.msra.mxu0 0.0
      %2511 = vmatprep.subr.mxu0 0.0
      %2512 = vmatpush1.msra.mxu0 0.0
      %2513 = vmatprep.subr.mxu0 0.0
      %2514 = vmatpush1.msra.mxu0 0.0
      %2515 = vmatprep.subr.mxu0 0.0
      %2516 = vmatpush1.msra.mxu0 0.0
      %2517 = vmatprep.subr.mxu0 0.0
      %2518 = vmatpush1.msra.mxu0 0.0
      %2519 = vmatprep.subr.mxu0 0.0
      %2520 = vmatpush1.msra.mxu0 0.0
      %2521 = vmatprep.subr.mxu0 0.0
      %2522 = vmatpush1.msra.mxu0 0.0
      %2523 = vmatprep.subr.mxu0 0.0
      %2524 = vmatpush1.msra.mxu0 %v2480
      %2525 = vmatprep.subr.mxu0 0.0
      %2526 = vmatpush1.msra.mxu0 %v2479
      %2527 = vmatprep.subr.mxu0 0.0
      %2528 = vmatpush1.msra.mxu0 %v2478
      %2529 = vmatprep.subr.mxu0 0.0
      %2530 = vmatpush1.msra.mxu0 %v2477
      %2531 = vmatprep.subr.mxu0 0.0
      %2532 = vmatpush2.msra.mxu0 0.0
      %2533 = vmatprep.subr.mxu0 0.0
      %2534 = vmatpush2.msra.mxu0 0.0
      %2535 = vmatprep.subr.mxu0 0.0
      %2536 = vmatpush2.msra.mxu0 0.0
      %2537 = vmatprep.subr.mxu0 0.0
      %2538 = vmatpush2.msra.mxu0 0.0
      %2539 = vmatprep.subr.mxu0 0.0
      %2540 = vmatpush2.msra.mxu0 0.0
      %2541 = vmatprep.subr.mxu0 0.0
      %2542 = vmatpush2.msra.mxu0 0.0
      %2543 = vmatprep.subr.mxu0 0.0
      %2544 = vmatpush2.msra.mxu0 0.0
      %2545 = vmatprep.subr.mxu0 0.0
      %2546 = vmatpush2.msra.mxu0 0.0
      %2547 = vmatprep.subr.mxu0 0.0
      %2548 = vmatpush2.msra.mxu0 0.0
      %2549 = vmatprep.subr.mxu0 0.0
      %2550 = vmatpush2.msra.mxu0 0.0
      %2551 = vmatprep.subr.mxu0 0.0
      %2552 = vmatpush2.msra.mxu0 0.0
      %2553 = vmatprep.subr.mxu0 0.0
      %2554 = vmatpush2.msra.mxu0 0.0
      %2555 = vmatprep.subr.mxu0 0.0
      %2556 = vmatpush2.msra.mxu0 0.0
      %2557 = vmatprep.subr.mxu0 0.0
      %2558 = vmatpush2.msra.mxu0 0.0
      %2559 = vmatprep.subr.mxu0 0.0
      %2560 = vmatpush2.msra.mxu0 0.0
      %2561 = vmatprep.subr.mxu0 0.0
      %2562 = vmatpush2.msra.mxu0 0.0
      %2563 = vmatprep.mubr.f32.mxu0 0.0
      %2564 = vmatmul.mubr.f32.gmra.mxu0 %v446
      %v2565 = vpop.f32.mrf.mxu0
      %v2566 = vadd.f32 %v2497, %v2565
      %v2567 = vpop.f32.mrf.mxu0
      %2568 = vmatprep.mubr.f32.mxu0 0.0
      %2569 = vmatmul.mubr.f32.gmra.mxu0 %v449
      %v2570 = vpop.f32.mrf.mxu0
      %v2571 = vadd.f32 %v2497, %v2570
      %v2572 = vpop.f32.mrf.mxu0
      %2573 = vmatprep.mubr.f32.mxu0 0.0
      %2574 = vmatmul.mubr.f32.gmra.mxu0 %v452
      %v2575 = vpop.f32.mrf.mxu0
      %v2576 = vadd.f32 %v2497, %v2575
      %v2577 = vpop.f32.mrf.mxu0
      %2578 = vmatprep.mubr.f32.mxu0 0.0
      %2579 = vmatmul.mubr.f32.gmra.mxu0 %v455
      %v2580 = vpop.f32.mrf.mxu0
      %v2581 = vadd.f32 %v2497, %v2580
      %v2582 = vpop.f32.mrf.mxu0
      %2583 = vdwg.mxu0
      %v2584 = vmul.f32 %v2566, 0.35355338
      %v2585 = vmul.f32 %v2571, 0.35355338
      %v2586 = vmul.f32 %v2576, 0.35355338
      %v2587 = vmul.f32 %v2581, 0.35355338
      %2588 = vmatprep.subr.mxu0 0.0
      %2589 = vmatpush1.msra.mxu0 0.0
      %2590 = vmatprep.subr.mxu0 0.0
      %2591 = vmatpush1.msra.mxu0 0.0
      %2592 = vmatprep.subr.mxu0 0.0
      %2593 = vmatpush1.msra.mxu0 0.0
      %2594 = vmatprep.subr.mxu0 0.0
      %2595 = vmatpush1.msra.mxu0 0.0
      %2596 = vmatprep.subr.mxu0 0.0
      %2597 = vmatpush1.msra.mxu0 0.0
      %2598 = vmatprep.subr.mxu0 0.0
      %2599 = vmatpush1.msra.mxu0 0.0
      %2600 = vmatprep.subr.mxu0 0.0
      %2601 = vmatpush1.msra.mxu0 0.0
      %2602 = vmatprep.subr.mxu0 0.0
      %2603 = vmatpush1.msra.mxu0 0.0
      %2604 = vmatprep.subr.mxu0 0.0
      %2605 = vmatpush1.msra.mxu0 0.0
      %2606 = vmatprep.subr.mxu0 0.0
      %2607 = vmatpush1.msra.mxu0 0.0
      %2608 = vmatprep.subr.mxu0 0.0
      %2609 = vmatpush1.msra.mxu0 0.0
      %2610 = vmatprep.subr.mxu0 0.0
      %2611 = vmatpush1.msra.mxu0 0.0
      %2612 = vmatprep.subr.mxu0 0.0
      %2613 = vmatpush1.msra.mxu0 %v2485
      %2614 = vmatprep.subr.mxu0 0.0
      %2615 = vmatpush1.msra.mxu0 %v2484
      %2616 = vmatprep.subr.mxu0 0.0
      %2617 = vmatpush1.msra.mxu0 %v2483
      %2618 = vmatprep.subr.mxu0 0.0
      %2619 = vmatpush1.msra.mxu0 %v2482
      %2620 = vmatprep.subr.mxu0 0.0
      %2621 = vmatpush2.msra.mxu0 0.0
      %2622 = vmatprep.subr.mxu0 0.0
      %2623 = vmatpush2.msra.mxu0 0.0
      %2624 = vmatprep.subr.mxu0 0.0
      %2625 = vmatpush2.msra.mxu0 0.0
      %2626 = vmatprep.subr.mxu0 0.0
      %2627 = vmatpush2.msra.mxu0 0.0
      %2628 = vmatprep.subr.mxu0 0.0
      %2629 = vmatpush2.msra.mxu0 0.0
      %2630 = vmatprep.subr.mxu0 0.0
      %2631 = vmatpush2.msra.mxu0 0.0
      %2632 = vmatprep.subr.mxu0 0.0
      %2633 = vmatpush2.msra.mxu0 0.0
      %2634 = vmatprep.subr.mxu0 0.0
      %2635 = vmatpush2.msra.mxu0 0.0
      %2636 = vmatprep.subr.mxu0 0.0
      %2637 = vmatpush2.msra.mxu0 0.0
      %2638 = vmatprep.subr.mxu0 0.0
      %2639 = vmatpush2.msra.mxu0 0.0
      %2640 = vmatprep.subr.mxu0 0.0
      %2641 = vmatpush2.msra.mxu0 0.0
      %2642 = vmatprep.subr.mxu0 0.0
      %2643 = vmatpush2.msra.mxu0 0.0
      %2644 = vmatprep.subr.mxu0 0.0
      %2645 = vmatpush2.msra.mxu0 0.0
      %2646 = vmatprep.subr.mxu0 0.0
      %2647 = vmatpush2.msra.mxu0 0.0
      %2648 = vmatprep.subr.mxu0 0.0
      %2649 = vmatpush2.msra.mxu0 0.0
      %2650 = vmatprep.subr.mxu0 0.0
      %2651 = vmatpush2.msra.mxu0 0.0
      %2652 = vmatprep.mubr.f32.mxu0 0.0
      %2653 = vmatmul.mubr.f32.gmra.mxu0 %v446
      %v2654 = vpop.f32.mrf.mxu0
      %v2655 = vadd.f32 0.0, %v2654
      %v2656 = vpop.f32.mrf.mxu0
      %2657 = vmatprep.mubr.f32.mxu0 0.0
      %2658 = vmatmul.mubr.f32.gmra.mxu0 %v449
      %v2659 = vpop.f32.mrf.mxu0
      %v2660 = vadd.f32 0.0, %v2659
      %v2661 = vpop.f32.mrf.mxu0
      %2662 = vmatprep.mubr.f32.mxu0 0.0
      %2663 = vmatmul.mubr.f32.gmra.mxu0 %v452
      %v2664 = vpop.f32.mrf.mxu0
      %v2665 = vadd.f32 0.0, %v2664
      %v2666 = vpop.f32.mrf.mxu0
      %2667 = vmatprep.mubr.f32.mxu0 0.0
      %2668 = vmatmul.mubr.f32.gmra.mxu0 %v455
      %v2669 = vpop.f32.mrf.mxu0
      %v2670 = vadd.f32 0.0, %v2669
      %v2671 = vpop.f32.mrf.mxu0
      %2672 = vdwg.mxu0
      %2673 = vmatprep.subr.mxu0 0.0
      %2674 = vmatpush1.msra.mxu0 0.0
      %2675 = vmatprep.subr.mxu0 0.0
      %2676 = vmatpush1.msra.mxu0 0.0
      %2677 = vmatprep.subr.mxu0 0.0
      %2678 = vmatpush1.msra.mxu0 0.0
      %2679 = vmatprep.subr.mxu0 0.0
      %2680 = vmatpush1.msra.mxu0 0.0
      %2681 = vmatprep.subr.mxu0 0.0
      %2682 = vmatpush1.msra.mxu0 0.0
      %2683 = vmatprep.subr.mxu0 0.0
      %2684 = vmatpush1.msra.mxu0 0.0
      %2685 = vmatprep.subr.mxu0 0.0
      %2686 = vmatpush1.msra.mxu0 0.0
      %2687 = vmatprep.subr.mxu0 0.0
      %2688 = vmatpush1.msra.mxu0 0.0
      %2689 = vmatprep.subr.mxu0 0.0
      %2690 = vmatpush1.msra.mxu0 0.0
      %2691 = vmatprep.subr.mxu0 0.0
      %2692 = vmatpush1.msra.mxu0 0.0
      %2693 = vmatprep.subr.mxu0 0.0
      %2694 = vmatpush1.msra.mxu0 0.0
      %2695 = vmatprep.subr.mxu0 0.0
      %2696 = vmatpush1.msra.mxu0 0.0
      %2697 = vmatprep.subr.mxu0 0.0
      %2698 = vmatpush1.msra.mxu0 %v2490
      %2699 = vmatprep.subr.mxu0 0.0
      %2700 = vmatpush1.msra.mxu0 %v2489
      %2701 = vmatprep.subr.mxu0 0.0
      %2702 = vmatpush1.msra.mxu0 %v2488
      %2703 = vmatprep.subr.mxu0 0.0
      %2704 = vmatpush1.msra.mxu0 %v2487
      %2705 = vmatprep.subr.mxu0 0.0
      %2706 = vmatpush2.msra.mxu0 0.0
      %2707 = vmatprep.subr.mxu0 0.0
      %2708 = vmatpush2.msra.mxu0 0.0
      %2709 = vmatprep.subr.mxu0 0.0
      %2710 = vmatpush2.msra.mxu0 0.0
      %2711 = vmatprep.subr.mxu0 0.0
      %2712 = vmatpush2.msra.mxu0 0.0
      %2713 = vmatprep.subr.mxu0 0.0
      %2714 = vmatpush2.msra.mxu0 0.0
      %2715 = vmatprep.subr.mxu0 0.0
      %2716 = vmatpush2.msra.mxu0 0.0
      %2717 = vmatprep.subr.mxu0 0.0
      %2718 = vmatpush2.msra.mxu0 0.0
      %2719 = vmatprep.subr.mxu0 0.0
      %2720 = vmatpush2.msra.mxu0 0.0
      %2721 = vmatprep.subr.mxu0 0.0
      %2722 = vmatpush2.msra.mxu0 0.0
      %2723 = vmatprep.subr.mxu0 0.0
      %2724 = vmatpush2.msra.mxu0 0.0
      %2725 = vmatprep.subr.mxu0 0.0
      %2726 = vmatpush2.msra.mxu0 0.0
      %2727 = vmatprep.subr.mxu0 0.0
      %2728 = vmatpush2.msra.mxu0 0.0
      %2729 = vmatprep.subr.mxu0 0.0
      %2730 = vmatpush2.msra.mxu0 0.0
      %2731 = vmatprep.subr.mxu0 0.0
      %2732 = vmatpush2.msra.mxu0 0.0
      %2733 = vmatprep.subr.mxu0 0.0
      %2734 = vmatpush2.msra.mxu0 0.0
      %2735 = vmatprep.subr.mxu0 0.0
      %2736 = vmatpush2.msra.mxu0 0.0
      %2737 = vmatprep.mubr.f32.mxu0 0.0
      %2738 = vmatmul.mubr.f32.gmra.mxu0 %v446
      %v2739 = vpop.f32.mrf.mxu0
      %v2740 = vadd.f32 0.0, %v2739
      %v2741 = vpop.f32.mrf.mxu0
      %2742 = vmatprep.mubr.f32.mxu0 0.0
      %2743 = vmatmul.mubr.f32.gmra.mxu0 %v449
      %v2744 = vpop.f32.mrf.mxu0
      %v2745 = vadd.f32 0.0, %v2744
      %v2746 = vpop.f32.mrf.mxu0
      %2747 = vmatprep.mubr.f32.mxu0 0.0
      %2748 = vmatmul.mubr.f32.gmra.mxu0 %v452
      %v2749 = vpop.f32.mrf.mxu0
      %v2750 = vadd.f32 0.0, %v2749
      %v2751 = vpop.f32.mrf.mxu0
      %2752 = vmatprep.mubr.f32.mxu0 0.0
      %2753 = vmatmul.mubr.f32.gmra.mxu0 %v455
      %v2754 = vpop.f32.mrf.mxu0
      %v2755 = vadd.f32 0.0, %v2754
      %v2756 = vpop.f32.mrf.mxu0
      %2757 = vdwg.mxu0
      %v2759 = vsel %vm716, %v2584, 0
      %v2762 = vsel %vm716, %v2655, 0
      %2764 = vmatprep.subr.mxu0 0.0
      %2765 = vmatpush1.xpose.msra.mxu0 0.0
      %2766 = vmatprep.subr.mxu0 0.0
      %2767 = vmatpush1.xpose.msra.mxu0 0.0
      %2768 = vmatprep.subr.mxu0 0.0
      %2769 = vmatpush1.xpose.msra.mxu0 0.0
      %2770 = vmatprep.subr.mxu0 0.0
      %2771 = vmatpush1.xpose.msra.mxu0 0.0
      %2772 = vmatprep.subr.mxu0 0.0
      %2773 = vmatpush1.xpose.msra.mxu0 0.0
      %2774 = vmatprep.subr.mxu0 0.0
      %2775 = vmatpush1.xpose.msra.mxu0 0.0
      %2776 = vmatprep.subr.mxu0 0.0
      %2777 = vmatpush1.xpose.msra.mxu0 0.0
      %2778 = vmatprep.subr.mxu0 0.0
      %2779 = vmatpush1.xpose.msra.mxu0 0.0
      %2780 = vmatprep.subr.mxu0 0.0
      %2781 = vmatpush1.xpose.msra.mxu0 0.0
      %2782 = vmatprep.subr.mxu0 0.0
      %2783 = vmatpush1.xpose.msra.mxu0 0.0
      %2784 = vmatprep.subr.mxu0 0.0
      %2785 = vmatpush1.xpose.msra.mxu0 0.0
      %2786 = vmatprep.subr.mxu0 0.0
      %2787 = vmatpush1.xpose.msra.mxu0 0.0
      %2788 = vmatprep.subr.mxu0 0.0
      %2789 = vmatpush1.xpose.msra.mxu0 0.0
      %2790 = vmatprep.subr.mxu0 0.0
      %2791 = vmatpush1.xpose.msra.mxu0 0.0
      %2792 = vmatprep.subr.mxu0 0.0
      %2793 = vmatpush1.xpose.msra.mxu0 0.0
      %2794 = vmatprep.subr.mxu0 0.0
      %2795 = vmatpush1.xpose.msra.mxu0 %v2762
      %2796 = vmatprep.subr.mxu0 0.0
      %2797 = vmatpush2.xpose.msra.mxu0 0.0
      %2798 = vmatprep.subr.mxu0 0.0
      %2799 = vmatpush2.xpose.msra.mxu0 0.0
      %2800 = vmatprep.subr.mxu0 0.0
      %2801 = vmatpush2.xpose.msra.mxu0 0.0
      %2802 = vmatprep.subr.mxu0 0.0
      %2803 = vmatpush2.xpose.msra.mxu0 0.0
      %2804 = vmatprep.subr.mxu0 0.0
      %2805 = vmatpush2.xpose.msra.mxu0 0.0
      %2806 = vmatprep.subr.mxu0 0.0
      %2807 = vmatpush2.xpose.msra.mxu0 0.0
      %2808 = vmatprep.subr.mxu0 0.0
      %2809 = vmatpush2.xpose.msra.mxu0 0.0
      %2810 = vmatprep.subr.mxu0 0.0
      %2811 = vmatpush2.xpose.msra.mxu0 0.0
      %2812 = vmatprep.subr.mxu0 0.0
      %2813 = vmatpush2.xpose.msra.mxu0 0.0
      %2814 = vmatprep.subr.mxu0 0.0
      %2815 = vmatpush2.xpose.msra.mxu0 0.0
      %2816 = vmatprep.subr.mxu0 0.0
      %2817 = vmatpush2.xpose.msra.mxu0 0.0
      %2818 = vmatprep.subr.mxu0 0.0
      %2819 = vmatpush2.xpose.msra.mxu0 0.0
      %2820 = vmatprep.subr.mxu0 0.0
      %2821 = vmatpush2.xpose.msra.mxu0 0.0
      %2822 = vmatprep.subr.mxu0 0.0
      %2823 = vmatpush2.xpose.msra.mxu0 0.0
      %2824 = vmatprep.subr.mxu0 0.0
      %2825 = vmatpush2.xpose.msra.mxu0 0.0
      %2826 = vmatprep.subr.mxu0 0.0
      %2827 = vmatpush2.xpose.msra.mxu0 0.0
      %2828 = vmatprep.mubr.f32.mxu0 0.0
      %2829 = vmatmul.mubr.f32.gmra.mxu0 %v2759
      %v2830 = vpop.f32.mrf.mxu0
      %v2831 = vadd.f32 0.0, %v2830
      %v2832 = vpop.f32.mrf.mxu0
      %2833 = vdwg.mxu0
      %v2835 = vsel %vm716, %v2585, 0
      %v2838 = vsel %vm716, %v2660, 0
      %2840 = vmatprep.subr.mxu0 0.0
      %2841 = vmatpush1.xpose.msra.mxu0 0.0
      %2842 = vmatprep.subr.mxu0 0.0
      %2843 = vmatpush1.xpose.msra.mxu0 0.0
      %2844 = vmatprep.subr.mxu0 0.0
      %2845 = vmatpush1.xpose.msra.mxu0 0.0
      %2846 = vmatprep.subr.mxu0 0.0
      %2847 = vmatpush1.xpose.msra.mxu0 0.0
      %2848 = vmatprep.subr.mxu0 0.0
      %2849 = vmatpush1.xpose.msra.mxu0 0.0
      %2850 = vmatprep.subr.mxu0 0.0
      %2851 = vmatpush1.xpose.msra.mxu0 0.0
      %2852 = vmatprep.subr.mxu0 0.0
      %2853 = vmatpush1.xpose.msra.mxu0 0.0
      %2854 = vmatprep.subr.mxu0 0.0
      %2855 = vmatpush1.xpose.msra.mxu0 0.0
      %2856 = vmatprep.subr.mxu0 0.0
      %2857 = vmatpush1.xpose.msra.mxu0 0.0
      %2858 = vmatprep.subr.mxu0 0.0
      %2859 = vmatpush1.xpose.msra.mxu0 0.0
      %2860 = vmatprep.subr.mxu0 0.0
      %2861 = vmatpush1.xpose.msra.mxu0 0.0
      %2862 = vmatprep.subr.mxu0 0.0
      %2863 = vmatpush1.xpose.msra.mxu0 0.0
      %2864 = vmatprep.subr.mxu0 0.0
      %2865 = vmatpush1.xpose.msra.mxu0 0.0
      %2866 = vmatprep.subr.mxu0 0.0
      %2867 = vmatpush1.xpose.msra.mxu0 0.0
      %2868 = vmatprep.subr.mxu0 0.0
      %2869 = vmatpush1.xpose.msra.mxu0 0.0
      %2870 = vmatprep.subr.mxu0 0.0
      %2871 = vmatpush1.xpose.msra.mxu0 %v2838
      %2872 = vmatprep.subr.mxu0 0.0
      %2873 = vmatpush2.xpose.msra.mxu0 0.0
      %2874 = vmatprep.subr.mxu0 0.0
      %2875 = vmatpush2.xpose.msra.mxu0 0.0
      %2876 = vmatprep.subr.mxu0 0.0
      %2877 = vmatpush2.xpose.msra.mxu0 0.0
      %2878 = vmatprep.subr.mxu0 0.0
      %2879 = vmatpush2.xpose.msra.mxu0 0.0
      %2880 = vmatprep.subr.mxu0 0.0
      %2881 = vmatpush2.xpose.msra.mxu0 0.0
      %2882 = vmatprep.subr.mxu0 0.0
      %2883 = vmatpush2.xpose.msra.mxu0 0.0
      %2884 = vmatprep.subr.mxu0 0.0
      %2885 = vmatpush2.xpose.msra.mxu0 0.0
      %2886 = vmatprep.subr.mxu0 0.0
      %2887 = vmatpush2.xpose.msra.mxu0 0.0
      %2888 = vmatprep.subr.mxu0 0.0
      %2889 = vmatpush2.xpose.msra.mxu0 0.0
      %2890 = vmatprep.subr.mxu0 0.0
      %2891 = vmatpush2.xpose.msra.mxu0 0.0
      %2892 = vmatprep.subr.mxu0 0.0
      %2893 = vmatpush2.xpose.msra.mxu0 0.0
      %2894 = vmatprep.subr.mxu0 0.0
      %2895 = vmatpush2.xpose.msra.mxu0 0.0
      %2896 = vmatprep.subr.mxu0 0.0
      %2897 = vmatpush2.xpose.msra.mxu0 0.0
      %2898 = vmatprep.subr.mxu0 0.0
      %2899 = vmatpush2.xpose.msra.mxu0 0.0
      %2900 = vmatprep.subr.mxu0 0.0
      %2901 = vmatpush2.xpose.msra.mxu0 0.0
      %2902 = vmatprep.subr.mxu0 0.0
      %2903 = vmatpush2.xpose.msra.mxu0 0.0
      %2904 = vmatprep.mubr.f32.mxu0 0.0
      %2905 = vmatmul.mubr.f32.gmra.mxu0 %v2835
      %v2906 = vpop.f32.mrf.mxu0
      %v2907 = vadd.f32 0.0, %v2906
      %v2908 = vpop.f32.mrf.mxu0
      %2909 = vdwg.mxu0
      %v2911 = vsel %vm716, %v2586, 0
      %v2914 = vsel %vm716, %v2665, 0
      %2916 = vmatprep.subr.mxu0 0.0
      %2917 = vmatpush1.xpose.msra.mxu0 0.0
      %2918 = vmatprep.subr.mxu0 0.0
      %2919 = vmatpush1.xpose.msra.mxu0 0.0
      %2920 = vmatprep.subr.mxu0 0.0
      %2921 = vmatpush1.xpose.msra.mxu0 0.0
      %2922 = vmatprep.subr.mxu0 0.0
      %2923 = vmatpush1.xpose.msra.mxu0 0.0
      %2924 = vmatprep.subr.mxu0 0.0
      %2925 = vmatpush1.xpose.msra.mxu0 0.0
      %2926 = vmatprep.subr.mxu0 0.0
      %2927 = vmatpush1.xpose.msra.mxu0 0.0
      %2928 = vmatprep.subr.mxu0 0.0
      %2929 = vmatpush1.xpose.msra.mxu0 0.0
      %2930 = vmatprep.subr.mxu0 0.0
      %2931 = vmatpush1.xpose.msra.mxu0 0.0
      %2932 = vmatprep.subr.mxu0 0.0
      %2933 = vmatpush1.xpose.msra.mxu0 0.0
      %2934 = vmatprep.subr.mxu0 0.0
      %2935 = vmatpush1.xpose.msra.mxu0 0.0
      %2936 = vmatprep.subr.mxu0 0.0
      %2937 = vmatpush1.xpose.msra.mxu0 0.0
      %2938 = vmatprep.subr.mxu0 0.0
      %2939 = vmatpush1.xpose.msra.mxu0 0.0
      %2940 = vmatprep.subr.mxu0 0.0
      %2941 = vmatpush1.xpose.msra.mxu0 0.0
      %2942 = vmatprep.subr.mxu0 0.0
      %2943 = vmatpush1.xpose.msra.mxu0 0.0
      %2944 = vmatprep.subr.mxu0 0.0
      %2945 = vmatpush1.xpose.msra.mxu0 0.0
      %2946 = vmatprep.subr.mxu0 0.0
      %2947 = vmatpush1.xpose.msra.mxu0 %v2914
      %2948 = vmatprep.subr.mxu0 0.0
      %2949 = vmatpush2.xpose.msra.mxu0 0.0
      %2950 = vmatprep.subr.mxu0 0.0
      %2951 = vmatpush2.xpose.msra.mxu0 0.0
      %2952 = vmatprep.subr.mxu0 0.0
      %2953 = vmatpush2.xpose.msra.mxu0 0.0
      %2954 = vmatprep.subr.mxu0 0.0
      %2955 = vmatpush2.xpose.msra.mxu0 0.0
      %2956 = vmatprep.subr.mxu0 0.0
      %2957 = vmatpush2.xpose.msra.mxu0 0.0
      %2958 = vmatprep.subr.mxu0 0.0
      %2959 = vmatpush2.xpose.msra.mxu0 0.0
      %2960 = vmatprep.subr.mxu0 0.0
      %2961 = vmatpush2.xpose.msra.mxu0 0.0
      %2962 = vmatprep.subr.mxu0 0.0
      %2963 = vmatpush2.xpose.msra.mxu0 0.0
      %2964 = vmatprep.subr.mxu0 0.0
      %2965 = vmatpush2.xpose.msra.mxu0 0.0
      %2966 = vmatprep.subr.mxu0 0.0
      %2967 = vmatpush2.xpose.msra.mxu0 0.0
      %2968 = vmatprep.subr.mxu0 0.0
      %2969 = vmatpush2.xpose.msra.mxu0 0.0
      %2970 = vmatprep.subr.mxu0 0.0
      %2971 = vmatpush2.xpose.msra.mxu0 0.0
      %2972 = vmatprep.subr.mxu0 0.0
      %2973 = vmatpush2.xpose.msra.mxu0 0.0
      %2974 = vmatprep.subr.mxu0 0.0
      %2975 = vmatpush2.xpose.msra.mxu0 0.0
      %2976 = vmatprep.subr.mxu0 0.0
      %2977 = vmatpush2.xpose.msra.mxu0 0.0
      %2978 = vmatprep.subr.mxu0 0.0
      %2979 = vmatpush2.xpose.msra.mxu0 0.0
      %2980 = vmatprep.mubr.f32.mxu0 0.0
      %2981 = vmatmul.mubr.f32.gmra.mxu0 %v2911
      %v2982 = vpop.f32.mrf.mxu0
      %v2983 = vadd.f32 0.0, %v2982
      %v2984 = vpop.f32.mrf.mxu0
      %2985 = vdwg.mxu0
      %v2987 = vsel %vm716, %v2587, 0
      %v2990 = vsel %vm716, %v2670, 0
      %2992 = vmatprep.subr.mxu0 0.0
      %2993 = vmatpush1.xpose.msra.mxu0 0.0
      %2994 = vmatprep.subr.mxu0 0.0
      %2995 = vmatpush1.xpose.msra.mxu0 0.0
      %2996 = vmatprep.subr.mxu0 0.0
      %2997 = vmatpush1.xpose.msra.mxu0 0.0
      %2998 = vmatprep.subr.mxu0 0.0
      %2999 = vmatpush1.xpose.msra.mxu0 0.0
      %3000 = vmatprep.subr.mxu0 0.0
      %3001 = vmatpush1.xpose.msra.mxu0 0.0
      %3002 = vmatprep.subr.mxu0 0.0
      %3003 = vmatpush1.xpose.msra.mxu0 0.0
      %3004 = vmatprep.subr.mxu0 0.0
      %3005 = vmatpush1.xpose.msra.mxu0 0.0
      %3006 = vmatprep.subr.mxu0 0.0
      %3007 = vmatpush1.xpose.msra.mxu0 0.0
      %3008 = vmatprep.subr.mxu0 0.0
      %3009 = vmatpush1.xpose.msra.mxu0 0.0
      %3010 = vmatprep.subr.mxu0 0.0
      %3011 = vmatpush1.xpose.msra.mxu0 0.0
      %3012 = vmatprep.subr.mxu0 0.0
      %3013 = vmatpush1.xpose.msra.mxu0 0.0
      %3014 = vmatprep.subr.mxu0 0.0
      %3015 = vmatpush1.xpose.msra.mxu0 0.0
      %3016 = vmatprep.subr.mxu0 0.0
      %3017 = vmatpush1.xpose.msra.mxu0 0.0
      %3018 = vmatprep.subr.mxu0 0.0
      %3019 = vmatpush1.xpose.msra.mxu0 0.0
      %3020 = vmatprep.subr.mxu0 0.0
      %3021 = vmatpush1.xpose.msra.mxu0 0.0
      %3022 = vmatprep.subr.mxu0 0.0
      %3023 = vmatpush1.xpose.msra.mxu0 %v2990
      %3024 = vmatprep.subr.mxu0 0.0
      %3025 = vmatpush2.xpose.msra.mxu0 0.0
      %3026 = vmatprep.subr.mxu0 0.0
      %3027 = vmatpush2.xpose.msra.mxu0 0.0
      %3028 = vmatprep.subr.mxu0 0.0
      %3029 = vmatpush2.xpose.msra.mxu0 0.0
      %3030 = vmatprep.subr.mxu0 0.0
      %3031 = vmatpush2.xpose.msra.mxu0 0.0
      %3032 = vmatprep.subr.mxu0 0.0
      %3033 = vmatpush2.xpose.msra.mxu0 0.0
      %3034 = vmatprep.subr.mxu0 0.0
      %3035 = vmatpush2.xpose.msra.mxu0 0.0
      %3036 = vmatprep.subr.mxu0 0.0
      %3037 = vmatpush2.xpose.msra.mxu0 0.0
      %3038 = vmatprep.subr.mxu0 0.0
      %3039 = vmatpush2.xpose.msra.mxu0 0.0
      %3040 = vmatprep.subr.mxu0 0.0
      %3041 = vmatpush2.xpose.msra.mxu0 0.0
      %3042 = vmatprep.subr.mxu0 0.0
      %3043 = vmatpush2.xpose.msra.mxu0 0.0
      %3044 = vmatprep.subr.mxu0 0.0
      %3045 = vmatpush2.xpose.msra.mxu0 0.0
      %3046 = vmatprep.subr.mxu0 0.0
      %3047 = vmatpush2.xpose.msra.mxu0 0.0
      %3048 = vmatprep.subr.mxu0 0.0
      %3049 = vmatpush2.xpose.msra.mxu0 0.0
      %3050 = vmatprep.subr.mxu0 0.0
      %3051 = vmatpush2.xpose.msra.mxu0 0.0
      %3052 = vmatprep.subr.mxu0 0.0
      %3053 = vmatpush2.xpose.msra.mxu0 0.0
      %3054 = vmatprep.subr.mxu0 0.0
      %3055 = vmatpush2.xpose.msra.mxu0 0.0
      %3056 = vmatprep.mubr.f32.mxu0 0.0
      %3057 = vmatmul.mubr.f32.gmra.mxu0 %v2987
      %v3058 = vpop.f32.mrf.mxu0
      %v3059 = vadd.f32 0.0, %v3058
      %v3060 = vpop.f32.mrf.mxu0
      %3061 = vdwg.mxu0
      %v3062 = vsel %vm716, %v2831, -inf
      %3063 = vmax.xlane.f32.xlu0 %v3062
      %v3064 = vpop.xlane.xlu0 %3063
      %v3065 = vsel %vm716, %v2907, -inf
      %3066 = vmax.xlane.f32.xlu0 %v3065
      %v3067 = vpop.xlane.xlu0 %3066
      %v3068 = vsel %vm716, %v2983, -inf
      %3069 = vmax.xlane.f32.xlu0 %v3068
      %v3070 = vpop.xlane.xlu0 %3069
      %v3071 = vsel %vm716, %v3059, -inf
      %3072 = vmax.xlane.f32.xlu0 %v3071
      %v3073 = vpop.xlane.xlu0 %3072
      %v3074 = vsub.f32 %v2831, %v3064
      %v3075 = vsub.f32 %v2907, %v3067
      %v3076 = vsub.f32 %v2983, %v3070
      %v3077 = vsub.f32 %v3059, %v3073
      %v3078 = vmul.f32 %v3074, 1.442695
      %v3079 = vpow.pop %v3078
      %v3080 = vmul.f32 %v3075, 1.442695
      %v3081 = vpow.pop %v3080
      %v3082 = vmul.f32 %v3076, 1.442695
      %v3083 = vpow.pop %v3082
      %v3084 = vmul.f32 %v3077, 1.442695
      %v3085 = vpow.pop %v3084
      %v3086 = vsel %vm716, %v3079, 0.0
      %3087 = vadd.xlane.f32.xlu0 %v3086
      %v3088 = vpop.xlane.xlu0 %3087
      %v3089 = vsel %vm716, %v3081, 0.0
      %3090 = vadd.xlane.f32.xlu0 %v3089
      %v3091 = vpop.xlane.xlu0 %3090
      %v3092 = vsel %vm716, %v3083, 0.0
      %3093 = vadd.xlane.f32.xlu0 %v3092
      %v3094 = vpop.xlane.xlu0 %3093
      %v3095 = vsel %vm716, %v3085, 0.0
      %3096 = vadd.xlane.f32.xlu0 %v3095
      %v3097 = vpop.xlane.xlu0 %3096
      %v3098 = vrcp.pop %v3088
      %v3099 = vrcp.pop %v3091
      %v3100 = vrcp.pop %v3094
      %v3101 = vrcp.pop %v3097
      %v3102 = vmul.f32 %v3079, %v3098
      %v3103 = vmul.f32 %v3081, %v3099
      %v3104 = vmul.f32 %v3083, %v3100
      %v3105 = vmul.f32 %v3085, %v3101
      %v3107 = vsel %vm716, %v3102, 0
      %3109 = vmatprep.subr.mxu0 0.0
      %3110 = vmatpush1.msra.mxu0 0.0
      %3111 = vmatprep.subr.mxu0 0.0
      %3112 = vmatpush1.msra.mxu0 0.0
      %3113 = vmatprep.subr.mxu0 0.0
      %3114 = vmatpush1.msra.mxu0 0.0
      %3115 = vmatprep.subr.mxu0 0.0
      %3116 = vmatpush1.msra.mxu0 0.0
      %3117 = vmatprep.subr.mxu0 0.0
      %3118 = vmatpush1.msra.mxu0 0.0
      %3119 = vmatprep.subr.mxu0 0.0
      %3120 = vmatpush1.msra.mxu0 0.0
      %3121 = vmatprep.subr.mxu0 0.0
      %3122 = vmatpush1.msra.mxu0 0.0
      %3123 = vmatprep.subr.mxu0 0.0
      %3124 = vmatpush1.msra.mxu0 0.0
      %3125 = vmatprep.subr.mxu0 0.0
      %3126 = vmatpush1.msra.mxu0 0.0
      %3127 = vmatprep.subr.mxu0 0.0
      %3128 = vmatpush1.msra.mxu0 0.0
      %3129 = vmatprep.subr.mxu0 0.0
      %3130 = vmatpush1.msra.mxu0 0.0
      %3131 = vmatprep.subr.mxu0 0.0
      %3132 = vmatpush1.msra.mxu0 0.0
      %3133 = vmatprep.subr.mxu0 0.0
      %3134 = vmatpush1.msra.mxu0 0.0
      %3135 = vmatprep.subr.mxu0 0.0
      %3136 = vmatpush1.msra.mxu0 0.0
      %3137 = vmatprep.subr.mxu0 0.0
      %3138 = vmatpush1.msra.mxu0 0.0
      %3139 = vmatprep.subr.mxu0 0.0
      %3140 = vmatpush1.msra.mxu0 %v2740
      %3141 = vmatprep.subr.mxu0 0.0
      %3142 = vmatpush2.msra.mxu0 0.0
      %3143 = vmatprep.subr.mxu0 0.0
      %3144 = vmatpush2.msra.mxu0 0.0
      %3145 = vmatprep.subr.mxu0 0.0
      %3146 = vmatpush2.msra.mxu0 0.0
      %3147 = vmatprep.subr.mxu0 0.0
      %3148 = vmatpush2.msra.mxu0 0.0
      %3149 = vmatprep.subr.mxu0 0.0
      %3150 = vmatpush2.msra.mxu0 0.0
      %3151 = vmatprep.subr.mxu0 0.0
      %3152 = vmatpush2.msra.mxu0 0.0
      %3153 = vmatprep.subr.mxu0 0.0
      %3154 = vmatpush2.msra.mxu0 0.0
      %3155 = vmatprep.subr.mxu0 0.0
      %3156 = vmatpush2.msra.mxu0 0.0
      %3157 = vmatprep.subr.mxu0 0.0
      %3158 = vmatpush2.msra.mxu0 0.0
      %3159 = vmatprep.subr.mxu0 0.0
      %3160 = vmatpush2.msra.mxu0 0.0
      %3161 = vmatprep.subr.mxu0 0.0
      %3162 = vmatpush2.msra.mxu0 0.0
      %3163 = vmatprep.subr.mxu0 0.0
      %3164 = vmatpush2.msra.mxu0 0.0
      %3165 = vmatprep.subr.mxu0 0.0
      %3166 = vmatpush2.msra.mxu0 0.0
      %3167 = vmatprep.subr.mxu0 0.0
      %3168 = vmatpush2.msra.mxu0 0.0
      %3169 = vmatprep.subr.mxu0 0.0
      %3170 = vmatpush2.msra.mxu0 0.0
      %3171 = vmatprep.subr.mxu0 0.0
      %3172 = vmatpush2.msra.mxu0 0.0
      %3173 = vmatprep.mubr.f32.mxu0 0.0
      %3174 = vmatmul.mubr.f32.gmra.mxu0 %v3107
      %v3175 = vpop.f32.mrf.mxu0
      %v3176 = vadd.f32 0.0, %v3175
      %v3177 = vpop.f32.mrf.mxu0
      %3178 = vdwg.mxu0
      %v3180 = vsel %vm716, %v3103, 0
      %3182 = vmatprep.subr.mxu0 0.0
      %3183 = vmatpush1.msra.mxu0 0.0
      %3184 = vmatprep.subr.mxu0 0.0
      %3185 = vmatpush1.msra.mxu0 0.0
      %3186 = vmatprep.subr.mxu0 0.0
      %3187 = vmatpush1.msra.mxu0 0.0
      %3188 = vmatprep.subr.mxu0 0.0
      %3189 = vmatpush1.msra.mxu0 0.0
      %3190 = vmatprep.subr.mxu0 0.0
      %3191 = vmatpush1.msra.mxu0 0.0
      %3192 = vmatprep.subr.mxu0 0.0
      %3193 = vmatpush1.msra.mxu0 0.0
      %3194 = vmatprep.subr.mxu0 0.0
      %3195 = vmatpush1.msra.mxu0 0.0
      %3196 = vmatprep.subr.mxu0 0.0
      %3197 = vmatpush1.msra.mxu0 0.0
      %3198 = vmatprep.subr.mxu0 0.0
      %3199 = vmatpush1.msra.mxu0 0.0
      %3200 = vmatprep.subr.mxu0 0.0
      %3201 = vmatpush1.msra.mxu0 0.0
      %3202 = vmatprep.subr.mxu0 0.0
      %3203 = vmatpush1.msra.mxu0 0.0
      %3204 = vmatprep.subr.mxu0 0.0
      %3205 = vmatpush1.msra.mxu0 0.0
      %3206 = vmatprep.subr.mxu0 0.0
      %3207 = vmatpush1.msra.mxu0 0.0
      %3208 = vmatprep.subr.mxu0 0.0
      %3209 = vmatpush1.msra.mxu0 0.0
      %3210 = vmatprep.subr.mxu0 0.0
      %3211 = vmatpush1.msra.mxu0 0.0
      %3212 = vmatprep.subr.mxu0 0.0
      %3213 = vmatpush1.msra.mxu0 %v2745
      %3214 = vmatprep.subr.mxu0 0.0
      %3215 = vmatpush2.msra.mxu0 0.0
      %3216 = vmatprep.subr.mxu0 0.0
      %3217 = vmatpush2.msra.mxu0 0.0
      %3218 = vmatprep.subr.mxu0 0.0
      %3219 = vmatpush2.msra.mxu0 0.0
      %3220 = vmatprep.subr.mxu0 0.0
      %3221 = vmatpush2.msra.mxu0 0.0
      %3222 = vmatprep.subr.mxu0 0.0
      %3223 = vmatpush2.msra.mxu0 0.0
      %3224 = vmatprep.subr.mxu0 0.0
      %3225 = vmatpush2.msra.mxu0 0.0
      %3226 = vmatprep.subr.mxu0 0.0
      %3227 = vmatpush2.msra.mxu0 0.0
      %3228 = vmatprep.subr.mxu0 0.0
      %3229 = vmatpush2.msra.mxu0 0.0
      %3230 = vmatprep.subr.mxu0 0.0
      %3231 = vmatpush2.msra.mxu0 0.0
      %3232 = vmatprep.subr.mxu0 0.0
      %3233 = vmatpush2.msra.mxu0 0.0
      %3234 = vmatprep.subr.mxu0 0.0
      %3235 = vmatpush2.msra.mxu0 0.0
      %3236 = vmatprep.subr.mxu0 0.0
      %3237 = vmatpush2.msra.mxu0 0.0
      %3238 = vmatprep.subr.mxu0 0.0
      %3239 = vmatpush2.msra.mxu0 0.0
      %3240 = vmatprep.subr.mxu0 0.0
      %3241 = vmatpush2.msra.mxu0 0.0
      %3242 = vmatprep.subr.mxu0 0.0
      %3243 = vmatpush2.msra.mxu0 0.0
      %3244 = vmatprep.subr.mxu0 0.0
      %3245 = vmatpush2.msra.mxu0 0.0
      %3246 = vmatprep.mubr.f32.mxu0 0.0
      %3247 = vmatmul.mubr.f32.gmra.mxu0 %v3180
      %v3248 = vpop.f32.mrf.mxu0
      %v3249 = vadd.f32 0.0, %v3248
      %v3250 = vpop.f32.mrf.mxu0
      %3251 = vdwg.mxu0
      %v3253 = vsel %vm716, %v3104, 0
      %3255 = vmatprep.subr.mxu0 0.0
      %3256 = vmatpush1.msra.mxu0 0.0
      %3257 = vmatprep.subr.mxu0 0.0
      %3258 = vmatpush1.msra.mxu0 0.0
      %3259 = vmatprep.subr.mxu0 0.0
      %3260 = vmatpush1.msra.mxu0 0.0
      %3261 = vmatprep.subr.mxu0 0.0
      %3262 = vmatpush1.msra.mxu0 0.0
      %3263 = vmatprep.subr.mxu0 0.0
      %3264 = vmatpush1.msra.mxu0 0.0
      %3265 = vmatprep.subr.mxu0 0.0
      %3266 = vmatpush1.msra.mxu0 0.0
      %3267 = vmatprep.subr.mxu0 0.0
      %3268 = vmatpush1.msra.mxu0 0.0
      %3269 = vmatprep.subr.mxu0 0.0
      %3270 = vmatpush1.msra.mxu0 0.0
      %3271 = vmatprep.subr.mxu0 0.0
      %3272 = vmatpush1.msra.mxu0 0.0
      %3273 = vmatprep.subr.mxu0 0.0
      %3274 = vmatpush1.msra.mxu0 0.0
      %3275 = vmatprep.subr.mxu0 0.0
      %3276 = vmatpush1.msra.mxu0 0.0
      %3277 = vmatprep.subr.mxu0 0.0
      %3278 = vmatpush1.msra.mxu0 0.0
      %3279 = vmatprep.subr.mxu0 0.0
      %3280 = vmatpush1.msra.mxu0 0.0
      %3281 = vmatprep.subr.mxu0 0.0
      %3282 = vmatpush1.msra.mxu0 0.0
      %3283 = vmatprep.subr.mxu0 0.0
      %3284 = vmatpush1.msra.mxu0 0.0
      %3285 = vmatprep.subr.mxu0 0.0
      %3286 = vmatpush1.msra.mxu0 %v2750
      %3287 = vmatprep.subr.mxu0 0.0
      %3288 = vmatpush2.msra.mxu0 0.0
      %3289 = vmatprep.subr.mxu0 0.0
      %3290 = vmatpush2.msra.mxu0 0.0
      %3291 = vmatprep.subr.mxu0 0.0
      %3292 = vmatpush2.msra.mxu0 0.0
      %3293 = vmatprep.subr.mxu0 0.0
      %3294 = vmatpush2.msra.mxu0 0.0
      %3295 = vmatprep.subr.mxu0 0.0
      %3296 = vmatpush2.msra.mxu0 0.0
      %3297 = vmatprep.subr.mxu0 0.0
      %3298 = vmatpush2.msra.mxu0 0.0
      %3299 = vmatprep.subr.mxu0 0.0
      %3300 = vmatpush2.msra.mxu0 0.0
      %3301 = vmatprep.subr.mxu0 0.0
      %3302 = vmatpush2.msra.mxu0 0.0
      %3303 = vmatprep.subr.mxu0 0.0
      %3304 = vmatpush2.msra.mxu0 0.0
      %3305 = vmatprep.subr.mxu0 0.0
      %3306 = vmatpush2.msra.mxu0 0.0
      %3307 = vmatprep.subr.mxu0 0.0
      %3308 = vmatpush2.msra.mxu0 0.0
      %3309 = vmatprep.subr.mxu0 0.0
      %3310 = vmatpush2.msra.mxu0 0.0
      %3311 = vmatprep.subr.mxu0 0.0
      %3312 = vmatpush2.msra.mxu0 0.0
      %3313 = vmatprep.subr.mxu0 0.0
      %3314 = vmatpush2.msra.mxu0 0.0
      %3315 = vmatprep.subr.mxu0 0.0
      %3316 = vmatpush2.msra.mxu0 0.0
      %3317 = vmatprep.subr.mxu0 0.0
      %3318 = vmatpush2.msra.mxu0 0.0
      %3319 = vmatprep.mubr.f32.mxu0 0.0
      %3320 = vmatmul.mubr.f32.gmra.mxu0 %v3253
      %v3321 = vpop.f32.mrf.mxu0
      %v3322 = vadd.f32 0.0, %v3321
      %v3323 = vpop.f32.mrf.mxu0
      %3324 = vdwg.mxu0
      %v3326 = vsel %vm716, %v3105, 0
      %3328 = vmatprep.subr.mxu0 0.0
      %3329 = vmatpush1.msra.mxu0 0.0
      %3330 = vmatprep.subr.mxu0 0.0
      %3331 = vmatpush1.msra.mxu0 0.0
      %3332 = vmatprep.subr.mxu0 0.0
      %3333 = vmatpush1.msra.mxu0 0.0
      %3334 = vmatprep.subr.mxu0 0.0
      %3335 = vmatpush1.msra.mxu0 0.0
      %3336 = vmatprep.subr.mxu0 0.0
      %3337 = vmatpush1.msra.mxu0 0.0
      %3338 = vmatprep.subr.mxu0 0.0
      %3339 = vmatpush1.msra.mxu0 0.0
      %3340 = vmatprep.subr.mxu0 0.0
      %3341 = vmatpush1.msra.mxu0 0.0
      %3342 = vmatprep.subr.mxu0 0.0
      %3343 = vmatpush1.msra.mxu0 0.0
      %3344 = vmatprep.subr.mxu0 0.0
      %3345 = vmatpush1.msra.mxu0 0.0
      %3346 = vmatprep.subr.mxu0 0.0
      %3347 = vmatpush1.msra.mxu0 0.0
      %3348 = vmatprep.subr.mxu0 0.0
      %3349 = vmatpush1.msra.mxu0 0.0
      %3350 = vmatprep.subr.mxu0 0.0
      %3351 = vmatpush1.msra.mxu0 0.0
      %3352 = vmatprep.subr.mxu0 0.0
      %3353 = vmatpush1.msra.mxu0 0.0
      %3354 = vmatprep.subr.mxu0 0.0
      %3355 = vmatpush1.msra.mxu0 0.0
      %3356 = vmatprep.subr.mxu0 0.0
      %3357 = vmatpush1.msra.mxu0 0.0
      %3358 = vmatprep.subr.mxu0 0.0
      %3359 = vmatpush1.msra.mxu0 %v2755
      %3360 = vmatprep.subr.mxu0 0.0
      %3361 = vmatpush2.msra.mxu0 0.0
      %3362 = vmatprep.subr.mxu0 0.0
      %3363 = vmatpush2.msra.mxu0 0.0
      %3364 = vmatprep.subr.mxu0 0.0
      %3365 = vmatpush2.msra.mxu0 0.0
      %3366 = vmatprep.subr.mxu0 0.0
      %3367 = vmatpush2.msra.mxu0 0.0
      %3368 = vmatprep.subr.mxu0 0.0
      %3369 = vmatpush2.msra.mxu0 0.0
      %3370 = vmatprep.subr.mxu0 0.0
      %3371 = vmatpush2.msra.mxu0 0.0
      %3372 = vmatprep.subr.mxu0 0.0
      %3373 = vmatpush2.msra.mxu0 0.0
      %3374 = vmatprep.subr.mxu0 0.0
      %3375 = vmatpush2.msra.mxu0 0.0
      %3376 = vmatprep.subr.mxu0 0.0
      %3377 = vmatpush2.msra.mxu0 0.0
      %3378 = vmatprep.subr.mxu0 0.0
      %3379 = vmatpush2.msra.mxu0 0.0
      %3380 = vmatprep.subr.mxu0 0.0
      %3381 = vmatpush2.msra.mxu0 0.0
      %3382 = vmatprep.subr.mxu0 0.0
      %3383 = vmatpush2.msra.mxu0 0.0
      %3384 = vmatprep.subr.mxu0 0.0
      %3385 = vmatpush2.msra.mxu0 0.0
      %3386 = vmatprep.subr.mxu0 0.0
      %3387 = vmatpush2.msra.mxu0 0.0
      %3388 = vmatprep.subr.mxu0 0.0
      %3389 = vmatpush2.msra.mxu0 0.0
      %3390 = vmatprep.subr.mxu0 0.0
      %3391 = vmatpush2.msra.mxu0 0.0
      %3392 = vmatprep.mubr.f32.mxu0 0.0
      %3393 = vmatmul.mubr.f32.gmra.mxu0 %v3326
      %v3394 = vpop.f32.mrf.mxu0
      %v3395 = vadd.f32 0.0, %v3394
      %v3396 = vpop.f32.mrf.mxu0
      %3397 = vdwg.mxu0
      %s3398 = scalar_lea.vmem %s4, 16
      %v3399 = vld [vmem:[%s3398] sm:$0xff]
      %v3401 = vsel %vm716, %v3176, 0
      %v3404 = vsel %vm716, %v3249, 0
      %v3407 = vsel %vm716, %v3322, 0
      %v3410 = vsel %vm716, %v3395, 0
      %3412 = vmatprep.subr.mxu0 0.0
      %3413 = vmatpush1.msra.mxu0 0.0
      %3414 = vmatprep.subr.mxu0 0.0
      %3415 = vmatpush1.msra.mxu0 0.0
      %3416 = vmatprep.subr.mxu0 0.0
      %3417 = vmatpush1.msra.mxu0 0.0
      %3418 = vmatprep.subr.mxu0 0.0
      %3419 = vmatpush1.msra.mxu0 0.0
      %3420 = vmatprep.subr.mxu0 0.0
      %3421 = vmatpush1.msra.mxu0 0.0
      %3422 = vmatprep.subr.mxu0 0.0
      %3423 = vmatpush1.msra.mxu0 0.0
      %3424 = vmatprep.subr.mxu0 0.0
      %3425 = vmatpush1.msra.mxu0 0.0
      %3426 = vmatprep.subr.mxu0 0.0
      %3427 = vmatpush1.msra.mxu0 0.0
      %3428 = vmatprep.subr.mxu0 0.0
      %3429 = vmatpush1.msra.mxu0 0.0
      %3430 = vmatprep.subr.mxu0 0.0
      %3431 = vmatpush1.msra.mxu0 0.0
      %3432 = vmatprep.subr.mxu0 0.0
      %3433 = vmatpush1.msra.mxu0 0.0
      %3434 = vmatprep.subr.mxu0 0.0
      %3435 = vmatpush1.msra.mxu0 0.0
      %3436 = vmatprep.subr.mxu0 0.0
      %3437 = vmatpush1.msra.mxu0 0.0
      %3438 = vmatprep.subr.mxu0 0.0
      %3439 = vmatpush1.msra.mxu0 0.0
      %3440 = vmatprep.subr.mxu0 0.0
      %3441 = vmatpush1.msra.mxu0 0.0
      %3442 = vmatprep.subr.mxu0 0.0
      %3443 = vmatpush1.msra.mxu0 %v3399
      %3444 = vmatprep.subr.mxu0 0.0
      %3445 = vmatpush2.msra.mxu0 0.0
      %3446 = vmatprep.subr.mxu0 0.0
      %3447 = vmatpush2.msra.mxu0 0.0
      %3448 = vmatprep.subr.mxu0 0.0
      %3449 = vmatpush2.msra.mxu0 0.0
      %3450 = vmatprep.subr.mxu0 0.0
      %3451 = vmatpush2.msra.mxu0 0.0
      %3452 = vmatprep.subr.mxu0 0.0
      %3453 = vmatpush2.msra.mxu0 0.0
      %3454 = vmatprep.subr.mxu0 0.0
      %3455 = vmatpush2.msra.mxu0 0.0
      %3456 = vmatprep.subr.mxu0 0.0
      %3457 = vmatpush2.msra.mxu0 0.0
      %3458 = vmatprep.subr.mxu0 0.0
      %3459 = vmatpush2.msra.mxu0 0.0
      %3460 = vmatprep.subr.mxu0 0.0
      %3461 = vmatpush2.msra.mxu0 0.0
      %3462 = vmatprep.subr.mxu0 0.0
      %3463 = vmatpush2.msra.mxu0 0.0
      %3464 = vmatprep.subr.mxu0 0.0
      %3465 = vmatpush2.msra.mxu0 0.0
      %3466 = vmatprep.subr.mxu0 0.0
      %3467 = vmatpush2.msra.mxu0 0.0
      %3468 = vmatprep.subr.mxu0 0.0
      %3469 = vmatpush2.msra.mxu0 0.0
      %3470 = vmatprep.subr.mxu0 0.0
      %3471 = vmatpush2.msra.mxu0 0.0
      %3472 = vmatprep.subr.mxu0 0.0
      %3473 = vmatpush2.msra.mxu0 0.0
      %3474 = vmatprep.subr.mxu0 0.0
      %3475 = vmatpush2.msra.mxu0 0.0
      %3476 = vmatprep.mubr.f32.mxu0 0.0
      %3477 = vmatmul.mubr.f32.gmra.mxu0 %v3401
      %v3478 = vpop.f32.mrf.mxu0
      %v3479 = vadd.f32 0.0, %v3478
      %v3480 = vpop.f32.mrf.mxu0
      %3481 = vmatprep.mubr.f32.mxu0 0.0
      %3482 = vmatmul.mubr.f32.gmra.mxu0 %v3404
      %v3483 = vpop.f32.mrf.mxu0
      %v3484 = vadd.f32 0.0, %v3483
      %v3485 = vpop.f32.mrf.mxu0
      %3486 = vmatprep.mubr.f32.mxu0 0.0
      %3487 = vmatmul.mubr.f32.gmra.mxu0 %v3407
      %v3488 = vpop.f32.mrf.mxu0
      %v3489 = vadd.f32 0.0, %v3488
      %v3490 = vpop.f32.mrf.mxu0
      %3491 = vmatprep.mubr.f32.mxu0 0.0
      %3492 = vmatmul.mubr.f32.gmra.mxu0 %v3410
      %v3493 = vpop.f32.mrf.mxu0
      %v3494 = vadd.f32 0.0, %v3493
      %v3495 = vpop.f32.mrf.mxu0
      %3496 = vdwg.mxu0
      %v3497 = vadd.f32 %v2458, %v3479
      %v3498 = vadd.f32 %v2463, %v3484
      %v3499 = vadd.f32 %v2468, %v3489
      %v3500 = vadd.f32 %v2473, %v3494
      %s3501 = scalar_lea.vmem %s2, 96
      %v3502 = vld [vmem:[%s3501] sm:$0xff]
      %v3503 = vld [vmem:[%s3501 + $0x8] sm:$0xff]
      %v3504 = vld [vmem:[%s3501 + $0x10] sm:$0xff]
      %v3505 = vld [vmem:[%s3501 + $0x18] sm:$0xff]
      %s3506 = scalar_lea.vmem %s2, 224
      %v3507 = vld [vmem:[%s3506] sm:$0xff]
      %v3508 = vld [vmem:[%s3506 + $0x8] sm:$0xff]
      %v3509 = vld [vmem:[%s3506 + $0x10] sm:$0xff]
      %v3510 = vld [vmem:[%s3506 + $0x18] sm:$0xff]
      %s3511 = scalar_lea.vmem %s2, 352
      %v3512 = vld [vmem:[%s3511] sm:$0xff]
      %v3513 = vld [vmem:[%s3511 + $0x8] sm:$0xff]
      %v3514 = vld [vmem:[%s3511 + $0x10] sm:$0xff]
      %v3515 = vld [vmem:[%s3511 + $0x18] sm:$0xff]
      %s3516 = scalar_lea.vmem %s3, 3
      %v3517 = vld [vmem:[%s3516] sm:$0x1]
      %v3519 = vlaneseq
      %v3520 = vshrl.u32 %v3519, 7
      %v3521 = vsub.s32 0, %v3520
      %v3522 = vrot.slane %v3517, %v3521
      %3524 = vmatprep.subr.mxu0 0.0
      %3525 = vmatpush1.msra.mxu0 0.0
      %3526 = vmatprep.subr.mxu0 0.0
      %3527 = vmatpush1.msra.mxu0 0.0
      %3528 = vmatprep.subr.mxu0 0.0
      %3529 = vmatpush1.msra.mxu0 0.0
      %3530 = vmatprep.subr.mxu0 0.0
      %3531 = vmatpush1.msra.mxu0 0.0
      %3532 = vmatprep.subr.mxu0 0.0
      %3533 = vmatpush1.msra.mxu0 0.0
      %3534 = vmatprep.subr.mxu0 0.0
      %3535 = vmatpush1.msra.mxu0 0.0
      %3536 = vmatprep.subr.mxu0 0.0
      %3537 = vmatpush1.msra.mxu0 0.0
      %3538 = vmatprep.subr.mxu0 0.0
      %3539 = vmatpush1.msra.mxu0 0.0
      %3540 = vmatprep.subr.mxu0 0.0
      %3541 = vmatpush1.msra.mxu0 0.0
      %3542 = vmatprep.subr.mxu0 0.0
      %3543 = vmatpush1.msra.mxu0 0.0
      %3544 = vmatprep.subr.mxu0 0.0
      %3545 = vmatpush1.msra.mxu0 0.0
      %3546 = vmatprep.subr.mxu0 0.0
      %3547 = vmatpush1.msra.mxu0 0.0
      %3548 = vmatprep.subr.mxu0 0.0
      %3549 = vmatpush1.msra.mxu0 %v3505
      %3550 = vmatprep.subr.mxu0 0.0
      %3551 = vmatpush1.msra.mxu0 %v3504
      %3552 = vmatprep.subr.mxu0 0.0
      %3553 = vmatpush1.msra.mxu0 %v3503
      %3554 = vmatprep.subr.mxu0 0.0
      %3555 = vmatpush1.msra.mxu0 %v3502
      %3556 = vmatprep.subr.mxu0 0.0
      %3557 = vmatpush2.msra.mxu0 0.0
      %3558 = vmatprep.subr.mxu0 0.0
      %3559 = vmatpush2.msra.mxu0 0.0
      %3560 = vmatprep.subr.mxu0 0.0
      %3561 = vmatpush2.msra.mxu0 0.0
      %3562 = vmatprep.subr.mxu0 0.0
      %3563 = vmatpush2.msra.mxu0 0.0
      %3564 = vmatprep.subr.mxu0 0.0
      %3565 = vmatpush2.msra.mxu0 0.0
      %3566 = vmatprep.subr.mxu0 0.0
      %3567 = vmatpush2.msra.mxu0 0.0
      %3568 = vmatprep.subr.mxu0 0.0
      %3569 = vmatpush2.msra.mxu0 0.0
      %3570 = vmatprep.subr.mxu0 0.0
      %3571 = vmatpush2.msra.mxu0 0.0
      %3572 = vmatprep.subr.mxu0 0.0
      %3573 = vmatpush2.msra.mxu0 0.0
      %3574 = vmatprep.subr.mxu0 0.0
      %3575 = vmatpush2.msra.mxu0 0.0
      %3576 = vmatprep.subr.mxu0 0.0
      %3577 = vmatpush2.msra.mxu0 0.0
      %3578 = vmatprep.subr.mxu0 0.0
      %3579 = vmatpush2.msra.mxu0 0.0
      %3580 = vmatprep.subr.mxu0 0.0
      %3581 = vmatpush2.msra.mxu0 0.0
      %3582 = vmatprep.subr.mxu0 0.0
      %3583 = vmatpush2.msra.mxu0 0.0
      %3584 = vmatprep.subr.mxu0 0.0
      %3585 = vmatpush2.msra.mxu0 0.0
      %3586 = vmatprep.subr.mxu0 0.0
      %3587 = vmatpush2.msra.mxu0 0.0
      %3588 = vmatprep.mubr.f32.mxu0 0.0
      %3589 = vmatmul.mubr.f32.gmra.mxu0 %v446
      %v3590 = vpop.f32.mrf.mxu0
      %v3591 = vadd.f32 %v3522, %v3590
      %v3592 = vpop.f32.mrf.mxu0
      %3593 = vmatprep.mubr.f32.mxu0 0.0
      %3594 = vmatmul.mubr.f32.gmra.mxu0 %v449
      %v3595 = vpop.f32.mrf.mxu0
      %v3596 = vadd.f32 %v3522, %v3595
      %v3597 = vpop.f32.mrf.mxu0
      %3598 = vmatprep.mubr.f32.mxu0 0.0
      %3599 = vmatmul.mubr.f32.gmra.mxu0 %v452
      %v3600 = vpop.f32.mrf.mxu0
      %v3601 = vadd.f32 %v3522, %v3600
      %v3602 = vpop.f32.mrf.mxu0
      %3603 = vmatprep.mubr.f32.mxu0 0.0
      %3604 = vmatmul.mubr.f32.gmra.mxu0 %v455
      %v3605 = vpop.f32.mrf.mxu0
      %v3606 = vadd.f32 %v3522, %v3605
      %v3607 = vpop.f32.mrf.mxu0
      %3608 = vdwg.mxu0
      %v3609 = vmul.f32 %v3591, 0.35355338
      %v3610 = vmul.f32 %v3596, 0.35355338
      %v3611 = vmul.f32 %v3601, 0.35355338
      %v3612 = vmul.f32 %v3606, 0.35355338
      %3613 = vmatprep.subr.mxu0 0.0
      %3614 = vmatpush1.msra.mxu0 0.0
      %3615 = vmatprep.subr.mxu0 0.0
      %3616 = vmatpush1.msra.mxu0 0.0
      %3617 = vmatprep.subr.mxu0 0.0
      %3618 = vmatpush1.msra.mxu0 0.0
      %3619 = vmatprep.subr.mxu0 0.0
      %3620 = vmatpush1.msra.mxu0 0.0
      %3621 = vmatprep.subr.mxu0 0.0
      %3622 = vmatpush1.msra.mxu0 0.0
      %3623 = vmatprep.subr.mxu0 0.0
      %3624 = vmatpush1.msra.mxu0 0.0
      %3625 = vmatprep.subr.mxu0 0.0
      %3626 = vmatpush1.msra.mxu0 0.0
      %3627 = vmatprep.subr.mxu0 0.0
      %3628 = vmatpush1.msra.mxu0 0.0
      %3629 = vmatprep.subr.mxu0 0.0
      %3630 = vmatpush1.msra.mxu0 0.0
      %3631 = vmatprep.subr.mxu0 0.0
      %3632 = vmatpush1.msra.mxu0 0.0
      %3633 = vmatprep.subr.mxu0 0.0
      %3634 = vmatpush1.msra.mxu0 0.0
      %3635 = vmatprep.subr.mxu0 0.0
      %3636 = vmatpush1.msra.mxu0 0.0
      %3637 = vmatprep.subr.mxu0 0.0
      %3638 = vmatpush1.msra.mxu0 %v3510
      %3639 = vmatprep.subr.mxu0 0.0
      %3640 = vmatpush1.msra.mxu0 %v3509
      %3641 = vmatprep.subr.mxu0 0.0
      %3642 = vmatpush1.msra.mxu0 %v3508
      %3643 = vmatprep.subr.mxu0 0.0
      %3644 = vmatpush1.msra.mxu0 %v3507
      %3645 = vmatprep.subr.mxu0 0.0
      %3646 = vmatpush2.msra.mxu0 0.0
      %3647 = vmatprep.subr.mxu0 0.0
      %3648 = vmatpush2.msra.mxu0 0.0
      %3649 = vmatprep.subr.mxu0 0.0
      %3650 = vmatpush2.msra.mxu0 0.0
      %3651 = vmatprep.subr.mxu0 0.0
      %3652 = vmatpush2.msra.mxu0 0.0
      %3653 = vmatprep.subr.mxu0 0.0
      %3654 = vmatpush2.msra.mxu0 0.0
      %3655 = vmatprep.subr.mxu0 0.0
      %3656 = vmatpush2.msra.mxu0 0.0
      %3657 = vmatprep.subr.mxu0 0.0
      %3658 = vmatpush2.msra.mxu0 0.0
      %3659 = vmatprep.subr.mxu0 0.0
      %3660 = vmatpush2.msra.mxu0 0.0
      %3661 = vmatprep.subr.mxu0 0.0
      %3662 = vmatpush2.msra.mxu0 0.0
      %3663 = vmatprep.subr.mxu0 0.0
      %3664 = vmatpush2.msra.mxu0 0.0
      %3665 = vmatprep.subr.mxu0 0.0
      %3666 = vmatpush2.msra.mxu0 0.0
      %3667 = vmatprep.subr.mxu0 0.0
      %3668 = vmatpush2.msra.mxu0 0.0
      %3669 = vmatprep.subr.mxu0 0.0
      %3670 = vmatpush2.msra.mxu0 0.0
      %3671 = vmatprep.subr.mxu0 0.0
      %3672 = vmatpush2.msra.mxu0 0.0
      %3673 = vmatprep.subr.mxu0 0.0
      %3674 = vmatpush2.msra.mxu0 0.0
      %3675 = vmatprep.subr.mxu0 0.0
      %3676 = vmatpush2.msra.mxu0 0.0
      %3677 = vmatprep.mubr.f32.mxu0 0.0
      %3678 = vmatmul.mubr.f32.gmra.mxu0 %v446
      %v3679 = vpop.f32.mrf.mxu0
      %v3680 = vadd.f32 0.0, %v3679
      %v3681 = vpop.f32.mrf.mxu0
      %3682 = vmatprep.mubr.f32.mxu0 0.0
      %3683 = vmatmul.mubr.f32.gmra.mxu0 %v449
      %v3684 = vpop.f32.mrf.mxu0
      %v3685 = vadd.f32 0.0, %v3684
      %v3686 = vpop.f32.mrf.mxu0
      %3687 = vmatprep.mubr.f32.mxu0 0.0
      %3688 = vmatmul.mubr.f32.gmra.mxu0 %v452
      %v3689 = vpop.f32.mrf.mxu0
      %v3690 = vadd.f32 0.0, %v3689
      %v3691 = vpop.f32.mrf.mxu0
      %3692 = vmatprep.mubr.f32.mxu0 0.0
      %3693 = vmatmul.mubr.f32.gmra.mxu0 %v455
      %v3694 = vpop.f32.mrf.mxu0
      %v3695 = vadd.f32 0.0, %v3694
      %v3696 = vpop.f32.mrf.mxu0
      %3697 = vdwg.mxu0
      %3698 = vmatprep.subr.mxu0 0.0
      %3699 = vmatpush1.msra.mxu0 0.0
      %3700 = vmatprep.subr.mxu0 0.0
      %3701 = vmatpush1.msra.mxu0 0.0
      %3702 = vmatprep.subr.mxu0 0.0
      %3703 = vmatpush1.msra.mxu0 0.0
      %3704 = vmatprep.subr.mxu0 0.0
      %3705 = vmatpush1.msra.mxu0 0.0
      %3706 = vmatprep.subr.mxu0 0.0
      %3707 = vmatpush1.msra.mxu0 0.0
      %3708 = vmatprep.subr.mxu0 0.0
      %3709 = vmatpush1.msra.mxu0 0.0
      %3710 = vmatprep.subr.mxu0 0.0
      %3711 = vmatpush1.msra.mxu0 0.0
      %3712 = vmatprep.subr.mxu0 0.0
      %3713 = vmatpush1.msra.mxu0 0.0
      %3714 = vmatprep.subr.mxu0 0.0
      %3715 = vmatpush1.msra.mxu0 0.0
      %3716 = vmatprep.subr.mxu0 0.0
      %3717 = vmatpush1.msra.mxu0 0.0
      %3718 = vmatprep.subr.mxu0 0.0
      %3719 = vmatpush1.msra.mxu0 0.0
      %3720 = vmatprep.subr.mxu0 0.0
      %3721 = vmatpush1.msra.mxu0 0.0
      %3722 = vmatprep.subr.mxu0 0.0
      %3723 = vmatpush1.msra.mxu0 %v3515
      %3724 = vmatprep.subr.mxu0 0.0
      %3725 = vmatpush1.msra.mxu0 %v3514
      %3726 = vmatprep.subr.mxu0 0.0
      %3727 = vmatpush1.msra.mxu0 %v3513
      %3728 = vmatprep.subr.mxu0 0.0
      %3729 = vmatpush1.msra.mxu0 %v3512
      %3730 = vmatprep.subr.mxu0 0.0
      %3731 = vmatpush2.msra.mxu0 0.0
      %3732 = vmatprep.subr.mxu0 0.0
      %3733 = vmatpush2.msra.mxu0 0.0
      %3734 = vmatprep.subr.mxu0 0.0
      %3735 = vmatpush2.msra.mxu0 0.0
      %3736 = vmatprep.subr.mxu0 0.0
      %3737 = vmatpush2.msra.mxu0 0.0
      %3738 = vmatprep.subr.mxu0 0.0
      %3739 = vmatpush2.msra.mxu0 0.0
      %3740 = vmatprep.subr.mxu0 0.0
      %3741 = vmatpush2.msra.mxu0 0.0
      %3742 = vmatprep.subr.mxu0 0.0
      %3743 = vmatpush2.msra.mxu0 0.0
      %3744 = vmatprep.subr.mxu0 0.0
      %3745 = vmatpush2.msra.mxu0 0.0
      %3746 = vmatprep.subr.mxu0 0.0
      %3747 = vmatpush2.msra.mxu0 0.0
      %3748 = vmatprep.subr.mxu0 0.0
      %3749 = vmatpush2.msra.mxu0 0.0
      %3750 = vmatprep.subr.mxu0 0.0
      %3751 = vmatpush2.msra.mxu0 0.0
      %3752 = vmatprep.subr.mxu0 0.0
      %3753 = vmatpush2.msra.mxu0 0.0
      %3754 = vmatprep.subr.mxu0 0.0
      %3755 = vmatpush2.msra.mxu0 0.0
      %3756 = vmatprep.subr.mxu0 0.0
      %3757 = vmatpush2.msra.mxu0 0.0
      %3758 = vmatprep.subr.mxu0 0.0
      %3759 = vmatpush2.msra.mxu0 0.0
      %3760 = vmatprep.subr.mxu0 0.0
      %3761 = vmatpush2.msra.mxu0 0.0
      %3762 = vmatprep.mubr.f32.mxu0 0.0
      %3763 = vmatmul.mubr.f32.gmra.mxu0 %v446
      %v3764 = vpop.f32.mrf.mxu0
      %v3765 = vadd.f32 0.0, %v3764
      %v3766 = vpop.f32.mrf.mxu0
      %3767 = vmatprep.mubr.f32.mxu0 0.0
      %3768 = vmatmul.mubr.f32.gmra.mxu0 %v449
      %v3769 = vpop.f32.mrf.mxu0
      %v3770 = vadd.f32 0.0, %v3769
      %v3771 = vpop.f32.mrf.mxu0
      %3772 = vmatprep.mubr.f32.mxu0 0.0
      %3773 = vmatmul.mubr.f32.gmra.mxu0 %v452
      %v3774 = vpop.f32.mrf.mxu0
      %v3775 = vadd.f32 0.0, %v3774
      %v3776 = vpop.f32.mrf.mxu0
      %3777 = vmatprep.mubr.f32.mxu0 0.0
      %3778 = vmatmul.mubr.f32.gmra.mxu0 %v455
      %v3779 = vpop.f32.mrf.mxu0
      %v3780 = vadd.f32 0.0, %v3779
      %v3781 = vpop.f32.mrf.mxu0
      %3782 = vdwg.mxu0
      %v3784 = vsel %vm716, %v3609, 0
      %v3787 = vsel %vm716, %v3680, 0
      %3789 = vmatprep.subr.mxu0 0.0
      %3790 = vmatpush1.xpose.msra.mxu0 0.0
      %3791 = vmatprep.subr.mxu0 0.0
      %3792 = vmatpush1.xpose.msra.mxu0 0.0
      %3793 = vmatprep.subr.mxu0 0.0
      %3794 = vmatpush1.xpose.msra.mxu0 0.0
      %3795 = vmatprep.subr.mxu0 0.0
      %3796 = vmatpush1.xpose.msra.mxu0 0.0
      %3797 = vmatprep.subr.mxu0 0.0
      %3798 = vmatpush1.xpose.msra.mxu0 0.0
      %3799 = vmatprep.subr.mxu0 0.0
      %3800 = vmatpush1.xpose.msra.mxu0 0.0
      %3801 = vmatprep.subr.mxu0 0.0
      %3802 = vmatpush1.xpose.msra.mxu0 0.0
      %3803 = vmatprep.subr.mxu0 0.0
      %3804 = vmatpush1.xpose.msra.mxu0 0.0
      %3805 = vmatprep.subr.mxu0 0.0
      %3806 = vmatpush1.xpose.msra.mxu0 0.0
      %3807 = vmatprep.subr.mxu0 0.0
      %3808 = vmatpush1.xpose.msra.mxu0 0.0
      %3809 = vmatprep.subr.mxu0 0.0
      %3810 = vmatpush1.xpose.msra.mxu0 0.0
      %3811 = vmatprep.subr.mxu0 0.0
      %3812 = vmatpush1.xpose.msra.mxu0 0.0
      %3813 = vmatprep.subr.mxu0 0.0
      %3814 = vmatpush1.xpose.msra.mxu0 0.0
      %3815 = vmatprep.subr.mxu0 0.0
      %3816 = vmatpush1.xpose.msra.mxu0 0.0
      %3817 = vmatprep.subr.mxu0 0.0
      %3818 = vmatpush1.xpose.msra.mxu0 0.0
      %3819 = vmatprep.subr.mxu0 0.0
      %3820 = vmatpush1.xpose.msra.mxu0 %v3787
      %3821 = vmatprep.subr.mxu0 0.0
      %3822 = vmatpush2.xpose.msra.mxu0 0.0
      %3823 = vmatprep.subr.mxu0 0.0
      %3824 = vmatpush2.xpose.msra.mxu0 0.0
      %3825 = vmatprep.subr.mxu0 0.0
      %3826 = vmatpush2.xpose.msra.mxu0 0.0
      %3827 = vmatprep.subr.mxu0 0.0
      %3828 = vmatpush2.xpose.msra.mxu0 0.0
      %3829 = vmatprep.subr.mxu0 0.0
      %3830 = vmatpush2.xpose.msra.mxu0 0.0
      %3831 = vmatprep.subr.mxu0 0.0
      %3832 = vmatpush2.xpose.msra.mxu0 0.0
      %3833 = vmatprep.subr.mxu0 0.0
      %3834 = vmatpush2.xpose.msra.mxu0 0.0
      %3835 = vmatprep.subr.mxu0 0.0
      %3836 = vmatpush2.xpose.msra.mxu0 0.0
      %3837 = vmatprep.subr.mxu0 0.0
      %3838 = vmatpush2.xpose.msra.mxu0 0.0
      %3839 = vmatprep.subr.mxu0 0.0
      %3840 = vmatpush2.xpose.msra.mxu0 0.0
      %3841 = vmatprep.subr.mxu0 0.0
      %3842 = vmatpush2.xpose.msra.mxu0 0.0
      %3843 = vmatprep.subr.mxu0 0.0
      %3844 = vmatpush2.xpose.msra.mxu0 0.0
      %3845 = vmatprep.subr.mxu0 0.0
      %3846 = vmatpush2.xpose.msra.mxu0 0.0
      %3847 = vmatprep.subr.mxu0 0.0
      %3848 = vmatpush2.xpose.msra.mxu0 0.0
      %3849 = vmatprep.subr.mxu0 0.0
      %3850 = vmatpush2.xpose.msra.mxu0 0.0
      %3851 = vmatprep.subr.mxu0 0.0
      %3852 = vmatpush2.xpose.msra.mxu0 0.0
      %3853 = vmatprep.mubr.f32.mxu0 0.0
      %3854 = vmatmul.mubr.f32.gmra.mxu0 %v3784
      %v3855 = vpop.f32.mrf.mxu0
      %v3856 = vadd.f32 0.0, %v3855
      %v3857 = vpop.f32.mrf.mxu0
      %3858 = vdwg.mxu0
      %v3860 = vsel %vm716, %v3610, 0
      %v3863 = vsel %vm716, %v3685, 0
      %3865 = vmatprep.subr.mxu0 0.0
      %3866 = vmatpush1.xpose.msra.mxu0 0.0
      %3867 = vmatprep.subr.mxu0 0.0
      %3868 = vmatpush1.xpose.msra.mxu0 0.0
      %3869 = vmatprep.subr.mxu0 0.0
      %3870 = vmatpush1.xpose.msra.mxu0 0.0
      %3871 = vmatprep.subr.mxu0 0.0
      %3872 = vmatpush1.xpose.msra.mxu0 0.0
      %3873 = vmatprep.subr.mxu0 0.0
      %3874 = vmatpush1.xpose.msra.mxu0 0.0
      %3875 = vmatprep.subr.mxu0 0.0
      %3876 = vmatpush1.xpose.msra.mxu0 0.0
      %3877 = vmatprep.subr.mxu0 0.0
      %3878 = vmatpush1.xpose.msra.mxu0 0.0
      %3879 = vmatprep.subr.mxu0 0.0
      %3880 = vmatpush1.xpose.msra.mxu0 0.0
      %3881 = vmatprep.subr.mxu0 0.0
      %3882 = vmatpush1.xpose.msra.mxu0 0.0
      %3883 = vmatprep.subr.mxu0 0.0
      %3884 = vmatpush1.xpose.msra.mxu0 0.0
      %3885 = vmatprep.subr.mxu0 0.0
      %3886 = vmatpush1.xpose.msra.mxu0 0.0
      %3887 = vmatprep.subr.mxu0 0.0
      %3888 = vmatpush1.xpose.msra.mxu0 0.0
      %3889 = vmatprep.subr.mxu0 0.0
      %3890 = vmatpush1.xpose.msra.mxu0 0.0
      %3891 = vmatprep.subr.mxu0 0.0
      %3892 = vmatpush1.xpose.msra.mxu0 0.0
      %3893 = vmatprep.subr.mxu0 0.0
      %3894 = vmatpush1.xpose.msra.mxu0 0.0
      %3895 = vmatprep.subr.mxu0 0.0
      %3896 = vmatpush1.xpose.msra.mxu0 %v3863
      %3897 = vmatprep.subr.mxu0 0.0
      %3898 = vmatpush2.xpose.msra.mxu0 0.0
      %3899 = vmatprep.subr.mxu0 0.0
      %3900 = vmatpush2.xpose.msra.mxu0 0.0
      %3901 = vmatprep.subr.mxu0 0.0
      %3902 = vmatpush2.xpose.msra.mxu0 0.0
      %3903 = vmatprep.subr.mxu0 0.0
      %3904 = vmatpush2.xpose.msra.mxu0 0.0
      %3905 = vmatprep.subr.mxu0 0.0
      %3906 = vmatpush2.xpose.msra.mxu0 0.0
      %3907 = vmatprep.subr.mxu0 0.0
      %3908 = vmatpush2.xpose.msra.mxu0 0.0
      %3909 = vmatprep.subr.mxu0 0.0
      %3910 = vmatpush2.xpose.msra.mxu0 0.0
      %3911 = vmatprep.subr.mxu0 0.0
      %3912 = vmatpush2.xpose.msra.mxu0 0.0
      %3913 = vmatprep.subr.mxu0 0.0
      %3914 = vmatpush2.xpose.msra.mxu0 0.0
      %3915 = vmatprep.subr.mxu0 0.0
      %3916 = vmatpush2.xpose.msra.mxu0 0.0
      %3917 = vmatprep.subr.mxu0 0.0
      %3918 = vmatpush2.xpose.msra.mxu0 0.0
      %3919 = vmatprep.subr.mxu0 0.0
      %3920 = vmatpush2.xpose.msra.mxu0 0.0
      %3921 = vmatprep.subr.mxu0 0.0
      %3922 = vmatpush2.xpose.msra.mxu0 0.0
      %3923 = vmatprep.subr.mxu0 0.0
      %3924 = vmatpush2.xpose.msra.mxu0 0.0
      %3925 = vmatprep.subr.mxu0 0.0
      %3926 = vmatpush2.xpose.msra.mxu0 0.0
      %3927 = vmatprep.subr.mxu0 0.0
      %3928 = vmatpush2.xpose.msra.mxu0 0.0
      %3929 = vmatprep.mubr.f32.mxu0 0.0
      %3930 = vmatmul.mubr.f32.gmra.mxu0 %v3860
      %v3931 = vpop.f32.mrf.mxu0
      %v3932 = vadd.f32 0.0, %v3931
      %v3933 = vpop.f32.mrf.mxu0
      %3934 = vdwg.mxu0
      %v3936 = vsel %vm716, %v3611, 0
      %v3939 = vsel %vm716, %v3690, 0
      %3941 = vmatprep.subr.mxu0 0.0
      %3942 = vmatpush1.xpose.msra.mxu0 0.0
      %3943 = vmatprep.subr.mxu0 0.0
      %3944 = vmatpush1.xpose.msra.mxu0 0.0
      %3945 = vmatprep.subr.mxu0 0.0
      %3946 = vmatpush1.xpose.msra.mxu0 0.0
      %3947 = vmatprep.subr.mxu0 0.0
      %3948 = vmatpush1.xpose.msra.mxu0 0.0
      %3949 = vmatprep.subr.mxu0 0.0
      %3950 = vmatpush1.xpose.msra.mxu0 0.0
      %3951 = vmatprep.subr.mxu0 0.0
      %3952 = vmatpush1.xpose.msra.mxu0 0.0
      %3953 = vmatprep.subr.mxu0 0.0
      %3954 = vmatpush1.xpose.msra.mxu0 0.0
      %3955 = vmatprep.subr.mxu0 0.0
      %3956 = vmatpush1.xpose.msra.mxu0 0.0
      %3957 = vmatprep.subr.mxu0 0.0
      %3958 = vmatpush1.xpose.msra.mxu0 0.0
      %3959 = vmatprep.subr.mxu0 0.0
      %3960 = vmatpush1.xpose.msra.mxu0 0.0
      %3961 = vmatprep.subr.mxu0 0.0
      %3962 = vmatpush1.xpose.msra.mxu0 0.0
      %3963 = vmatprep.subr.mxu0 0.0
      %3964 = vmatpush1.xpose.msra.mxu0 0.0
      %3965 = vmatprep.subr.mxu0 0.0
      %3966 = vmatpush1.xpose.msra.mxu0 0.0
      %3967 = vmatprep.subr.mxu0 0.0
      %3968 = vmatpush1.xpose.msra.mxu0 0.0
      %3969 = vmatprep.subr.mxu0 0.0
      %3970 = vmatpush1.xpose.msra.mxu0 0.0
      %3971 = vmatprep.subr.mxu0 0.0
      %3972 = vmatpush1.xpose.msra.mxu0 %v3939
      %3973 = vmatprep.subr.mxu0 0.0
      %3974 = vmatpush2.xpose.msra.mxu0 0.0
      %3975 = vmatprep.subr.mxu0 0.0
      %3976 = vmatpush2.xpose.msra.mxu0 0.0
      %3977 = vmatprep.subr.mxu0 0.0
      %3978 = vmatpush2.xpose.msra.mxu0 0.0
      %3979 = vmatprep.subr.mxu0 0.0
      %3980 = vmatpush2.xpose.msra.mxu0 0.0
      %3981 = vmatprep.subr.mxu0 0.0
      %3982 = vmatpush2.xpose.msra.mxu0 0.0
      %3983 = vmatprep.subr.mxu0 0.0
      %3984 = vmatpush2.xpose.msra.mxu0 0.0
      %3985 = vmatprep.subr.mxu0 0.0
      %3986 = vmatpush2.xpose.msra.mxu0 0.0
      %3987 = vmatprep.subr.mxu0 0.0
      %3988 = vmatpush2.xpose.msra.mxu0 0.0
      %3989 = vmatprep.subr.mxu0 0.0
      %3990 = vmatpush2.xpose.msra.mxu0 0.0
      %3991 = vmatprep.subr.mxu0 0.0
      %3992 = vmatpush2.xpose.msra.mxu0 0.0
      %3993 = vmatprep.subr.mxu0 0.0
      %3994 = vmatpush2.xpose.msra.mxu0 0.0
      %3995 = vmatprep.subr.mxu0 0.0
      %3996 = vmatpush2.xpose.msra.mxu0 0.0
      %3997 = vmatprep.subr.mxu0 0.0
      %3998 = vmatpush2.xpose.msra.mxu0 0.0
      %3999 = vmatprep.subr.mxu0 0.0
      %4000 = vmatpush2.xpose.msra.mxu0 0.0
      %4001 = vmatprep.subr.mxu0 0.0
      %4002 = vmatpush2.xpose.msra.mxu0 0.0
      %4003 = vmatprep.subr.mxu0 0.0
      %4004 = vmatpush2.xpose.msra.mxu0 0.0
      %4005 = vmatprep.mubr.f32.mxu0 0.0
      %4006 = vmatmul.mubr.f32.gmra.mxu0 %v3936
      %v4007 = vpop.f32.mrf.mxu0
      %v4008 = vadd.f32 0.0, %v4007
      %v4009 = vpop.f32.mrf.mxu0
      %4010 = vdwg.mxu0
      %v4012 = vsel %vm716, %v3612, 0
      %v4015 = vsel %vm716, %v3695, 0
      %4017 = vmatprep.subr.mxu0 0.0
      %4018 = vmatpush1.xpose.msra.mxu0 0.0
      %4019 = vmatprep.subr.mxu0 0.0
      %4020 = vmatpush1.xpose.msra.mxu0 0.0
      %4021 = vmatprep.subr.mxu0 0.0
      %4022 = vmatpush1.xpose.msra.mxu0 0.0
      %4023 = vmatprep.subr.mxu0 0.0
      %4024 = vmatpush1.xpose.msra.mxu0 0.0
      %4025 = vmatprep.subr.mxu0 0.0
      %4026 = vmatpush1.xpose.msra.mxu0 0.0
      %4027 = vmatprep.subr.mxu0 0.0
      %4028 = vmatpush1.xpose.msra.mxu0 0.0
      %4029 = vmatprep.subr.mxu0 0.0
      %4030 = vmatpush1.xpose.msra.mxu0 0.0
      %4031 = vmatprep.subr.mxu0 0.0
      %4032 = vmatpush1.xpose.msra.mxu0 0.0
      %4033 = vmatprep.subr.mxu0 0.0
      %4034 = vmatpush1.xpose.msra.mxu0 0.0
      %4035 = vmatprep.subr.mxu0 0.0
      %4036 = vmatpush1.xpose.msra.mxu0 0.0
      %4037 = vmatprep.subr.mxu0 0.0
      %4038 = vmatpush1.xpose.msra.mxu0 0.0
      %4039 = vmatprep.subr.mxu0 0.0
      %4040 = vmatpush1.xpose.msra.mxu0 0.0
      %4041 = vmatprep.subr.mxu0 0.0
      %4042 = vmatpush1.xpose.msra.mxu0 0.0
      %4043 = vmatprep.subr.mxu0 0.0
      %4044 = vmatpush1.xpose.msra.mxu0 0.0
      %4045 = vmatprep.subr.mxu0 0.0
      %4046 = vmatpush1.xpose.msra.mxu0 0.0
      %4047 = vmatprep.subr.mxu0 0.0
      %4048 = vmatpush1.xpose.msra.mxu0 %v4015
      %4049 = vmatprep.subr.mxu0 0.0
      %4050 = vmatpush2.xpose.msra.mxu0 0.0
      %4051 = vmatprep.subr.mxu0 0.0
      %4052 = vmatpush2.xpose.msra.mxu0 0.0
      %4053 = vmatprep.subr.mxu0 0.0
      %4054 = vmatpush2.xpose.msra.mxu0 0.0
      %4055 = vmatprep.subr.mxu0 0.0
      %4056 = vmatpush2.xpose.msra.mxu0 0.0
      %4057 = vmatprep.subr.mxu0 0.0
      %4058 = vmatpush2.xpose.msra.mxu0 0.0
      %4059 = vmatprep.subr.mxu0 0.0
      %4060 = vmatpush2.xpose.msra.mxu0 0.0
      %4061 = vmatprep.subr.mxu0 0.0
      %4062 = vmatpush2.xpose.msra.mxu0 0.0
      %4063 = vmatprep.subr.mxu0 0.0
      %4064 = vmatpush2.xpose.msra.mxu0 0.0
      %4065 = vmatprep.subr.mxu0 0.0
      %4066 = vmatpush2.xpose.msra.mxu0 0.0
      %4067 = vmatprep.subr.mxu0 0.0
      %4068 = vmatpush2.xpose.msra.mxu0 0.0
      %4069 = vmatprep.subr.mxu0 0.0
      %4070 = vmatpush2.xpose.msra.mxu0 0.0
      %4071 = vmatprep.subr.mxu0 0.0
      %4072 = vmatpush2.xpose.msra.mxu0 0.0
      %4073 = vmatprep.subr.mxu0 0.0
      %4074 = vmatpush2.xpose.msra.mxu0 0.0
      %4075 = vmatprep.subr.mxu0 0.0
      %4076 = vmatpush2.xpose.msra.mxu0 0.0
      %4077 = vmatprep.subr.mxu0 0.0
      %4078 = vmatpush2.xpose.msra.mxu0 0.0
      %4079 = vmatprep.subr.mxu0 0.0
      %4080 = vmatpush2.xpose.msra.mxu0 0.0
      %4081 = vmatprep.mubr.f32.mxu0 0.0
      %4082 = vmatmul.mubr.f32.gmra.mxu0 %v4012
      %v4083 = vpop.f32.mrf.mxu0
      %v4084 = vadd.f32 0.0, %v4083
      %v4085 = vpop.f32.mrf.mxu0
      %4086 = vdwg.mxu0
      %v4087 = vsel %vm716, %v3856, -inf
      %4088 = vmax.xlane.f32.xlu0 %v4087
      %v4089 = vpop.xlane.xlu0 %4088
      %v4090 = vsel %vm716, %v3932, -inf
      %4091 = vmax.xlane.f32.xlu0 %v4090
      %v4092 = vpop.xlane.xlu0 %4091
      %v4093 = vsel %vm716, %v4008, -inf
      %4094 = vmax.xlane.f32.xlu0 %v4093
      %v4095 = vpop.xlane.xlu0 %4094
      %v4096 = vsel %vm716, %v4084, -inf
      %4097 = vmax.xlane.f32.xlu0 %v4096
      %v4098 = vpop.xlane.xlu0 %4097
      %v4099 = vsub.f32 %v3856, %v4089
      %v4100 = vsub.f32 %v3932, %v4092
      %v4101 = vsub.f32 %v4008, %v4095
      %v4102 = vsub.f32 %v4084, %v4098
      %v4103 = vmul.f32 %v4099, 1.442695
      %v4104 = vpow.pop %v4103
      %v4105 = vmul.f32 %v4100, 1.442695
      %v4106 = vpow.pop %v4105
      %v4107 = vmul.f32 %v4101, 1.442695
      %v4108 = vpow.pop %v4107
      %v4109 = vmul.f32 %v4102, 1.442695
      %v4110 = vpow.pop %v4109
      %v4111 = vsel %vm716, %v4104, 0.0
      %4112 = vadd.xlane.f32.xlu0 %v4111
      %v4113 = vpop.xlane.xlu0 %4112
      %v4114 = vsel %vm716, %v4106, 0.0
      %4115 = vadd.xlane.f32.xlu0 %v4114
      %v4116 = vpop.xlane.xlu0 %4115
      %v4117 = vsel %vm716, %v4108, 0.0
      %4118 = vadd.xlane.f32.xlu0 %v4117
      %v4119 = vpop.xlane.xlu0 %4118
      %v4120 = vsel %vm716, %v4110, 0.0
      %4121 = vadd.xlane.f32.xlu0 %v4120
      %v4122 = vpop.xlane.xlu0 %4121
      %v4123 = vrcp.pop %v4113
      %v4124 = vrcp.pop %v4116
      %v4125 = vrcp.pop %v4119
      %v4126 = vrcp.pop %v4122
      %v4127 = vmul.f32 %v4104, %v4123
      %v4128 = vmul.f32 %v4106, %v4124
      %v4129 = vmul.f32 %v4108, %v4125
      %v4130 = vmul.f32 %v4110, %v4126
      %v4132 = vsel %vm716, %v4127, 0
      %4134 = vmatprep.subr.mxu0 0.0
      %4135 = vmatpush1.msra.mxu0 0.0
      %4136 = vmatprep.subr.mxu0 0.0
      %4137 = vmatpush1.msra.mxu0 0.0
      %4138 = vmatprep.subr.mxu0 0.0
      %4139 = vmatpush1.msra.mxu0 0.0
      %4140 = vmatprep.subr.mxu0 0.0
      %4141 = vmatpush1.msra.mxu0 0.0
      %4142 = vmatprep.subr.mxu0 0.0
      %4143 = vmatpush1.msra.mxu0 0.0
      %4144 = vmatprep.subr.mxu0 0.0
      %4145 = vmatpush1.msra.mxu0 0.0
      %4146 = vmatprep.subr.mxu0 0.0
      %4147 = vmatpush1.msra.mxu0 0.0
      %4148 = vmatprep.subr.mxu0 0.0
      %4149 = vmatpush1.msra.mxu0 0.0
      %4150 = vmatprep.subr.mxu0 0.0
      %4151 = vmatpush1.msra.mxu0 0.0
      %4152 = vmatprep.subr.mxu0 0.0
      %4153 = vmatpush1.msra.mxu0 0.0
      %4154 = vmatprep.subr.mxu0 0.0
      %4155 = vmatpush1.msra.mxu0 0.0
      %4156 = vmatprep.subr.mxu0 0.0
      %4157 = vmatpush1.msra.mxu0 0.0
      %4158 = vmatprep.subr.mxu0 0.0
      %4159 = vmatpush1.msra.mxu0 0.0
      %4160 = vmatprep.subr.mxu0 0.0
      %4161 = vmatpush1.msra.mxu0 0.0
      %4162 = vmatprep.subr.mxu0 0.0
      %4163 = vmatpush1.msra.mxu0 0.0
      %4164 = vmatprep.subr.mxu0 0.0
      %4165 = vmatpush1.msra.mxu0 %v3765
      %4166 = vmatprep.subr.mxu0 0.0
      %4167 = vmatpush2.msra.mxu0 0.0
      %4168 = vmatprep.subr.mxu0 0.0
      %4169 = vmatpush2.msra.mxu0 0.0
      %4170 = vmatprep.subr.mxu0 0.0
      %4171 = vmatpush2.msra.mxu0 0.0
      %4172 = vmatprep.subr.mxu0 0.0
      %4173 = vmatpush2.msra.mxu0 0.0
      %4174 = vmatprep.subr.mxu0 0.0
      %4175 = vmatpush2.msra.mxu0 0.0
      %4176 = vmatprep.subr.mxu0 0.0
      %4177 = vmatpush2.msra.mxu0 0.0
      %4178 = vmatprep.subr.mxu0 0.0
      %4179 = vmatpush2.msra.mxu0 0.0
      %4180 = vmatprep.subr.mxu0 0.0
      %4181 = vmatpush2.msra.mxu0 0.0
      %4182 = vmatprep.subr.mxu0 0.0
      %4183 = vmatpush2.msra.mxu0 0.0
      %4184 = vmatprep.subr.mxu0 0.0
      %4185 = vmatpush2.msra.mxu0 0.0
      %4186 = vmatprep.subr.mxu0 0.0
      %4187 = vmatpush2.msra.mxu0 0.0
      %4188 = vmatprep.subr.mxu0 0.0
      %4189 = vmatpush2.msra.mxu0 0.0
      %4190 = vmatprep.subr.mxu0 0.0
      %4191 = vmatpush2.msra.mxu0 0.0
      %4192 = vmatprep.subr.mxu0 0.0
      %4193 = vmatpush2.msra.mxu0 0.0
      %4194 = vmatprep.subr.mxu0 0.0
      %4195 = vmatpush2.msra.mxu0 0.0
      %4196 = vmatprep.subr.mxu0 0.0
      %4197 = vmatpush2.msra.mxu0 0.0
      %4198 = vmatprep.mubr.f32.mxu0 0.0
      %4199 = vmatmul.mubr.f32.gmra.mxu0 %v4132
      %v4200 = vpop.f32.mrf.mxu0
      %v4201 = vadd.f32 0.0, %v4200
      %v4202 = vpop.f32.mrf.mxu0
      %4203 = vdwg.mxu0
      %v4205 = vsel %vm716, %v4128, 0
      %4207 = vmatprep.subr.mxu0 0.0
      %4208 = vmatpush1.msra.mxu0 0.0
      %4209 = vmatprep.subr.mxu0 0.0
      %4210 = vmatpush1.msra.mxu0 0.0
      %4211 = vmatprep.subr.mxu0 0.0
      %4212 = vmatpush1.msra.mxu0 0.0
      %4213 = vmatprep.subr.mxu0 0.0
      %4214 = vmatpush1.msra.mxu0 0.0
      %4215 = vmatprep.subr.mxu0 0.0
      %4216 = vmatpush1.msra.mxu0 0.0
      %4217 = vmatprep.subr.mxu0 0.0
      %4218 = vmatpush1.msra.mxu0 0.0
      %4219 = vmatprep.subr.mxu0 0.0
      %4220 = vmatpush1.msra.mxu0 0.0
      %4221 = vmatprep.subr.mxu0 0.0
      %4222 = vmatpush1.msra.mxu0 0.0
      %4223 = vmatprep.subr.mxu0 0.0
      %4224 = vmatpush1.msra.mxu0 0.0
      %4225 = vmatprep.subr.mxu0 0.0
      %4226 = vmatpush1.msra.mxu0 0.0
      %4227 = vmatprep.subr.mxu0 0.0
      %4228 = vmatpush1.msra.mxu0 0.0
      %4229 = vmatprep.subr.mxu0 0.0
      %4230 = vmatpush1.msra.mxu0 0.0
      %4231 = vmatprep.subr.mxu0 0.0
      %4232 = vmatpush1.msra.mxu0 0.0
      %4233 = vmatprep.subr.mxu0 0.0
      %4234 = vmatpush1.msra.mxu0 0.0
      %4235 = vmatprep.subr.mxu0 0.0
      %4236 = vmatpush1.msra.mxu0 0.0
      %4237 = vmatprep.subr.mxu0 0.0
      %4238 = vmatpush1.msra.mxu0 %v3770
      %4239 = vmatprep.subr.mxu0 0.0
      %4240 = vmatpush2.msra.mxu0 0.0
      %4241 = vmatprep.subr.mxu0 0.0
      %4242 = vmatpush2.msra.mxu0 0.0
      %4243 = vmatprep.subr.mxu0 0.0
      %4244 = vmatpush2.msra.mxu0 0.0
      %4245 = vmatprep.subr.mxu0 0.0
      %4246 = vmatpush2.msra.mxu0 0.0
      %4247 = vmatprep.subr.mxu0 0.0
      %4248 = vmatpush2.msra.mxu0 0.0
      %4249 = vmatprep.subr.mxu0 0.0
      %4250 = vmatpush2.msra.mxu0 0.0
      %4251 = vmatprep.subr.mxu0 0.0
      %4252 = vmatpush2.msra.mxu0 0.0
      %4253 = vmatprep.subr.mxu0 0.0
      %4254 = vmatpush2.msra.mxu0 0.0
      %4255 = vmatprep.subr.mxu0 0.0
      %4256 = vmatpush2.msra.mxu0 0.0
      %4257 = vmatprep.subr.mxu0 0.0
      %4258 = vmatpush2.msra.mxu0 0.0
      %4259 = vmatprep.subr.mxu0 0.0
      %4260 = vmatpush2.msra.mxu0 0.0
      %4261 = vmatprep.subr.mxu0 0.0
      %4262 = vmatpush2.msra.mxu0 0.0
      %4263 = vmatprep.subr.mxu0 0.0
      %4264 = vmatpush2.msra.mxu0 0.0
      %4265 = vmatprep.subr.mxu0 0.0
      %4266 = vmatpush2.msra.mxu0 0.0
      %4267 = vmatprep.subr.mxu0 0.0
      %4268 = vmatpush2.msra.mxu0 0.0
      %4269 = vmatprep.subr.mxu0 0.0
      %4270 = vmatpush2.msra.mxu0 0.0
      %4271 = vmatprep.mubr.f32.mxu0 0.0
      %4272 = vmatmul.mubr.f32.gmra.mxu0 %v4205
      %v4273 = vpop.f32.mrf.mxu0
      %v4274 = vadd.f32 0.0, %v4273
      %v4275 = vpop.f32.mrf.mxu0
      %4276 = vdwg.mxu0
      %v4278 = vsel %vm716, %v4129, 0
      %4280 = vmatprep.subr.mxu0 0.0
      %4281 = vmatpush1.msra.mxu0 0.0
      %4282 = vmatprep.subr.mxu0 0.0
      %4283 = vmatpush1.msra.mxu0 0.0
      %4284 = vmatprep.subr.mxu0 0.0
      %4285 = vmatpush1.msra.mxu0 0.0
      %4286 = vmatprep.subr.mxu0 0.0
      %4287 = vmatpush1.msra.mxu0 0.0
      %4288 = vmatprep.subr.mxu0 0.0
      %4289 = vmatpush1.msra.mxu0 0.0
      %4290 = vmatprep.subr.mxu0 0.0
      %4291 = vmatpush1.msra.mxu0 0.0
      %4292 = vmatprep.subr.mxu0 0.0
      %4293 = vmatpush1.msra.mxu0 0.0
      %4294 = vmatprep.subr.mxu0 0.0
      %4295 = vmatpush1.msra.mxu0 0.0
      %4296 = vmatprep.subr.mxu0 0.0
      %4297 = vmatpush1.msra.mxu0 0.0
      %4298 = vmatprep.subr.mxu0 0.0
      %4299 = vmatpush1.msra.mxu0 0.0
      %4300 = vmatprep.subr.mxu0 0.0
      %4301 = vmatpush1.msra.mxu0 0.0
      %4302 = vmatprep.subr.mxu0 0.0
      %4303 = vmatpush1.msra.mxu0 0.0
      %4304 = vmatprep.subr.mxu0 0.0
      %4305 = vmatpush1.msra.mxu0 0.0
      %4306 = vmatprep.subr.mxu0 0.0
      %4307 = vmatpush1.msra.mxu0 0.0
      %4308 = vmatprep.subr.mxu0 0.0
      %4309 = vmatpush1.msra.mxu0 0.0
      %4310 = vmatprep.subr.mxu0 0.0
      %4311 = vmatpush1.msra.mxu0 %v3775
      %4312 = vmatprep.subr.mxu0 0.0
      %4313 = vmatpush2.msra.mxu0 0.0
      %4314 = vmatprep.subr.mxu0 0.0
      %4315 = vmatpush2.msra.mxu0 0.0
      %4316 = vmatprep.subr.mxu0 0.0
      %4317 = vmatpush2.msra.mxu0 0.0
      %4318 = vmatprep.subr.mxu0 0.0
      %4319 = vmatpush2.msra.mxu0 0.0
      %4320 = vmatprep.subr.mxu0 0.0
      %4321 = vmatpush2.msra.mxu0 0.0
      %4322 = vmatprep.subr.mxu0 0.0
      %4323 = vmatpush2.msra.mxu0 0.0
      %4324 = vmatprep.subr.mxu0 0.0
      %4325 = vmatpush2.msra.mxu0 0.0
      %4326 = vmatprep.subr.mxu0 0.0
      %4327 = vmatpush2.msra.mxu0 0.0
      %4328 = vmatprep.subr.mxu0 0.0
      %4329 = vmatpush2.msra.mxu0 0.0
      %4330 = vmatprep.subr.mxu0 0.0
      %4331 = vmatpush2.msra.mxu0 0.0
      %4332 = vmatprep.subr.mxu0 0.0
      %4333 = vmatpush2.msra.mxu0 0.0
      %4334 = vmatprep.subr.mxu0 0.0
      %4335 = vmatpush2.msra.mxu0 0.0
      %4336 = vmatprep.subr.mxu0 0.0
      %4337 = vmatpush2.msra.mxu0 0.0
      %4338 = vmatprep.subr.mxu0 0.0
      %4339 = vmatpush2.msra.mxu0 0.0
      %4340 = vmatprep.subr.mxu0 0.0
      %4341 = vmatpush2.msra.mxu0 0.0
      %4342 = vmatprep.subr.mxu0 0.0
      %4343 = vmatpush2.msra.mxu0 0.0
      %4344 = vmatprep.mubr.f32.mxu0 0.0
      %4345 = vmatmul.mubr.f32.gmra.mxu0 %v4278
      %v4346 = vpop.f32.mrf.mxu0
      %v4347 = vadd.f32 0.0, %v4346
      %v4348 = vpop.f32.mrf.mxu0
      %4349 = vdwg.mxu0
      %v4351 = vsel %vm716, %v4130, 0
      %4353 = vmatprep.subr.mxu0 0.0
      %4354 = vmatpush1.msra.mxu0 0.0
      %4355 = vmatprep.subr.mxu0 0.0
      %4356 = vmatpush1.msra.mxu0 0.0
      %4357 = vmatprep.subr.mxu0 0.0
      %4358 = vmatpush1.msra.mxu0 0.0
      %4359 = vmatprep.subr.mxu0 0.0
      %4360 = vmatpush1.msra.mxu0 0.0
      %4361 = vmatprep.subr.mxu0 0.0
      %4362 = vmatpush1.msra.mxu0 0.0
      %4363 = vmatprep.subr.mxu0 0.0
      %4364 = vmatpush1.msra.mxu0 0.0
      %4365 = vmatprep.subr.mxu0 0.0
      %4366 = vmatpush1.msra.mxu0 0.0
      %4367 = vmatprep.subr.mxu0 0.0
      %4368 = vmatpush1.msra.mxu0 0.0
      %4369 = vmatprep.subr.mxu0 0.0
      %4370 = vmatpush1.msra.mxu0 0.0
      %4371 = vmatprep.subr.mxu0 0.0
      %4372 = vmatpush1.msra.mxu0 0.0
      %4373 = vmatprep.subr.mxu0 0.0
      %4374 = vmatpush1.msra.mxu0 0.0
      %4375 = vmatprep.subr.mxu0 0.0
      %4376 = vmatpush1.msra.mxu0 0.0
      %4377 = vmatprep.subr.mxu0 0.0
      %4378 = vmatpush1.msra.mxu0 0.0
      %4379 = vmatprep.subr.mxu0 0.0
      %4380 = vmatpush1.msra.mxu0 0.0
      %4381 = vmatprep.subr.mxu0 0.0
      %4382 = vmatpush1.msra.mxu0 0.0
      %4383 = vmatprep.subr.mxu0 0.0
      %4384 = vmatpush1.msra.mxu0 %v3780
      %4385 = vmatprep.subr.mxu0 0.0
      %4386 = vmatpush2.msra.mxu0 0.0
      %4387 = vmatprep.subr.mxu0 0.0
      %4388 = vmatpush2.msra.mxu0 0.0
      %4389 = vmatprep.subr.mxu0 0.0
      %4390 = vmatpush2.msra.mxu0 0.0
      %4391 = vmatprep.subr.mxu0 0.0
      %4392 = vmatpush2.msra.mxu0 0.0
      %4393 = vmatprep.subr.mxu0 0.0
      %4394 = vmatpush2.msra.mxu0 0.0
      %4395 = vmatprep.subr.mxu0 0.0
      %4396 = vmatpush2.msra.mxu0 0.0
      %4397 = vmatprep.subr.mxu0 0.0
      %4398 = vmatpush2.msra.mxu0 0.0
      %4399 = vmatprep.subr.mxu0 0.0
      %4400 = vmatpush2.msra.mxu0 0.0
      %4401 = vmatprep.subr.mxu0 0.0
      %4402 = vmatpush2.msra.mxu0 0.0
      %4403 = vmatprep.subr.mxu0 0.0
      %4404 = vmatpush2.msra.mxu0 0.0
      %4405 = vmatprep.subr.mxu0 0.0
      %4406 = vmatpush2.msra.mxu0 0.0
      %4407 = vmatprep.subr.mxu0 0.0
      %4408 = vmatpush2.msra.mxu0 0.0
      %4409 = vmatprep.subr.mxu0 0.0
      %4410 = vmatpush2.msra.mxu0 0.0
      %4411 = vmatprep.subr.mxu0 0.0
      %4412 = vmatpush2.msra.mxu0 0.0
      %4413 = vmatprep.subr.mxu0 0.0
      %4414 = vmatpush2.msra.mxu0 0.0
      %4415 = vmatprep.subr.mxu0 0.0
      %4416 = vmatpush2.msra.mxu0 0.0
      %4417 = vmatprep.mubr.f32.mxu0 0.0
      %4418 = vmatmul.mubr.f32.gmra.mxu0 %v4351
      %v4419 = vpop.f32.mrf.mxu0
      %v4420 = vadd.f32 0.0, %v4419
      %v4421 = vpop.f32.mrf.mxu0
      %4422 = vdwg.mxu0
      %s4423 = scalar_lea.vmem %s4, 24
      %v4424 = vld [vmem:[%s4423] sm:$0xff]
      %v4426 = vsel %vm716, %v4201, 0
      %v4429 = vsel %vm716, %v4274, 0
      %v4432 = vsel %vm716, %v4347, 0
      %v4435 = vsel %vm716, %v4420, 0
      %4437 = vmatprep.subr.mxu0 0.0
      %4438 = vmatpush1.msra.mxu0 0.0
      %4439 = vmatprep.subr.mxu0 0.0
      %4440 = vmatpush1.msra.mxu0 0.0
      %4441 = vmatprep.subr.mxu0 0.0
      %4442 = vmatpush1.msra.mxu0 0.0
      %4443 = vmatprep.subr.mxu0 0.0
      %4444 = vmatpush1.msra.mxu0 0.0
      %4445 = vmatprep.subr.mxu0 0.0
      %4446 = vmatpush1.msra.mxu0 0.0
      %4447 = vmatprep.subr.mxu0 0.0
      %4448 = vmatpush1.msra.mxu0 0.0
      %4449 = vmatprep.subr.mxu0 0.0
      %4450 = vmatpush1.msra.mxu0 0.0
      %4451 = vmatprep.subr.mxu0 0.0
      %4452 = vmatpush1.msra.mxu0 0.0
      %4453 = vmatprep.subr.mxu0 0.0
      %4454 = vmatpush1.msra.mxu0 0.0
      %4455 = vmatprep.subr.mxu0 0.0
      %4456 = vmatpush1.msra.mxu0 0.0
      %4457 = vmatprep.subr.mxu0 0.0
      %4458 = vmatpush1.msra.mxu0 0.0
      %4459 = vmatprep.subr.mxu0 0.0
      %4460 = vmatpush1.msra.mxu0 0.0
      %4461 = vmatprep.subr.mxu0 0.0
      %4462 = vmatpush1.msra.mxu0 0.0
      %4463 = vmatprep.subr.mxu0 0.0
      %4464 = vmatpush1.msra.mxu0 0.0
      %4465 = vmatprep.subr.mxu0 0.0
      %4466 = vmatpush1.msra.mxu0 0.0
      %4467 = vmatprep.subr.mxu0 0.0
      %4468 = vmatpush1.msra.mxu0 %v4424
      %4469 = vmatprep.subr.mxu0 0.0
      %4470 = vmatpush2.msra.mxu0 0.0
      %4471 = vmatprep.subr.mxu0 0.0
      %4472 = vmatpush2.msra.mxu0 0.0
      %4473 = vmatprep.subr.mxu0 0.0
      %4474 = vmatpush2.msra.mxu0 0.0
      %4475 = vmatprep.subr.mxu0 0.0
      %4476 = vmatpush2.msra.mxu0 0.0
      %4477 = vmatprep.subr.mxu0 0.0
      %4478 = vmatpush2.msra.mxu0 0.0
      %4479 = vmatprep.subr.mxu0 0.0
      %4480 = vmatpush2.msra.mxu0 0.0
      %4481 = vmatprep.subr.mxu0 0.0
      %4482 = vmatpush2.msra.mxu0 0.0
      %4483 = vmatprep.subr.mxu0 0.0
      %4484 = vmatpush2.msra.mxu0 0.0
      %4485 = vmatprep.subr.mxu0 0.0
      %4486 = vmatpush2.msra.mxu0 0.0
      %4487 = vmatprep.subr.mxu0 0.0
      %4488 = vmatpush2.msra.mxu0 0.0
      %4489 = vmatprep.subr.mxu0 0.0
      %4490 = vmatpush2.msra.mxu0 0.0
      %4491 = vmatprep.subr.mxu0 0.0
      %4492 = vmatpush2.msra.mxu0 0.0
      %4493 = vmatprep.subr.mxu0 0.0
      %4494 = vmatpush2.msra.mxu0 0.0
      %4495 = vmatprep.subr.mxu0 0.0
      %4496 = vmatpush2.msra.mxu0 0.0
      %4497 = vmatprep.subr.mxu0 0.0
      %4498 = vmatpush2.msra.mxu0 0.0
      %4499 = vmatprep.subr.mxu0 0.0
      %4500 = vmatpush2.msra.mxu0 0.0
      %4501 = vmatprep.mubr.f32.mxu0 0.0
      %4502 = vmatmul.mubr.f32.gmra.mxu0 %v4426
      %v4503 = vpop.f32.mrf.mxu0
      %v4504 = vadd.f32 0.0, %v4503
      %v4505 = vpop.f32.mrf.mxu0
      %4506 = vmatprep.mubr.f32.mxu0 0.0
      %4507 = vmatmul.mubr.f32.gmra.mxu0 %v4429
      %v4508 = vpop.f32.mrf.mxu0
      %v4509 = vadd.f32 0.0, %v4508
      %v4510 = vpop.f32.mrf.mxu0
      %4511 = vmatprep.mubr.f32.mxu0 0.0
      %4512 = vmatmul.mubr.f32.gmra.mxu0 %v4432
      %v4513 = vpop.f32.mrf.mxu0
      %v4514 = vadd.f32 0.0, %v4513
      %v4515 = vpop.f32.mrf.mxu0
      %4516 = vmatprep.mubr.f32.mxu0 0.0
      %4517 = vmatmul.mubr.f32.gmra.mxu0 %v4435
      %v4518 = vpop.f32.mrf.mxu0
      %v4519 = vadd.f32 0.0, %v4518
      %v4520 = vpop.f32.mrf.mxu0
      %4521 = vdwg.mxu0
      %v4522 = vadd.f32 %v3497, %v4504
      %v4523 = vadd.f32 %v3498, %v4509
      %v4524 = vadd.f32 %v3499, %v4514
      %v4525 = vadd.f32 %v3500, %v4519
      %v4526 = vlaneseq
      %v4527 = vshrl.u32 %v4526, 7
      %v4528 = vsub.s32 0, %v4527
      %v4529 = vrot.slane %v416, %v4528
      %v4530 = vadd.f32 %v4522, %v4529
      %v4531 = vadd.f32 %v4523, %v4529
      %v4532 = vadd.f32 %v4524, %v4529
      %v4533 = vadd.f32 %v4525, %v4529
      %v4534 = vadd.f32 %v398, %v4530
      %v4535 = vadd.f32 %v403, %v4531
      %v4536 = vadd.f32 %v408, %v4532
      %v4537 = vadd.f32 %v413, %v4533
      %v4538 = vsel %vm444, %v4534, 0.0
      %4539 = vadd.xlane.f32.xlu0 %v4538
      %v4540 = vpop.xlane.xlu0 %4539
      %v4541 = vsel %vm444, %v4535, 0.0
      %4542 = vadd.xlane.f32.xlu0 %v4541
      %v4543 = vpop.xlane.xlu0 %4542
      %v4544 = vsel %vm444, %v4536, 0.0
      %4545 = vadd.xlane.f32.xlu0 %v4544
      %v4546 = vpop.xlane.xlu0 %4545
      %v4547 = vsel %vm444, %v4537, 0.0
      %4548 = vadd.xlane.f32.xlu0 %v4547
      %v4549 = vpop.xlane.xlu0 %4548
      %v4550 = vrcp.pop 32.0
      %v4551 = vmul.f32 %v4540, %v4550
      %v4552 = vmul.f32 %v4543, %v4550
      %v4553 = vmul.f32 %v4546, %v4550
      %v4554 = vmul.f32 %v4549, %v4550
      %v4555 = vsub.f32 %v4534, %v4551
      %v4556 = vsub.f32 %v4535, %v4552
      %v4557 = vsub.f32 %v4536, %v4553
      %v4558 = vsub.f32 %v4537, %v4554
      %v4559 = vmul.f32 %v4555, %v4555
      %v4560 = vmul.f32 %v4556, %v4556
      %v4561 = vmul.f32 %v4557, %v4557
      %v4562 = vmul.f32 %v4558, %v4558
      %v4563 = vsel %vm444, %v4559, 0.0
      %4564 = vadd.xlane.f32.xlu0 %v4563
      %v4565 = vpop.xlane.xlu0 %4564
      %v4566 = vsel %vm444, %v4560, 0.0
      %4567 = vadd.xlane.f32.xlu0 %v4566
      %v4568 = vpop.xlane.xlu0 %4567
      %v4569 = vsel %vm444, %v4561, 0.0
      %4570 = vadd.xlane.f32.xlu0 %v4569
      %v4571 = vpop.xlane.xlu0 %4570
      %v4572 = vsel %vm444, %v4562, 0.0
      %4573 = vadd.xlane.f32.xlu0 %v4572
      %v4574 = vpop.xlane.xlu0 %4573
      %v4575 = vmul.f32 %v4565, %v4550
      %v4576 = vmul.f32 %v4568, %v4550
      %v4577 = vmul.f32 %v4571, %v4550
      %v4578 = vmul.f32 %v4574, %v4550
      %v4579 = vadd.f32 %v4575, 1e-05
      %v4580 = vadd.f32 %v4576, 1e-05
      %v4581 = vadd.f32 %v4577, 1e-05
      %v4582 = vadd.f32 %v4578, 1e-05
      %v4583 = vrsqrt.pop %v4579
      %v4584 = vrsqrt.pop %v4580
      %v4585 = vrsqrt.pop %v4581
      %v4586 = vrsqrt.pop %v4582
      %v4587 = vmul.f32 %v4555, %v4583
      %v4588 = vmul.f32 %v4556, %v4584
      %v4589 = vmul.f32 %v4557, %v4585
      %v4590 = vmul.f32 %v4558, %v4586
      %v4591 = vlaneseq
      %v4592 = vshrl.u32 %v4591, 7
      %v4593 = vsub.s32 0, %v4592
      %v4594 = vrot.slane %v417, %v4593
      %v4595 = vmul.f32 %v4587, %v4594
      %v4596 = vmul.f32 %v4588, %v4594
      %v4597 = vmul.f32 %v4589, %v4594
      %v4598 = vmul.f32 %v4590, %v4594
      %v4599 = vlaneseq
      %v4600 = vshrl.u32 %v4599, 7
      %v4601 = vsub.s32 0, %v4600
      %v4602 = vrot.slane %v418, %v4601
      %v4603 = vadd.f32 %v4595, %v4602
      %v4604 = vadd.f32 %v4596, %v4602
      %v4605 = vadd.f32 %v4597, %v4602
      %v4606 = vadd.f32 %v4598, %v4602
      %v4607 = vld [vmem:[%s5] sm:$0xff]
      %v4608 = vld [vmem:[%s5 + $0x8] sm:$0xff]
      %v4609 = vld [vmem:[%s5 + $0x10] sm:$0xff]
      %v4610 = vld [vmem:[%s5 + $0x18] sm:$0xff]
      %v4611 = vlaneseq
      %v4612 = vshrl.u32 %v4611, 7
      %v4613 = vsub.s32 0, %v4612
      %v4614 = vrot.slane %v419, %v4613
      %v4616 = vsel %vm444, %v4603, 0
      %v4619 = vsel %vm444, %v4604, 0
      %v4622 = vsel %vm444, %v4605, 0
      %v4625 = vsel %vm444, %v4606, 0
      %4627 = vmatprep.subr.mxu0 0.0
      %4628 = vmatpush1.msra.mxu0 0.0
      %4629 = vmatprep.subr.mxu0 0.0
      %4630 = vmatpush1.msra.mxu0 0.0
      %4631 = vmatprep.subr.mxu0 0.0
      %4632 = vmatpush1.msra.mxu0 0.0
      %4633 = vmatprep.subr.mxu0 0.0
      %4634 = vmatpush1.msra.mxu0 0.0
      %4635 = vmatprep.subr.mxu0 0.0
      %4636 = vmatpush1.msra.mxu0 0.0
      %4637 = vmatprep.subr.mxu0 0.0
      %4638 = vmatpush1.msra.mxu0 0.0
      %4639 = vmatprep.subr.mxu0 0.0
      %4640 = vmatpush1.msra.mxu0 0.0
      %4641 = vmatprep.subr.mxu0 0.0
      %4642 = vmatpush1.msra.mxu0 0.0
      %4643 = vmatprep.subr.mxu0 0.0
      %4644 = vmatpush1.msra.mxu0 0.0
      %4645 = vmatprep.subr.mxu0 0.0
      %4646 = vmatpush1.msra.mxu0 0.0
      %4647 = vmatprep.subr.mxu0 0.0
      %4648 = vmatpush1.msra.mxu0 0.0
      %4649 = vmatprep.subr.mxu0 0.0
      %4650 = vmatpush1.msra.mxu0 0.0
      %4651 = vmatprep.subr.mxu0 0.0
      %4652 = vmatpush1.msra.mxu0 %v4610
      %4653 = vmatprep.subr.mxu0 0.0
      %4654 = vmatpush1.msra.mxu0 %v4609
      %4655 = vmatprep.subr.mxu0 0.0
      %4656 = vmatpush1.msra.mxu0 %v4608
      %4657 = vmatprep.subr.mxu0 0.0
      %4658 = vmatpush1.msra.mxu0 %v4607
      %4659 = vmatprep.subr.mxu0 0.0
      %4660 = vmatpush2.msra.mxu0 0.0
      %4661 = vmatprep.subr.mxu0 0.0
      %4662 = vmatpush2.msra.mxu0 0.0
      %4663 = vmatprep.subr.mxu0 0.0
      %4664 = vmatpush2.msra.mxu0 0.0
      %4665 = vmatprep.subr.mxu0 0.0
      %4666 = vmatpush2.msra.mxu0 0.0
      %4667 = vmatprep.subr.mxu0 0.0
      %4668 = vmatpush2.msra.mxu0 0.0
      %4669 = vmatprep.subr.mxu0 0.0
      %4670 = vmatpush2.msra.mxu0 0.0
      %4671 = vmatprep.subr.mxu0 0.0
      %4672 = vmatpush2.msra.mxu0 0.0
      %4673 = vmatprep.subr.mxu0 0.0
      %4674 = vmatpush2.msra.mxu0 0.0
      %4675 = vmatprep.subr.mxu0 0.0
      %4676 = vmatpush2.msra.mxu0 0.0
      %4677 = vmatprep.subr.mxu0 0.0
      %4678 = vmatpush2.msra.mxu0 0.0
      %4679 = vmatprep.subr.mxu0 0.0
      %4680 = vmatpush2.msra.mxu0 0.0
      %4681 = vmatprep.subr.mxu0 0.0
      %4682 = vmatpush2.msra.mxu0 0.0
      %4683 = vmatprep.subr.mxu0 0.0
      %4684 = vmatpush2.msra.mxu0 0.0
      %4685 = vmatprep.subr.mxu0 0.0
      %4686 = vmatpush2.msra.mxu0 0.0
      %4687 = vmatprep.subr.mxu0 0.0
      %4688 = vmatpush2.msra.mxu0 0.0
      %4689 = vmatprep.subr.mxu0 0.0
      %4690 = vmatpush2.msra.mxu0 0.0
      %4691 = vmatprep.mubr.f32.mxu0 0.0
      %4692 = vmatmul.mubr.f32.gmra.mxu0 %v4616
      %v4693 = vpop.f32.mrf.mxu0
      %v4694 = vadd.f32 %v4614, %v4693
      %v4695 = vpop.f32.mrf.mxu0
      %4696 = vmatprep.mubr.f32.mxu0 0.0
      %4697 = vmatmul.mubr.f32.gmra.mxu0 %v4619
      %v4698 = vpop.f32.mrf.mxu0
      %v4699 = vadd.f32 %v4614, %v4698
      %v4700 = vpop.f32.mrf.mxu0
      %4701 = vmatprep.mubr.f32.mxu0 0.0
      %4702 = vmatmul.mubr.f32.gmra.mxu0 %v4622
      %v4703 = vpop.f32.mrf.mxu0
      %v4704 = vadd.f32 %v4614, %v4703
      %v4705 = vpop.f32.mrf.mxu0
      %4706 = vmatprep.mubr.f32.mxu0 0.0
      %4707 = vmatmul.mubr.f32.gmra.mxu0 %v4625
      %v4708 = vpop.f32.mrf.mxu0
      %v4709 = vadd.f32 %v4614, %v4708
      %v4710 = vpop.f32.mrf.mxu0
      %4711 = vdwg.mxu0
      %v4712 = vmax.f32 %v4694, 0.0
      %v4713 = vmax.f32 %v4699, 0.0
      %v4714 = vmax.f32 %v4704, 0.0
      %v4715 = vmax.f32 %v4709, 0.0
      %v4716 = vld [vmem:[%s6] sm:$0xff]
      %v4717 = vld [vmem:[%s6 + $0x8] sm:$0xff]
      %v4718 = vld [vmem:[%s6 + $0x10] sm:$0xff]
      %v4719 = vld [vmem:[%s6 + $0x18] sm:$0xff]
      %v4720 = vld [vmem:[%s6 + $0x20] sm:$0xff]
      %v4721 = vld [vmem:[%s6 + $0x28] sm:$0xff]
      %v4722 = vld [vmem:[%s6 + $0x30] sm:$0xff]
      %v4723 = vld [vmem:[%s6 + $0x38] sm:$0xff]
      %v4724 = vlaneseq
      %v4725 = vshrl.u32 %v4724, 7
      %v4726 = vsub.s32 0, %v4725
      %v4727 = vrot.slane %v420, %v4726
      %vm4728 = vcmask 523264
      %v4730 = vsel %vm4728, %v4712, 0
      %v4733 = vsel %vm4728, %v4713, 0
      %v4736 = vsel %vm4728, %v4714, 0
      %v4739 = vsel %vm4728, %v4715, 0
      %4741 = vmatprep.subr.mxu0 0.0
      %4742 = vmatpush1.msra.mxu0 0.0
      %4743 = vmatprep.subr.mxu0 0.0
      %4744 = vmatpush1.msra.mxu0 0.0
      %4745 = vmatprep.subr.mxu0 0.0
      %4746 = vmatpush1.msra.mxu0 0.0
      %4747 = vmatprep.subr.mxu0 0.0
      %4748 = vmatpush1.msra.mxu0 0.0
      %4749 = vmatprep.subr.mxu0 0.0
      %4750 = vmatpush1.msra.mxu0 0.0
      %4751 = vmatprep.subr.mxu0 0.0
      %4752 = vmatpush1.msra.mxu0 0.0
      %4753 = vmatprep.subr.mxu0 0.0
      %4754 = vmatpush1.msra.mxu0 0.0
      %4755 = vmatprep.subr.mxu0 0.0
      %4756 = vmatpush1.msra.mxu0 0.0
      %4757 = vmatprep.subr.mxu0 0.0
      %4758 = vmatpush1.msra.mxu0 %v4723
      %4759 = vmatprep.subr.mxu0 0.0
      %4760 = vmatpush1.msra.mxu0 %v4722
      %4761 = vmatprep.subr.mxu0 0.0
      %4762 = vmatpush1.msra.mxu0 %v4721
      %4763 = vmatprep.subr.mxu0 0.0
      %4764 = vmatpush1.msra.mxu0 %v4720
      %4765 = vmatprep.subr.mxu0 0.0
      %4766 = vmatpush1.msra.mxu0 %v4719
      %4767 = vmatprep.subr.mxu0 0.0
      %4768 = vmatpush1.msra.mxu0 %v4718
      %4769 = vmatprep.subr.mxu0 0.0
      %4770 = vmatpush1.msra.mxu0 %v4717
      %4771 = vmatprep.subr.mxu0 0.0
      %4772 = vmatpush1.msra.mxu0 %v4716
      %4773 = vmatprep.subr.mxu0 0.0
      %4774 = vmatpush2.msra.mxu0 0.0
      %4775 = vmatprep.subr.mxu0 0.0
      %4776 = vmatpush2.msra.mxu0 0.0
      %4777 = vmatprep.subr.mxu0 0.0
      %4778 = vmatpush2.msra.mxu0 0.0
      %4779 = vmatprep.subr.mxu0 0.0
      %4780 = vmatpush2.msra.mxu0 0.0
      %4781 = vmatprep.subr.mxu0 0.0
      %4782 = vmatpush2.msra.mxu0 0.0
      %4783 = vmatprep.subr.mxu0 0.0
      %4784 = vmatpush2.msra.mxu0 0.0
      %4785 = vmatprep.subr.mxu0 0.0
      %4786 = vmatpush2.msra.mxu0 0.0
      %4787 = vmatprep.subr.mxu0 0.0
      %4788 = vmatpush2.msra.mxu0 0.0
      %4789 = vmatprep.subr.mxu0 0.0
      %4790 = vmatpush2.msra.mxu0 0.0
      %4791 = vmatprep.subr.mxu0 0.0
      %4792 = vmatpush2.msra.mxu0 0.0
      %4793 = vmatprep.subr.mxu0 0.0
      %4794 = vmatpush2.msra.mxu0 0.0
      %4795 = vmatprep.subr.mxu0 0.0
      %4796 = vmatpush2.msra.mxu0 0.0
      %4797 = vmatprep.subr.mxu0 0.0
      %4798 = vmatpush2.msra.mxu0 0.0
      %4799 = vmatprep.subr.mxu0 0.0
      %4800 = vmatpush2.msra.mxu0 0.0
      %4801 = vmatprep.subr.mxu0 0.0
      %4802 = vmatpush2.msra.mxu0 0.0
      %4803 = vmatprep.subr.mxu0 0.0
      %4804 = vmatpush2.msra.mxu0 0.0
      %4805 = vmatprep.mubr.f32.mxu0 0.0
      %4806 = vmatmul.mubr.f32.gmra.mxu0 %v4730
      %v4807 = vpop.f32.mrf.mxu0
      %v4808 = vadd.f32 %v4727, %v4807
      %v4809 = vpop.f32.mrf.mxu0
      %4810 = vmatprep.mubr.f32.mxu0 0.0
      %4811 = vmatmul.mubr.f32.gmra.mxu0 %v4733
      %v4812 = vpop.f32.mrf.mxu0
      %v4813 = vadd.f32 %v4727, %v4812
      %v4814 = vpop.f32.mrf.mxu0
      %4815 = vmatprep.mubr.f32.mxu0 0.0
      %4816 = vmatmul.mubr.f32.gmra.mxu0 %v4736
      %v4817 = vpop.f32.mrf.mxu0
      %v4818 = vadd.f32 %v4727, %v4817
      %v4819 = vpop.f32.mrf.mxu0
      %4820 = vmatprep.mubr.f32.mxu0 0.0
      %4821 = vmatmul.mubr.f32.gmra.mxu0 %v4739
      %v4822 = vpop.f32.mrf.mxu0
      %v4823 = vadd.f32 %v4727, %v4822
      %v4824 = vpop.f32.mrf.mxu0
      %4825 = vdwg.mxu0
      %v4826 = vadd.f32 %v4603, %v4808
      %v4827 = vadd.f32 %v4604, %v4813
      %v4828 = vadd.f32 %v4605, %v4818
      %v4829 = vadd.f32 %v4606, %v4823
      %v4830 = vsel %vm444, %v4826, 0.0
      %4831 = vadd.xlane.f32.xlu0 %v4830
      %v4832 = vpop.xlane.xlu0 %4831
      %v4833 = vsel %vm444, %v4827, 0.0
      %4834 = vadd.xlane.f32.xlu0 %v4833
      %v4835 = vpop.xlane.xlu0 %4834
      %v4836 = vsel %vm444, %v4828, 0.0
      %4837 = vadd.xlane.f32.xlu0 %v4836
      %v4838 = vpop.xlane.xlu0 %4837
      %v4839 = vsel %vm444, %v4829, 0.0
      %4840 = vadd.xlane.f32.xlu0 %v4839
      %v4841 = vpop.xlane.xlu0 %4840
      %v4842 = vmul.f32 %v4832, %v4550
      %v4843 = vmul.f32 %v4835, %v4550
      %v4844 = vmul.f32 %v4838, %v4550
      %v4845 = vmul.f32 %v4841, %v4550
      %v4846 = vsub.f32 %v4826, %v4842
      %v4847 = vsub.f32 %v4827, %v4843
      %v4848 = vsub.f32 %v4828, %v4844
      %v4849 = vsub.f32 %v4829, %v4845
      %v4850 = vmul.f32 %v4846, %v4846
      %v4851 = vmul.f32 %v4847, %v4847
      %v4852 = vmul.f32 %v4848, %v4848
      %v4853 = vmul.f32 %v4849, %v4849
      %v4854 = vsel %vm444, %v4850, 0.0
      %4855 = vadd.xlane.f32.xlu0 %v4854
      %v4856 = vpop.xlane.xlu0 %4855
      %v4857 = vsel %vm444, %v4851, 0.0
      %4858 = vadd.xlane.f32.xlu0 %v4857
      %v4859 = vpop.xlane.xlu0 %4858
      %v4860 = vsel %vm444, %v4852, 0.0
      %4861 = vadd.xlane.f32.xlu0 %v4860
      %v4862 = vpop.xlane.xlu0 %4861
      %v4863 = vsel %vm444, %v4853, 0.0
      %4864 = vadd.xlane.f32.xlu0 %v4863
      %v4865 = vpop.xlane.xlu0 %4864
      %v4866 = vmul.f32 %v4856, %v4550
      %v4867 = vmul.f32 %v4859, %v4550
      %v4868 = vmul.f32 %v4862, %v4550
      %v4869 = vmul.f32 %v4865, %v4550
      %v4870 = vadd.f32 %v4866, 1e-05
      %v4871 = vadd.f32 %v4867, 1e-05
      %v4872 = vadd.f32 %v4868, 1e-05
      %v4873 = vadd.f32 %v4869, 1e-05
      %v4874 = vrsqrt.pop %v4870
      %v4875 = vrsqrt.pop %v4871
      %v4876 = vrsqrt.pop %v4872
      %v4877 = vrsqrt.pop %v4873
      %v4878 = vmul.f32 %v4846, %v4874
      %v4879 = vmul.f32 %v4847, %v4875
      %v4880 = vmul.f32 %v4848, %v4876
      %v4881 = vmul.f32 %v4849, %v4877
      %v4882 = vlaneseq
      %v4883 = vshrl.u32 %v4882, 7
      %v4884 = vsub.s32 0, %v4883
      %v4885 = vrot.slane %v421, %v4884
      %v4886 = vmul.f32 %v4878, %v4885
      %v4887 = vmul.f32 %v4879, %v4885
      %v4888 = vmul.f32 %v4880, %v4885
      %v4889 = vmul.f32 %v4881, %v4885
      %v4890 = vlaneseq
      %v4891 = vshrl.u32 %v4890, 7
      %v4892 = vsub.s32 0, %v4891
      %v4893 = vrot.slane %v422, %v4892
      %v4894 = vadd.f32 %v4886, %v4893
      %v4895 = vadd.f32 %v4887, %v4893
      %v4896 = vadd.f32 %v4888, %v4893
      %v4897 = vadd.f32 %v4889, %v4893
      %v4898 = vld [vmem:[%s7 + $0x8] sm:$0x1]
      %v4899 = vld [vmem:[%s7 + $0x9] sm:$0x1]
      %v4900 = vld [vmem:[%s7 + $0xa] sm:$0x1]
      %v4901 = vld [vmem:[%s7 + $0xb] sm:$0x1]
      %v4902 = vld [vmem:[%s7 + $0xc] sm:$0x1]
      %v4903 = vld [vmem:[%s7 + $0xd] sm:$0x1]
      %v4904 = vld [vmem:[%s7 + $0xe] sm:$0x1]
      %s4905 = scalar_lea.vmem %s2, 384
      %v4906 = vld [vmem:[%s4905] sm:$0xff]
      %v4907 = vld [vmem:[%s4905 + $0x8] sm:$0xff]
      %v4908 = vld [vmem:[%s4905 + $0x10] sm:$0xff]
      %v4909 = vld [vmem:[%s4905 + $0x18] sm:$0xff]
      %s4910 = scalar_lea.vmem %s2, 512
      %v4911 = vld [vmem:[%s4910] sm:$0xff]
      %v4912 = vld [vmem:[%s4910 + $0x8] sm:$0xff]
      %v4913 = vld [vmem:[%s4910 + $0x10] sm:$0xff]
      %v4914 = vld [vmem:[%s4910 + $0x18] sm:$0xff]
      %s4915 = scalar_lea.vmem %s2, 640
      %v4916 = vld [vmem:[%s4915] sm:$0xff]
      %v4917 = vld [vmem:[%s4915 + $0x8] sm:$0xff]
      %v4918 = vld [vmem:[%s4915 + $0x10] sm:$0xff]
      %v4919 = vld [vmem:[%s4915 + $0x18] sm:$0xff]
      %s4920 = scalar_lea.vmem %s3, 4
      %v4921 = vld [vmem:[%s4920] sm:$0x1]
      %v4923 = vlaneseq
      %v4924 = vshrl.u32 %v4923, 7
      %v4925 = vsub.s32 0, %v4924
      %v4926 = vrot.slane %v4921, %v4925
      %v4929 = vsel %vm444, %v4894, 0
      %v4932 = vsel %vm444, %v4895, 0
      %v4935 = vsel %vm444, %v4896, 0
      %v4938 = vsel %vm444, %v4897, 0
      %4940 = vmatprep.subr.mxu0 0.0
      %4941 = vmatpush1.msra.mxu0 0.0
      %4942 = vmatprep.subr.mxu0 0.0
      %4943 = vmatpush1.msra.mxu0 0.0
      %4944 = vmatprep.subr.mxu0 0.0
      %4945 = vmatpush1.msra.mxu0 0.0
      %4946 = vmatprep.subr.mxu0 0.0
      %4947 = vmatpush1.msra.mxu0 0.0
      %4948 = vmatprep.subr.mxu0 0.0
      %4949 = vmatpush1.msra.mxu0 0.0
      %4950 = vmatprep.subr.mxu0 0.0
      %4951 = vmatpush1.msra.mxu0 0.0
      %4952 = vmatprep.subr.mxu0 0.0
      %4953 = vmatpush1.msra.mxu0 0.0
      %4954 = vmatprep.subr.mxu0 0.0
      %4955 = vmatpush1.msra.mxu0 0.0
      %4956 = vmatprep.subr.mxu0 0.0
      %4957 = vmatpush1.msra.mxu0 0.0
      %4958 = vmatprep.subr.mxu0 0.0
      %4959 = vmatpush1.msra.mxu0 0.0
      %4960 = vmatprep.subr.mxu0 0.0
      %4961 = vmatpush1.msra.mxu0 0.0
      %4962 = vmatprep.subr.mxu0 0.0
      %4963 = vmatpush1.msra.mxu0 0.0
      %4964 = vmatprep.subr.mxu0 0.0
      %4965 = vmatpush1.msra.mxu0 %v4909
      %4966 = vmatprep.subr.mxu0 0.0
      %4967 = vmatpush1.msra.mxu0 %v4908
      %4968 = vmatprep.subr.mxu0 0.0
      %4969 = vmatpush1.msra.mxu0 %v4907
      %4970 = vmatprep.subr.mxu0 0.0
      %4971 = vmatpush1.msra.mxu0 %v4906
      %4972 = vmatprep.subr.mxu0 0.0
      %4973 = vmatpush2.msra.mxu0 0.0
      %4974 = vmatprep.subr.mxu0 0.0
      %4975 = vmatpush2.msra.mxu0 0.0
      %4976 = vmatprep.subr.mxu0 0.0
      %4977 = vmatpush2.msra.mxu0 0.0
      %4978 = vmatprep.subr.mxu0 0.0
      %4979 = vmatpush2.msra.mxu0 0.0
      %4980 = vmatprep.subr.mxu0 0.0
      %4981 = vmatpush2.msra.mxu0 0.0
      %4982 = vmatprep.subr.mxu0 0.0
      %4983 = vmatpush2.msra.mxu0 0.0
      %4984 = vmatprep.subr.mxu0 0.0
      %4985 = vmatpush2.msra.mxu0 0.0
      %4986 = vmatprep.subr.mxu0 0.0
      %4987 = vmatpush2.msra.mxu0 0.0
      %4988 = vmatprep.subr.mxu0 0.0
      %4989 = vmatpush2.msra.mxu0 0.0
      %4990 = vmatprep.subr.mxu0 0.0
      %4991 = vmatpush2.msra.mxu0 0.0
      %4992 = vmatprep.subr.mxu0 0.0
      %4993 = vmatpush2.msra.mxu0 0.0
      %4994 = vmatprep.subr.mxu0 0.0
      %4995 = vmatpush2.msra.mxu0 0.0
      %4996 = vmatprep.subr.mxu0 0.0
      %4997 = vmatpush2.msra.mxu0 0.0
      %4998 = vmatprep.subr.mxu0 0.0
      %4999 = vmatpush2.msra.mxu0 0.0
      %5000 = vmatprep.subr.mxu0 0.0
      %5001 = vmatpush2.msra.mxu0 0.0
      %5002 = vmatprep.subr.mxu0 0.0
      %5003 = vmatpush2.msra.mxu0 0.0
      %5004 = vmatprep.mubr.f32.mxu0 0.0
      %5005 = vmatmul.mubr.f32.gmra.mxu0 %v4929
      %v5006 = vpop.f32.mrf.mxu0
      %v5007 = vadd.f32 %v4926, %v5006
      %v5008 = vpop.f32.mrf.mxu0
      %5009 = vmatprep.mubr.f32.mxu0 0.0
      %5010 = vmatmul.mubr.f32.gmra.mxu0 %v4932
      %v5011 = vpop.f32.mrf.mxu0
      %v5012 = vadd.f32 %v4926, %v5011
      %v5013 = vpop.f32.mrf.mxu0
      %5014 = vmatprep.mubr.f32.mxu0 0.0
      %5015 = vmatmul.mubr.f32.gmra.mxu0 %v4935
      %v5016 = vpop.f32.mrf.mxu0
      %v5017 = vadd.f32 %v4926, %v5016
      %v5018 = vpop.f32.mrf.mxu0
      %5019 = vmatprep.mubr.f32.mxu0 0.0
      %5020 = vmatmul.mubr.f32.gmra.mxu0 %v4938
      %v5021 = vpop.f32.mrf.mxu0
      %v5022 = vadd.f32 %v4926, %v5021
      %v5023 = vpop.f32.mrf.mxu0
      %5024 = vdwg.mxu0
      %v5025 = vmul.f32 %v5007, 0.35355338
      %v5026 = vmul.f32 %v5012, 0.35355338
      %v5027 = vmul.f32 %v5017, 0.35355338
      %v5028 = vmul.f32 %v5022, 0.35355338
      %5029 = vmatprep.subr.mxu0 0.0
      %5030 = vmatpush1.msra.mxu0 0.0
      %5031 = vmatprep.subr.mxu0 0.0
      %5032 = vmatpush1.msra.mxu0 0.0
      %5033 = vmatprep.subr.mxu0 0.0
      %5034 = vmatpush1.msra.mxu0 0.0
      %5035 = vmatprep.subr.mxu0 0.0
      %5036 = vmatpush1.msra.mxu0 0.0
      %5037 = vmatprep.subr.mxu0 0.0
      %5038 = vmatpush1.msra.mxu0 0.0
      %5039 = vmatprep.subr.mxu0 0.0
      %5040 = vmatpush1.msra.mxu0 0.0
      %5041 = vmatprep.subr.mxu0 0.0
      %5042 = vmatpush1.msra.mxu0 0.0
      %5043 = vmatprep.subr.mxu0 0.0
      %5044 = vmatpush1.msra.mxu0 0.0
      %5045 = vmatprep.subr.mxu0 0.0
      %5046 = vmatpush1.msra.mxu0 0.0
      %5047 = vmatprep.subr.mxu0 0.0
      %5048 = vmatpush1.msra.mxu0 0.0
      %5049 = vmatprep.subr.mxu0 0.0
      %5050 = vmatpush1.msra.mxu0 0.0
      %5051 = vmatprep.subr.mxu0 0.0
      %5052 = vmatpush1.msra.mxu0 0.0
      %5053 = vmatprep.subr.mxu0 0.0
      %5054 = vmatpush1.msra.mxu0 %v4914
      %5055 = vmatprep.subr.mxu0 0.0
      %5056 = vmatpush1.msra.mxu0 %v4913
      %5057 = vmatprep.subr.mxu0 0.0
      %5058 = vmatpush1.msra.mxu0 %v4912
      %5059 = vmatprep.subr.mxu0 0.0
      %5060 = vmatpush1.msra.mxu0 %v4911
      %5061 = vmatprep.subr.mxu0 0.0
      %5062 = vmatpush2.msra.mxu0 0.0
      %5063 = vmatprep.subr.mxu0 0.0
      %5064 = vmatpush2.msra.mxu0 0.0
      %5065 = vmatprep.subr.mxu0 0.0
      %5066 = vmatpush2.msra.mxu0 0.0
      %5067 = vmatprep.subr.mxu0 0.0
      %5068 = vmatpush2.msra.mxu0 0.0
      %5069 = vmatprep.subr.mxu0 0.0
      %5070 = vmatpush2.msra.mxu0 0.0
      %5071 = vmatprep.subr.mxu0 0.0
      %5072 = vmatpush2.msra.mxu0 0.0
      %5073 = vmatprep.subr.mxu0 0.0
      %5074 = vmatpush2.msra.mxu0 0.0
      %5075 = vmatprep.subr.mxu0 0.0
      %5076 = vmatpush2.msra.mxu0 0.0
      %5077 = vmatprep.subr.mxu0 0.0
      %5078 = vmatpush2.msra.mxu0 0.0
      %5079 = vmatprep.subr.mxu0 0.0
      %5080 = vmatpush2.msra.mxu0 0.0
      %5081 = vmatprep.subr.mxu0 0.0
      %5082 = vmatpush2.msra.mxu0 0.0
      %5083 = vmatprep.subr.mxu0 0.0
      %5084 = vmatpush2.msra.mxu0 0.0
      %5085 = vmatprep.subr.mxu0 0.0
      %5086 = vmatpush2.msra.mxu0 0.0
      %5087 = vmatprep.subr.mxu0 0.0
      %5088 = vmatpush2.msra.mxu0 0.0
      %5089 = vmatprep.subr.mxu0 0.0
      %5090 = vmatpush2.msra.mxu0 0.0
      %5091 = vmatprep.subr.mxu0 0.0
      %5092 = vmatpush2.msra.mxu0 0.0
      %5093 = vmatprep.mubr.f32.mxu0 0.0
      %5094 = vmatmul.mubr.f32.gmra.mxu0 %v4929
      %v5095 = vpop.f32.mrf.mxu0
      %v5096 = vadd.f32 0.0, %v5095
      %v5097 = vpop.f32.mrf.mxu0
      %5098 = vmatprep.mubr.f32.mxu0 0.0
      %5099 = vmatmul.mubr.f32.gmra.mxu0 %v4932
      %v5100 = vpop.f32.mrf.mxu0
      %v5101 = vadd.f32 0.0, %v5100
      %v5102 = vpop.f32.mrf.mxu0
      %5103 = vmatprep.mubr.f32.mxu0 0.0
      %5104 = vmatmul.mubr.f32.gmra.mxu0 %v4935
      %v5105 = vpop.f32.mrf.mxu0
      %v5106 = vadd.f32 0.0, %v5105
      %v5107 = vpop.f32.mrf.mxu0
      %5108 = vmatprep.mubr.f32.mxu0 0.0
      %5109 = vmatmul.mubr.f32.gmra.mxu0 %v4938
      %v5110 = vpop.f32.mrf.mxu0
      %v5111 = vadd.f32 0.0, %v5110
      %v5112 = vpop.f32.mrf.mxu0
      %5113 = vdwg.mxu0
      %5114 = vmatprep.subr.mxu0 0.0
      %5115 = vmatpush1.msra.mxu0 0.0
      %5116 = vmatprep.subr.mxu0 0.0
      %5117 = vmatpush1.msra.mxu0 0.0
      %5118 = vmatprep.subr.mxu0 0.0
      %5119 = vmatpush1.msra.mxu0 0.0
      %5120 = vmatprep.subr.mxu0 0.0
      %5121 = vmatpush1.msra.mxu0 0.0
      %5122 = vmatprep.subr.mxu0 0.0
      %5123 = vmatpush1.msra.mxu0 0.0
      %5124 = vmatprep.subr.mxu0 0.0
      %5125 = vmatpush1.msra.mxu0 0.0
      %5126 = vmatprep.subr.mxu0 0.0
      %5127 = vmatpush1.msra.mxu0 0.0
      %5128 = vmatprep.subr.mxu0 0.0
      %5129 = vmatpush1.msra.mxu0 0.0
      %5130 = vmatprep.subr.mxu0 0.0
      %5131 = vmatpush1.msra.mxu0 0.0
      %5132 = vmatprep.subr.mxu0 0.0
      %5133 = vmatpush1.msra.mxu0 0.0
      %5134 = vmatprep.subr.mxu0 0.0
      %5135 = vmatpush1.msra.mxu0 0.0
      %5136 = vmatprep.subr.mxu0 0.0
      %5137 = vmatpush1.msra.mxu0 0.0
      %5138 = vmatprep.subr.mxu0 0.0
      %5139 = vmatpush1.msra.mxu0 %v4919
      %5140 = vmatprep.subr.mxu0 0.0
      %5141 = vmatpush1.msra.mxu0 %v4918
      %5142 = vmatprep.subr.mxu0 0.0
      %5143 = vmatpush1.msra.mxu0 %v4917
      %5144 = vmatprep.subr.mxu0 0.0
      %5145 = vmatpush1.msra.mxu0 %v4916
      %5146 = vmatprep.subr.mxu0 0.0
      %5147 = vmatpush2.msra.mxu0 0.0
      %5148 = vmatprep.subr.mxu0 0.0
      %5149 = vmatpush2.msra.mxu0 0.0
      %5150 = vmatprep.subr.mxu0 0.0
      %5151 = vmatpush2.msra.mxu0 0.0
      %5152 = vmatprep.subr.mxu0 0.0
      %5153 = vmatpush2.msra.mxu0 0.0
      %5154 = vmatprep.subr.mxu0 0.0
      %5155 = vmatpush2.msra.mxu0 0.0
      %5156 = vmatprep.subr.mxu0 0.0
      %5157 = vmatpush2.msra.mxu0 0.0
      %5158 = vmatprep.subr.mxu0 0.0
      %5159 = vmatpush2.msra.mxu0 0.0
      %5160 = vmatprep.subr.mxu0 0.0
      %5161 = vmatpush2.msra.mxu0 0.0
      %5162 = vmatprep.subr.mxu0 0.0
      %5163 = vmatpush2.msra.mxu0 0.0
      %5164 = vmatprep.subr.mxu0 0.0
      %5165 = vmatpush2.msra.mxu0 0.0
      %5166 = vmatprep.subr.mxu0 0.0
      %5167 = vmatpush2.msra.mxu0 0.0
      %5168 = vmatprep.subr.mxu0 0.0
      %5169 = vmatpush2.msra.mxu0 0.0
      %5170 = vmatprep.subr.mxu0 0.0
      %5171 = vmatpush2.msra.mxu0 0.0
      %5172 = vmatprep.subr.mxu0 0.0
      %5173 = vmatpush2.msra.mxu0 0.0
      %5174 = vmatprep.subr.mxu0 0.0
      %5175 = vmatpush2.msra.mxu0 0.0
      %5176 = vmatprep.subr.mxu0 0.0
      %5177 = vmatpush2.msra.mxu0 0.0
      %5178 = vmatprep.mubr.f32.mxu0 0.0
      %5179 = vmatmul.mubr.f32.gmra.mxu0 %v4929
      %v5180 = vpop.f32.mrf.mxu0
      %v5181 = vadd.f32 0.0, %v5180
      %v5182 = vpop.f32.mrf.mxu0
      %5183 = vmatprep.mubr.f32.mxu0 0.0
      %5184 = vmatmul.mubr.f32.gmra.mxu0 %v4932
      %v5185 = vpop.f32.mrf.mxu0
      %v5186 = vadd.f32 0.0, %v5185
      %v5187 = vpop.f32.mrf.mxu0
      %5188 = vmatprep.mubr.f32.mxu0 0.0
      %5189 = vmatmul.mubr.f32.gmra.mxu0 %v4935
      %v5190 = vpop.f32.mrf.mxu0
      %v5191 = vadd.f32 0.0, %v5190
      %v5192 = vpop.f32.mrf.mxu0
      %5193 = vmatprep.mubr.f32.mxu0 0.0
      %5194 = vmatmul.mubr.f32.gmra.mxu0 %v4938
      %v5195 = vpop.f32.mrf.mxu0
      %v5196 = vadd.f32 0.0, %v5195
      %v5197 = vpop.f32.mrf.mxu0
      %5198 = vdwg.mxu0
      %v5200 = vsel %vm716, %v5025, 0
      %v5203 = vsel %vm716, %v5096, 0
      %5205 = vmatprep.subr.mxu0 0.0
      %5206 = vmatpush1.xpose.msra.mxu0 0.0
      %5207 = vmatprep.subr.mxu0 0.0
      %5208 = vmatpush1.xpose.msra.mxu0 0.0
      %5209 = vmatprep.subr.mxu0 0.0
      %5210 = vmatpush1.xpose.msra.mxu0 0.0
      %5211 = vmatprep.subr.mxu0 0.0
      %5212 = vmatpush1.xpose.msra.mxu0 0.0
      %5213 = vmatprep.subr.mxu0 0.0
      %5214 = vmatpush1.xpose.msra.mxu0 0.0
      %5215 = vmatprep.subr.mxu0 0.0
      %5216 = vmatpush1.xpose.msra.mxu0 0.0
      %5217 = vmatprep.subr.mxu0 0.0
      %5218 = vmatpush1.xpose.msra.mxu0 0.0
      %5219 = vmatprep.subr.mxu0 0.0
      %5220 = vmatpush1.xpose.msra.mxu0 0.0
      %5221 = vmatprep.subr.mxu0 0.0
      %5222 = vmatpush1.xpose.msra.mxu0 0.0
      %5223 = vmatprep.subr.mxu0 0.0
      %5224 = vmatpush1.xpose.msra.mxu0 0.0
      %5225 = vmatprep.subr.mxu0 0.0
      %5226 = vmatpush1.xpose.msra.mxu0 0.0
      %5227 = vmatprep.subr.mxu0 0.0
      %5228 = vmatpush1.xpose.msra.mxu0 0.0
      %5229 = vmatprep.subr.mxu0 0.0
      %5230 = vmatpush1.xpose.msra.mxu0 0.0
      %5231 = vmatprep.subr.mxu0 0.0
      %5232 = vmatpush1.xpose.msra.mxu0 0.0
      %5233 = vmatprep.subr.mxu0 0.0
      %5234 = vmatpush1.xpose.msra.mxu0 0.0
      %5235 = vmatprep.subr.mxu0 0.0
      %5236 = vmatpush1.xpose.msra.mxu0 %v5203
      %5237 = vmatprep.subr.mxu0 0.0
      %5238 = vmatpush2.xpose.msra.mxu0 0.0
      %5239 = vmatprep.subr.mxu0 0.0
      %5240 = vmatpush2.xpose.msra.mxu0 0.0
      %5241 = vmatprep.subr.mxu0 0.0
      %5242 = vmatpush2.xpose.msra.mxu0 0.0
      %5243 = vmatprep.subr.mxu0 0.0
      %5244 = vmatpush2.xpose.msra.mxu0 0.0
      %5245 = vmatprep.subr.mxu0 0.0
      %5246 = vmatpush2.xpose.msra.mxu0 0.0
      %5247 = vmatprep.subr.mxu0 0.0
      %5248 = vmatpush2.xpose.msra.mxu0 0.0
      %5249 = vmatprep.subr.mxu0 0.0
      %5250 = vmatpush2.xpose.msra.mxu0 0.0
      %5251 = vmatprep.subr.mxu0 0.0
      %5252 = vmatpush2.xpose.msra.mxu0 0.0
      %5253 = vmatprep.subr.mxu0 0.0
      %5254 = vmatpush2.xpose.msra.mxu0 0.0
      %5255 = vmatprep.subr.mxu0 0.0
      %5256 = vmatpush2.xpose.msra.mxu0 0.0
      %5257 = vmatprep.subr.mxu0 0.0
      %5258 = vmatpush2.xpose.msra.mxu0 0.0
      %5259 = vmatprep.subr.mxu0 0.0
      %5260 = vmatpush2.xpose.msra.mxu0 0.0
      %5261 = vmatprep.subr.mxu0 0.0
      %5262 = vmatpush2.xpose.msra.mxu0 0.0
      %5263 = vmatprep.subr.mxu0 0.0
      %5264 = vmatpush2.xpose.msra.mxu0 0.0
      %5265 = vmatprep.subr.mxu0 0.0
      %5266 = vmatpush2.xpose.msra.mxu0 0.0
      %5267 = vmatprep.subr.mxu0 0.0
      %5268 = vmatpush2.xpose.msra.mxu0 0.0
      %5269 = vmatprep.mubr.f32.mxu0 0.0
      %5270 = vmatmul.mubr.f32.gmra.mxu0 %v5200
      %v5271 = vpop.f32.mrf.mxu0
      %v5272 = vadd.f32 0.0, %v5271
      %v5273 = vpop.f32.mrf.mxu0
      %5274 = vdwg.mxu0
      %v5276 = vsel %vm716, %v5026, 0
      %v5279 = vsel %vm716, %v5101, 0
      %5281 = vmatprep.subr.mxu0 0.0
      %5282 = vmatpush1.xpose.msra.mxu0 0.0
      %5283 = vmatprep.subr.mxu0 0.0
      %5284 = vmatpush1.xpose.msra.mxu0 0.0
      %5285 = vmatprep.subr.mxu0 0.0
      %5286 = vmatpush1.xpose.msra.mxu0 0.0
      %5287 = vmatprep.subr.mxu0 0.0
      %5288 = vmatpush1.xpose.msra.mxu0 0.0
      %5289 = vmatprep.subr.mxu0 0.0
      %5290 = vmatpush1.xpose.msra.mxu0 0.0
      %5291 = vmatprep.subr.mxu0 0.0
      %5292 = vmatpush1.xpose.msra.mxu0 0.0
      %5293 = vmatprep.subr.mxu0 0.0
      %5294 = vmatpush1.xpose.msra.mxu0 0.0
      %5295 = vmatprep.subr.mxu0 0.0
      %5296 = vmatpush1.xpose.msra.mxu0 0.0
      %5297 = vmatprep.subr.mxu0 0.0
      %5298 = vmatpush1.xpose.msra.mxu0 0.0
      %5299 = vmatprep.subr.mxu0 0.0
      %5300 = vmatpush1.xpose.msra.mxu0 0.0
      %5301 = vmatprep.subr.mxu0 0.0
      %5302 = vmatpush1.xpose.msra.mxu0 0.0
      %5303 = vmatprep.subr.mxu0 0.0
      %5304 = vmatpush1.xpose.msra.mxu0 0.0
      %5305 = vmatprep.subr.mxu0 0.0
      %5306 = vmatpush1.xpose.msra.mxu0 0.0
      %5307 = vmatprep.subr.mxu0 0.0
      %5308 = vmatpush1.xpose.msra.mxu0 0.0
      %5309 = vmatprep.subr.mxu0 0.0
      %5310 = vmatpush1.xpose.msra.mxu0 0.0
      %5311 = vmatprep.subr.mxu0 0.0
      %5312 = vmatpush1.xpose.msra.mxu0 %v5279
      %5313 = vmatprep.subr.mxu0 0.0
      %5314 = vmatpush2.xpose.msra.mxu0 0.0
      %5315 = vmatprep.subr.mxu0 0.0
      %5316 = vmatpush2.xpose.msra.mxu0 0.0
      %5317 = vmatprep.subr.mxu0 0.0
      %5318 = vmatpush2.xpose.msra.mxu0 0.0
      %5319 = vmatprep.subr.mxu0 0.0
      %5320 = vmatpush2.xpose.msra.mxu0 0.0
      %5321 = vmatprep.subr.mxu0 0.0
      %5322 = vmatpush2.xpose.msra.mxu0 0.0
      %5323 = vmatprep.subr.mxu0 0.0
      %5324 = vmatpush2.xpose.msra.mxu0 0.0
      %5325 = vmatprep.subr.mxu0 0.0
      %5326 = vmatpush2.xpose.msra.mxu0 0.0
      %5327 = vmatprep.subr.mxu0 0.0
      %5328 = vmatpush2.xpose.msra.mxu0 0.0
      %5329 = vmatprep.subr.mxu0 0.0
      %5330 = vmatpush2.xpose.msra.mxu0 0.0
      %5331 = vmatprep.subr.mxu0 0.0
      %5332 = vmatpush2.xpose.msra.mxu0 0.0
      %5333 = vmatprep.subr.mxu0 0.0
      %5334 = vmatpush2.xpose.msra.mxu0 0.0
      %5335 = vmatprep.subr.mxu0 0.0
      %5336 = vmatpush2.xpose.msra.mxu0 0.0
      %5337 = vmatprep.subr.mxu0 0.0
      %5338 = vmatpush2.xpose.msra.mxu0 0.0
      %5339 = vmatprep.subr.mxu0 0.0
      %5340 = vmatpush2.xpose.msra.mxu0 0.0
      %5341 = vmatprep.subr.mxu0 0.0
      %5342 = vmatpush2.xpose.msra.mxu0 0.0
      %5343 = vmatprep.subr.mxu0 0.0
      %5344 = vmatpush2.xpose.msra.mxu0 0.0
      %5345 = vmatprep.mubr.f32.mxu0 0.0
      %5346 = vmatmul.mubr.f32.gmra.mxu0 %v5276
      %v5347 = vpop.f32.mrf.mxu0
      %v5348 = vadd.f32 0.0, %v5347
      %v5349 = vpop.f32.mrf.mxu0
      %5350 = vdwg.mxu0
      %v5352 = vsel %vm716, %v5027, 0
      %v5355 = vsel %vm716, %v5106, 0
      %5357 = vmatprep.subr.mxu0 0.0
      %5358 = vmatpush1.xpose.msra.mxu0 0.0
      %5359 = vmatprep.subr.mxu0 0.0
      %5360 = vmatpush1.xpose.msra.mxu0 0.0
      %5361 = vmatprep.subr.mxu0 0.0
      %5362 = vmatpush1.xpose.msra.mxu0 0.0
      %5363 = vmatprep.subr.mxu0 0.0
      %5364 = vmatpush1.xpose.msra.mxu0 0.0
      %5365 = vmatprep.subr.mxu0 0.0
      %5366 = vmatpush1.xpose.msra.mxu0 0.0
      %5367 = vmatprep.subr.mxu0 0.0
      %5368 = vmatpush1.xpose.msra.mxu0 0.0
      %5369 = vmatprep.subr.mxu0 0.0
      %5370 = vmatpush1.xpose.msra.mxu0 0.0
      %5371 = vmatprep.subr.mxu0 0.0
      %5372 = vmatpush1.xpose.msra.mxu0 0.0
      %5373 = vmatprep.subr.mxu0 0.0
      %5374 = vmatpush1.xpose.msra.mxu0 0.0
      %5375 = vmatprep.subr.mxu0 0.0
      %5376 = vmatpush1.xpose.msra.mxu0 0.0
      %5377 = vmatprep.subr.mxu0 0.0
      %5378 = vmatpush1.xpose.msra.mxu0 0.0
      %5379 = vmatprep.subr.mxu0 0.0
      %5380 = vmatpush1.xpose.msra.mxu0 0.0
      %5381 = vmatprep.subr.mxu0 0.0
      %5382 = vmatpush1.xpose.msra.mxu0 0.0
      %5383 = vmatprep.subr.mxu0 0.0
      %5384 = vmatpush1.xpose.msra.mxu0 0.0
      %5385 = vmatprep.subr.mxu0 0.0
      %5386 = vmatpush1.xpose.msra.mxu0 0.0
      %5387 = vmatprep.subr.mxu0 0.0
      %5388 = vmatpush1.xpose.msra.mxu0 %v5355
      %5389 = vmatprep.subr.mxu0 0.0
      %5390 = vmatpush2.xpose.msra.mxu0 0.0
      %5391 = vmatprep.subr.mxu0 0.0
      %5392 = vmatpush2.xpose.msra.mxu0 0.0
      %5393 = vmatprep.subr.mxu0 0.0
      %5394 = vmatpush2.xpose.msra.mxu0 0.0
      %5395 = vmatprep.subr.mxu0 0.0
      %5396 = vmatpush2.xpose.msra.mxu0 0.0
      %5397 = vmatprep.subr.mxu0 0.0
      %5398 = vmatpush2.xpose.msra.mxu0 0.0
      %5399 = vmatprep.subr.mxu0 0.0
      %5400 = vmatpush2.xpose.msra.mxu0 0.0
      %5401 = vmatprep.subr.mxu0 0.0
      %5402 = vmatpush2.xpose.msra.mxu0 0.0
      %5403 = vmatprep.subr.mxu0 0.0
      %5404 = vmatpush2.xpose.msra.mxu0 0.0
      %5405 = vmatprep.subr.mxu0 0.0
      %5406 = vmatpush2.xpose.msra.mxu0 0.0
      %5407 = vmatprep.subr.mxu0 0.0
      %5408 = vmatpush2.xpose.msra.mxu0 0.0
      %5409 = vmatprep.subr.mxu0 0.0
      %5410 = vmatpush2.xpose.msra.mxu0 0.0
      %5411 = vmatprep.subr.mxu0 0.0
      %5412 = vmatpush2.xpose.msra.mxu0 0.0
      %5413 = vmatprep.subr.mxu0 0.0
      %5414 = vmatpush2.xpose.msra.mxu0 0.0
      %5415 = vmatprep.subr.mxu0 0.0
      %5416 = vmatpush2.xpose.msra.mxu0 0.0
      %5417 = vmatprep.subr.mxu0 0.0
      %5418 = vmatpush2.xpose.msra.mxu0 0.0
      %5419 = vmatprep.subr.mxu0 0.0
      %5420 = vmatpush2.xpose.msra.mxu0 0.0
      %5421 = vmatprep.mubr.f32.mxu0 0.0
      %5422 = vmatmul.mubr.f32.gmra.mxu0 %v5352
      %v5423 = vpop.f32.mrf.mxu0
      %v5424 = vadd.f32 0.0, %v5423
      %v5425 = vpop.f32.mrf.mxu0
      %5426 = vdwg.mxu0
      %v5428 = vsel %vm716, %v5028, 0
      %v5431 = vsel %vm716, %v5111, 0
      %5433 = vmatprep.subr.mxu0 0.0
      %5434 = vmatpush1.xpose.msra.mxu0 0.0
      %5435 = vmatprep.subr.mxu0 0.0
      %5436 = vmatpush1.xpose.msra.mxu0 0.0
      %5437 = vmatprep.subr.mxu0 0.0
      %5438 = vmatpush1.xpose.msra.mxu0 0.0
      %5439 = vmatprep.subr.mxu0 0.0
      %5440 = vmatpush1.xpose.msra.mxu0 0.0
      %5441 = vmatprep.subr.mxu0 0.0
      %5442 = vmatpush1.xpose.msra.mxu0 0.0
      %5443 = vmatprep.subr.mxu0 0.0
      %5444 = vmatpush1.xpose.msra.mxu0 0.0
      %5445 = vmatprep.subr.mxu0 0.0
      %5446 = vmatpush1.xpose.msra.mxu0 0.0
      %5447 = vmatprep.subr.mxu0 0.0
      %5448 = vmatpush1.xpose.msra.mxu0 0.0
      %5449 = vmatprep.subr.mxu0 0.0
      %5450 = vmatpush1.xpose.msra.mxu0 0.0
      %5451 = vmatprep.subr.mxu0 0.0
      %5452 = vmatpush1.xpose.msra.mxu0 0.0
      %5453 = vmatprep.subr.mxu0 0.0
      %5454 = vmatpush1.xpose.msra.mxu0 0.0
      %5455 = vmatprep.subr.mxu0 0.0
      %5456 = vmatpush1.xpose.msra.mxu0 0.0
      %5457 = vmatprep.subr.mxu0 0.0
      %5458 = vmatpush1.xpose.msra.mxu0 0.0
      %5459 = vmatprep.subr.mxu0 0.0
      %5460 = vmatpush1.xpose.msra.mxu0 0.0
      %5461 = vmatprep.subr.mxu0 0.0
      %5462 = vmatpush1.xpose.msra.mxu0 0.0
      %5463 = vmatprep.subr.mxu0 0.0
      %5464 = vmatpush1.xpose.msra.mxu0 %v5431
      %5465 = vmatprep.subr.mxu0 0.0
      %5466 = vmatpush2.xpose.msra.mxu0 0.0
      %5467 = vmatprep.subr.mxu0 0.0
      %5468 = vmatpush2.xpose.msra.mxu0 0.0
      %5469 = vmatprep.subr.mxu0 0.0
      %5470 = vmatpush2.xpose.msra.mxu0 0.0
      %5471 = vmatprep.subr.mxu0 0.0
      %5472 = vmatpush2.xpose.msra.mxu0 0.0
      %5473 = vmatprep.subr.mxu0 0.0
      %5474 = vmatpush2.xpose.msra.mxu0 0.0
      %5475 = vmatprep.subr.mxu0 0.0
      %5476 = vmatpush2.xpose.msra.mxu0 0.0
      %5477 = vmatprep.subr.mxu0 0.0
      %5478 = vmatpush2.xpose.msra.mxu0 0.0
      %5479 = vmatprep.subr.mxu0 0.0
      %5480 = vmatpush2.xpose.msra.mxu0 0.0
      %5481 = vmatprep.subr.mxu0 0.0
      %5482 = vmatpush2.xpose.msra.mxu0 0.0
      %5483 = vmatprep.subr.mxu0 0.0
      %5484 = vmatpush2.xpose.msra.mxu0 0.0
      %5485 = vmatprep.subr.mxu0 0.0
      %5486 = vmatpush2.xpose.msra.mxu0 0.0
      %5487 = vmatprep.subr.mxu0 0.0
      %5488 = vmatpush2.xpose.msra.mxu0 0.0
      %5489 = vmatprep.subr.mxu0 0.0
      %5490 = vmatpush2.xpose.msra.mxu0 0.0
      %5491 = vmatprep.subr.mxu0 0.0
      %5492 = vmatpush2.xpose.msra.mxu0 0.0
      %5493 = vmatprep.subr.mxu0 0.0
      %5494 = vmatpush2.xpose.msra.mxu0 0.0
      %5495 = vmatprep.subr.mxu0 0.0
      %5496 = vmatpush2.xpose.msra.mxu0 0.0
      %5497 = vmatprep.mubr.f32.mxu0 0.0
      %5498 = vmatmul.mubr.f32.gmra.mxu0 %v5428
      %v5499 = vpop.f32.mrf.mxu0
      %v5500 = vadd.f32 0.0, %v5499
      %v5501 = vpop.f32.mrf.mxu0
      %5502 = vdwg.mxu0
      %v5503 = vsel %vm716, %v5272, -inf
      %5504 = vmax.xlane.f32.xlu0 %v5503
      %v5505 = vpop.xlane.xlu0 %5504
      %v5506 = vsel %vm716, %v5348, -inf
      %5507 = vmax.xlane.f32.xlu0 %v5506
      %v5508 = vpop.xlane.xlu0 %5507
      %v5509 = vsel %vm716, %v5424, -inf
      %5510 = vmax.xlane.f32.xlu0 %v5509
      %v5511 = vpop.xlane.xlu0 %5510
      %v5512 = vsel %vm716, %v5500, -inf
      %5513 = vmax.xlane.f32.xlu0 %v5512
      %v5514 = vpop.xlane.xlu0 %5513
      %v5515 = vsub.f32 %v5272, %v5505
      %v5516 = vsub.f32 %v5348, %v5508
      %v5517 = vsub.f32 %v5424, %v5511
      %v5518 = vsub.f32 %v5500, %v5514
      %v5519 = vmul.f32 %v5515, 1.442695
      %v5520 = vpow.pop %v5519
      %v5521 = vmul.f32 %v5516, 1.442695
      %v5522 = vpow.pop %v5521
      %v5523 = vmul.f32 %v5517, 1.442695
      %v5524 = vpow.pop %v5523
      %v5525 = vmul.f32 %v5518, 1.442695
      %v5526 = vpow.pop %v5525
      %v5527 = vsel %vm716, %v5520, 0.0
      %5528 = vadd.xlane.f32.xlu0 %v5527
      %v5529 = vpop.xlane.xlu0 %5528
      %v5530 = vsel %vm716, %v5522, 0.0
      %5531 = vadd.xlane.f32.xlu0 %v5530
      %v5532 = vpop.xlane.xlu0 %5531
      %v5533 = vsel %vm716, %v5524, 0.0
      %5534 = vadd.xlane.f32.xlu0 %v5533
      %v5535 = vpop.xlane.xlu0 %5534
      %v5536 = vsel %vm716, %v5526, 0.0
      %5537 = vadd.xlane.f32.xlu0 %v5536
      %v5538 = vpop.xlane.xlu0 %5537
      %v5539 = vrcp.pop %v5529
      %v5540 = vrcp.pop %v5532
      %v5541 = vrcp.pop %v5535
      %v5542 = vrcp.pop %v5538
      %v5543 = vmul.f32 %v5520, %v5539
      %v5544 = vmul.f32 %v5522, %v5540
      %v5545 = vmul.f32 %v5524, %v5541
      %v5546 = vmul.f32 %v5526, %v5542
      %v5548 = vsel %vm716, %v5543, 0
      %5550 = vmatprep.subr.mxu0 0.0
      %5551 = vmatpush1.msra.mxu0 0.0
      %5552 = vmatprep.subr.mxu0 0.0
      %5553 = vmatpush1.msra.mxu0 0.0
      %5554 = vmatprep.subr.mxu0 0.0
      %5555 = vmatpush1.msra.mxu0 0.0
      %5556 = vmatprep.subr.mxu0 0.0
      %5557 = vmatpush1.msra.mxu0 0.0
      %5558 = vmatprep.subr.mxu0 0.0
      %5559 = vmatpush1.msra.mxu0 0.0
      %5560 = vmatprep.subr.mxu0 0.0
      %5561 = vmatpush1.msra.mxu0 0.0
      %5562 = vmatprep.subr.mxu0 0.0
      %5563 = vmatpush1.msra.mxu0 0.0
      %5564 = vmatprep.subr.mxu0 0.0
      %5565 = vmatpush1.msra.mxu0 0.0
      %5566 = vmatprep.subr.mxu0 0.0
      %5567 = vmatpush1.msra.mxu0 0.0
      %5568 = vmatprep.subr.mxu0 0.0
      %5569 = vmatpush1.msra.mxu0 0.0
      %5570 = vmatprep.subr.mxu0 0.0
      %5571 = vmatpush1.msra.mxu0 0.0
      %5572 = vmatprep.subr.mxu0 0.0
      %5573 = vmatpush1.msra.mxu0 0.0
      %5574 = vmatprep.subr.mxu0 0.0
      %5575 = vmatpush1.msra.mxu0 0.0
      %5576 = vmatprep.subr.mxu0 0.0
      %5577 = vmatpush1.msra.mxu0 0.0
      %5578 = vmatprep.subr.mxu0 0.0
      %5579 = vmatpush1.msra.mxu0 0.0
      %5580 = vmatprep.subr.mxu0 0.0
      %5581 = vmatpush1.msra.mxu0 %v5181
      %5582 = vmatprep.subr.mxu0 0.0
      %5583 = vmatpush2.msra.mxu0 0.0
      %5584 = vmatprep.subr.mxu0 0.0
      %5585 = vmatpush2.msra.mxu0 0.0
      %5586 = vmatprep.subr.mxu0 0.0
      %5587 = vmatpush2.msra.mxu0 0.0
      %5588 = vmatprep.subr.mxu0 0.0
      %5589 = vmatpush2.msra.mxu0 0.0
      %5590 = vmatprep.subr.mxu0 0.0
      %5591 = vmatpush2.msra.mxu0 0.0
      %5592 = vmatprep.subr.mxu0 0.0
      %5593 = vmatpush2.msra.mxu0 0.0
      %5594 = vmatprep.subr.mxu0 0.0
      %5595 = vmatpush2.msra.mxu0 0.0
      %5596 = vmatprep.subr.mxu0 0.0
      %5597 = vmatpush2.msra.mxu0 0.0
      %5598 = vmatprep.subr.mxu0 0.0
      %5599 = vmatpush2.msra.mxu0 0.0
      %5600 = vmatprep.subr.mxu0 0.0
      %5601 = vmatpush2.msra.mxu0 0.0
      %5602 = vmatprep.subr.mxu0 0.0
      %5603 = vmatpush2.msra.mxu0 0.0
      %5604 = vmatprep.subr.mxu0 0.0
      %5605 = vmatpush2.msra.mxu0 0.0
      %5606 = vmatprep.subr.mxu0 0.0
      %5607 = vmatpush2.msra.mxu0 0.0
      %5608 = vmatprep.subr.mxu0 0.0
      %5609 = vmatpush2.msra.mxu0 0.0
      %5610 = vmatprep.subr.mxu0 0.0
      %5611 = vmatpush2.msra.mxu0 0.0
      %5612 = vmatprep.subr.mxu0 0.0
      %5613 = vmatpush2.msra.mxu0 0.0
      %5614 = vmatprep.mubr.f32.mxu0 0.0
      %5615 = vmatmul.mubr.f32.gmra.mxu0 %v5548
      %v5616 = vpop.f32.mrf.mxu0
      %v5617 = vadd.f32 0.0, %v5616
      %v5618 = vpop.f32.mrf.mxu0
      %5619 = vdwg.mxu0
      %v5621 = vsel %vm716, %v5544, 0
      %5623 = vmatprep.subr.mxu0 0.0
      %5624 = vmatpush1.msra.mxu0 0.0
      %5625 = vmatprep.subr.mxu0 0.0
      %5626 = vmatpush1.msra.mxu0 0.0
      %5627 = vmatprep.subr.mxu0 0.0
      %5628 = vmatpush1.msra.mxu0 0.0
      %5629 = vmatprep.subr.mxu0 0.0
      %5630 = vmatpush1.msra.mxu0 0.0
      %5631 = vmatprep.subr.mxu0 0.0
      %5632 = vmatpush1.msra.mxu0 0.0
      %5633 = vmatprep.subr.mxu0 0.0
      %5634 = vmatpush1.msra.mxu0 0.0
      %5635 = vmatprep.subr.mxu0 0.0
      %5636 = vmatpush1.msra.mxu0 0.0
      %5637 = vmatprep.subr.mxu0 0.0
      %5638 = vmatpush1.msra.mxu0 0.0
      %5639 = vmatprep.subr.mxu0 0.0
      %5640 = vmatpush1.msra.mxu0 0.0
      %5641 = vmatprep.subr.mxu0 0.0
      %5642 = vmatpush1.msra.mxu0 0.0
      %5643 = vmatprep.subr.mxu0 0.0
      %5644 = vmatpush1.msra.mxu0 0.0
      %5645 = vmatprep.subr.mxu0 0.0
      %5646 = vmatpush1.msra.mxu0 0.0
      %5647 = vmatprep.subr.mxu0 0.0
      %5648 = vmatpush1.msra.mxu0 0.0
      %5649 = vmatprep.subr.mxu0 0.0
      %5650 = vmatpush1.msra.mxu0 0.0
      %5651 = vmatprep.subr.mxu0 0.0
      %5652 = vmatpush1.msra.mxu0 0.0
      %5653 = vmatprep.subr.mxu0 0.0
      %5654 = vmatpush1.msra.mxu0 %v5186
      %5655 = vmatprep.subr.mxu0 0.0
      %5656 = vmatpush2.msra.mxu0 0.0
      %5657 = vmatprep.subr.mxu0 0.0
      %5658 = vmatpush2.msra.mxu0 0.0
      %5659 = vmatprep.subr.mxu0 0.0
      %5660 = vmatpush2.msra.mxu0 0.0
      %5661 = vmatprep.subr.mxu0 0.0
      %5662 = vmatpush2.msra.mxu0 0.0
      %5663 = vmatprep.subr.mxu0 0.0
      %5664 = vmatpush2.msra.mxu0 0.0
      %5665 = vmatprep.subr.mxu0 0.0
      %5666 = vmatpush2.msra.mxu0 0.0
      %5667 = vmatprep.subr.mxu0 0.0
      %5668 = vmatpush2.msra.mxu0 0.0
      %5669 = vmatprep.subr.mxu0 0.0
      %5670 = vmatpush2.msra.mxu0 0.0
      %5671 = vmatprep.subr.mxu0 0.0
      %5672 = vmatpush2.msra.mxu0 0.0
      %5673 = vmatprep.subr.mxu0 0.0
      %5674 = vmatpush2.msra.mxu0 0.0
      %5675 = vmatprep.subr.mxu0 0.0
      %5676 = vmatpush2.msra.mxu0 0.0
      %5677 = vmatprep.subr.mxu0 0.0
      %5678 = vmatpush2.msra.mxu0 0.0
      %5679 = vmatprep.subr.mxu0 0.0
      %5680 = vmatpush2.msra.mxu0 0.0
      %5681 = vmatprep.subr.mxu0 0.0
      %5682 = vmatpush2.msra.mxu0 0.0
      %5683 = vmatprep.subr.mxu0 0.0
      %5684 = vmatpush2.msra.mxu0 0.0
      %5685 = vmatprep.subr.mxu0 0.0
      %5686 = vmatpush2.msra.mxu0 0.0
      %5687 = vmatprep.mubr.f32.mxu0 0.0
      %5688 = vmatmul.mubr.f32.gmra.mxu0 %v5621
      %v5689 = vpop.f32.mrf.mxu0
      %v5690 = vadd.f32 0.0, %v5689
      %v5691 = vpop.f32.mrf.mxu0
      %5692 = vdwg.mxu0
      %v5694 = vsel %vm716, %v5545, 0
      %5696 = vmatprep.subr.mxu0 0.0
      %5697 = vmatpush1.msra.mxu0 0.0
      %5698 = vmatprep.subr.mxu0 0.0
      %5699 = vmatpush1.msra.mxu0 0.0
      %5700 = vmatprep.subr.mxu0 0.0
      %5701 = vmatpush1.msra.mxu0 0.0
      %5702 = vmatprep.subr.mxu0 0.0
      %5703 = vmatpush1.msra.mxu0 0.0
      %5704 = vmatprep.subr.mxu0 0.0
      %5705 = vmatpush1.msra.mxu0 0.0
      %5706 = vmatprep.subr.mxu0 0.0
      %5707 = vmatpush1.msra.mxu0 0.0
      %5708 = vmatprep.subr.mxu0 0.0
      %5709 = vmatpush1.msra.mxu0 0.0
      %5710 = vmatprep.subr.mxu0 0.0
      %5711 = vmatpush1.msra.mxu0 0.0
      %5712 = vmatprep.subr.mxu0 0.0
      %5713 = vmatpush1.msra.mxu0 0.0
      %5714 = vmatprep.subr.mxu0 0.0
      %5715 = vmatpush1.msra.mxu0 0.0
      %5716 = vmatprep.subr.mxu0 0.0
      %5717 = vmatpush1.msra.mxu0 0.0
      %5718 = vmatprep.subr.mxu0 0.0
      %5719 = vmatpush1.msra.mxu0 0.0
      %5720 = vmatprep.subr.mxu0 0.0
      %5721 = vmatpush1.msra.mxu0 0.0
      %5722 = vmatprep.subr.mxu0 0.0
      %5723 = vmatpush1.msra.mxu0 0.0
      %5724 = vmatprep.subr.mxu0 0.0
      %5725 = vmatpush1.msra.mxu0 0.0
      %5726 = vmatprep.subr.mxu0 0.0
      %5727 = vmatpush1.msra.mxu0 %v5191
      %5728 = vmatprep.subr.mxu0 0.0
      %5729 = vmatpush2.msra.mxu0 0.0
      %5730 = vmatprep.subr.mxu0 0.0
      %5731 = vmatpush2.msra.mxu0 0.0
      %5732 = vmatprep.subr.mxu0 0.0
      %5733 = vmatpush2.msra.mxu0 0.0
      %5734 = vmatprep.subr.mxu0 0.0
      %5735 = vmatpush2.msra.mxu0 0.0
      %5736 = vmatprep.subr.mxu0 0.0
      %5737 = vmatpush2.msra.mxu0 0.0
      %5738 = vmatprep.subr.mxu0 0.0
      %5739 = vmatpush2.msra.mxu0 0.0
      %5740 = vmatprep.subr.mxu0 0.0
      %5741 = vmatpush2.msra.mxu0 0.0
      %5742 = vmatprep.subr.mxu0 0.0
      %5743 = vmatpush2.msra.mxu0 0.0
      %5744 = vmatprep.subr.mxu0 0.0
      %5745 = vmatpush2.msra.mxu0 0.0
      %5746 = vmatprep.subr.mxu0 0.0
      %5747 = vmatpush2.msra.mxu0 0.0
      %5748 = vmatprep.subr.mxu0 0.0
      %5749 = vmatpush2.msra.mxu0 0.0
      %5750 = vmatprep.subr.mxu0 0.0
      %5751 = vmatpush2.msra.mxu0 0.0
      %5752 = vmatprep.subr.mxu0 0.0
      %5753 = vmatpush2.msra.mxu0 0.0
      %5754 = vmatprep.subr.mxu0 0.0
      %5755 = vmatpush2.msra.mxu0 0.0
      %5756 = vmatprep.subr.mxu0 0.0
      %5757 = vmatpush2.msra.mxu0 0.0
      %5758 = vmatprep.subr.mxu0 0.0
      %5759 = vmatpush2.msra.mxu0 0.0
      %5760 = vmatprep.mubr.f32.mxu0 0.0
      %5761 = vmatmul.mubr.f32.gmra.mxu0 %v5694
      %v5762 = vpop.f32.mrf.mxu0
      %v5763 = vadd.f32 0.0, %v5762
      %v5764 = vpop.f32.mrf.mxu0
      %5765 = vdwg.mxu0
      %v5767 = vsel %vm716, %v5546, 0
      %5769 = vmatprep.subr.mxu0 0.0
      %5770 = vmatpush1.msra.mxu0 0.0
      %5771 = vmatprep.subr.mxu0 0.0
      %5772 = vmatpush1.msra.mxu0 0.0
      %5773 = vmatprep.subr.mxu0 0.0
      %5774 = vmatpush1.msra.mxu0 0.0
      %5775 = vmatprep.subr.mxu0 0.0
      %5776 = vmatpush1.msra.mxu0 0.0
      %5777 = vmatprep.subr.mxu0 0.0
      %5778 = vmatpush1.msra.mxu0 0.0
      %5779 = vmatprep.subr.mxu0 0.0
      %5780 = vmatpush1.msra.mxu0 0.0
      %5781 = vmatprep.subr.mxu0 0.0
      %5782 = vmatpush1.msra.mxu0 0.0
      %5783 = vmatprep.subr.mxu0 0.0
      %5784 = vmatpush1.msra.mxu0 0.0
      %5785 = vmatprep.subr.mxu0 0.0
      %5786 = vmatpush1.msra.mxu0 0.0
      %5787 = vmatprep.subr.mxu0 0.0
      %5788 = vmatpush1.msra.mxu0 0.0
      %5789 = vmatprep.subr.mxu0 0.0
      %5790 = vmatpush1.msra.mxu0 0.0
      %5791 = vmatprep.subr.mxu0 0.0
      %5792 = vmatpush1.msra.mxu0 0.0
      %5793 = vmatprep.subr.mxu0 0.0
      %5794 = vmatpush1.msra.mxu0 0.0
      %5795 = vmatprep.subr.mxu0 0.0
      %5796 = vmatpush1.msra.mxu0 0.0
      %5797 = vmatprep.subr.mxu0 0.0
      %5798 = vmatpush1.msra.mxu0 0.0
      %5799 = vmatprep.subr.mxu0 0.0
      %5800 = vmatpush1.msra.mxu0 %v5196
      %5801 = vmatprep.subr.mxu0 0.0
      %5802 = vmatpush2.msra.mxu0 0.0
      %5803 = vmatprep.subr.mxu0 0.0
      %5804 = vmatpush2.msra.mxu0 0.0
      %5805 = vmatprep.subr.mxu0 0.0
      %5806 = vmatpush2.msra.mxu0 0.0
      %5807 = vmatprep.subr.mxu0 0.0
      %5808 = vmatpush2.msra.mxu0 0.0
      %5809 = vmatprep.subr.mxu0 0.0
      %5810 = vmatpush2.msra.mxu0 0.0
      %5811 = vmatprep.subr.mxu0 0.0
      %5812 = vmatpush2.msra.mxu0 0.0
      %5813 = vmatprep.subr.mxu0 0.0
      %5814 = vmatpush2.msra.mxu0 0.0
      %5815 = vmatprep.subr.mxu0 0.0
      %5816 = vmatpush2.msra.mxu0 0.0
      %5817 = vmatprep.subr.mxu0 0.0
      %5818 = vmatpush2.msra.mxu0 0.0
      %5819 = vmatprep.subr.mxu0 0.0
      %5820 = vmatpush2.msra.mxu0 0.0
      %5821 = vmatprep.subr.mxu0 0.0
      %5822 = vmatpush2.msra.mxu0 0.0
      %5823 = vmatprep.subr.mxu0 0.0
      %5824 = vmatpush2.msra.mxu0 0.0
      %5825 = vmatprep.subr.mxu0 0.0
      %5826 = vmatpush2.msra.mxu0 0.0
      %5827 = vmatprep.subr.mxu0 0.0
      %5828 = vmatpush2.msra.mxu0 0.0
      %5829 = vmatprep.subr.mxu0 0.0
      %5830 = vmatpush2.msra.mxu0 0.0
      %5831 = vmatprep.subr.mxu0 0.0
      %5832 = vmatpush2.msra.mxu0 0.0
      %5833 = vmatprep.mubr.f32.mxu0 0.0
      %5834 = vmatmul.mubr.f32.gmra.mxu0 %v5767
      %v5835 = vpop.f32.mrf.mxu0
      %v5836 = vadd.f32 0.0, %v5835
      %v5837 = vpop.f32.mrf.mxu0
      %5838 = vdwg.mxu0
      %s5839 = scalar_lea.vmem %s4, 32
      %v5840 = vld [vmem:[%s5839] sm:$0xff]
      %s5841 = scalar_lea.vmem %s2, 416
      %v5842 = vld [vmem:[%s5841] sm:$0xff]
      %v5843 = vld [vmem:[%s5841 + $0x8] sm:$0xff]
      %v5844 = vld [vmem:[%s5841 + $0x10] sm:$0xff]
      %v5845 = vld [vmem:[%s5841 + $0x18] sm:$0xff]
      %s5846 = scalar_lea.vmem %s2, 544
      %v5847 = vld [vmem:[%s5846] sm:$0xff]
      %v5848 = vld [vmem:[%s5846 + $0x8] sm:$0xff]
      %v5849 = vld [vmem:[%s5846 + $0x10] sm:$0xff]
      %v5850 = vld [vmem:[%s5846 + $0x18] sm:$0xff]
      %s5851 = scalar_lea.vmem %s2, 672
      %v5852 = vld [vmem:[%s5851] sm:$0xff]
      %v5853 = vld [vmem:[%s5851 + $0x8] sm:$0xff]
      %v5854 = vld [vmem:[%s5851 + $0x10] sm:$0xff]
      %v5855 = vld [vmem:[%s5851 + $0x18] sm:$0xff]
      %s5856 = scalar_lea.vmem %s3, 5
      %v5857 = vld [vmem:[%s5856] sm:$0x1]
      %v5859 = vlaneseq
      %v5860 = vshrl.u32 %v5859, 7
      %v5861 = vsub.s32 0, %v5860
      %v5862 = vrot.slane %v5857, %v5861
      %5864 = vmatprep.subr.mxu0 0.0
      %5865 = vmatpush1.msra.mxu0 0.0
      %5866 = vmatprep.subr.mxu0 0.0
      %5867 = vmatpush1.msra.mxu0 0.0
      %5868 = vmatprep.subr.mxu0 0.0
      %5869 = vmatpush1.msra.mxu0 0.0
      %5870 = vmatprep.subr.mxu0 0.0
      %5871 = vmatpush1.msra.mxu0 0.0
      %5872 = vmatprep.subr.mxu0 0.0
      %5873 = vmatpush1.msra.mxu0 0.0
      %5874 = vmatprep.subr.mxu0 0.0
      %5875 = vmatpush1.msra.mxu0 0.0
      %5876 = vmatprep.subr.mxu0 0.0
      %5877 = vmatpush1.msra.mxu0 0.0
      %5878 = vmatprep.subr.mxu0 0.0
      %5879 = vmatpush1.msra.mxu0 0.0
      %5880 = vmatprep.subr.mxu0 0.0
      %5881 = vmatpush1.msra.mxu0 0.0
      %5882 = vmatprep.subr.mxu0 0.0
      %5883 = vmatpush1.msra.mxu0 0.0
      %5884 = vmatprep.subr.mxu0 0.0
      %5885 = vmatpush1.msra.mxu0 0.0
      %5886 = vmatprep.subr.mxu0 0.0
      %5887 = vmatpush1.msra.mxu0 0.0
      %5888 = vmatprep.subr.mxu0 0.0
      %5889 = vmatpush1.msra.mxu0 %v5845
      %5890 = vmatprep.subr.mxu0 0.0
      %5891 = vmatpush1.msra.mxu0 %v5844
      %5892 = vmatprep.subr.mxu0 0.0
      %5893 = vmatpush1.msra.mxu0 %v5843
      %5894 = vmatprep.subr.mxu0 0.0
      %5895 = vmatpush1.msra.mxu0 %v5842
      %5896 = vmatprep.subr.mxu0 0.0
      %5897 = vmatpush2.msra.mxu0 0.0
      %5898 = vmatprep.subr.mxu0 0.0
      %5899 = vmatpush2.msra.mxu0 0.0
      %5900 = vmatprep.subr.mxu0 0.0
      %5901 = vmatpush2.msra.mxu0 0.0
      %5902 = vmatprep.subr.mxu0 0.0
      %5903 = vmatpush2.msra.mxu0 0.0
      %5904 = vmatprep.subr.mxu0 0.0
      %5905 = vmatpush2.msra.mxu0 0.0
      %5906 = vmatprep.subr.mxu0 0.0
      %5907 = vmatpush2.msra.mxu0 0.0
      %5908 = vmatprep.subr.mxu0 0.0
      %5909 = vmatpush2.msra.mxu0 0.0
      %5910 = vmatprep.subr.mxu0 0.0
      %5911 = vmatpush2.msra.mxu0 0.0
      %5912 = vmatprep.subr.mxu0 0.0
      %5913 = vmatpush2.msra.mxu0 0.0
      %5914 = vmatprep.subr.mxu0 0.0
      %5915 = vmatpush2.msra.mxu0 0.0
      %5916 = vmatprep.subr.mxu0 0.0
      %5917 = vmatpush2.msra.mxu0 0.0
      %5918 = vmatprep.subr.mxu0 0.0
      %5919 = vmatpush2.msra.mxu0 0.0
      %5920 = vmatprep.subr.mxu0 0.0
      %5921 = vmatpush2.msra.mxu0 0.0
      %5922 = vmatprep.subr.mxu0 0.0
      %5923 = vmatpush2.msra.mxu0 0.0
      %5924 = vmatprep.subr.mxu0 0.0
      %5925 = vmatpush2.msra.mxu0 0.0
      %5926 = vmatprep.subr.mxu0 0.0
      %5927 = vmatpush2.msra.mxu0 0.0
      %5928 = vmatprep.mubr.f32.mxu0 0.0
      %5929 = vmatmul.mubr.f32.gmra.mxu0 %v4929
      %v5930 = vpop.f32.mrf.mxu0
      %v5931 = vadd.f32 %v5862, %v5930
      %v5932 = vpop.f32.mrf.mxu0
      %5933 = vmatprep.mubr.f32.mxu0 0.0
      %5934 = vmatmul.mubr.f32.gmra.mxu0 %v4932
      %v5935 = vpop.f32.mrf.mxu0
      %v5936 = vadd.f32 %v5862, %v5935
      %v5937 = vpop.f32.mrf.mxu0
      %5938 = vmatprep.mubr.f32.mxu0 0.0
      %5939 = vmatmul.mubr.f32.gmra.mxu0 %v4935
      %v5940 = vpop.f32.mrf.mxu0
      %v5941 = vadd.f32 %v5862, %v5940
      %v5942 = vpop.f32.mrf.mxu0
      %5943 = vmatprep.mubr.f32.mxu0 0.0
      %5944 = vmatmul.mubr.f32.gmra.mxu0 %v4938
      %v5945 = vpop.f32.mrf.mxu0
      %v5946 = vadd.f32 %v5862, %v5945
      %v5947 = vpop.f32.mrf.mxu0
      %5948 = vdwg.mxu0
      %v5949 = vmul.f32 %v5931, 0.35355338
      %v5950 = vmul.f32 %v5936, 0.35355338
      %v5951 = vmul.f32 %v5941, 0.35355338
      %v5952 = vmul.f32 %v5946, 0.35355338
      %5953 = vmatprep.subr.mxu0 0.0
      %5954 = vmatpush1.msra.mxu0 0.0
      %5955 = vmatprep.subr.mxu0 0.0
      %5956 = vmatpush1.msra.mxu0 0.0
      %5957 = vmatprep.subr.mxu0 0.0
      %5958 = vmatpush1.msra.mxu0 0.0
      %5959 = vmatprep.subr.mxu0 0.0
      %5960 = vmatpush1.msra.mxu0 0.0
      %5961 = vmatprep.subr.mxu0 0.0
      %5962 = vmatpush1.msra.mxu0 0.0
      %5963 = vmatprep.subr.mxu0 0.0
      %5964 = vmatpush1.msra.mxu0 0.0
      %5965 = vmatprep.subr.mxu0 0.0
      %5966 = vmatpush1.msra.mxu0 0.0
      %5967 = vmatprep.subr.mxu0 0.0
      %5968 = vmatpush1.msra.mxu0 0.0
      %5969 = vmatprep.subr.mxu0 0.0
      %5970 = vmatpush1.msra.mxu0 0.0
      %5971 = vmatprep.subr.mxu0 0.0
      %5972 = vmatpush1.msra.mxu0 0.0
      %5973 = vmatprep.subr.mxu0 0.0
      %5974 = vmatpush1.msra.mxu0 0.0
      %5975 = vmatprep.subr.mxu0 0.0
      %5976 = vmatpush1.msra.mxu0 0.0
      %5977 = vmatprep.subr.mxu0 0.0
      %5978 = vmatpush1.msra.mxu0 %v5850
      %5979 = vmatprep.subr.mxu0 0.0
      %5980 = vmatpush1.msra.mxu0 %v5849
      %5981 = vmatprep.subr.mxu0 0.0
      %5982 = vmatpush1.msra.mxu0 %v5848
      %5983 = vmatprep.subr.mxu0 0.0
      %5984 = vmatpush1.msra.mxu0 %v5847
      %5985 = vmatprep.subr.mxu0 0.0
      %5986 = vmatpush2.msra.mxu0 0.0
      %5987 = vmatprep.subr.mxu0 0.0
      %5988 = vmatpush2.msra.mxu0 0.0
      %5989 = vmatprep.subr.mxu0 0.0
      %5990 = vmatpush2.msra.mxu0 0.0
      %5991 = vmatprep.subr.mxu0 0.0
      %5992 = vmatpush2.msra.mxu0 0.0
      %5993 = vmatprep.subr.mxu0 0.0
      %5994 = vmatpush2.msra.mxu0 0.0
      %5995 = vmatprep.subr.mxu0 0.0
      %5996 = vmatpush2.msra.mxu0 0.0
      %5997 = vmatprep.subr.mxu0 0.0
      %5998 = vmatpush2.msra.mxu0 0.0
      %5999 = vmatprep.subr.mxu0 0.0
      %6000 = vmatpush2.msra.mxu0 0.0
      %6001 = vmatprep.subr.mxu0 0.0
      %6002 = vmatpush2.msra.mxu0 0.0
      %6003 = vmatprep.subr.mxu0 0.0
      %6004 = vmatpush2.msra.mxu0 0.0
      %6005 = vmatprep.subr.mxu0 0.0
      %6006 = vmatpush2.msra.mxu0 0.0
      %6007 = vmatprep.subr.mxu0 0.0
      %6008 = vmatpush2.msra.mxu0 0.0
      %6009 = vmatprep.subr.mxu0 0.0
      %6010 = vmatpush2.msra.mxu0 0.0
      %6011 = vmatprep.subr.mxu0 0.0
      %6012 = vmatpush2.msra.mxu0 0.0
      %6013 = vmatprep.subr.mxu0 0.0
      %6014 = vmatpush2.msra.mxu0 0.0
      %6015 = vmatprep.subr.mxu0 0.0
      %6016 = vmatpush2.msra.mxu0 0.0
      %6017 = vmatprep.mubr.f32.mxu0 0.0
      %6018 = vmatmul.mubr.f32.gmra.mxu0 %v4929
      %v6019 = vpop.f32.mrf.mxu0
      %v6020 = vadd.f32 0.0, %v6019
      %v6021 = vpop.f32.mrf.mxu0
      %6022 = vmatprep.mubr.f32.mxu0 0.0
      %6023 = vmatmul.mubr.f32.gmra.mxu0 %v4932
      %v6024 = vpop.f32.mrf.mxu0
      %v6025 = vadd.f32 0.0, %v6024
      %v6026 = vpop.f32.mrf.mxu0
      %6027 = vmatprep.mubr.f32.mxu0 0.0
      %6028 = vmatmul.mubr.f32.gmra.mxu0 %v4935
      %v6029 = vpop.f32.mrf.mxu0
      %v6030 = vadd.f32 0.0, %v6029
      %v6031 = vpop.f32.mrf.mxu0
      %6032 = vmatprep.mubr.f32.mxu0 0.0
      %6033 = vmatmul.mubr.f32.gmra.mxu0 %v4938
      %v6034 = vpop.f32.mrf.mxu0
      %v6035 = vadd.f32 0.0, %v6034
      %v6036 = vpop.f32.mrf.mxu0
      %6037 = vdwg.mxu0
      %6038 = vmatprep.subr.mxu0 0.0
      %6039 = vmatpush1.msra.mxu0 0.0
      %6040 = vmatprep.subr.mxu0 0.0
      %6041 = vmatpush1.msra.mxu0 0.0
      %6042 = vmatprep.subr.mxu0 0.0
      %6043 = vmatpush1.msra.mxu0 0.0
      %6044 = vmatprep.subr.mxu0 0.0
      %6045 = vmatpush1.msra.mxu0 0.0
      %6046 = vmatprep.subr.mxu0 0.0
      %6047 = vmatpush1.msra.mxu0 0.0
      %6048 = vmatprep.subr.mxu0 0.0
      %6049 = vmatpush1.msra.mxu0 0.0
      %6050 = vmatprep.subr.mxu0 0.0
      %6051 = vmatpush1.msra.mxu0 0.0
      %6052 = vmatprep.subr.mxu0 0.0
      %6053 = vmatpush1.msra.mxu0 0.0
      %6054 = vmatprep.subr.mxu0 0.0
      %6055 = vmatpush1.msra.mxu0 0.0
      %6056 = vmatprep.subr.mxu0 0.0
      %6057 = vmatpush1.msra.mxu0 0.0
      %6058 = vmatprep.subr.mxu0 0.0
      %6059 = vmatpush1.msra.mxu0 0.0
      %6060 = vmatprep.subr.mxu0 0.0
      %6061 = vmatpush1.msra.mxu0 0.0
      %6062 = vmatprep.subr.mxu0 0.0
      %6063 = vmatpush1.msra.mxu0 %v5855
      %6064 = vmatprep.subr.mxu0 0.0
      %6065 = vmatpush1.msra.mxu0 %v5854
      %6066 = vmatprep.subr.mxu0 0.0
      %6067 = vmatpush1.msra.mxu0 %v5853
      %6068 = vmatprep.subr.mxu0 0.0
      %6069 = vmatpush1.msra.mxu0 %v5852
      %6070 = vmatprep.subr.mxu0 0.0
      %6071 = vmatpush2.msra.mxu0 0.0
      %6072 = vmatprep.subr.mxu0 0.0
      %6073 = vmatpush2.msra.mxu0 0.0
      %6074 = vmatprep.subr.mxu0 0.0
      %6075 = vmatpush2.msra.mxu0 0.0
      %6076 = vmatprep.subr.mxu0 0.0
      %6077 = vmatpush2.msra.mxu0 0.0
      %6078 = vmatprep.subr.mxu0 0.0
      %6079 = vmatpush2.msra.mxu0 0.0
      %6080 = vmatprep.subr.mxu0 0.0
      %6081 = vmatpush2.msra.mxu0 0.0
      %6082 = vmatprep.subr.mxu0 0.0
      %6083 = vmatpush2.msra.mxu0 0.0
      %6084 = vmatprep.subr.mxu0 0.0
      %6085 = vmatpush2.msra.mxu0 0.0
      %6086 = vmatprep.subr.mxu0 0.0
      %6087 = vmatpush2.msra.mxu0 0.0
      %6088 = vmatprep.subr.mxu0 0.0
      %6089 = vmatpush2.msra.mxu0 0.0
      %6090 = vmatprep.subr.mxu0 0.0
      %6091 = vmatpush2.msra.mxu0 0.0
      %6092 = vmatprep.subr.mxu0 0.0
      %6093 = vmatpush2.msra.mxu0 0.0
      %6094 = vmatprep.subr.mxu0 0.0
      %6095 = vmatpush2.msra.mxu0 0.0
      %6096 = vmatprep.subr.mxu0 0.0
      %6097 = vmatpush2.msra.mxu0 0.0
      %6098 = vmatprep.subr.mxu0 0.0
      %6099 = vmatpush2.msra.mxu0 0.0
      %6100 = vmatprep.subr.mxu0 0.0
      %6101 = vmatpush2.msra.mxu0 0.0
      %6102 = vmatprep.mubr.f32.mxu0 0.0
      %6103 = vmatmul.mubr.f32.gmra.mxu0 %v4929
      %v6104 = vpop.f32.mrf.mxu0
      %v6105 = vadd.f32 0.0, %v6104
      %v6106 = vpop.f32.mrf.mxu0
      %6107 = vmatprep.mubr.f32.mxu0 0.0
      %6108 = vmatmul.mubr.f32.gmra.mxu0 %v4932
      %v6109 = vpop.f32.mrf.mxu0
      %v6110 = vadd.f32 0.0, %v6109
      %v6111 = vpop.f32.mrf.mxu0
      %6112 = vmatprep.mubr.f32.mxu0 0.0
      %6113 = vmatmul.mubr.f32.gmra.mxu0 %v4935
      %v6114 = vpop.f32.mrf.mxu0
      %v6115 = vadd.f32 0.0, %v6114
      %v6116 = vpop.f32.mrf.mxu0
      %6117 = vmatprep.mubr.f32.mxu0 0.0
      %6118 = vmatmul.mubr.f32.gmra.mxu0 %v4938
      %v6119 = vpop.f32.mrf.mxu0
      %v6120 = vadd.f32 0.0, %v6119
      %v6121 = vpop.f32.mrf.mxu0
      %6122 = vdwg.mxu0
      %v6124 = vsel %vm716, %v5949, 0
      %v6127 = vsel %vm716, %v6020, 0
      %6129 = vmatprep.subr.mxu0 0.0
      %6130 = vmatpush1.xpose.msra.mxu0 0.0
      %6131 = vmatprep.subr.mxu0 0.0
      %6132 = vmatpush1.xpose.msra.mxu0 0.0
      %6133 = vmatprep.subr.mxu0 0.0
      %6134 = vmatpush1.xpose.msra.mxu0 0.0
      %6135 = vmatprep.subr.mxu0 0.0
      %6136 = vmatpush1.xpose.msra.mxu0 0.0
      %6137 = vmatprep.subr.mxu0 0.0
      %6138 = vmatpush1.xpose.msra.mxu0 0.0
      %6139 = vmatprep.subr.mxu0 0.0
      %6140 = vmatpush1.xpose.msra.mxu0 0.0
      %6141 = vmatprep.subr.mxu0 0.0
      %6142 = vmatpush1.xpose.msra.mxu0 0.0
      %6143 = vmatprep.subr.mxu0 0.0
      %6144 = vmatpush1.xpose.msra.mxu0 0.0
      %6145 = vmatprep.subr.mxu0 0.0
      %6146 = vmatpush1.xpose.msra.mxu0 0.0
      %6147 = vmatprep.subr.mxu0 0.0
      %6148 = vmatpush1.xpose.msra.mxu0 0.0
      %6149 = vmatprep.subr.mxu0 0.0
      %6150 = vmatpush1.xpose.msra.mxu0 0.0
      %6151 = vmatprep.subr.mxu0 0.0
      %6152 = vmatpush1.xpose.msra.mxu0 0.0
      %6153 = vmatprep.subr.mxu0 0.0
      %6154 = vmatpush1.xpose.msra.mxu0 0.0
      %6155 = vmatprep.subr.mxu0 0.0
      %6156 = vmatpush1.xpose.msra.mxu0 0.0
      %6157 = vmatprep.subr.mxu0 0.0
      %6158 = vmatpush1.xpose.msra.mxu0 0.0
      %6159 = vmatprep.subr.mxu0 0.0
      %6160 = vmatpush1.xpose.msra.mxu0 %v6127
      %6161 = vmatprep.subr.mxu0 0.0
      %6162 = vmatpush2.xpose.msra.mxu0 0.0
      %6163 = vmatprep.subr.mxu0 0.0
      %6164 = vmatpush2.xpose.msra.mxu0 0.0
      %6165 = vmatprep.subr.mxu0 0.0
      %6166 = vmatpush2.xpose.msra.mxu0 0.0
      %6167 = vmatprep.subr.mxu0 0.0
      %6168 = vmatpush2.xpose.msra.mxu0 0.0
      %6169 = vmatprep.subr.mxu0 0.0
      %6170 = vmatpush2.xpose.msra.mxu0 0.0
      %6171 = vmatprep.subr.mxu0 0.0
      %6172 = vmatpush2.xpose.msra.mxu0 0.0
      %6173 = vmatprep.subr.mxu0 0.0
      %6174 = vmatpush2.xpose.msra.mxu0 0.0
      %6175 = vmatprep.subr.mxu0 0.0
      %6176 = vmatpush2.xpose.msra.mxu0 0.0
      %6177 = vmatprep.subr.mxu0 0.0
      %6178 = vmatpush2.xpose.msra.mxu0 0.0
      %6179 = vmatprep.subr.mxu0 0.0
      %6180 = vmatpush2.xpose.msra.mxu0 0.0
      %6181 = vmatprep.subr.mxu0 0.0
      %6182 = vmatpush2.xpose.msra.mxu0 0.0
      %6183 = vmatprep.subr.mxu0 0.0
      %6184 = vmatpush2.xpose.msra.mxu0 0.0
      %6185 = vmatprep.subr.mxu0 0.0
      %6186 = vmatpush2.xpose.msra.mxu0 0.0
      %6187 = vmatprep.subr.mxu0 0.0
      %6188 = vmatpush2.xpose.msra.mxu0 0.0
      %6189 = vmatprep.subr.mxu0 0.0
      %6190 = vmatpush2.xpose.msra.mxu0 0.0
      %6191 = vmatprep.subr.mxu0 0.0
      %6192 = vmatpush2.xpose.msra.mxu0 0.0
      %6193 = vmatprep.mubr.f32.mxu0 0.0
      %6194 = vmatmul.mubr.f32.gmra.mxu0 %v6124
      %v6195 = vpop.f32.mrf.mxu0
      %v6196 = vadd.f32 0.0, %v6195
      %v6197 = vpop.f32.mrf.mxu0
      %6198 = vdwg.mxu0
      %v6200 = vsel %vm716, %v5950, 0
      %v6203 = vsel %vm716, %v6025, 0
      %6205 = vmatprep.subr.mxu0 0.0
      %6206 = vmatpush1.xpose.msra.mxu0 0.0
      %6207 = vmatprep.subr.mxu0 0.0
      %6208 = vmatpush1.xpose.msra.mxu0 0.0
      %6209 = vmatprep.subr.mxu0 0.0
      %6210 = vmatpush1.xpose.msra.mxu0 0.0
      %6211 = vmatprep.subr.mxu0 0.0
      %6212 = vmatpush1.xpose.msra.mxu0 0.0
      %6213 = vmatprep.subr.mxu0 0.0
      %6214 = vmatpush1.xpose.msra.mxu0 0.0
      %6215 = vmatprep.subr.mxu0 0.0
      %6216 = vmatpush1.xpose.msra.mxu0 0.0
      %6217 = vmatprep.subr.mxu0 0.0
      %6218 = vmatpush1.xpose.msra.mxu0 0.0
      %6219 = vmatprep.subr.mxu0 0.0
      %6220 = vmatpush1.xpose.msra.mxu0 0.0
      %6221 = vmatprep.subr.mxu0 0.0
      %6222 = vmatpush1.xpose.msra.mxu0 0.0
      %6223 = vmatprep.subr.mxu0 0.0
      %6224 = vmatpush1.xpose.msra.mxu0 0.0
      %6225 = vmatprep.subr.mxu0 0.0
      %6226 = vmatpush1.xpose.msra.mxu0 0.0
      %6227 = vmatprep.subr.mxu0 0.0
      %6228 = vmatpush1.xpose.msra.mxu0 0.0
      %6229 = vmatprep.subr.mxu0 0.0
      %6230 = vmatpush1.xpose.msra.mxu0 0.0
      %6231 = vmatprep.subr.mxu0 0.0
      %6232 = vmatpush1.xpose.msra.mxu0 0.0
      %6233 = vmatprep.subr.mxu0 0.0
      %6234 = vmatpush1.xpose.msra.mxu0 0.0
      %6235 = vmatprep.subr.mxu0 0.0
      %6236 = vmatpush1.xpose.msra.mxu0 %v6203
      %6237 = vmatprep.subr.mxu0 0.0
      %6238 = vmatpush2.xpose.msra.mxu0 0.0
      %6239 = vmatprep.subr.mxu0 0.0
      %6240 = vmatpush2.xpose.msra.mxu0 0.0
      %6241 = vmatprep.subr.mxu0 0.0
      %6242 = vmatpush2.xpose.msra.mxu0 0.0
      %6243 = vmatprep.subr.mxu0 0.0
      %6244 = vmatpush2.xpose.msra.mxu0 0.0
      %6245 = vmatprep.subr.mxu0 0.0
      %6246 = vmatpush2.xpose.msra.mxu0 0.0
      %6247 = vmatprep.subr.mxu0 0.0
      %6248 = vmatpush2.xpose.msra.mxu0 0.0
      %6249 = vmatprep.subr.mxu0 0.0
      %6250 = vmatpush2.xpose.msra.mxu0 0.0
      %6251 = vmatprep.subr.mxu0 0.0
      %6252 = vmatpush2.xpose.msra.mxu0 0.0
      %6253 = vmatprep.subr.mxu0 0.0
      %6254 = vmatpush2.xpose.msra.mxu0 0.0
      %6255 = vmatprep.subr.mxu0 0.0
      %6256 = vmatpush2.xpose.msra.mxu0 0.0
      %6257 = vmatprep.subr.mxu0 0.0
      %6258 = vmatpush2.xpose.msra.mxu0 0.0
      %6259 = vmatprep.subr.mxu0 0.0
      %6260 = vmatpush2.xpose.msra.mxu0 0.0
      %6261 = vmatprep.subr.mxu0 0.0
      %6262 = vmatpush2.xpose.msra.mxu0 0.0
      %6263 = vmatprep.subr.mxu0 0.0
      %6264 = vmatpush2.xpose.msra.mxu0 0.0
      %6265 = vmatprep.subr.mxu0 0.0
      %6266 = vmatpush2.xpose.msra.mxu0 0.0
      %6267 = vmatprep.subr.mxu0 0.0
      %6268 = vmatpush2.xpose.msra.mxu0 0.0
      %6269 = vmatprep.mubr.f32.mxu0 0.0
      %6270 = vmatmul.mubr.f32.gmra.mxu0 %v6200
      %v6271 = vpop.f32.mrf.mxu0
      %v6272 = vadd.f32 0.0, %v6271
      %v6273 = vpop.f32.mrf.mxu0
      %6274 = vdwg.mxu0
      %v6276 = vsel %vm716, %v5951, 0
      %v6279 = vsel %vm716, %v6030, 0
      %6281 = vmatprep.subr.mxu0 0.0
      %6282 = vmatpush1.xpose.msra.mxu0 0.0
      %6283 = vmatprep.subr.mxu0 0.0
      %6284 = vmatpush1.xpose.msra.mxu0 0.0
      %6285 = vmatprep.subr.mxu0 0.0
      %6286 = vmatpush1.xpose.msra.mxu0 0.0
      %6287 = vmatprep.subr.mxu0 0.0
      %6288 = vmatpush1.xpose.msra.mxu0 0.0
      %6289 = vmatprep.subr.mxu0 0.0
      %6290 = vmatpush1.xpose.msra.mxu0 0.0
      %6291 = vmatprep.subr.mxu0 0.0
      %6292 = vmatpush1.xpose.msra.mxu0 0.0
      %6293 = vmatprep.subr.mxu0 0.0
      %6294 = vmatpush1.xpose.msra.mxu0 0.0
      %6295 = vmatprep.subr.mxu0 0.0
      %6296 = vmatpush1.xpose.msra.mxu0 0.0
      %6297 = vmatprep.subr.mxu0 0.0
      %6298 = vmatpush1.xpose.msra.mxu0 0.0
      %6299 = vmatprep.subr.mxu0 0.0
      %6300 = vmatpush1.xpose.msra.mxu0 0.0
      %6301 = vmatprep.subr.mxu0 0.0
      %6302 = vmatpush1.xpose.msra.mxu0 0.0
      %6303 = vmatprep.subr.mxu0 0.0
      %6304 = vmatpush1.xpose.msra.mxu0 0.0
      %6305 = vmatprep.subr.mxu0 0.0
      %6306 = vmatpush1.xpose.msra.mxu0 0.0
      %6307 = vmatprep.subr.mxu0 0.0
      %6308 = vmatpush1.xpose.msra.mxu0 0.0
      %6309 = vmatprep.subr.mxu0 0.0
      %6310 = vmatpush1.xpose.msra.mxu0 0.0
      %6311 = vmatprep.subr.mxu0 0.0
      %6312 = vmatpush1.xpose.msra.mxu0 %v6279
      %6313 = vmatprep.subr.mxu0 0.0
      %6314 = vmatpush2.xpose.msra.mxu0 0.0
      %6315 = vmatprep.subr.mxu0 0.0
      %6316 = vmatpush2.xpose.msra.mxu0 0.0
      %6317 = vmatprep.subr.mxu0 0.0
      %6318 = vmatpush2.xpose.msra.mxu0 0.0
      %6319 = vmatprep.subr.mxu0 0.0
      %6320 = vmatpush2.xpose.msra.mxu0 0.0
      %6321 = vmatprep.subr.mxu0 0.0
      %6322 = vmatpush2.xpose.msra.mxu0 0.0
      %6323 = vmatprep.subr.mxu0 0.0
      %6324 = vmatpush2.xpose.msra.mxu0 0.0
      %6325 = vmatprep.subr.mxu0 0.0
      %6326 = vmatpush2.xpose.msra.mxu0 0.0
      %6327 = vmatprep.subr.mxu0 0.0
      %6328 = vmatpush2.xpose.msra.mxu0 0.0
      %6329 = vmatprep.subr.mxu0 0.0
      %6330 = vmatpush2.xpose.msra.mxu0 0.0
      %6331 = vmatprep.subr.mxu0 0.0
      %6332 = vmatpush2.xpose.msra.mxu0 0.0
      %6333 = vmatprep.subr.mxu0 0.0
      %6334 = vmatpush2.xpose.msra.mxu0 0.0
      %6335 = vmatprep.subr.mxu0 0.0
      %6336 = vmatpush2.xpose.msra.mxu0 0.0
      %6337 = vmatprep.subr.mxu0 0.0
      %6338 = vmatpush2.xpose.msra.mxu0 0.0
      %6339 = vmatprep.subr.mxu0 0.0
      %6340 = vmatpush2.xpose.msra.mxu0 0.0
      %6341 = vmatprep.subr.mxu0 0.0
      %6342 = vmatpush2.xpose.msra.mxu0 0.0
      %6343 = vmatprep.subr.mxu0 0.0
      %6344 = vmatpush2.xpose.msra.mxu0 0.0
      %6345 = vmatprep.mubr.f32.mxu0 0.0
      %6346 = vmatmul.mubr.f32.gmra.mxu0 %v6276
      %v6347 = vpop.f32.mrf.mxu0
      %v6348 = vadd.f32 0.0, %v6347
      %v6349 = vpop.f32.mrf.mxu0
      %6350 = vdwg.mxu0
      %v6352 = vsel %vm716, %v5952, 0
      %v6355 = vsel %vm716, %v6035, 0
      %6357 = vmatprep.subr.mxu0 0.0
      %6358 = vmatpush1.xpose.msra.mxu0 0.0
      %6359 = vmatprep.subr.mxu0 0.0
      %6360 = vmatpush1.xpose.msra.mxu0 0.0
      %6361 = vmatprep.subr.mxu0 0.0
      %6362 = vmatpush1.xpose.msra.mxu0 0.0
      %6363 = vmatprep.subr.mxu0 0.0
      %6364 = vmatpush1.xpose.msra.mxu0 0.0
      %6365 = vmatprep.subr.mxu0 0.0
      %6366 = vmatpush1.xpose.msra.mxu0 0.0
      %6367 = vmatprep.subr.mxu0 0.0
      %6368 = vmatpush1.xpose.msra.mxu0 0.0
      %6369 = vmatprep.subr.mxu0 0.0
      %6370 = vmatpush1.xpose.msra.mxu0 0.0
      %6371 = vmatprep.subr.mxu0 0.0
      %6372 = vmatpush1.xpose.msra.mxu0 0.0
      %6373 = vmatprep.subr.mxu0 0.0
      %6374 = vmatpush1.xpose.msra.mxu0 0.0
      %6375 = vmatprep.subr.mxu0 0.0
      %6376 = vmatpush1.xpose.msra.mxu0 0.0
      %6377 = vmatprep.subr.mxu0 0.0
      %6378 = vmatpush1.xpose.msra.mxu0 0.0
      %6379 = vmatprep.subr.mxu0 0.0
      %6380 = vmatpush1.xpose.msra.mxu0 0.0
      %6381 = vmatprep.subr.mxu0 0.0
      %6382 = vmatpush1.xpose.msra.mxu0 0.0
      %6383 = vmatprep.subr.mxu0 0.0
      %6384 = vmatpush1.xpose.msra.mxu0 0.0
      %6385 = vmatprep.subr.mxu0 0.0
      %6386 = vmatpush1.xpose.msra.mxu0 0.0
      %6387 = vmatprep.subr.mxu0 0.0
      %6388 = vmatpush1.xpose.msra.mxu0 %v6355
      %6389 = vmatprep.subr.mxu0 0.0
      %6390 = vmatpush2.xpose.msra.mxu0 0.0
      %6391 = vmatprep.subr.mxu0 0.0
      %6392 = vmatpush2.xpose.msra.mxu0 0.0
      %6393 = vmatprep.subr.mxu0 0.0
      %6394 = vmatpush2.xpose.msra.mxu0 0.0
      %6395 = vmatprep.subr.mxu0 0.0
      %6396 = vmatpush2.xpose.msra.mxu0 0.0
      %6397 = vmatprep.subr.mxu0 0.0
      %6398 = vmatpush2.xpose.msra.mxu0 0.0
      %6399 = vmatprep.subr.mxu0 0.0
      %6400 = vmatpush2.xpose.msra.mxu0 0.0
      %6401 = vmatprep.subr.mxu0 0.0
      %6402 = vmatpush2.xpose.msra.mxu0 0.0
      %6403 = vmatprep.subr.mxu0 0.0
      %6404 = vmatpush2.xpose.msra.mxu0 0.0
      %6405 = vmatprep.subr.mxu0 0.0
      %6406 = vmatpush2.xpose.msra.mxu0 0.0
      %6407 = vmatprep.subr.mxu0 0.0
      %6408 = vmatpush2.xpose.msra.mxu0 0.0
      %6409 = vmatprep.subr.mxu0 0.0
      %6410 = vmatpush2.xpose.msra.mxu0 0.0
      %6411 = vmatprep.subr.mxu0 0.0
      %6412 = vmatpush2.xpose.msra.mxu0 0.0
      %6413 = vmatprep.subr.mxu0 0.0
      %6414 = vmatpush2.xpose.msra.mxu0 0.0
      %6415 = vmatprep.subr.mxu0 0.0
      %6416 = vmatpush2.xpose.msra.mxu0 0.0
      %6417 = vmatprep.subr.mxu0 0.0
      %6418 = vmatpush2.xpose.msra.mxu0 0.0
      %6419 = vmatprep.subr.mxu0 0.0
      %6420 = vmatpush2.xpose.msra.mxu0 0.0
      %6421 = vmatprep.mubr.f32.mxu0 0.0
      %6422 = vmatmul.mubr.f32.gmra.mxu0 %v6352
      %v6423 = vpop.f32.mrf.mxu0
      %v6424 = vadd.f32 0.0, %v6423
      %v6425 = vpop.f32.mrf.mxu0
      %6426 = vdwg.mxu0
      %v6427 = vsel %vm716, %v6196, -inf
      %6428 = vmax.xlane.f32.xlu0 %v6427
      %v6429 = vpop.xlane.xlu0 %6428
      %v6430 = vsel %vm716, %v6272, -inf
      %6431 = vmax.xlane.f32.xlu0 %v6430
      %v6432 = vpop.xlane.xlu0 %6431
      %v6433 = vsel %vm716, %v6348, -inf
      %6434 = vmax.xlane.f32.xlu0 %v6433
      %v6435 = vpop.xlane.xlu0 %6434
      %v6436 = vsel %vm716, %v6424, -inf
      %6437 = vmax.xlane.f32.xlu0 %v6436
      %v6438 = vpop.xlane.xlu0 %6437
      %v6439 = vsub.f32 %v6196, %v6429
      %v6440 = vsub.f32 %v6272, %v6432
      %v6441 = vsub.f32 %v6348, %v6435
      %v6442 = vsub.f32 %v6424, %v6438
      %v6443 = vmul.f32 %v6439, 1.442695
      %v6444 = vpow.pop %v6443
      %v6445 = vmul.f32 %v6440, 1.442695
      %v6446 = vpow.pop %v6445
      %v6447 = vmul.f32 %v6441, 1.442695
      %v6448 = vpow.pop %v6447
      %v6449 = vmul.f32 %v6442, 1.442695
      %v6450 = vpow.pop %v6449
      %v6451 = vsel %vm716, %v6444, 0.0
      %6452 = vadd.xlane.f32.xlu0 %v6451
      %v6453 = vpop.xlane.xlu0 %6452
      %v6454 = vsel %vm716, %v6446, 0.0
      %6455 = vadd.xlane.f32.xlu0 %v6454
      %v6456 = vpop.xlane.xlu0 %6455
      %v6457 = vsel %vm716, %v6448, 0.0
      %6458 = vadd.xlane.f32.xlu0 %v6457
      %v6459 = vpop.xlane.xlu0 %6458
      %v6460 = vsel %vm716, %v6450, 0.0
      %6461 = vadd.xlane.f32.xlu0 %v6460
      %v6462 = vpop.xlane.xlu0 %6461
      %v6463 = vrcp.pop %v6453
      %v6464 = vrcp.pop %v6456
      %v6465 = vrcp.pop %v6459
      %v6466 = vrcp.pop %v6462
      %v6467 = vmul.f32 %v6444, %v6463
      %v6468 = vmul.f32 %v6446, %v6464
      %v6469 = vmul.f32 %v6448, %v6465
      %v6470 = vmul.f32 %v6450, %v6466
      %v6472 = vsel %vm716, %v6467, 0
      %6474 = vmatprep.subr.mxu0 0.0
      %6475 = vmatpush1.msra.mxu0 0.0
      %6476 = vmatprep.subr.mxu0 0.0
      %6477 = vmatpush1.msra.mxu0 0.0
      %6478 = vmatprep.subr.mxu0 0.0
      %6479 = vmatpush1.msra.mxu0 0.0
      %6480 = vmatprep.subr.mxu0 0.0
      %6481 = vmatpush1.msra.mxu0 0.0
      %6482 = vmatprep.subr.mxu0 0.0
      %6483 = vmatpush1.msra.mxu0 0.0
      %6484 = vmatprep.subr.mxu0 0.0
      %6485 = vmatpush1.msra.mxu0 0.0
      %6486 = vmatprep.subr.mxu0 0.0
      %6487 = vmatpush1.msra.mxu0 0.0
      %6488 = vmatprep.subr.mxu0 0.0
      %6489 = vmatpush1.msra.mxu0 0.0
      %6490 = vmatprep.subr.mxu0 0.0
      %6491 = vmatpush1.msra.mxu0 0.0
      %6492 = vmatprep.subr.mxu0 0.0
      %6493 = vmatpush1.msra.mxu0 0.0
      %6494 = vmatprep.subr.mxu0 0.0
      %6495 = vmatpush1.msra.mxu0 0.0
      %6496 = vmatprep.subr.mxu0 0.0
      %6497 = vmatpush1.msra.mxu0 0.0
      %6498 = vmatprep.subr.mxu0 0.0
      %6499 = vmatpush1.msra.mxu0 0.0
      %6500 = vmatprep.subr.mxu0 0.0
      %6501 = vmatpush1.msra.mxu0 0.0
      %6502 = vmatprep.subr.mxu0 0.0
      %6503 = vmatpush1.msra.mxu0 0.0
      %6504 = vmatprep.subr.mxu0 0.0
      %6505 = vmatpush1.msra.mxu0 %v6105
      %6506 = vmatprep.subr.mxu0 0.0
      %6507 = vmatpush2.msra.mxu0 0.0
      %6508 = vmatprep.subr.mxu0 0.0
      %6509 = vmatpush2.msra.mxu0 0.0
      %6510 = vmatprep.subr.mxu0 0.0
      %6511 = vmatpush2.msra.mxu0 0.0
      %6512 = vmatprep.subr.mxu0 0.0
      %6513 = vmatpush2.msra.mxu0 0.0
      %6514 = vmatprep.subr.mxu0 0.0
      %6515 = vmatpush2.msra.mxu0 0.0
      %6516 = vmatprep.subr.mxu0 0.0
      %6517 = vmatpush2.msra.mxu0 0.0
      %6518 = vmatprep.subr.mxu0 0.0
      %6519 = vmatpush2.msra.mxu0 0.0
      %6520 = vmatprep.subr.mxu0 0.0
      %6521 = vmatpush2.msra.mxu0 0.0
      %6522 = vmatprep.subr.mxu0 0.0
      %6523 = vmatpush2.msra.mxu0 0.0
      %6524 = vmatprep.subr.mxu0 0.0
      %6525 = vmatpush2.msra.mxu0 0.0
      %6526 = vmatprep.subr.mxu0 0.0
      %6527 = vmatpush2.msra.mxu0 0.0
      %6528 = vmatprep.subr.mxu0 0.0
      %6529 = vmatpush2.msra.mxu0 0.0
      %6530 = vmatprep.subr.mxu0 0.0
      %6531 = vmatpush2.msra.mxu0 0.0
      %6532 = vmatprep.subr.mxu0 0.0
      %6533 = vmatpush2.msra.mxu0 0.0
      %6534 = vmatprep.subr.mxu0 0.0
      %6535 = vmatpush2.msra.mxu0 0.0
      %6536 = vmatprep.subr.mxu0 0.0
      %6537 = vmatpush2.msra.mxu0 0.0
      %6538 = vmatprep.mubr.f32.mxu0 0.0
      %6539 = vmatmul.mubr.f32.gmra.mxu0 %v6472
      %v6540 = vpop.f32.mrf.mxu0
      %v6541 = vadd.f32 0.0, %v6540
      %v6542 = vpop.f32.mrf.mxu0
      %6543 = vdwg.mxu0
      %v6545 = vsel %vm716, %v6468, 0
      %6547 = vmatprep.subr.mxu0 0.0
      %6548 = vmatpush1.msra.mxu0 0.0
      %6549 = vmatprep.subr.mxu0 0.0
      %6550 = vmatpush1.msra.mxu0 0.0
      %6551 = vmatprep.subr.mxu0 0.0
      %6552 = vmatpush1.msra.mxu0 0.0
      %6553 = vmatprep.subr.mxu0 0.0
      %6554 = vmatpush1.msra.mxu0 0.0
      %6555 = vmatprep.subr.mxu0 0.0
      %6556 = vmatpush1.msra.mxu0 0.0
      %6557 = vmatprep.subr.mxu0 0.0
      %6558 = vmatpush1.msra.mxu0 0.0
      %6559 = vmatprep.subr.mxu0 0.0
      %6560 = vmatpush1.msra.mxu0 0.0
      %6561 = vmatprep.subr.mxu0 0.0
      %6562 = vmatpush1.msra.mxu0 0.0
      %6563 = vmatprep.subr.mxu0 0.0
      %6564 = vmatpush1.msra.mxu0 0.0
      %6565 = vmatprep.subr.mxu0 0.0
      %6566 = vmatpush1.msra.mxu0 0.0
      %6567 = vmatprep.subr.mxu0 0.0
      %6568 = vmatpush1.msra.mxu0 0.0
      %6569 = vmatprep.subr.mxu0 0.0
      %6570 = vmatpush1.msra.mxu0 0.0
      %6571 = vmatprep.subr.mxu0 0.0
      %6572 = vmatpush1.msra.mxu0 0.0
      %6573 = vmatprep.subr.mxu0 0.0
      %6574 = vmatpush1.msra.mxu0 0.0
      %6575 = vmatprep.subr.mxu0 0.0
      %6576 = vmatpush1.msra.mxu0 0.0
      %6577 = vmatprep.subr.mxu0 0.0
      %6578 = vmatpush1.msra.mxu0 %v6110
      %6579 = vmatprep.subr.mxu0 0.0
      %6580 = vmatpush2.msra.mxu0 0.0
      %6581 = vmatprep.subr.mxu0 0.0
      %6582 = vmatpush2.msra.mxu0 0.0
      %6583 = vmatprep.subr.mxu0 0.0
      %6584 = vmatpush2.msra.mxu0 0.0
      %6585 = vmatprep.subr.mxu0 0.0
      %6586 = vmatpush2.msra.mxu0 0.0
      %6587 = vmatprep.subr.mxu0 0.0
      %6588 = vmatpush2.msra.mxu0 0.0
      %6589 = vmatprep.subr.mxu0 0.0
      %6590 = vmatpush2.msra.mxu0 0.0
      %6591 = vmatprep.subr.mxu0 0.0
      %6592 = vmatpush2.msra.mxu0 0.0
      %6593 = vmatprep.subr.mxu0 0.0
      %6594 = vmatpush2.msra.mxu0 0.0
      %6595 = vmatprep.subr.mxu0 0.0
      %6596 = vmatpush2.msra.mxu0 0.0
      %6597 = vmatprep.subr.mxu0 0.0
      %6598 = vmatpush2.msra.mxu0 0.0
      %6599 = vmatprep.subr.mxu0 0.0
      %6600 = vmatpush2.msra.mxu0 0.0
      %6601 = vmatprep.subr.mxu0 0.0
      %6602 = vmatpush2.msra.mxu0 0.0
      %6603 = vmatprep.subr.mxu0 0.0
      %6604 = vmatpush2.msra.mxu0 0.0
      %6605 = vmatprep.subr.mxu0 0.0
      %6606 = vmatpush2.msra.mxu0 0.0
      %6607 = vmatprep.subr.mxu0 0.0
      %6608 = vmatpush2.msra.mxu0 0.0
      %6609 = vmatprep.subr.mxu0 0.0
      %6610 = vmatpush2.msra.mxu0 0.0
      %6611 = vmatprep.mubr.f32.mxu0 0.0
      %6612 = vmatmul.mubr.f32.gmra.mxu0 %v6545
      %v6613 = vpop.f32.mrf.mxu0
      %v6614 = vadd.f32 0.0, %v6613
      %v6615 = vpop.f32.mrf.mxu0
      %6616 = vdwg.mxu0
      %v6618 = vsel %vm716, %v6469, 0
      %6620 = vmatprep.subr.mxu0 0.0
      %6621 = vmatpush1.msra.mxu0 0.0
      %6622 = vmatprep.subr.mxu0 0.0
      %6623 = vmatpush1.msra.mxu0 0.0
      %6624 = vmatprep.subr.mxu0 0.0
      %6625 = vmatpush1.msra.mxu0 0.0
      %6626 = vmatprep.subr.mxu0 0.0
      %6627 = vmatpush1.msra.mxu0 0.0
      %6628 = vmatprep.subr.mxu0 0.0
      %6629 = vmatpush1.msra.mxu0 0.0
      %6630 = vmatprep.subr.mxu0 0.0
      %6631 = vmatpush1.msra.mxu0 0.0
      %6632 = vmatprep.subr.mxu0 0.0
      %6633 = vmatpush1.msra.mxu0 0.0
      %6634 = vmatprep.subr.mxu0 0.0
      %6635 = vmatpush1.msra.mxu0 0.0
      %6636 = vmatprep.subr.mxu0 0.0
      %6637 = vmatpush1.msra.mxu0 0.0
      %6638 = vmatprep.subr.mxu0 0.0
      %6639 = vmatpush1.msra.mxu0 0.0
      %6640 = vmatprep.subr.mxu0 0.0
      %6641 = vmatpush1.msra.mxu0 0.0
      %6642 = vmatprep.subr.mxu0 0.0
      %6643 = vmatpush1.msra.mxu0 0.0
      %6644 = vmatprep.subr.mxu0 0.0
      %6645 = vmatpush1.msra.mxu0 0.0
      %6646 = vmatprep.subr.mxu0 0.0
      %6647 = vmatpush1.msra.mxu0 0.0
      %6648 = vmatprep.subr.mxu0 0.0
      %6649 = vmatpush1.msra.mxu0 0.0
      %6650 = vmatprep.subr.mxu0 0.0
      %6651 = vmatpush1.msra.mxu0 %v6115
      %6652 = vmatprep.subr.mxu0 0.0
      %6653 = vmatpush2.msra.mxu0 0.0
      %6654 = vmatprep.subr.mxu0 0.0
      %6655 = vmatpush2.msra.mxu0 0.0
      %6656 = vmatprep.subr.mxu0 0.0
      %6657 = vmatpush2.msra.mxu0 0.0
      %6658 = vmatprep.subr.mxu0 0.0
      %6659 = vmatpush2.msra.mxu0 0.0
      %6660 = vmatprep.subr.mxu0 0.0
      %6661 = vmatpush2.msra.mxu0 0.0
      %6662 = vmatprep.subr.mxu0 0.0
      %6663 = vmatpush2.msra.mxu0 0.0
      %6664 = vmatprep.subr.mxu0 0.0
      %6665 = vmatpush2.msra.mxu0 0.0
      %6666 = vmatprep.subr.mxu0 0.0
      %6667 = vmatpush2.msra.mxu0 0.0
      %6668 = vmatprep.subr.mxu0 0.0
      %6669 = vmatpush2.msra.mxu0 0.0
      %6670 = vmatprep.subr.mxu0 0.0
      %6671 = vmatpush2.msra.mxu0 0.0
      %6672 = vmatprep.subr.mxu0 0.0
      %6673 = vmatpush2.msra.mxu0 0.0
      %6674 = vmatprep.subr.mxu0 0.0
      %6675 = vmatpush2.msra.mxu0 0.0
      %6676 = vmatprep.subr.mxu0 0.0
      %6677 = vmatpush2.msra.mxu0 0.0
      %6678 = vmatprep.subr.mxu0 0.0
      %6679 = vmatpush2.msra.mxu0 0.0
      %6680 = vmatprep.subr.mxu0 0.0
      %6681 = vmatpush2.msra.mxu0 0.0
      %6682 = vmatprep.subr.mxu0 0.0
      %6683 = vmatpush2.msra.mxu0 0.0
      %6684 = vmatprep.mubr.f32.mxu0 0.0
      %6685 = vmatmul.mubr.f32.gmra.mxu0 %v6618
      %v6686 = vpop.f32.mrf.mxu0
      %v6687 = vadd.f32 0.0, %v6686
      %v6688 = vpop.f32.mrf.mxu0
      %6689 = vdwg.mxu0
      %v6691 = vsel %vm716, %v6470, 0
      %6693 = vmatprep.subr.mxu0 0.0
      %6694 = vmatpush1.msra.mxu0 0.0
      %6695 = vmatprep.subr.mxu0 0.0
      %6696 = vmatpush1.msra.mxu0 0.0
      %6697 = vmatprep.subr.mxu0 0.0
      %6698 = vmatpush1.msra.mxu0 0.0
      %6699 = vmatprep.subr.mxu0 0.0
      %6700 = vmatpush1.msra.mxu0 0.0
      %6701 = vmatprep.subr.mxu0 0.0
      %6702 = vmatpush1.msra.mxu0 0.0
      %6703 = vmatprep.subr.mxu0 0.0
      %6704 = vmatpush1.msra.mxu0 0.0
      %6705 = vmatprep.subr.mxu0 0.0
      %6706 = vmatpush1.msra.mxu0 0.0
      %6707 = vmatprep.subr.mxu0 0.0
      %6708 = vmatpush1.msra.mxu0 0.0
      %6709 = vmatprep.subr.mxu0 0.0
      %6710 = vmatpush1.msra.mxu0 0.0
      %6711 = vmatprep.subr.mxu0 0.0
      %6712 = vmatpush1.msra.mxu0 0.0
      %6713 = vmatprep.subr.mxu0 0.0
      %6714 = vmatpush1.msra.mxu0 0.0
      %6715 = vmatprep.subr.mxu0 0.0
      %6716 = vmatpush1.msra.mxu0 0.0
      %6717 = vmatprep.subr.mxu0 0.0
      %6718 = vmatpush1.msra.mxu0 0.0
      %6719 = vmatprep.subr.mxu0 0.0
      %6720 = vmatpush1.msra.mxu0 0.0
      %6721 = vmatprep.subr.mxu0 0.0
      %6722 = vmatpush1.msra.mxu0 0.0
      %6723 = vmatprep.subr.mxu0 0.0
      %6724 = vmatpush1.msra.mxu0 %v6120
      %6725 = vmatprep.subr.mxu0 0.0
      %6726 = vmatpush2.msra.mxu0 0.0
      %6727 = vmatprep.subr.mxu0 0.0
      %6728 = vmatpush2.msra.mxu0 0.0
      %6729 = vmatprep.subr.mxu0 0.0
      %6730 = vmatpush2.msra.mxu0 0.0
      %6731 = vmatprep.subr.mxu0 0.0
      %6732 = vmatpush2.msra.mxu0 0.0
      %6733 = vmatprep.subr.mxu0 0.0
      %6734 = vmatpush2.msra.mxu0 0.0
      %6735 = vmatprep.subr.mxu0 0.0
      %6736 = vmatpush2.msra.mxu0 0.0
      %6737 = vmatprep.subr.mxu0 0.0
      %6738 = vmatpush2.msra.mxu0 0.0
      %6739 = vmatprep.subr.mxu0 0.0
      %6740 = vmatpush2.msra.mxu0 0.0
      %6741 = vmatprep.subr.mxu0 0.0
      %6742 = vmatpush2.msra.mxu0 0.0
      %6743 = vmatprep.subr.mxu0 0.0
      %6744 = vmatpush2.msra.mxu0 0.0
      %6745 = vmatprep.subr.mxu0 0.0
      %6746 = vmatpush2.msra.mxu0 0.0
      %6747 = vmatprep.subr.mxu0 0.0
      %6748 = vmatpush2.msra.mxu0 0.0
      %6749 = vmatprep.subr.mxu0 0.0
      %6750 = vmatpush2.msra.mxu0 0.0
      %6751 = vmatprep.subr.mxu0 0.0
      %6752 = vmatpush2.msra.mxu0 0.0
      %6753 = vmatprep.subr.mxu0 0.0
      %6754 = vmatpush2.msra.mxu0 0.0
      %6755 = vmatprep.subr.mxu0 0.0
      %6756 = vmatpush2.msra.mxu0 0.0
      %6757 = vmatprep.mubr.f32.mxu0 0.0
      %6758 = vmatmul.mubr.f32.gmra.mxu0 %v6691
      %v6759 = vpop.f32.mrf.mxu0
      %v6760 = vadd.f32 0.0, %v6759
      %v6761 = vpop.f32.mrf.mxu0
      %6762 = vdwg.mxu0
      %s6763 = scalar_lea.vmem %s4, 40
      %v6764 = vld [vmem:[%s6763] sm:$0xff]
      %v6766 = vsel %vm716, %v6541, 0
      %v6769 = vsel %vm716, %v6614, 0
      %v6772 = vsel %vm716, %v6687, 0
      %v6775 = vsel %vm716, %v6760, 0
      %6777 = vmatprep.subr.mxu0 0.0
      %6778 = vmatpush1.msra.mxu0 0.0
      %6779 = vmatprep.subr.mxu0 0.0
      %6780 = vmatpush1.msra.mxu0 0.0
      %6781 = vmatprep.subr.mxu0 0.0
      %6782 = vmatpush1.msra.mxu0 0.0
      %6783 = vmatprep.subr.mxu0 0.0
      %6784 = vmatpush1.msra.mxu0 0.0
      %6785 = vmatprep.subr.mxu0 0.0
      %6786 = vmatpush1.msra.mxu0 0.0
      %6787 = vmatprep.subr.mxu0 0.0
      %6788 = vmatpush1.msra.mxu0 0.0
      %6789 = vmatprep.subr.mxu0 0.0
      %6790 = vmatpush1.msra.mxu0 0.0
      %6791 = vmatprep.subr.mxu0 0.0
      %6792 = vmatpush1.msra.mxu0 0.0
      %6793 = vmatprep.subr.mxu0 0.0
      %6794 = vmatpush1.msra.mxu0 0.0
      %6795 = vmatprep.subr.mxu0 0.0
      %6796 = vmatpush1.msra.mxu0 0.0
      %6797 = vmatprep.subr.mxu0 0.0
      %6798 = vmatpush1.msra.mxu0 0.0
      %6799 = vmatprep.subr.mxu0 0.0
      %6800 = vmatpush1.msra.mxu0 0.0
      %6801 = vmatprep.subr.mxu0 0.0
      %6802 = vmatpush1.msra.mxu0 0.0
      %6803 = vmatprep.subr.mxu0 0.0
      %6804 = vmatpush1.msra.mxu0 0.0
      %6805 = vmatprep.subr.mxu0 0.0
      %6806 = vmatpush1.msra.mxu0 0.0
      %6807 = vmatprep.subr.mxu0 0.0
      %6808 = vmatpush1.msra.mxu0 %v6764
      %6809 = vmatprep.subr.mxu0 0.0
      %6810 = vmatpush2.msra.mxu0 0.0
      %6811 = vmatprep.subr.mxu0 0.0
      %6812 = vmatpush2.msra.mxu0 0.0
      %6813 = vmatprep.subr.mxu0 0.0
      %6814 = vmatpush2.msra.mxu0 0.0
      %6815 = vmatprep.subr.mxu0 0.0
      %6816 = vmatpush2.msra.mxu0 0.0
      %6817 = vmatprep.subr.mxu0 0.0
      %6818 = vmatpush2.msra.mxu0 0.0
      %6819 = vmatprep.subr.mxu0 0.0
      %6820 = vmatpush2.msra.mxu0 0.0
      %6821 = vmatprep.subr.mxu0 0.0
      %6822 = vmatpush2.msra.mxu0 0.0
      %6823 = vmatprep.subr.mxu0 0.0
      %6824 = vmatpush2.msra.mxu0 0.0
      %6825 = vmatprep.subr.mxu0 0.0
      %6826 = vmatpush2.msra.mxu0 0.0
      %6827 = vmatprep.subr.mxu0 0.0
      %6828 = vmatpush2.msra.mxu0 0.0
      %6829 = vmatprep.subr.mxu0 0.0
      %6830 = vmatpush2.msra.mxu0 0.0
      %6831 = vmatprep.subr.mxu0 0.0
      %6832 = vmatpush2.msra.mxu0 0.0
      %6833 = vmatprep.subr.mxu0 0.0
      %6834 = vmatpush2.msra.mxu0 0.0
      %6835 = vmatprep.subr.mxu0 0.0
      %6836 = vmatpush2.msra.mxu0 0.0
      %6837 = vmatprep.subr.mxu0 0.0
      %6838 = vmatpush2.msra.mxu0 0.0
      %6839 = vmatprep.subr.mxu0 0.0
      %6840 = vmatpush2.msra.mxu0 0.0
      %6841 = vmatprep.mubr.f32.mxu0 0.0
      %6842 = vmatmul.mubr.f32.gmra.mxu0 %v6766
      %v6843 = vpop.f32.mrf.mxu0
      %v6844 = vadd.f32 0.0, %v6843
      %v6845 = vpop.f32.mrf.mxu0
      %6846 = vmatprep.mubr.f32.mxu0 0.0
      %6847 = vmatmul.mubr.f32.gmra.mxu0 %v6769
      %v6848 = vpop.f32.mrf.mxu0
      %v6849 = vadd.f32 0.0, %v6848
      %v6850 = vpop.f32.mrf.mxu0
      %6851 = vmatprep.mubr.f32.mxu0 0.0
      %6852 = vmatmul.mubr.f32.gmra.mxu0 %v6772
      %v6853 = vpop.f32.mrf.mxu0
      %v6854 = vadd.f32 0.0, %v6853
      %v6855 = vpop.f32.mrf.mxu0
      %6856 = vmatprep.mubr.f32.mxu0 0.0
      %6857 = vmatmul.mubr.f32.gmra.mxu0 %v6775
      %v6858 = vpop.f32.mrf.mxu0
      %v6859 = vadd.f32 0.0, %v6858
      %v6860 = vpop.f32.mrf.mxu0
      %6861 = vdwg.mxu0
      %v6863 = vsel %vm716, %v5617, 0
      %v6866 = vsel %vm716, %v5690, 0
      %v6869 = vsel %vm716, %v5763, 0
      %v6872 = vsel %vm716, %v5836, 0
      %6874 = vmatprep.subr.mxu0 0.0
      %6875 = vmatpush1.msra.mxu0 0.0
      %6876 = vmatprep.subr.mxu0 0.0
      %6877 = vmatpush1.msra.mxu0 0.0
      %6878 = vmatprep.subr.mxu0 0.0
      %6879 = vmatpush1.msra.mxu0 0.0
      %6880 = vmatprep.subr.mxu0 0.0
      %6881 = vmatpush1.msra.mxu0 0.0
      %6882 = vmatprep.subr.mxu0 0.0
      %6883 = vmatpush1.msra.mxu0 0.0
      %6884 = vmatprep.subr.mxu0 0.0
      %6885 = vmatpush1.msra.mxu0 0.0
      %6886 = vmatprep.subr.mxu0 0.0
      %6887 = vmatpush1.msra.mxu0 0.0
      %6888 = vmatprep.subr.mxu0 0.0
      %6889 = vmatpush1.msra.mxu0 0.0
      %6890 = vmatprep.subr.mxu0 0.0
      %6891 = vmatpush1.msra.mxu0 0.0
      %6892 = vmatprep.subr.mxu0 0.0
      %6893 = vmatpush1.msra.mxu0 0.0
      %6894 = vmatprep.subr.mxu0 0.0
      %6895 = vmatpush1.msra.mxu0 0.0
      %6896 = vmatprep.subr.mxu0 0.0
      %6897 = vmatpush1.msra.mxu0 0.0
      %6898 = vmatprep.subr.mxu0 0.0
      %6899 = vmatpush1.msra.mxu0 0.0
      %6900 = vmatprep.subr.mxu0 0.0
      %6901 = vmatpush1.msra.mxu0 0.0
      %6902 = vmatprep.subr.mxu0 0.0
      %6903 = vmatpush1.msra.mxu0 0.0
      %6904 = vmatprep.subr.mxu0 0.0
      %6905 = vmatpush1.msra.mxu0 %v5840
      %6906 = vmatprep.subr.mxu0 0.0
      %6907 = vmatpush2.msra.mxu0 0.0
      %6908 = vmatprep.subr.mxu0 0.0
      %6909 = vmatpush2.msra.mxu0 0.0
      %6910 = vmatprep.subr.mxu0 0.0
      %6911 = vmatpush2.msra.mxu0 0.0
      %6912 = vmatprep.subr.mxu0 0.0
      %6913 = vmatpush2.msra.mxu0 0.0
      %6914 = vmatprep.subr.mxu0 0.0
      %6915 = vmatpush2.msra.mxu0 0.0
      %6916 = vmatprep.subr.mxu0 0.0
      %6917 = vmatpush2.msra.mxu0 0.0
      %6918 = vmatprep.subr.mxu0 0.0
      %6919 = vmatpush2.msra.mxu0 0.0
      %6920 = vmatprep.subr.mxu0 0.0
      %6921 = vmatpush2.msra.mxu0 0.0
      %6922 = vmatprep.subr.mxu0 0.0
      %6923 = vmatpush2.msra.mxu0 0.0
      %6924 = vmatprep.subr.mxu0 0.0
      %6925 = vmatpush2.msra.mxu0 0.0
      %6926 = vmatprep.subr.mxu0 0.0
      %6927 = vmatpush2.msra.mxu0 0.0
      %6928 = vmatprep.subr.mxu0 0.0
      %6929 = vmatpush2.msra.mxu0 0.0
      %6930 = vmatprep.subr.mxu0 0.0
      %6931 = vmatpush2.msra.mxu0 0.0
      %6932 = vmatprep.subr.mxu0 0.0
      %6933 = vmatpush2.msra.mxu0 0.0
      %6934 = vmatprep.subr.mxu0 0.0
      %6935 = vmatpush2.msra.mxu0 0.0
      %6936 = vmatprep.subr.mxu0 0.0
      %6937 = vmatpush2.msra.mxu0 0.0
      %6938 = vmatprep.mubr.f32.mxu0 0.0
      %6939 = vmatmul.mubr.f32.gmra.mxu0 %v6863
      %v6940 = vpop.f32.mrf.mxu0
      %v6941 = vadd.f32 %v6844, %v6940
      %v6942 = vpop.f32.mrf.mxu0
      %6943 = vmatprep.mubr.f32.mxu0 0.0
      %6944 = vmatmul.mubr.f32.gmra.mxu0 %v6866
      %v6945 = vpop.f32.mrf.mxu0
      %v6946 = vadd.f32 %v6849, %v6945
      %v6947 = vpop.f32.mrf.mxu0
      %6948 = vmatprep.mubr.f32.mxu0 0.0
      %6949 = vmatmul.mubr.f32.gmra.mxu0 %v6869
      %v6950 = vpop.f32.mrf.mxu0
      %v6951 = vadd.f32 %v6854, %v6950
      %v6952 = vpop.f32.mrf.mxu0
      %6953 = vmatprep.mubr.f32.mxu0 0.0
      %6954 = vmatmul.mubr.f32.gmra.mxu0 %v6872
      %v6955 = vpop.f32.mrf.mxu0
      %v6956 = vadd.f32 %v6859, %v6955
      %v6957 = vpop.f32.mrf.mxu0
      %6958 = vdwg.mxu0
      %s6959 = scalar_lea.vmem %s2, 448
      %v6960 = vld [vmem:[%s6959] sm:$0xff]
      %v6961 = vld [vmem:[%s6959 + $0x8] sm:$0xff]
      %v6962 = vld [vmem:[%s6959 + $0x10] sm:$0xff]
      %v6963 = vld [vmem:[%s6959 + $0x18] sm:$0xff]
      %s6964 = scalar_lea.vmem %s2, 576
      %v6965 = vld [vmem:[%s6964] sm:$0xff]
      %v6966 = vld [vmem:[%s6964 + $0x8] sm:$0xff]
      %v6967 = vld [vmem:[%s6964 + $0x10] sm:$0xff]
      %v6968 = vld [vmem:[%s6964 + $0x18] sm:$0xff]
      %s6969 = scalar_lea.vmem %s2, 704
      %v6970 = vld [vmem:[%s6969] sm:$0xff]
      %v6971 = vld [vmem:[%s6969 + $0x8] sm:$0xff]
      %v6972 = vld [vmem:[%s6969 + $0x10] sm:$0xff]
      %v6973 = vld [vmem:[%s6969 + $0x18] sm:$0xff]
      %s6974 = scalar_lea.vmem %s3, 6
      %v6975 = vld [vmem:[%s6974] sm:$0x1]
      %v6977 = vlaneseq
      %v6978 = vshrl.u32 %v6977, 7
      %v6979 = vsub.s32 0, %v6978
      %v6980 = vrot.slane %v6975, %v6979
      %6982 = vmatprep.subr.mxu0 0.0
      %6983 = vmatpush1.msra.mxu0 0.0
      %6984 = vmatprep.subr.mxu0 0.0
      %6985 = vmatpush1.msra.mxu0 0.0
      %6986 = vmatprep.subr.mxu0 0.0
      %6987 = vmatpush1.msra.mxu0 0.0
      %6988 = vmatprep.subr.mxu0 0.0
      %6989 = vmatpush1.msra.mxu0 0.0
      %6990 = vmatprep.subr.mxu0 0.0
      %6991 = vmatpush1.msra.mxu0 0.0
      %6992 = vmatprep.subr.mxu0 0.0
      %6993 = vmatpush1.msra.mxu0 0.0
      %6994 = vmatprep.subr.mxu0 0.0
      %6995 = vmatpush1.msra.mxu0 0.0
      %6996 = vmatprep.subr.mxu0 0.0
      %6997 = vmatpush1.msra.mxu0 0.0
      %6998 = vmatprep.subr.mxu0 0.0
      %6999 = vmatpush1.msra.mxu0 0.0
      %7000 = vmatprep.subr.mxu0 0.0
      %7001 = vmatpush1.msra.mxu0 0.0
      %7002 = vmatprep.subr.mxu0 0.0
      %7003 = vmatpush1.msra.mxu0 0.0
      %7004 = vmatprep.subr.mxu0 0.0
      %7005 = vmatpush1.msra.mxu0 0.0
      %7006 = vmatprep.subr.mxu0 0.0
      %7007 = vmatpush1.msra.mxu0 %v6963
      %7008 = vmatprep.subr.mxu0 0.0
      %7009 = vmatpush1.msra.mxu0 %v6962
      %7010 = vmatprep.subr.mxu0 0.0
      %7011 = vmatpush1.msra.mxu0 %v6961
      %7012 = vmatprep.subr.mxu0 0.0
      %7013 = vmatpush1.msra.mxu0 %v6960
      %7014 = vmatprep.subr.mxu0 0.0
      %7015 = vmatpush2.msra.mxu0 0.0
      %7016 = vmatprep.subr.mxu0 0.0
      %7017 = vmatpush2.msra.mxu0 0.0
      %7018 = vmatprep.subr.mxu0 0.0
      %7019 = vmatpush2.msra.mxu0 0.0
      %7020 = vmatprep.subr.mxu0 0.0
      %7021 = vmatpush2.msra.mxu0 0.0
      %7022 = vmatprep.subr.mxu0 0.0
      %7023 = vmatpush2.msra.mxu0 0.0
      %7024 = vmatprep.subr.mxu0 0.0
      %7025 = vmatpush2.msra.mxu0 0.0
      %7026 = vmatprep.subr.mxu0 0.0
      %7027 = vmatpush2.msra.mxu0 0.0
      %7028 = vmatprep.subr.mxu0 0.0
      %7029 = vmatpush2.msra.mxu0 0.0
      %7030 = vmatprep.subr.mxu0 0.0
      %7031 = vmatpush2.msra.mxu0 0.0
      %7032 = vmatprep.subr.mxu0 0.0
      %7033 = vmatpush2.msra.mxu0 0.0
      %7034 = vmatprep.subr.mxu0 0.0
      %7035 = vmatpush2.msra.mxu0 0.0
      %7036 = vmatprep.subr.mxu0 0.0
      %7037 = vmatpush2.msra.mxu0 0.0
      %7038 = vmatprep.subr.mxu0 0.0
      %7039 = vmatpush2.msra.mxu0 0.0
      %7040 = vmatprep.subr.mxu0 0.0
      %7041 = vmatpush2.msra.mxu0 0.0
      %7042 = vmatprep.subr.mxu0 0.0
      %7043 = vmatpush2.msra.mxu0 0.0
      %7044 = vmatprep.subr.mxu0 0.0
      %7045 = vmatpush2.msra.mxu0 0.0
      %7046 = vmatprep.mubr.f32.mxu0 0.0
      %7047 = vmatmul.mubr.f32.gmra.mxu0 %v4929
      %v7048 = vpop.f32.mrf.mxu0
      %v7049 = vadd.f32 %v6980, %v7048
      %v7050 = vpop.f32.mrf.mxu0
      %7051 = vmatprep.mubr.f32.mxu0 0.0
      %7052 = vmatmul.mubr.f32.gmra.mxu0 %v4932
      %v7053 = vpop.f32.mrf.mxu0
      %v7054 = vadd.f32 %v6980, %v7053
      %v7055 = vpop.f32.mrf.mxu0
      %7056 = vmatprep.mubr.f32.mxu0 0.0
      %7057 = vmatmul.mubr.f32.gmra.mxu0 %v4935
      %v7058 = vpop.f32.mrf.mxu0
      %v7059 = vadd.f32 %v6980, %v7058
      %v7060 = vpop.f32.mrf.mxu0
      %7061 = vmatprep.mubr.f32.mxu0 0.0
      %7062 = vmatmul.mubr.f32.gmra.mxu0 %v4938
      %v7063 = vpop.f32.mrf.mxu0
      %v7064 = vadd.f32 %v6980, %v7063
      %v7065 = vpop.f32.mrf.mxu0
      %7066 = vdwg.mxu0
      %v7067 = vmul.f32 %v7049, 0.35355338
      %v7068 = vmul.f32 %v7054, 0.35355338
      %v7069 = vmul.f32 %v7059, 0.35355338
      %v7070 = vmul.f32 %v7064, 0.35355338
      %7071 = vmatprep.subr.mxu0 0.0
      %7072 = vmatpush1.msra.mxu0 0.0
      %7073 = vmatprep.subr.mxu0 0.0
      %7074 = vmatpush1.msra.mxu0 0.0
      %7075 = vmatprep.subr.mxu0 0.0
      %7076 = vmatpush1.msra.mxu0 0.0
      %7077 = vmatprep.subr.mxu0 0.0
      %7078 = vmatpush1.msra.mxu0 0.0
      %7079 = vmatprep.subr.mxu0 0.0
      %7080 = vmatpush1.msra.mxu0 0.0
      %7081 = vmatprep.subr.mxu0 0.0
      %7082 = vmatpush1.msra.mxu0 0.0
      %7083 = vmatprep.subr.mxu0 0.0
      %7084 = vmatpush1.msra.mxu0 0.0
      %7085 = vmatprep.subr.mxu0 0.0
      %7086 = vmatpush1.msra.mxu0 0.0
      %7087 = vmatprep.subr.mxu0 0.0
      %7088 = vmatpush1.msra.mxu0 0.0
      %7089 = vmatprep.subr.mxu0 0.0
      %7090 = vmatpush1.msra.mxu0 0.0
      %7091 = vmatprep.subr.mxu0 0.0
      %7092 = vmatpush1.msra.mxu0 0.0
      %7093 = vmatprep.subr.mxu0 0.0
      %7094 = vmatpush1.msra.mxu0 0.0
      %7095 = vmatprep.subr.mxu0 0.0
      %7096 = vmatpush1.msra.mxu0 %v6968
      %7097 = vmatprep.subr.mxu0 0.0
      %7098 = vmatpush1.msra.mxu0 %v6967
      %7099 = vmatprep.subr.mxu0 0.0
      %7100 = vmatpush1.msra.mxu0 %v6966
      %7101 = vmatprep.subr.mxu0 0.0
      %7102 = vmatpush1.msra.mxu0 %v6965
      %7103 = vmatprep.subr.mxu0 0.0
      %7104 = vmatpush2.msra.mxu0 0.0
      %7105 = vmatprep.subr.mxu0 0.0
      %7106 = vmatpush2.msra.mxu0 0.0
      %7107 = vmatprep.subr.mxu0 0.0
      %7108 = vmatpush2.msra.mxu0 0.0
      %7109 = vmatprep.subr.mxu0 0.0
      %7110 = vmatpush2.msra.mxu0 0.0
      %7111 = vmatprep.subr.mxu0 0.0
      %7112 = vmatpush2.msra.mxu0 0.0
      %7113 = vmatprep.subr.mxu0 0.0
      %7114 = vmatpush2.msra.mxu0 0.0
      %7115 = vmatprep.subr.mxu0 0.0
      %7116 = vmatpush2.msra.mxu0 0.0
      %7117 = vmatprep.subr.mxu0 0.0
      %7118 = vmatpush2.msra.mxu0 0.0
      %7119 = vmatprep.subr.mxu0 0.0
      %7120 = vmatpush2.msra.mxu0 0.0
      %7121 = vmatprep.subr.mxu0 0.0
      %7122 = vmatpush2.msra.mxu0 0.0
      %7123 = vmatprep.subr.mxu0 0.0
      %7124 = vmatpush2.msra.mxu0 0.0
      %7125 = vmatprep.subr.mxu0 0.0
      %7126 = vmatpush2.msra.mxu0 0.0
      %7127 = vmatprep.subr.mxu0 0.0
      %7128 = vmatpush2.msra.mxu0 0.0
      %7129 = vmatprep.subr.mxu0 0.0
      %7130 = vmatpush2.msra.mxu0 0.0
      %7131 = vmatprep.subr.mxu0 0.0
      %7132 = vmatpush2.msra.mxu0 0.0
      %7133 = vmatprep.subr.mxu0 0.0
      %7134 = vmatpush2.msra.mxu0 0.0
      %7135 = vmatprep.mubr.f32.mxu0 0.0
      %7136 = vmatmul.mubr.f32.gmra.mxu0 %v4929
      %v7137 = vpop.f32.mrf.mxu0
      %v7138 = vadd.f32 0.0, %v7137
      %v7139 = vpop.f32.mrf.mxu0
      %7140 = vmatprep.mubr.f32.mxu0 0.0
      %7141 = vmatmul.mubr.f32.gmra.mxu0 %v4932
      %v7142 = vpop.f32.mrf.mxu0
      %v7143 = vadd.f32 0.0, %v7142
      %v7144 = vpop.f32.mrf.mxu0
      %7145 = vmatprep.mubr.f32.mxu0 0.0
      %7146 = vmatmul.mubr.f32.gmra.mxu0 %v4935
      %v7147 = vpop.f32.mrf.mxu0
      %v7148 = vadd.f32 0.0, %v7147
      %v7149 = vpop.f32.mrf.mxu0
      %7150 = vmatprep.mubr.f32.mxu0 0.0
      %7151 = vmatmul.mubr.f32.gmra.mxu0 %v4938
      %v7152 = vpop.f32.mrf.mxu0
      %v7153 = vadd.f32 0.0, %v7152
      %v7154 = vpop.f32.mrf.mxu0
      %7155 = vdwg.mxu0
      %7156 = vmatprep.subr.mxu0 0.0
      %7157 = vmatpush1.msra.mxu0 0.0
      %7158 = vmatprep.subr.mxu0 0.0
      %7159 = vmatpush1.msra.mxu0 0.0
      %7160 = vmatprep.subr.mxu0 0.0
      %7161 = vmatpush1.msra.mxu0 0.0
      %7162 = vmatprep.subr.mxu0 0.0
      %7163 = vmatpush1.msra.mxu0 0.0
      %7164 = vmatprep.subr.mxu0 0.0
      %7165 = vmatpush1.msra.mxu0 0.0
      %7166 = vmatprep.subr.mxu0 0.0
      %7167 = vmatpush1.msra.mxu0 0.0
      %7168 = vmatprep.subr.mxu0 0.0
      %7169 = vmatpush1.msra.mxu0 0.0
      %7170 = vmatprep.subr.mxu0 0.0
      %7171 = vmatpush1.msra.mxu0 0.0
      %7172 = vmatprep.subr.mxu0 0.0
      %7173 = vmatpush1.msra.mxu0 0.0
      %7174 = vmatprep.subr.mxu0 0.0
      %7175 = vmatpush1.msra.mxu0 0.0
      %7176 = vmatprep.subr.mxu0 0.0
      %7177 = vmatpush1.msra.mxu0 0.0
      %7178 = vmatprep.subr.mxu0 0.0
      %7179 = vmatpush1.msra.mxu0 0.0
      %7180 = vmatprep.subr.mxu0 0.0
      %7181 = vmatpush1.msra.mxu0 %v6973
      %7182 = vmatprep.subr.mxu0 0.0
      %7183 = vmatpush1.msra.mxu0 %v6972
      %7184 = vmatprep.subr.mxu0 0.0
      %7185 = vmatpush1.msra.mxu0 %v6971
      %7186 = vmatprep.subr.mxu0 0.0
      %7187 = vmatpush1.msra.mxu0 %v6970
      %7188 = vmatprep.subr.mxu0 0.0
      %7189 = vmatpush2.msra.mxu0 0.0
      %7190 = vmatprep.subr.mxu0 0.0
      %7191 = vmatpush2.msra.mxu0 0.0
      %7192 = vmatprep.subr.mxu0 0.0
      %7193 = vmatpush2.msra.mxu0 0.0
      %7194 = vmatprep.subr.mxu0 0.0
      %7195 = vmatpush2.msra.mxu0 0.0
      %7196 = vmatprep.subr.mxu0 0.0
      %7197 = vmatpush2.msra.mxu0 0.0
      %7198 = vmatprep.subr.mxu0 0.0
      %7199 = vmatpush2.msra.mxu0 0.0
      %7200 = vmatprep.subr.mxu0 0.0
      %7201 = vmatpush2.msra.mxu0 0.0
      %7202 = vmatprep.subr.mxu0 0.0
      %7203 = vmatpush2.msra.mxu0 0.0
      %7204 = vmatprep.subr.mxu0 0.0
      %7205 = vmatpush2.msra.mxu0 0.0
      %7206 = vmatprep.subr.mxu0 0.0
      %7207 = vmatpush2.msra.mxu0 0.0
      %7208 = vmatprep.subr.mxu0 0.0
      %7209 = vmatpush2.msra.mxu0 0.0
      %7210 = vmatprep.subr.mxu0 0.0
      %7211 = vmatpush2.msra.mxu0 0.0
      %7212 = vmatprep.subr.mxu0 0.0
      %7213 = vmatpush2.msra.mxu0 0.0
      %7214 = vmatprep.subr.mxu0 0.0
      %7215 = vmatpush2.msra.mxu0 0.0
      %7216 = vmatprep.subr.mxu0 0.0
      %7217 = vmatpush2.msra.mxu0 0.0
      %7218 = vmatprep.subr.mxu0 0.0
      %7219 = vmatpush2.msra.mxu0 0.0
      %7220 = vmatprep.mubr.f32.mxu0 0.0
      %7221 = vmatmul.mubr.f32.gmra.mxu0 %v4929
      %v7222 = vpop.f32.mrf.mxu0
      %v7223 = vadd.f32 0.0, %v7222
      %v7224 = vpop.f32.mrf.mxu0
      %7225 = vmatprep.mubr.f32.mxu0 0.0
      %7226 = vmatmul.mubr.f32.gmra.mxu0 %v4932
      %v7227 = vpop.f32.mrf.mxu0
      %v7228 = vadd.f32 0.0, %v7227
      %v7229 = vpop.f32.mrf.mxu0
      %7230 = vmatprep.mubr.f32.mxu0 0.0
      %7231 = vmatmul.mubr.f32.gmra.mxu0 %v4935
      %v7232 = vpop.f32.mrf.mxu0
      %v7233 = vadd.f32 0.0, %v7232
      %v7234 = vpop.f32.mrf.mxu0
      %7235 = vmatprep.mubr.f32.mxu0 0.0
      %7236 = vmatmul.mubr.f32.gmra.mxu0 %v4938
      %v7237 = vpop.f32.mrf.mxu0
      %v7238 = vadd.f32 0.0, %v7237
      %v7239 = vpop.f32.mrf.mxu0
      %7240 = vdwg.mxu0
      %v7242 = vsel %vm716, %v7067, 0
      %v7245 = vsel %vm716, %v7138, 0
      %7247 = vmatprep.subr.mxu0 0.0
      %7248 = vmatpush1.xpose.msra.mxu0 0.0
      %7249 = vmatprep.subr.mxu0 0.0
      %7250 = vmatpush1.xpose.msra.mxu0 0.0
      %7251 = vmatprep.subr.mxu0 0.0
      %7252 = vmatpush1.xpose.msra.mxu0 0.0
      %7253 = vmatprep.subr.mxu0 0.0
      %7254 = vmatpush1.xpose.msra.mxu0 0.0
      %7255 = vmatprep.subr.mxu0 0.0
      %7256 = vmatpush1.xpose.msra.mxu0 0.0
      %7257 = vmatprep.subr.mxu0 0.0
      %7258 = vmatpush1.xpose.msra.mxu0 0.0
      %7259 = vmatprep.subr.mxu0 0.0
      %7260 = vmatpush1.xpose.msra.mxu0 0.0
      %7261 = vmatprep.subr.mxu0 0.0
      %7262 = vmatpush1.xpose.msra.mxu0 0.0
      %7263 = vmatprep.subr.mxu0 0.0
      %7264 = vmatpush1.xpose.msra.mxu0 0.0
      %7265 = vmatprep.subr.mxu0 0.0
      %7266 = vmatpush1.xpose.msra.mxu0 0.0
      %7267 = vmatprep.subr.mxu0 0.0
      %7268 = vmatpush1.xpose.msra.mxu0 0.0
      %7269 = vmatprep.subr.mxu0 0.0
      %7270 = vmatpush1.xpose.msra.mxu0 0.0
      %7271 = vmatprep.subr.mxu0 0.0
      %7272 = vmatpush1.xpose.msra.mxu0 0.0
      %7273 = vmatprep.subr.mxu0 0.0
      %7274 = vmatpush1.xpose.msra.mxu0 0.0
      %7275 = vmatprep.subr.mxu0 0.0
      %7276 = vmatpush1.xpose.msra.mxu0 0.0
      %7277 = vmatprep.subr.mxu0 0.0
      %7278 = vmatpush1.xpose.msra.mxu0 %v7245
      %7279 = vmatprep.subr.mxu0 0.0
      %7280 = vmatpush2.xpose.msra.mxu0 0.0
      %7281 = vmatprep.subr.mxu0 0.0
      %7282 = vmatpush2.xpose.msra.mxu0 0.0
      %7283 = vmatprep.subr.mxu0 0.0
      %7284 = vmatpush2.xpose.msra.mxu0 0.0
      %7285 = vmatprep.subr.mxu0 0.0
      %7286 = vmatpush2.xpose.msra.mxu0 0.0
      %7287 = vmatprep.subr.mxu0 0.0
      %7288 = vmatpush2.xpose.msra.mxu0 0.0
      %7289 = vmatprep.subr.mxu0 0.0
      %7290 = vmatpush2.xpose.msra.mxu0 0.0
      %7291 = vmatprep.subr.mxu0 0.0
      %7292 = vmatpush2.xpose.msra.mxu0 0.0
      %7293 = vmatprep.subr.mxu0 0.0
      %7294 = vmatpush2.xpose.msra.mxu0 0.0
      %7295 = vmatprep.subr.mxu0 0.0
      %7296 = vmatpush2.xpose.msra.mxu0 0.0
      %7297 = vmatprep.subr.mxu0 0.0
      %7298 = vmatpush2.xpose.msra.mxu0 0.0
      %7299 = vmatprep.subr.mxu0 0.0
      %7300 = vmatpush2.xpose.msra.mxu0 0.0
      %7301 = vmatprep.subr.mxu0 0.0
      %7302 = vmatpush2.xpose.msra.mxu0 0.0
      %7303 = vmatprep.subr.mxu0 0.0
      %7304 = vmatpush2.xpose.msra.mxu0 0.0
      %7305 = vmatprep.subr.mxu0 0.0
      %7306 = vmatpush2.xpose.msra.mxu0 0.0
      %7307 = vmatprep.subr.mxu0 0.0
      %7308 = vmatpush2.xpose.msra.mxu0 0.0
      %7309 = vmatprep.subr.mxu0 0.0
      %7310 = vmatpush2.xpose.msra.mxu0 0.0
      %7311 = vmatprep.mubr.f32.mxu0 0.0
      %7312 = vmatmul.mubr.f32.gmra.mxu0 %v7242
      %v7313 = vpop.f32.mrf.mxu0
      %v7314 = vadd.f32 0.0, %v7313
      %v7315 = vpop.f32.mrf.mxu0
      %7316 = vdwg.mxu0
      %v7318 = vsel %vm716, %v7068, 0
      %v7321 = vsel %vm716, %v7143, 0
      %7323 = vmatprep.subr.mxu0 0.0
      %7324 = vmatpush1.xpose.msra.mxu0 0.0
      %7325 = vmatprep.subr.mxu0 0.0
      %7326 = vmatpush1.xpose.msra.mxu0 0.0
      %7327 = vmatprep.subr.mxu0 0.0
      %7328 = vmatpush1.xpose.msra.mxu0 0.0
      %7329 = vmatprep.subr.mxu0 0.0
      %7330 = vmatpush1.xpose.msra.mxu0 0.0
      %7331 = vmatprep.subr.mxu0 0.0
      %7332 = vmatpush1.xpose.msra.mxu0 0.0
      %7333 = vmatprep.subr.mxu0 0.0
      %7334 = vmatpush1.xpose.msra.mxu0 0.0
      %7335 = vmatprep.subr.mxu0 0.0
      %7336 = vmatpush1.xpose.msra.mxu0 0.0
      %7337 = vmatprep.subr.mxu0 0.0
      %7338 = vmatpush1.xpose.msra.mxu0 0.0
      %7339 = vmatprep.subr.mxu0 0.0
      %7340 = vmatpush1.xpose.msra.mxu0 0.0
      %7341 = vmatprep.subr.mxu0 0.0
      %7342 = vmatpush1.xpose.msra.mxu0 0.0
      %7343 = vmatprep.subr.mxu0 0.0
      %7344 = vmatpush1.xpose.msra.mxu0 0.0
      %7345 = vmatprep.subr.mxu0 0.0
      %7346 = vmatpush1.xpose.msra.mxu0 0.0
      %7347 = vmatprep.subr.mxu0 0.0
      %7348 = vmatpush1.xpose.msra.mxu0 0.0
      %7349 = vmatprep.subr.mxu0 0.0
      %7350 = vmatpush1.xpose.msra.mxu0 0.0
      %7351 = vmatprep.subr.mxu0 0.0
      %7352 = vmatpush1.xpose.msra.mxu0 0.0
      %7353 = vmatprep.subr.mxu0 0.0
      %7354 = vmatpush1.xpose.msra.mxu0 %v7321
      %7355 = vmatprep.subr.mxu0 0.0
      %7356 = vmatpush2.xpose.msra.mxu0 0.0
      %7357 = vmatprep.subr.mxu0 0.0
      %7358 = vmatpush2.xpose.msra.mxu0 0.0
      %7359 = vmatprep.subr.mxu0 0.0
      %7360 = vmatpush2.xpose.msra.mxu0 0.0
      %7361 = vmatprep.subr.mxu0 0.0
      %7362 = vmatpush2.xpose.msra.mxu0 0.0
      %7363 = vmatprep.subr.mxu0 0.0
      %7364 = vmatpush2.xpose.msra.mxu0 0.0
      %7365 = vmatprep.subr.mxu0 0.0
      %7366 = vmatpush2.xpose.msra.mxu0 0.0
      %7367 = vmatprep.subr.mxu0 0.0
      %7368 = vmatpush2.xpose.msra.mxu0 0.0
      %7369 = vmatprep.subr.mxu0 0.0
      %7370 = vmatpush2.xpose.msra.mxu0 0.0
      %7371 = vmatprep.subr.mxu0 0.0
      %7372 = vmatpush2.xpose.msra.mxu0 0.0
      %7373 = vmatprep.subr.mxu0 0.0
      %7374 = vmatpush2.xpose.msra.mxu0 0.0
      %7375 = vmatprep.subr.mxu0 0.0
      %7376 = vmatpush2.xpose.msra.mxu0 0.0
      %7377 = vmatprep.subr.mxu0 0.0
      %7378 = vmatpush2.xpose.msra.mxu0 0.0
      %7379 = vmatprep.subr.mxu0 0.0
      %7380 = vmatpush2.xpose.msra.mxu0 0.0
      %7381 = vmatprep.subr.mxu0 0.0
      %7382 = vmatpush2.xpose.msra.mxu0 0.0
      %7383 = vmatprep.subr.mxu0 0.0
      %7384 = vmatpush2.xpose.msra.mxu0 0.0
      %7385 = vmatprep.subr.mxu0 0.0
      %7386 = vmatpush2.xpose.msra.mxu0 0.0
      %7387 = vmatprep.mubr.f32.mxu0 0.0
      %7388 = vmatmul.mubr.f32.gmra.mxu0 %v7318
      %v7389 = vpop.f32.mrf.mxu0
      %v7390 = vadd.f32 0.0, %v7389
      %v7391 = vpop.f32.mrf.mxu0
      %7392 = vdwg.mxu0
      %v7394 = vsel %vm716, %v7069, 0
      %v7397 = vsel %vm716, %v7148, 0
      %7399 = vmatprep.subr.mxu0 0.0
      %7400 = vmatpush1.xpose.msra.mxu0 0.0
      %7401 = vmatprep.subr.mxu0 0.0
      %7402 = vmatpush1.xpose.msra.mxu0 0.0
      %7403 = vmatprep.subr.mxu0 0.0
      %7404 = vmatpush1.xpose.msra.mxu0 0.0
      %7405 = vmatprep.subr.mxu0 0.0
      %7406 = vmatpush1.xpose.msra.mxu0 0.0
      %7407 = vmatprep.subr.mxu0 0.0
      %7408 = vmatpush1.xpose.msra.mxu0 0.0
      %7409 = vmatprep.subr.mxu0 0.0
      %7410 = vmatpush1.xpose.msra.mxu0 0.0
      %7411 = vmatprep.subr.mxu0 0.0
      %7412 = vmatpush1.xpose.msra.mxu0 0.0
      %7413 = vmatprep.subr.mxu0 0.0
      %7414 = vmatpush1.xpose.msra.mxu0 0.0
      %7415 = vmatprep.subr.mxu0 0.0
      %7416 = vmatpush1.xpose.msra.mxu0 0.0
      %7417 = vmatprep.subr.mxu0 0.0
      %7418 = vmatpush1.xpose.msra.mxu0 0.0
      %7419 = vmatprep.subr.mxu0 0.0
      %7420 = vmatpush1.xpose.msra.mxu0 0.0
      %7421 = vmatprep.subr.mxu0 0.0
      %7422 = vmatpush1.xpose.msra.mxu0 0.0
      %7423 = vmatprep.subr.mxu0 0.0
      %7424 = vmatpush1.xpose.msra.mxu0 0.0
      %7425 = vmatprep.subr.mxu0 0.0
      %7426 = vmatpush1.xpose.msra.mxu0 0.0
      %7427 = vmatprep.subr.mxu0 0.0
      %7428 = vmatpush1.xpose.msra.mxu0 0.0
      %7429 = vmatprep.subr.mxu0 0.0
      %7430 = vmatpush1.xpose.msra.mxu0 %v7397
      %7431 = vmatprep.subr.mxu0 0.0
      %7432 = vmatpush2.xpose.msra.mxu0 0.0
      %7433 = vmatprep.subr.mxu0 0.0
      %7434 = vmatpush2.xpose.msra.mxu0 0.0
      %7435 = vmatprep.subr.mxu0 0.0
      %7436 = vmatpush2.xpose.msra.mxu0 0.0
      %7437 = vmatprep.subr.mxu0 0.0
      %7438 = vmatpush2.xpose.msra.mxu0 0.0
      %7439 = vmatprep.subr.mxu0 0.0
      %7440 = vmatpush2.xpose.msra.mxu0 0.0
      %7441 = vmatprep.subr.mxu0 0.0
      %7442 = vmatpush2.xpose.msra.mxu0 0.0
      %7443 = vmatprep.subr.mxu0 0.0
      %7444 = vmatpush2.xpose.msra.mxu0 0.0
      %7445 = vmatprep.subr.mxu0 0.0
      %7446 = vmatpush2.xpose.msra.mxu0 0.0
      %7447 = vmatprep.subr.mxu0 0.0
      %7448 = vmatpush2.xpose.msra.mxu0 0.0
      %7449 = vmatprep.subr.mxu0 0.0
      %7450 = vmatpush2.xpose.msra.mxu0 0.0
      %7451 = vmatprep.subr.mxu0 0.0
      %7452 = vmatpush2.xpose.msra.mxu0 0.0
      %7453 = vmatprep.subr.mxu0 0.0
      %7454 = vmatpush2.xpose.msra.mxu0 0.0
      %7455 = vmatprep.subr.mxu0 0.0
      %7456 = vmatpush2.xpose.msra.mxu0 0.0
      %7457 = vmatprep.subr.mxu0 0.0
      %7458 = vmatpush2.xpose.msra.mxu0 0.0
      %7459 = vmatprep.subr.mxu0 0.0
      %7460 = vmatpush2.xpose.msra.mxu0 0.0
      %7461 = vmatprep.subr.mxu0 0.0
      %7462 = vmatpush2.xpose.msra.mxu0 0.0
      %7463 = vmatprep.mubr.f32.mxu0 0.0
      %7464 = vmatmul.mubr.f32.gmra.mxu0 %v7394
      %v7465 = vpop.f32.mrf.mxu0
      %v7466 = vadd.f32 0.0, %v7465
      %v7467 = vpop.f32.mrf.mxu0
      %7468 = vdwg.mxu0
      %v7470 = vsel %vm716, %v7070, 0
      %v7473 = vsel %vm716, %v7153, 0
      %7475 = vmatprep.subr.mxu0 0.0
      %7476 = vmatpush1.xpose.msra.mxu0 0.0
      %7477 = vmatprep.subr.mxu0 0.0
      %7478 = vmatpush1.xpose.msra.mxu0 0.0
      %7479 = vmatprep.subr.mxu0 0.0
      %7480 = vmatpush1.xpose.msra.mxu0 0.0
      %7481 = vmatprep.subr.mxu0 0.0
      %7482 = vmatpush1.xpose.msra.mxu0 0.0
      %7483 = vmatprep.subr.mxu0 0.0
      %7484 = vmatpush1.xpose.msra.mxu0 0.0
      %7485 = vmatprep.subr.mxu0 0.0
      %7486 = vmatpush1.xpose.msra.mxu0 0.0
      %7487 = vmatprep.subr.mxu0 0.0
      %7488 = vmatpush1.xpose.msra.mxu0 0.0
      %7489 = vmatprep.subr.mxu0 0.0
      %7490 = vmatpush1.xpose.msra.mxu0 0.0
      %7491 = vmatprep.subr.mxu0 0.0
      %7492 = vmatpush1.xpose.msra.mxu0 0.0
      %7493 = vmatprep.subr.mxu0 0.0
      %7494 = vmatpush1.xpose.msra.mxu0 0.0
      %7495 = vmatprep.subr.mxu0 0.0
      %7496 = vmatpush1.xpose.msra.mxu0 0.0
      %7497 = vmatprep.subr.mxu0 0.0
      %7498 = vmatpush1.xpose.msra.mxu0 0.0
      %7499 = vmatprep.subr.mxu0 0.0
      %7500 = vmatpush1.xpose.msra.mxu0 0.0
      %7501 = vmatprep.subr.mxu0 0.0
      %7502 = vmatpush1.xpose.msra.mxu0 0.0
      %7503 = vmatprep.subr.mxu0 0.0
      %7504 = vmatpush1.xpose.msra.mxu0 0.0
      %7505 = vmatprep.subr.mxu0 0.0
      %7506 = vmatpush1.xpose.msra.mxu0 %v7473
      %7507 = vmatprep.subr.mxu0 0.0
      %7508 = vmatpush2.xpose.msra.mxu0 0.0
      %7509 = vmatprep.subr.mxu0 0.0
      %7510 = vmatpush2.xpose.msra.mxu0 0.0
      %7511 = vmatprep.subr.mxu0 0.0
      %7512 = vmatpush2.xpose.msra.mxu0 0.0
      %7513 = vmatprep.subr.mxu0 0.0
      %7514 = vmatpush2.xpose.msra.mxu0 0.0
      %7515 = vmatprep.subr.mxu0 0.0
      %7516 = vmatpush2.xpose.msra.mxu0 0.0
      %7517 = vmatprep.subr.mxu0 0.0
      %7518 = vmatpush2.xpose.msra.mxu0 0.0
      %7519 = vmatprep.subr.mxu0 0.0
      %7520 = vmatpush2.xpose.msra.mxu0 0.0
      %7521 = vmatprep.subr.mxu0 0.0
      %7522 = vmatpush2.xpose.msra.mxu0 0.0
      %7523 = vmatprep.subr.mxu0 0.0
      %7524 = vmatpush2.xpose.msra.mxu0 0.0
      %7525 = vmatprep.subr.mxu0 0.0
      %7526 = vmatpush2.xpose.msra.mxu0 0.0
      %7527 = vmatprep.subr.mxu0 0.0
      %7528 = vmatpush2.xpose.msra.mxu0 0.0
      %7529 = vmatprep.subr.mxu0 0.0
      %7530 = vmatpush2.xpose.msra.mxu0 0.0
      %7531 = vmatprep.subr.mxu0 0.0
      %7532 = vmatpush2.xpose.msra.mxu0 0.0
      %7533 = vmatprep.subr.mxu0 0.0
      %7534 = vmatpush2.xpose.msra.mxu0 0.0
      %7535 = vmatprep.subr.mxu0 0.0
      %7536 = vmatpush2.xpose.msra.mxu0 0.0
      %7537 = vmatprep.subr.mxu0 0.0
      %7538 = vmatpush2.xpose.msra.mxu0 0.0
      %7539 = vmatprep.mubr.f32.mxu0 0.0
      %7540 = vmatmul.mubr.f32.gmra.mxu0 %v7470
      %v7541 = vpop.f32.mrf.mxu0
      %v7542 = vadd.f32 0.0, %v7541
      %v7543 = vpop.f32.mrf.mxu0
      %7544 = vdwg.mxu0
      %v7545 = vsel %vm716, %v7314, -inf
      %7546 = vmax.xlane.f32.xlu0 %v7545
      %v7547 = vpop.xlane.xlu0 %7546
      %v7548 = vsel %vm716, %v7390, -inf
      %7549 = vmax.xlane.f32.xlu0 %v7548
      %v7550 = vpop.xlane.xlu0 %7549
      %v7551 = vsel %vm716, %v7466, -inf
      %7552 = vmax.xlane.f32.xlu0 %v7551
      %v7553 = vpop.xlane.xlu0 %7552
      %v7554 = vsel %vm716, %v7542, -inf
      %7555 = vmax.xlane.f32.xlu0 %v7554
      %v7556 = vpop.xlane.xlu0 %7555
      %v7557 = vsub.f32 %v7314, %v7547
      %v7558 = vsub.f32 %v7390, %v7550
      %v7559 = vsub.f32 %v7466, %v7553
      %v7560 = vsub.f32 %v7542, %v7556
      %v7561 = vmul.f32 %v7557, 1.442695
      %v7562 = vpow.pop %v7561
      %v7563 = vmul.f32 %v7558, 1.442695
      %v7564 = vpow.pop %v7563
      %v7565 = vmul.f32 %v7559, 1.442695
      %v7566 = vpow.pop %v7565
      %v7567 = vmul.f32 %v7560, 1.442695
      %v7568 = vpow.pop %v7567
      %v7569 = vsel %vm716, %v7562, 0.0
      %7570 = vadd.xlane.f32.xlu0 %v7569
      %v7571 = vpop.xlane.xlu0 %7570
      %v7572 = vsel %vm716, %v7564, 0.0
      %7573 = vadd.xlane.f32.xlu0 %v7572
      %v7574 = vpop.xlane.xlu0 %7573
      %v7575 = vsel %vm716, %v7566, 0.0
      %7576 = vadd.xlane.f32.xlu0 %v7575
      %v7577 = vpop.xlane.xlu0 %7576
      %v7578 = vsel %vm716, %v7568, 0.0
      %7579 = vadd.xlane.f32.xlu0 %v7578
      %v7580 = vpop.xlane.xlu0 %7579
      %v7581 = vrcp.pop %v7571
      %v7582 = vrcp.pop %v7574
      %v7583 = vrcp.pop %v7577
      %v7584 = vrcp.pop %v7580
      %v7585 = vmul.f32 %v7562, %v7581
      %v7586 = vmul.f32 %v7564, %v7582
      %v7587 = vmul.f32 %v7566, %v7583
      %v7588 = vmul.f32 %v7568, %v7584
      %v7590 = vsel %vm716, %v7585, 0
      %7592 = vmatprep.subr.mxu0 0.0
      %7593 = vmatpush1.msra.mxu0 0.0
      %7594 = vmatprep.subr.mxu0 0.0
      %7595 = vmatpush1.msra.mxu0 0.0
      %7596 = vmatprep.subr.mxu0 0.0
      %7597 = vmatpush1.msra.mxu0 0.0
      %7598 = vmatprep.subr.mxu0 0.0
      %7599 = vmatpush1.msra.mxu0 0.0
      %7600 = vmatprep.subr.mxu0 0.0
      %7601 = vmatpush1.msra.mxu0 0.0
      %7602 = vmatprep.subr.mxu0 0.0
      %7603 = vmatpush1.msra.mxu0 0.0
      %7604 = vmatprep.subr.mxu0 0.0
      %7605 = vmatpush1.msra.mxu0 0.0
      %7606 = vmatprep.subr.mxu0 0.0
      %7607 = vmatpush1.msra.mxu0 0.0
      %7608 = vmatprep.subr.mxu0 0.0
      %7609 = vmatpush1.msra.mxu0 0.0
      %7610 = vmatprep.subr.mxu0 0.0
      %7611 = vmatpush1.msra.mxu0 0.0
      %7612 = vmatprep.subr.mxu0 0.0
      %7613 = vmatpush1.msra.mxu0 0.0
      %7614 = vmatprep.subr.mxu0 0.0
      %7615 = vmatpush1.msra.mxu0 0.0
      %7616 = vmatprep.subr.mxu0 0.0
      %7617 = vmatpush1.msra.mxu0 0.0
      %7618 = vmatprep.subr.mxu0 0.0
      %7619 = vmatpush1.msra.mxu0 0.0
      %7620 = vmatprep.subr.mxu0 0.0
      %7621 = vmatpush1.msra.mxu0 0.0
      %7622 = vmatprep.subr.mxu0 0.0
      %7623 = vmatpush1.msra.mxu0 %v7223
      %7624 = vmatprep.subr.mxu0 0.0
      %7625 = vmatpush2.msra.mxu0 0.0
      %7626 = vmatprep.subr.mxu0 0.0
      %7627 = vmatpush2.msra.mxu0 0.0
      %7628 = vmatprep.subr.mxu0 0.0
      %7629 = vmatpush2.msra.mxu0 0.0
      %7630 = vmatprep.subr.mxu0 0.0
      %7631 = vmatpush2.msra.mxu0 0.0
      %7632 = vmatprep.subr.mxu0 0.0
      %7633 = vmatpush2.msra.mxu0 0.0
      %7634 = vmatprep.subr.mxu0 0.0
      %7635 = vmatpush2.msra.mxu0 0.0
      %7636 = vmatprep.subr.mxu0 0.0
      %7637 = vmatpush2.msra.mxu0 0.0
      %7638 = vmatprep.subr.mxu0 0.0
      %7639 = vmatpush2.msra.mxu0 0.0
      %7640 = vmatprep.subr.mxu0 0.0
      %7641 = vmatpush2.msra.mxu0 0.0
      %7642 = vmatprep.subr.mxu0 0.0
      %7643 = vmatpush2.msra.mxu0 0.0
      %7644 = vmatprep.subr.mxu0 0.0
      %7645 = vmatpush2.msra.mxu0 0.0
      %7646 = vmatprep.subr.mxu0 0.0
      %7647 = vmatpush2.msra.mxu0 0.0
      %7648 = vmatprep.subr.mxu0 0.0
      %7649 = vmatpush2.msra.mxu0 0.0
      %7650 = vmatprep.subr.mxu0 0.0
      %7651 = vmatpush2.msra.mxu0 0.0
      %7652 = vmatprep.subr.mxu0 0.0
      %7653 = vmatpush2.msra.mxu0 0.0
      %7654 = vmatprep.subr.mxu0 0.0
      %7655 = vmatpush2.msra.mxu0 0.0
      %7656 = vmatprep.mubr.f32.mxu0 0.0
      %7657 = vmatmul.mubr.f32.gmra.mxu0 %v7590
      %v7658 = vpop.f32.mrf.mxu0
      %v7659 = vadd.f32 0.0, %v7658
      %v7660 = vpop.f32.mrf.mxu0
      %7661 = vdwg.mxu0
      %v7663 = vsel %vm716, %v7586, 0
      %7665 = vmatprep.subr.mxu0 0.0
      %7666 = vmatpush1.msra.mxu0 0.0
      %7667 = vmatprep.subr.mxu0 0.0
      %7668 = vmatpush1.msra.mxu0 0.0
      %7669 = vmatprep.subr.mxu0 0.0
      %7670 = vmatpush1.msra.mxu0 0.0
      %7671 = vmatprep.subr.mxu0 0.0
      %7672 = vmatpush1.msra.mxu0 0.0
      %7673 = vmatprep.subr.mxu0 0.0
      %7674 = vmatpush1.msra.mxu0 0.0
      %7675 = vmatprep.subr.mxu0 0.0
      %7676 = vmatpush1.msra.mxu0 0.0
      %7677 = vmatprep.subr.mxu0 0.0
      %7678 = vmatpush1.msra.mxu0 0.0
      %7679 = vmatprep.subr.mxu0 0.0
      %7680 = vmatpush1.msra.mxu0 0.0
      %7681 = vmatprep.subr.mxu0 0.0
      %7682 = vmatpush1.msra.mxu0 0.0
      %7683 = vmatprep.subr.mxu0 0.0
      %7684 = vmatpush1.msra.mxu0 0.0
      %7685 = vmatprep.subr.mxu0 0.0
      %7686 = vmatpush1.msra.mxu0 0.0
      %7687 = vmatprep.subr.mxu0 0.0
      %7688 = vmatpush1.msra.mxu0 0.0
      %7689 = vmatprep.subr.mxu0 0.0
      %7690 = vmatpush1.msra.mxu0 0.0
      %7691 = vmatprep.subr.mxu0 0.0
      %7692 = vmatpush1.msra.mxu0 0.0
      %7693 = vmatprep.subr.mxu0 0.0
      %7694 = vmatpush1.msra.mxu0 0.0
      %7695 = vmatprep.subr.mxu0 0.0
      %7696 = vmatpush1.msra.mxu0 %v7228
      %7697 = vmatprep.subr.mxu0 0.0
      %7698 = vmatpush2.msra.mxu0 0.0
      %7699 = vmatprep.subr.mxu0 0.0
      %7700 = vmatpush2.msra.mxu0 0.0
      %7701 = vmatprep.subr.mxu0 0.0
      %7702 = vmatpush2.msra.mxu0 0.0
      %7703 = vmatprep.subr.mxu0 0.0
      %7704 = vmatpush2.msra.mxu0 0.0
      %7705 = vmatprep.subr.mxu0 0.0
      %7706 = vmatpush2.msra.mxu0 0.0
      %7707 = vmatprep.subr.mxu0 0.0
      %7708 = vmatpush2.msra.mxu0 0.0
      %7709 = vmatprep.subr.mxu0 0.0
      %7710 = vmatpush2.msra.mxu0 0.0
      %7711 = vmatprep.subr.mxu0 0.0
      %7712 = vmatpush2.msra.mxu0 0.0
      %7713 = vmatprep.subr.mxu0 0.0
      %7714 = vmatpush2.msra.mxu0 0.0
      %7715 = vmatprep.subr.mxu0 0.0
      %7716 = vmatpush2.msra.mxu0 0.0
      %7717 = vmatprep.subr.mxu0 0.0
      %7718 = vmatpush2.msra.mxu0 0.0
      %7719 = vmatprep.subr.mxu0 0.0
      %7720 = vmatpush2.msra.mxu0 0.0
      %7721 = vmatprep.subr.mxu0 0.0
      %7722 = vmatpush2.msra.mxu0 0.0
      %7723 = vmatprep.subr.mxu0 0.0
      %7724 = vmatpush2.msra.mxu0 0.0
      %7725 = vmatprep.subr.mxu0 0.0
      %7726 = vmatpush2.msra.mxu0 0.0
      %7727 = vmatprep.subr.mxu0 0.0
      %7728 = vmatpush2.msra.mxu0 0.0
      %7729 = vmatprep.mubr.f32.mxu0 0.0
      %7730 = vmatmul.mubr.f32.gmra.mxu0 %v7663
      %v7731 = vpop.f32.mrf.mxu0
      %v7732 = vadd.f32 0.0, %v7731
      %v7733 = vpop.f32.mrf.mxu0
      %7734 = vdwg.mxu0
      %v7736 = vsel %vm716, %v7587, 0
      %7738 = vmatprep.subr.mxu0 0.0
      %7739 = vmatpush1.msra.mxu0 0.0
      %7740 = vmatprep.subr.mxu0 0.0
      %7741 = vmatpush1.msra.mxu0 0.0
      %7742 = vmatprep.subr.mxu0 0.0
      %7743 = vmatpush1.msra.mxu0 0.0
      %7744 = vmatprep.subr.mxu0 0.0
      %7745 = vmatpush1.msra.mxu0 0.0
      %7746 = vmatprep.subr.mxu0 0.0
      %7747 = vmatpush1.msra.mxu0 0.0
      %7748 = vmatprep.subr.mxu0 0.0
      %7749 = vmatpush1.msra.mxu0 0.0
      %7750 = vmatprep.subr.mxu0 0.0
      %7751 = vmatpush1.msra.mxu0 0.0
      %7752 = vmatprep.subr.mxu0 0.0
      %7753 = vmatpush1.msra.mxu0 0.0
      %7754 = vmatprep.subr.mxu0 0.0
      %7755 = vmatpush1.msra.mxu0 0.0
      %7756 = vmatprep.subr.mxu0 0.0
      %7757 = vmatpush1.msra.mxu0 0.0
      %7758 = vmatprep.subr.mxu0 0.0
      %7759 = vmatpush1.msra.mxu0 0.0
      %7760 = vmatprep.subr.mxu0 0.0
      %7761 = vmatpush1.msra.mxu0 0.0
      %7762 = vmatprep.subr.mxu0 0.0
      %7763 = vmatpush1.msra.mxu0 0.0
      %7764 = vmatprep.subr.mxu0 0.0
      %7765 = vmatpush1.msra.mxu0 0.0
      %7766 = vmatprep.subr.mxu0 0.0
      %7767 = vmatpush1.msra.mxu0 0.0
      %7768 = vmatprep.subr.mxu0 0.0
      %7769 = vmatpush1.msra.mxu0 %v7233
      %7770 = vmatprep.subr.mxu0 0.0
      %7771 = vmatpush2.msra.mxu0 0.0
      %7772 = vmatprep.subr.mxu0 0.0
      %7773 = vmatpush2.msra.mxu0 0.0
      %7774 = vmatprep.subr.mxu0 0.0
      %7775 = vmatpush2.msra.mxu0 0.0
      %7776 = vmatprep.subr.mxu0 0.0
      %7777 = vmatpush2.msra.mxu0 0.0
      %7778 = vmatprep.subr.mxu0 0.0
      %7779 = vmatpush2.msra.mxu0 0.0
      %7780 = vmatprep.subr.mxu0 0.0
      %7781 = vmatpush2.msra.mxu0 0.0
      %7782 = vmatprep.subr.mxu0 0.0
      %7783 = vmatpush2.msra.mxu0 0.0
      %7784 = vmatprep.subr.mxu0 0.0
      %7785 = vmatpush2.msra.mxu0 0.0
      %7786 = vmatprep.subr.mxu0 0.0
      %7787 = vmatpush2.msra.mxu0 0.0
      %7788 = vmatprep.subr.mxu0 0.0
      %7789 = vmatpush2.msra.mxu0 0.0
      %7790 = vmatprep.subr.mxu0 0.0
      %7791 = vmatpush2.msra.mxu0 0.0
      %7792 = vmatprep.subr.mxu0 0.0
      %7793 = vmatpush2.msra.mxu0 0.0
      %7794 = vmatprep.subr.mxu0 0.0
      %7795 = vmatpush2.msra.mxu0 0.0
      %7796 = vmatprep.subr.mxu0 0.0
      %7797 = vmatpush2.msra.mxu0 0.0
      %7798 = vmatprep.subr.mxu0 0.0
      %7799 = vmatpush2.msra.mxu0 0.0
      %7800 = vmatprep.subr.mxu0 0.0
      %7801 = vmatpush2.msra.mxu0 0.0
      %7802 = vmatprep.mubr.f32.mxu0 0.0
      %7803 = vmatmul.mubr.f32.gmra.mxu0 %v7736
      %v7804 = vpop.f32.mrf.mxu0
      %v7805 = vadd.f32 0.0, %v7804
      %v7806 = vpop.f32.mrf.mxu0
      %7807 = vdwg.mxu0
      %v7809 = vsel %vm716, %v7588, 0
      %7811 = vmatprep.subr.mxu0 0.0
      %7812 = vmatpush1.msra.mxu0 0.0
      %7813 = vmatprep.subr.mxu0 0.0
      %7814 = vmatpush1.msra.mxu0 0.0
      %7815 = vmatprep.subr.mxu0 0.0
      %7816 = vmatpush1.msra.mxu0 0.0
      %7817 = vmatprep.subr.mxu0 0.0
      %7818 = vmatpush1.msra.mxu0 0.0
      %7819 = vmatprep.subr.mxu0 0.0
      %7820 = vmatpush1.msra.mxu0 0.0
      %7821 = vmatprep.subr.mxu0 0.0
      %7822 = vmatpush1.msra.mxu0 0.0
      %7823 = vmatprep.subr.mxu0 0.0
      %7824 = vmatpush1.msra.mxu0 0.0
      %7825 = vmatprep.subr.mxu0 0.0
      %7826 = vmatpush1.msra.mxu0 0.0
      %7827 = vmatprep.subr.mxu0 0.0
      %7828 = vmatpush1.msra.mxu0 0.0
      %7829 = vmatprep.subr.mxu0 0.0
      %7830 = vmatpush1.msra.mxu0 0.0
      %7831 = vmatprep.subr.mxu0 0.0
      %7832 = vmatpush1.msra.mxu0 0.0
      %7833 = vmatprep.subr.mxu0 0.0
      %7834 = vmatpush1.msra.mxu0 0.0
      %7835 = vmatprep.subr.mxu0 0.0
      %7836 = vmatpush1.msra.mxu0 0.0
      %7837 = vmatprep.subr.mxu0 0.0
      %7838 = vmatpush1.msra.mxu0 0.0
      %7839 = vmatprep.subr.mxu0 0.0
      %7840 = vmatpush1.msra.mxu0 0.0
      %7841 = vmatprep.subr.mxu0 0.0
      %7842 = vmatpush1.msra.mxu0 %v7238
      %7843 = vmatprep.subr.mxu0 0.0
      %7844 = vmatpush2.msra.mxu0 0.0
      %7845 = vmatprep.subr.mxu0 0.0
      %7846 = vmatpush2.msra.mxu0 0.0
      %7847 = vmatprep.subr.mxu0 0.0
      %7848 = vmatpush2.msra.mxu0 0.0
      %7849 = vmatprep.subr.mxu0 0.0
      %7850 = vmatpush2.msra.mxu0 0.0
      %7851 = vmatprep.subr.mxu0 0.0
      %7852 = vmatpush2.msra.mxu0 0.0
      %7853 = vmatprep.subr.mxu0 0.0
      %7854 = vmatpush2.msra.mxu0 0.0
      %7855 = vmatprep.subr.mxu0 0.0
      %7856 = vmatpush2.msra.mxu0 0.0
      %7857 = vmatprep.subr.mxu0 0.0
      %7858 = vmatpush2.msra.mxu0 0.0
      %7859 = vmatprep.subr.mxu0 0.0
      %7860 = vmatpush2.msra.mxu0 0.0
      %7861 = vmatprep.subr.mxu0 0.0
      %7862 = vmatpush2.msra.mxu0 0.0
      %7863 = vmatprep.subr.mxu0 0.0
      %7864 = vmatpush2.msra.mxu0 0.0
      %7865 = vmatprep.subr.mxu0 0.0
      %7866 = vmatpush2.msra.mxu0 0.0
      %7867 = vmatprep.subr.mxu0 0.0
      %7868 = vmatpush2.msra.mxu0 0.0
      %7869 = vmatprep.subr.mxu0 0.0
      %7870 = vmatpush2.msra.mxu0 0.0
      %7871 = vmatprep.subr.mxu0 0.0
      %7872 = vmatpush2.msra.mxu0 0.0
      %7873 = vmatprep.subr.mxu0 0.0
      %7874 = vmatpush2.msra.mxu0 0.0
      %7875 = vmatprep.mubr.f32.mxu0 0.0
      %7876 = vmatmul.mubr.f32.gmra.mxu0 %v7809
      %v7877 = vpop.f32.mrf.mxu0
      %v7878 = vadd.f32 0.0, %v7877
      %v7879 = vpop.f32.mrf.mxu0
      %7880 = vdwg.mxu0
      %s7881 = scalar_lea.vmem %s4, 48
      %v7882 = vld [vmem:[%s7881] sm:$0xff]
      %v7884 = vsel %vm716, %v7659, 0
      %v7887 = vsel %vm716, %v7732, 0
      %v7890 = vsel %vm716, %v7805, 0
      %v7893 = vsel %vm716, %v7878, 0
      %7895 = vmatprep.subr.mxu0 0.0
      %7896 = vmatpush1.msra.mxu0 0.0
      %7897 = vmatprep.subr.mxu0 0.0
      %7898 = vmatpush1.msra.mxu0 0.0
      %7899 = vmatprep.subr.mxu0 0.0
      %7900 = vmatpush1.msra.mxu0 0.0
      %7901 = vmatprep.subr.mxu0 0.0
      %7902 = vmatpush1.msra.mxu0 0.0
      %7903 = vmatprep.subr.mxu0 0.0
      %7904 = vmatpush1.msra.mxu0 0.0
      %7905 = vmatprep.subr.mxu0 0.0
      %7906 = vmatpush1.msra.mxu0 0.0
      %7907 = vmatprep.subr.mxu0 0.0
      %7908 = vmatpush1.msra.mxu0 0.0
      %7909 = vmatprep.subr.mxu0 0.0
      %7910 = vmatpush1.msra.mxu0 0.0
      %7911 = vmatprep.subr.mxu0 0.0
      %7912 = vmatpush1.msra.mxu0 0.0
      %7913 = vmatprep.subr.mxu0 0.0
      %7914 = vmatpush1.msra.mxu0 0.0
      %7915 = vmatprep.subr.mxu0 0.0
      %7916 = vmatpush1.msra.mxu0 0.0
      %7917 = vmatprep.subr.mxu0 0.0
      %7918 = vmatpush1.msra.mxu0 0.0
      %7919 = vmatprep.subr.mxu0 0.0
      %7920 = vmatpush1.msra.mxu0 0.0
      %7921 = vmatprep.subr.mxu0 0.0
      %7922 = vmatpush1.msra.mxu0 0.0
      %7923 = vmatprep.subr.mxu0 0.0
      %7924 = vmatpush1.msra.mxu0 0.0
      %7925 = vmatprep.subr.mxu0 0.0
      %7926 = vmatpush1.msra.mxu0 %v7882
      %7927 = vmatprep.subr.mxu0 0.0
      %7928 = vmatpush2.msra.mxu0 0.0
      %7929 = vmatprep.subr.mxu0 0.0
      %7930 = vmatpush2.msra.mxu0 0.0
      %7931 = vmatprep.subr.mxu0 0.0
      %7932 = vmatpush2.msra.mxu0 0.0
      %7933 = vmatprep.subr.mxu0 0.0
      %7934 = vmatpush2.msra.mxu0 0.0
      %7935 = vmatprep.subr.mxu0 0.0
      %7936 = vmatpush2.msra.mxu0 0.0
      %7937 = vmatprep.subr.mxu0 0.0
      %7938 = vmatpush2.msra.mxu0 0.0
      %7939 = vmatprep.subr.mxu0 0.0
      %7940 = vmatpush2.msra.mxu0 0.0
      %7941 = vmatprep.subr.mxu0 0.0
      %7942 = vmatpush2.msra.mxu0 0.0
      %7943 = vmatprep.subr.mxu0 0.0
      %7944 = vmatpush2.msra.mxu0 0.0
      %7945 = vmatprep.subr.mxu0 0.0
      %7946 = vmatpush2.msra.mxu0 0.0
      %7947 = vmatprep.subr.mxu0 0.0
      %7948 = vmatpush2.msra.mxu0 0.0
      %7949 = vmatprep.subr.mxu0 0.0
      %7950 = vmatpush2.msra.mxu0 0.0
      %7951 = vmatprep.subr.mxu0 0.0
      %7952 = vmatpush2.msra.mxu0 0.0
      %7953 = vmatprep.subr.mxu0 0.0
      %7954 = vmatpush2.msra.mxu0 0.0
      %7955 = vmatprep.subr.mxu0 0.0
      %7956 = vmatpush2.msra.mxu0 0.0
      %7957 = vmatprep.subr.mxu0 0.0
      %7958 = vmatpush2.msra.mxu0 0.0
      %7959 = vmatprep.mubr.f32.mxu0 0.0
      %7960 = vmatmul.mubr.f32.gmra.mxu0 %v7884
      %v7961 = vpop.f32.mrf.mxu0
      %v7962 = vadd.f32 0.0, %v7961
      %v7963 = vpop.f32.mrf.mxu0
      %7964 = vmatprep.mubr.f32.mxu0 0.0
      %7965 = vmatmul.mubr.f32.gmra.mxu0 %v7887
      %v7966 = vpop.f32.mrf.mxu0
      %v7967 = vadd.f32 0.0, %v7966
      %v7968 = vpop.f32.mrf.mxu0
      %7969 = vmatprep.mubr.f32.mxu0 0.0
      %7970 = vmatmul.mubr.f32.gmra.mxu0 %v7890
      %v7971 = vpop.f32.mrf.mxu0
      %v7972 = vadd.f32 0.0, %v7971
      %v7973 = vpop.f32.mrf.mxu0
      %7974 = vmatprep.mubr.f32.mxu0 0.0
      %7975 = vmatmul.mubr.f32.gmra.mxu0 %v7893
      %v7976 = vpop.f32.mrf.mxu0
      %v7977 = vadd.f32 0.0, %v7976
      %v7978 = vpop.f32.mrf.mxu0
      %7979 = vdwg.mxu0
      %v7980 = vadd.f32 %v6941, %v7962
      %v7981 = vadd.f32 %v6946, %v7967
      %v7982 = vadd.f32 %v6951, %v7972
      %v7983 = vadd.f32 %v6956, %v7977
      %s7984 = scalar_lea.vmem %s2, 480
      %v7985 = vld [vmem:[%s7984] sm:$0xff]
      %v7986 = vld [vmem:[%s7984 + $0x8] sm:$0xff]
      %v7987 = vld [vmem:[%s7984 + $0x10] sm:$0xff]
      %v7988 = vld [vmem:[%s7984 + $0x18] sm:$0xff]
      %s7989 = scalar_lea.vmem %s2, 608
      %v7990 = vld [vmem:[%s7989] sm:$0xff]
      %v7991 = vld [vmem:[%s7989 + $0x8] sm:$0xff]
      %v7992 = vld [vmem:[%s7989 + $0x10] sm:$0xff]
      %v7993 = vld [vmem:[%s7989 + $0x18] sm:$0xff]
      %s7994 = scalar_lea.vmem %s2, 736
      %v7995 = vld [vmem:[%s7994] sm:$0xff]
      %v7996 = vld [vmem:[%s7994 + $0x8] sm:$0xff]
      %v7997 = vld [vmem:[%s7994 + $0x10] sm:$0xff]
      %v7998 = vld [vmem:[%s7994 + $0x18] sm:$0xff]
      %s7999 = scalar_lea.vmem %s3, 7
      %v8000 = vld [vmem:[%s7999] sm:$0x1]
      %v8002 = vlaneseq
      %v8003 = vshrl.u32 %v8002, 7
      %v8004 = vsub.s32 0, %v8003
      %v8005 = vrot.slane %v8000, %v8004
      %8007 = vmatprep.subr.mxu0 0.0
      %8008 = vmatpush1.msra.mxu0 0.0
      %8009 = vmatprep.subr.mxu0 0.0
      %8010 = vmatpush1.msra.mxu0 0.0
      %8011 = vmatprep.subr.mxu0 0.0
      %8012 = vmatpush1.msra.mxu0 0.0
      %8013 = vmatprep.subr.mxu0 0.0
      %8014 = vmatpush1.msra.mxu0 0.0
      %8015 = vmatprep.subr.mxu0 0.0
      %8016 = vmatpush1.msra.mxu0 0.0
      %8017 = vmatprep.subr.mxu0 0.0
      %8018 = vmatpush1.msra.mxu0 0.0
      %8019 = vmatprep.subr.mxu0 0.0
      %8020 = vmatpush1.msra.mxu0 0.0
      %8021 = vmatprep.subr.mxu0 0.0
      %8022 = vmatpush1.msra.mxu0 0.0
      %8023 = vmatprep.subr.mxu0 0.0
      %8024 = vmatpush1.msra.mxu0 0.0
      %8025 = vmatprep.subr.mxu0 0.0
      %8026 = vmatpush1.msra.mxu0 0.0
      %8027 = vmatprep.subr.mxu0 0.0
      %8028 = vmatpush1.msra.mxu0 0.0
      %8029 = vmatprep.subr.mxu0 0.0
      %8030 = vmatpush1.msra.mxu0 0.0
      %8031 = vmatprep.subr.mxu0 0.0
      %8032 = vmatpush1.msra.mxu0 %v7988
      %8033 = vmatprep.subr.mxu0 0.0
      %8034 = vmatpush1.msra.mxu0 %v7987
      %8035 = vmatprep.subr.mxu0 0.0
      %8036 = vmatpush1.msra.mxu0 %v7986
      %8037 = vmatprep.subr.mxu0 0.0
      %8038 = vmatpush1.msra.mxu0 %v7985
      %8039 = vmatprep.subr.mxu0 0.0
      %8040 = vmatpush2.msra.mxu0 0.0
      %8041 = vmatprep.subr.mxu0 0.0
      %8042 = vmatpush2.msra.mxu0 0.0
      %8043 = vmatprep.subr.mxu0 0.0
      %8044 = vmatpush2.msra.mxu0 0.0
      %8045 = vmatprep.subr.mxu0 0.0
      %8046 = vmatpush2.msra.mxu0 0.0
      %8047 = vmatprep.subr.mxu0 0.0
      %8048 = vmatpush2.msra.mxu0 0.0
      %8049 = vmatprep.subr.mxu0 0.0
      %8050 = vmatpush2.msra.mxu0 0.0
      %8051 = vmatprep.subr.mxu0 0.0
      %8052 = vmatpush2.msra.mxu0 0.0
      %8053 = vmatprep.subr.mxu0 0.0
      %8054 = vmatpush2.msra.mxu0 0.0
      %8055 = vmatprep.subr.mxu0 0.0
      %8056 = vmatpush2.msra.mxu0 0.0
      %8057 = vmatprep.subr.mxu0 0.0
      %8058 = vmatpush2.msra.mxu0 0.0
      %8059 = vmatprep.subr.mxu0 0.0
      %8060 = vmatpush2.msra.mxu0 0.0
      %8061 = vmatprep.subr.mxu0 0.0
      %8062 = vmatpush2.msra.mxu0 0.0
      %8063 = vmatprep.subr.mxu0 0.0
      %8064 = vmatpush2.msra.mxu0 0.0
      %8065 = vmatprep.subr.mxu0 0.0
      %8066 = vmatpush2.msra.mxu0 0.0
      %8067 = vmatprep.subr.mxu0 0.0
      %8068 = vmatpush2.msra.mxu0 0.0
      %8069 = vmatprep.subr.mxu0 0.0
      %8070 = vmatpush2.msra.mxu0 0.0
      %8071 = vmatprep.mubr.f32.mxu0 0.0
      %8072 = vmatmul.mubr.f32.gmra.mxu0 %v4929
      %v8073 = vpop.f32.mrf.mxu0
      %v8074 = vadd.f32 %v8005, %v8073
      %v8075 = vpop.f32.mrf.mxu0
      %8076 = vmatprep.mubr.f32.mxu0 0.0
      %8077 = vmatmul.mubr.f32.gmra.mxu0 %v4932
      %v8078 = vpop.f32.mrf.mxu0
      %v8079 = vadd.f32 %v8005, %v8078
      %v8080 = vpop.f32.mrf.mxu0
      %8081 = vmatprep.mubr.f32.mxu0 0.0
      %8082 = vmatmul.mubr.f32.gmra.mxu0 %v4935
      %v8083 = vpop.f32.mrf.mxu0
      %v8084 = vadd.f32 %v8005, %v8083
      %v8085 = vpop.f32.mrf.mxu0
      %8086 = vmatprep.mubr.f32.mxu0 0.0
      %8087 = vmatmul.mubr.f32.gmra.mxu0 %v4938
      %v8088 = vpop.f32.mrf.mxu0
      %v8089 = vadd.f32 %v8005, %v8088
      %v8090 = vpop.f32.mrf.mxu0
      %8091 = vdwg.mxu0
      %v8092 = vmul.f32 %v8074, 0.35355338
      %v8093 = vmul.f32 %v8079, 0.35355338
      %v8094 = vmul.f32 %v8084, 0.35355338
      %v8095 = vmul.f32 %v8089, 0.35355338
      %8096 = vmatprep.subr.mxu0 0.0
      %8097 = vmatpush1.msra.mxu0 0.0
      %8098 = vmatprep.subr.mxu0 0.0
      %8099 = vmatpush1.msra.mxu0 0.0
      %8100 = vmatprep.subr.mxu0 0.0
      %8101 = vmatpush1.msra.mxu0 0.0
      %8102 = vmatprep.subr.mxu0 0.0
      %8103 = vmatpush1.msra.mxu0 0.0
      %8104 = vmatprep.subr.mxu0 0.0
      %8105 = vmatpush1.msra.mxu0 0.0
      %8106 = vmatprep.subr.mxu0 0.0
      %8107 = vmatpush1.msra.mxu0 0.0
      %8108 = vmatprep.subr.mxu0 0.0
      %8109 = vmatpush1.msra.mxu0 0.0
      %8110 = vmatprep.subr.mxu0 0.0
      %8111 = vmatpush1.msra.mxu0 0.0
      %8112 = vmatprep.subr.mxu0 0.0
      %8113 = vmatpush1.msra.mxu0 0.0
      %8114 = vmatprep.subr.mxu0 0.0
      %8115 = vmatpush1.msra.mxu0 0.0
      %8116 = vmatprep.subr.mxu0 0.0
      %8117 = vmatpush1.msra.mxu0 0.0
      %8118 = vmatprep.subr.mxu0 0.0
      %8119 = vmatpush1.msra.mxu0 0.0
      %8120 = vmatprep.subr.mxu0 0.0
      %8121 = vmatpush1.msra.mxu0 %v7993
      %8122 = vmatprep.subr.mxu0 0.0
      %8123 = vmatpush1.msra.mxu0 %v7992
      %8124 = vmatprep.subr.mxu0 0.0
      %8125 = vmatpush1.msra.mxu0 %v7991
      %8126 = vmatprep.subr.mxu0 0.0
      %8127 = vmatpush1.msra.mxu0 %v7990
      %8128 = vmatprep.subr.mxu0 0.0
      %8129 = vmatpush2.msra.mxu0 0.0
      %8130 = vmatprep.subr.mxu0 0.0
      %8131 = vmatpush2.msra.mxu0 0.0
      %8132 = vmatprep.subr.mxu0 0.0
      %8133 = vmatpush2.msra.mxu0 0.0
      %8134 = vmatprep.subr.mxu0 0.0
      %8135 = vmatpush2.msra.mxu0 0.0
      %8136 = vmatprep.subr.mxu0 0.0
      %8137 = vmatpush2.msra.mxu0 0.0
      %8138 = vmatprep.subr.mxu0 0.0
      %8139 = vmatpush2.msra.mxu0 0.0
      %8140 = vmatprep.subr.mxu0 0.0
      %8141 = vmatpush2.msra.mxu0 0.0
      %8142 = vmatprep.subr.mxu0 0.0
      %8143 = vmatpush2.msra.mxu0 0.0
      %8144 = vmatprep.subr.mxu0 0.0
      %8145 = vmatpush2.msra.mxu0 0.0
      %8146 = vmatprep.subr.mxu0 0.0
      %8147 = vmatpush2.msra.mxu0 0.0
      %8148 = vmatprep.subr.mxu0 0.0
      %8149 = vmatpush2.msra.mxu0 0.0
      %8150 = vmatprep.subr.mxu0 0.0
      %8151 = vmatpush2.msra.mxu0 0.0
      %8152 = vmatprep.subr.mxu0 0.0
      %8153 = vmatpush2.msra.mxu0 0.0
      %8154 = vmatprep.subr.mxu0 0.0
      %8155 = vmatpush2.msra.mxu0 0.0
      %8156 = vmatprep.subr.mxu0 0.0
      %8157 = vmatpush2.msra.mxu0 0.0
      %8158 = vmatprep.subr.mxu0 0.0
      %8159 = vmatpush2.msra.mxu0 0.0
      %8160 = vmatprep.mubr.f32.mxu0 0.0
      %8161 = vmatmul.mubr.f32.gmra.mxu0 %v4929
      %v8162 = vpop.f32.mrf.mxu0
      %v8163 = vadd.f32 0.0, %v8162
      %v8164 = vpop.f32.mrf.mxu0
      %8165 = vmatprep.mubr.f32.mxu0 0.0
      %8166 = vmatmul.mubr.f32.gmra.mxu0 %v4932
      %v8167 = vpop.f32.mrf.mxu0
      %v8168 = vadd.f32 0.0, %v8167
      %v8169 = vpop.f32.mrf.mxu0
      %8170 = vmatprep.mubr.f32.mxu0 0.0
      %8171 = vmatmul.mubr.f32.gmra.mxu0 %v4935
      %v8172 = vpop.f32.mrf.mxu0
      %v8173 = vadd.f32 0.0, %v8172
      %v8174 = vpop.f32.mrf.mxu0
      %8175 = vmatprep.mubr.f32.mxu0 0.0
      %8176 = vmatmul.mubr.f32.gmra.mxu0 %v4938
      %v8177 = vpop.f32.mrf.mxu0
      %v8178 = vadd.f32 0.0, %v8177
      %v8179 = vpop.f32.mrf.mxu0
      %8180 = vdwg.mxu0
      %8181 = vmatprep.subr.mxu0 0.0
      %8182 = vmatpush1.msra.mxu0 0.0
      %8183 = vmatprep.subr.mxu0 0.0
      %8184 = vmatpush1.msra.mxu0 0.0
      %8185 = vmatprep.subr.mxu0 0.0
      %8186 = vmatpush1.msra.mxu0 0.0
      %8187 = vmatprep.subr.mxu0 0.0
      %8188 = vmatpush1.msra.mxu0 0.0
      %8189 = vmatprep.subr.mxu0 0.0
      %8190 = vmatpush1.msra.mxu0 0.0
      %8191 = vmatprep.subr.mxu0 0.0
      %8192 = vmatpush1.msra.mxu0 0.0
      %8193 = vmatprep.subr.mxu0 0.0
      %8194 = vmatpush1.msra.mxu0 0.0
      %8195 = vmatprep.subr.mxu0 0.0
      %8196 = vmatpush1.msra.mxu0 0.0
      %8197 = vmatprep.subr.mxu0 0.0
      %8198 = vmatpush1.msra.mxu0 0.0
      %8199 = vmatprep.subr.mxu0 0.0
      %8200 = vmatpush1.msra.mxu0 0.0
      %8201 = vmatprep.subr.mxu0 0.0
      %8202 = vmatpush1.msra.mxu0 0.0
      %8203 = vmatprep.subr.mxu0 0.0
      %8204 = vmatpush1.msra.mxu0 0.0
      %8205 = vmatprep.subr.mxu0 0.0
      %8206 = vmatpush1.msra.mxu0 %v7998
      %8207 = vmatprep.subr.mxu0 0.0
      %8208 = vmatpush1.msra.mxu0 %v7997
      %8209 = vmatprep.subr.mxu0 0.0
      %8210 = vmatpush1.msra.mxu0 %v7996
      %8211 = vmatprep.subr.mxu0 0.0
      %8212 = vmatpush1.msra.mxu0 %v7995
      %8213 = vmatprep.subr.mxu0 0.0
      %8214 = vmatpush2.msra.mxu0 0.0
      %8215 = vmatprep.subr.mxu0 0.0
      %8216 = vmatpush2.msra.mxu0 0.0
      %8217 = vmatprep.subr.mxu0 0.0
      %8218 = vmatpush2.msra.mxu0 0.0
      %8219 = vmatprep.subr.mxu0 0.0
      %8220 = vmatpush2.msra.mxu0 0.0
      %8221 = vmatprep.subr.mxu0 0.0
      %8222 = vmatpush2.msra.mxu0 0.0
      %8223 = vmatprep.subr.mxu0 0.0
      %8224 = vmatpush2.msra.mxu0 0.0
      %8225 = vmatprep.subr.mxu0 0.0
      %8226 = vmatpush2.msra.mxu0 0.0
      %8227 = vmatprep.subr.mxu0 0.0
      %8228 = vmatpush2.msra.mxu0 0.0
      %8229 = vmatprep.subr.mxu0 0.0
      %8230 = vmatpush2.msra.mxu0 0.0
      %8231 = vmatprep.subr.mxu0 0.0
      %8232 = vmatpush2.msra.mxu0 0.0
      %8233 = vmatprep.subr.mxu0 0.0
      %8234 = vmatpush2.msra.mxu0 0.0
      %8235 = vmatprep.subr.mxu0 0.0
      %8236 = vmatpush2.msra.mxu0 0.0
      %8237 = vmatprep.subr.mxu0 0.0
      %8238 = vmatpush2.msra.mxu0 0.0
      %8239 = vmatprep.subr.mxu0 0.0
      %8240 = vmatpush2.msra.mxu0 0.0
      %8241 = vmatprep.subr.mxu0 0.0
      %8242 = vmatpush2.msra.mxu0 0.0
      %8243 = vmatprep.subr.mxu0 0.0
      %8244 = vmatpush2.msra.mxu0 0.0
      %8245 = vmatprep.mubr.f32.mxu0 0.0
      %8246 = vmatmul.mubr.f32.gmra.mxu0 %v4929
      %v8247 = vpop.f32.mrf.mxu0
      %v8248 = vadd.f32 0.0, %v8247
      %v8249 = vpop.f32.mrf.mxu0
      %8250 = vmatprep.mubr.f32.mxu0 0.0
      %8251 = vmatmul.mubr.f32.gmra.mxu0 %v4932
      %v8252 = vpop.f32.mrf.mxu0
      %v8253 = vadd.f32 0.0, %v8252
      %v8254 = vpop.f32.mrf.mxu0
      %8255 = vmatprep.mubr.f32.mxu0 0.0
      %8256 = vmatmul.mubr.f32.gmra.mxu0 %v4935
      %v8257 = vpop.f32.mrf.mxu0
      %v8258 = vadd.f32 0.0, %v8257
      %v8259 = vpop.f32.mrf.mxu0
      %8260 = vmatprep.mubr.f32.mxu0 0.0
      %8261 = vmatmul.mubr.f32.gmra.mxu0 %v4938
      %v8262 = vpop.f32.mrf.mxu0
      %v8263 = vadd.f32 0.0, %v8262
      %v8264 = vpop.f32.mrf.mxu0
      %8265 = vdwg.mxu0
      %v8267 = vsel %vm716, %v8092, 0
      %v8270 = vsel %vm716, %v8163, 0
      %8272 = vmatprep.subr.mxu0 0.0
      %8273 = vmatpush1.xpose.msra.mxu0 0.0
      %8274 = vmatprep.subr.mxu0 0.0
      %8275 = vmatpush1.xpose.msra.mxu0 0.0
      %8276 = vmatprep.subr.mxu0 0.0
      %8277 = vmatpush1.xpose.msra.mxu0 0.0
      %8278 = vmatprep.subr.mxu0 0.0
      %8279 = vmatpush1.xpose.msra.mxu0 0.0
      %8280 = vmatprep.subr.mxu0 0.0
      %8281 = vmatpush1.xpose.msra.mxu0 0.0
      %8282 = vmatprep.subr.mxu0 0.0
      %8283 = vmatpush1.xpose.msra.mxu0 0.0
      %8284 = vmatprep.subr.mxu0 0.0
      %8285 = vmatpush1.xpose.msra.mxu0 0.0
      %8286 = vmatprep.subr.mxu0 0.0
      %8287 = vmatpush1.xpose.msra.mxu0 0.0
      %8288 = vmatprep.subr.mxu0 0.0
      %8289 = vmatpush1.xpose.msra.mxu0 0.0
      %8290 = vmatprep.subr.mxu0 0.0
      %8291 = vmatpush1.xpose.msra.mxu0 0.0
      %8292 = vmatprep.subr.mxu0 0.0
      %8293 = vmatpush1.xpose.msra.mxu0 0.0
      %8294 = vmatprep.subr.mxu0 0.0
      %8295 = vmatpush1.xpose.msra.mxu0 0.0
      %8296 = vmatprep.subr.mxu0 0.0
      %8297 = vmatpush1.xpose.msra.mxu0 0.0
      %8298 = vmatprep.subr.mxu0 0.0
      %8299 = vmatpush1.xpose.msra.mxu0 0.0
      %8300 = vmatprep.subr.mxu0 0.0
      %8301 = vmatpush1.xpose.msra.mxu0 0.0
      %8302 = vmatprep.subr.mxu0 0.0
      %8303 = vmatpush1.xpose.msra.mxu0 %v8270
      %8304 = vmatprep.subr.mxu0 0.0
      %8305 = vmatpush2.xpose.msra.mxu0 0.0
      %8306 = vmatprep.subr.mxu0 0.0
      %8307 = vmatpush2.xpose.msra.mxu0 0.0
      %8308 = vmatprep.subr.mxu0 0.0
      %8309 = vmatpush2.xpose.msra.mxu0 0.0
      %8310 = vmatprep.subr.mxu0 0.0
      %8311 = vmatpush2.xpose.msra.mxu0 0.0
      %8312 = vmatprep.subr.mxu0 0.0
      %8313 = vmatpush2.xpose.msra.mxu0 0.0
      %8314 = vmatprep.subr.mxu0 0.0
      %8315 = vmatpush2.xpose.msra.mxu0 0.0
      %8316 = vmatprep.subr.mxu0 0.0
      %8317 = vmatpush2.xpose.msra.mxu0 0.0
      %8318 = vmatprep.subr.mxu0 0.0
      %8319 = vmatpush2.xpose.msra.mxu0 0.0
      %8320 = vmatprep.subr.mxu0 0.0
      %8321 = vmatpush2.xpose.msra.mxu0 0.0
      %8322 = vmatprep.subr.mxu0 0.0
      %8323 = vmatpush2.xpose.msra.mxu0 0.0
      %8324 = vmatprep.subr.mxu0 0.0
      %8325 = vmatpush2.xpose.msra.mxu0 0.0
      %8326 = vmatprep.subr.mxu0 0.0
      %8327 = vmatpush2.xpose.msra.mxu0 0.0
      %8328 = vmatprep.subr.mxu0 0.0
      %8329 = vmatpush2.xpose.msra.mxu0 0.0
      %8330 = vmatprep.subr.mxu0 0.0
      %8331 = vmatpush2.xpose.msra.mxu0 0.0
      %8332 = vmatprep.subr.mxu0 0.0
      %8333 = vmatpush2.xpose.msra.mxu0 0.0
      %8334 = vmatprep.subr.mxu0 0.0
      %8335 = vmatpush2.xpose.msra.mxu0 0.0
      %8336 = vmatprep.mubr.f32.mxu0 0.0
      %8337 = vmatmul.mubr.f32.gmra.mxu0 %v8267
      %v8338 = vpop.f32.mrf.mxu0
      %v8339 = vadd.f32 0.0, %v8338
      %v8340 = vpop.f32.mrf.mxu0
      %8341 = vdwg.mxu0
      %v8343 = vsel %vm716, %v8093, 0
      %v8346 = vsel %vm716, %v8168, 0
      %8348 = vmatprep.subr.mxu0 0.0
      %8349 = vmatpush1.xpose.msra.mxu0 0.0
      %8350 = vmatprep.subr.mxu0 0.0
      %8351 = vmatpush1.xpose.msra.mxu0 0.0
      %8352 = vmatprep.subr.mxu0 0.0
      %8353 = vmatpush1.xpose.msra.mxu0 0.0
      %8354 = vmatprep.subr.mxu0 0.0
      %8355 = vmatpush1.xpose.msra.mxu0 0.0
      %8356 = vmatprep.subr.mxu0 0.0
      %8357 = vmatpush1.xpose.msra.mxu0 0.0
      %8358 = vmatprep.subr.mxu0 0.0
      %8359 = vmatpush1.xpose.msra.mxu0 0.0
      %8360 = vmatprep.subr.mxu0 0.0
      %8361 = vmatpush1.xpose.msra.mxu0 0.0
      %8362 = vmatprep.subr.mxu0 0.0
      %8363 = vmatpush1.xpose.msra.mxu0 0.0
      %8364 = vmatprep.subr.mxu0 0.0
      %8365 = vmatpush1.xpose.msra.mxu0 0.0
      %8366 = vmatprep.subr.mxu0 0.0
      %8367 = vmatpush1.xpose.msra.mxu0 0.0
      %8368 = vmatprep.subr.mxu0 0.0
      %8369 = vmatpush1.xpose.msra.mxu0 0.0
      %8370 = vmatprep.subr.mxu0 0.0
      %8371 = vmatpush1.xpose.msra.mxu0 0.0
      %8372 = vmatprep.subr.mxu0 0.0
      %8373 = vmatpush1.xpose.msra.mxu0 0.0
      %8374 = vmatprep.subr.mxu0 0.0
      %8375 = vmatpush1.xpose.msra.mxu0 0.0
      %8376 = vmatprep.subr.mxu0 0.0
      %8377 = vmatpush1.xpose.msra.mxu0 0.0
      %8378 = vmatprep.subr.mxu0 0.0
      %8379 = vmatpush1.xpose.msra.mxu0 %v8346
      %8380 = vmatprep.subr.mxu0 0.0
      %8381 = vmatpush2.xpose.msra.mxu0 0.0
      %8382 = vmatprep.subr.mxu0 0.0
      %8383 = vmatpush2.xpose.msra.mxu0 0.0
      %8384 = vmatprep.subr.mxu0 0.0
      %8385 = vmatpush2.xpose.msra.mxu0 0.0
      %8386 = vmatprep.subr.mxu0 0.0
      %8387 = vmatpush2.xpose.msra.mxu0 0.0
      %8388 = vmatprep.subr.mxu0 0.0
      %8389 = vmatpush2.xpose.msra.mxu0 0.0
      %8390 = vmatprep.subr.mxu0 0.0
      %8391 = vmatpush2.xpose.msra.mxu0 0.0
      %8392 = vmatprep.subr.mxu0 0.0
      %8393 = vmatpush2.xpose.msra.mxu0 0.0
      %8394 = vmatprep.subr.mxu0 0.0
      %8395 = vmatpush2.xpose.msra.mxu0 0.0
      %8396 = vmatprep.subr.mxu0 0.0
      %8397 = vmatpush2.xpose.msra.mxu0 0.0
      %8398 = vmatprep.subr.mxu0 0.0
      %8399 = vmatpush2.xpose.msra.mxu0 0.0
      %8400 = vmatprep.subr.mxu0 0.0
      %8401 = vmatpush2.xpose.msra.mxu0 0.0
      %8402 = vmatprep.subr.mxu0 0.0
      %8403 = vmatpush2.xpose.msra.mxu0 0.0
      %8404 = vmatprep.subr.mxu0 0.0
      %8405 = vmatpush2.xpose.msra.mxu0 0.0
      %8406 = vmatprep.subr.mxu0 0.0
      %8407 = vmatpush2.xpose.msra.mxu0 0.0
      %8408 = vmatprep.subr.mxu0 0.0
      %8409 = vmatpush2.xpose.msra.mxu0 0.0
      %8410 = vmatprep.subr.mxu0 0.0
      %8411 = vmatpush2.xpose.msra.mxu0 0.0
      %8412 = vmatprep.mubr.f32.mxu0 0.0
      %8413 = vmatmul.mubr.f32.gmra.mxu0 %v8343
      %v8414 = vpop.f32.mrf.mxu0
      %v8415 = vadd.f32 0.0, %v8414
      %v8416 = vpop.f32.mrf.mxu0
      %8417 = vdwg.mxu0
      %v8419 = vsel %vm716, %v8094, 0
      %v8422 = vsel %vm716, %v8173, 0
      %8424 = vmatprep.subr.mxu0 0.0
      %8425 = vmatpush1.xpose.msra.mxu0 0.0
      %8426 = vmatprep.subr.mxu0 0.0
      %8427 = vmatpush1.xpose.msra.mxu0 0.0
      %8428 = vmatprep.subr.mxu0 0.0
      %8429 = vmatpush1.xpose.msra.mxu0 0.0
      %8430 = vmatprep.subr.mxu0 0.0
      %8431 = vmatpush1.xpose.msra.mxu0 0.0
      %8432 = vmatprep.subr.mxu0 0.0
      %8433 = vmatpush1.xpose.msra.mxu0 0.0
      %8434 = vmatprep.subr.mxu0 0.0
      %8435 = vmatpush1.xpose.msra.mxu0 0.0
      %8436 = vmatprep.subr.mxu0 0.0
      %8437 = vmatpush1.xpose.msra.mxu0 0.0
      %8438 = vmatprep.subr.mxu0 0.0
      %8439 = vmatpush1.xpose.msra.mxu0 0.0
      %8440 = vmatprep.subr.mxu0 0.0
      %8441 = vmatpush1.xpose.msra.mxu0 0.0
      %8442 = vmatprep.subr.mxu0 0.0
      %8443 = vmatpush1.xpose.msra.mxu0 0.0
      %8444 = vmatprep.subr.mxu0 0.0
      %8445 = vmatpush1.xpose.msra.mxu0 0.0
      %8446 = vmatprep.subr.mxu0 0.0
      %8447 = vmatpush1.xpose.msra.mxu0 0.0
      %8448 = vmatprep.subr.mxu0 0.0
      %8449 = vmatpush1.xpose.msra.mxu0 0.0
      %8450 = vmatprep.subr.mxu0 0.0
      %8451 = vmatpush1.xpose.msra.mxu0 0.0
      %8452 = vmatprep.subr.mxu0 0.0
      %8453 = vmatpush1.xpose.msra.mxu0 0.0
      %8454 = vmatprep.subr.mxu0 0.0
      %8455 = vmatpush1.xpose.msra.mxu0 %v8422
      %8456 = vmatprep.subr.mxu0 0.0
      %8457 = vmatpush2.xpose.msra.mxu0 0.0
      %8458 = vmatprep.subr.mxu0 0.0
      %8459 = vmatpush2.xpose.msra.mxu0 0.0
      %8460 = vmatprep.subr.mxu0 0.0
      %8461 = vmatpush2.xpose.msra.mxu0 0.0
      %8462 = vmatprep.subr.mxu0 0.0
      %8463 = vmatpush2.xpose.msra.mxu0 0.0
      %8464 = vmatprep.subr.mxu0 0.0
      %8465 = vmatpush2.xpose.msra.mxu0 0.0
      %8466 = vmatprep.subr.mxu0 0.0
      %8467 = vmatpush2.xpose.msra.mxu0 0.0
      %8468 = vmatprep.subr.mxu0 0.0
      %8469 = vmatpush2.xpose.msra.mxu0 0.0
      %8470 = vmatprep.subr.mxu0 0.0
      %8471 = vmatpush2.xpose.msra.mxu0 0.0
      %8472 = vmatprep.subr.mxu0 0.0
      %8473 = vmatpush2.xpose.msra.mxu0 0.0
      %8474 = vmatprep.subr.mxu0 0.0
      %8475 = vmatpush2.xpose.msra.mxu0 0.0
      %8476 = vmatprep.subr.mxu0 0.0
      %8477 = vmatpush2.xpose.msra.mxu0 0.0
      %8478 = vmatprep.subr.mxu0 0.0
      %8479 = vmatpush2.xpose.msra.mxu0 0.0
      %8480 = vmatprep.subr.mxu0 0.0
      %8481 = vmatpush2.xpose.msra.mxu0 0.0
      %8482 = vmatprep.subr.mxu0 0.0
      %8483 = vmatpush2.xpose.msra.mxu0 0.0
      %8484 = vmatprep.subr.mxu0 0.0
      %8485 = vmatpush2.xpose.msra.mxu0 0.0
      %8486 = vmatprep.subr.mxu0 0.0
      %8487 = vmatpush2.xpose.msra.mxu0 0.0
      %8488 = vmatprep.mubr.f32.mxu0 0.0
      %8489 = vmatmul.mubr.f32.gmra.mxu0 %v8419
      %v8490 = vpop.f32.mrf.mxu0
      %v8491 = vadd.f32 0.0, %v8490
      %v8492 = vpop.f32.mrf.mxu0
      %8493 = vdwg.mxu0
      %v8495 = vsel %vm716, %v8095, 0
      %v8498 = vsel %vm716, %v8178, 0
      %8500 = vmatprep.subr.mxu0 0.0
      %8501 = vmatpush1.xpose.msra.mxu0 0.0
      %8502 = vmatprep.subr.mxu0 0.0
      %8503 = vmatpush1.xpose.msra.mxu0 0.0
      %8504 = vmatprep.subr.mxu0 0.0
      %8505 = vmatpush1.xpose.msra.mxu0 0.0
      %8506 = vmatprep.subr.mxu0 0.0
      %8507 = vmatpush1.xpose.msra.mxu0 0.0
      %8508 = vmatprep.subr.mxu0 0.0
      %8509 = vmatpush1.xpose.msra.mxu0 0.0
      %8510 = vmatprep.subr.mxu0 0.0
      %8511 = vmatpush1.xpose.msra.mxu0 0.0
      %8512 = vmatprep.subr.mxu0 0.0
      %8513 = vmatpush1.xpose.msra.mxu0 0.0
      %8514 = vmatprep.subr.mxu0 0.0
      %8515 = vmatpush1.xpose.msra.mxu0 0.0
      %8516 = vmatprep.subr.mxu0 0.0
      %8517 = vmatpush1.xpose.msra.mxu0 0.0
      %8518 = vmatprep.subr.mxu0 0.0
      %8519 = vmatpush1.xpose.msra.mxu0 0.0
      %8520 = vmatprep.subr.mxu0 0.0
      %8521 = vmatpush1.xpose.msra.mxu0 0.0
      %8522 = vmatprep.subr.mxu0 0.0
      %8523 = vmatpush1.xpose.msra.mxu0 0.0
      %8524 = vmatprep.subr.mxu0 0.0
      %8525 = vmatpush1.xpose.msra.mxu0 0.0
      %8526 = vmatprep.subr.mxu0 0.0
      %8527 = vmatpush1.xpose.msra.mxu0 0.0
      %8528 = vmatprep.subr.mxu0 0.0
      %8529 = vmatpush1.xpose.msra.mxu0 0.0
      %8530 = vmatprep.subr.mxu0 0.0
      %8531 = vmatpush1.xpose.msra.mxu0 %v8498
      %8532 = vmatprep.subr.mxu0 0.0
      %8533 = vmatpush2.xpose.msra.mxu0 0.0
      %8534 = vmatprep.subr.mxu0 0.0
      %8535 = vmatpush2.xpose.msra.mxu0 0.0
      %8536 = vmatprep.subr.mxu0 0.0
      %8537 = vmatpush2.xpose.msra.mxu0 0.0
      %8538 = vmatprep.subr.mxu0 0.0
      %8539 = vmatpush2.xpose.msra.mxu0 0.0
      %8540 = vmatprep.subr.mxu0 0.0
      %8541 = vmatpush2.xpose.msra.mxu0 0.0
      %8542 = vmatprep.subr.mxu0 0.0
      %8543 = vmatpush2.xpose.msra.mxu0 0.0
      %8544 = vmatprep.subr.mxu0 0.0
      %8545 = vmatpush2.xpose.msra.mxu0 0.0
      %8546 = vmatprep.subr.mxu0 0.0
      %8547 = vmatpush2.xpose.msra.mxu0 0.0
      %8548 = vmatprep.subr.mxu0 0.0
      %8549 = vmatpush2.xpose.msra.mxu0 0.0
      %8550 = vmatprep.subr.mxu0 0.0
      %8551 = vmatpush2.xpose.msra.mxu0 0.0
      %8552 = vmatprep.subr.mxu0 0.0
      %8553 = vmatpush2.xpose.msra.mxu0 0.0
      %8554 = vmatprep.subr.mxu0 0.0
      %8555 = vmatpush2.xpose.msra.mxu0 0.0
      %8556 = vmatprep.subr.mxu0 0.0
      %8557 = vmatpush2.xpose.msra.mxu0 0.0
      %8558 = vmatprep.subr.mxu0 0.0
      %8559 = vmatpush2.xpose.msra.mxu0 0.0
      %8560 = vmatprep.subr.mxu0 0.0
      %8561 = vmatpush2.xpose.msra.mxu0 0.0
      %8562 = vmatprep.subr.mxu0 0.0
      %8563 = vmatpush2.xpose.msra.mxu0 0.0
      %8564 = vmatprep.mubr.f32.mxu0 0.0
      %8565 = vmatmul.mubr.f32.gmra.mxu0 %v8495
      %v8566 = vpop.f32.mrf.mxu0
      %v8567 = vadd.f32 0.0, %v8566
      %v8568 = vpop.f32.mrf.mxu0
      %8569 = vdwg.mxu0
      %v8570 = vsel %vm716, %v8339, -inf
      %8571 = vmax.xlane.f32.xlu0 %v8570
      %v8572 = vpop.xlane.xlu0 %8571
      %v8573 = vsel %vm716, %v8415, -inf
      %8574 = vmax.xlane.f32.xlu0 %v8573
      %v8575 = vpop.xlane.xlu0 %8574
      %v8576 = vsel %vm716, %v8491, -inf
      %8577 = vmax.xlane.f32.xlu0 %v8576
      %v8578 = vpop.xlane.xlu0 %8577
      %v8579 = vsel %vm716, %v8567, -inf
      %8580 = vmax.xlane.f32.xlu0 %v8579
      %v8581 = vpop.xlane.xlu0 %8580
      %v8582 = vsub.f32 %v8339, %v8572
      %v8583 = vsub.f32 %v8415, %v8575
      %v8584 = vsub.f32 %v8491, %v8578
      %v8585 = vsub.f32 %v8567, %v8581
      %v8586 = vmul.f32 %v8582, 1.442695
      %v8587 = vpow.pop %v8586
      %v8588 = vmul.f32 %v8583, 1.442695
      %v8589 = vpow.pop %v8588
      %v8590 = vmul.f32 %v8584, 1.442695
      %v8591 = vpow.pop %v8590
      %v8592 = vmul.f32 %v8585, 1.442695
      %v8593 = vpow.pop %v8592
      %v8594 = vsel %vm716, %v8587, 0.0
      %8595 = vadd.xlane.f32.xlu0 %v8594
      %v8596 = vpop.xlane.xlu0 %8595
      %v8597 = vsel %vm716, %v8589, 0.0
      %8598 = vadd.xlane.f32.xlu0 %v8597
      %v8599 = vpop.xlane.xlu0 %8598
      %v8600 = vsel %vm716, %v8591, 0.0
      %8601 = vadd.xlane.f32.xlu0 %v8600
      %v8602 = vpop.xlane.xlu0 %8601
      %v8603 = vsel %vm716, %v8593, 0.0
      %8604 = vadd.xlane.f32.xlu0 %v8603
      %v8605 = vpop.xlane.xlu0 %8604
      %v8606 = vrcp.pop %v8596
      %v8607 = vrcp.pop %v8599
      %v8608 = vrcp.pop %v8602
      %v8609 = vrcp.pop %v8605
      %v8610 = vmul.f32 %v8587, %v8606
      %v8611 = vmul.f32 %v8589, %v8607
      %v8612 = vmul.f32 %v8591, %v8608
      %v8613 = vmul.f32 %v8593, %v8609
      %v8615 = vsel %vm716, %v8610, 0
      %8617 = vmatprep.subr.mxu0 0.0
      %8618 = vmatpush1.msra.mxu0 0.0
      %8619 = vmatprep.subr.mxu0 0.0
      %8620 = vmatpush1.msra.mxu0 0.0
      %8621 = vmatprep.subr.mxu0 0.0
      %8622 = vmatpush1.msra.mxu0 0.0
      %8623 = vmatprep.subr.mxu0 0.0
      %8624 = vmatpush1.msra.mxu0 0.0
      %8625 = vmatprep.subr.mxu0 0.0
      %8626 = vmatpush1.msra.mxu0 0.0
      %8627 = vmatprep.subr.mxu0 0.0
      %8628 = vmatpush1.msra.mxu0 0.0
      %8629 = vmatprep.subr.mxu0 0.0
      %8630 = vmatpush1.msra.mxu0 0.0
      %8631 = vmatprep.subr.mxu0 0.0
      %8632 = vmatpush1.msra.mxu0 0.0
      %8633 = vmatprep.subr.mxu0 0.0
      %8634 = vmatpush1.msra.mxu0 0.0
      %8635 = vmatprep.subr.mxu0 0.0
      %8636 = vmatpush1.msra.mxu0 0.0
      %8637 = vmatprep.subr.mxu0 0.0
      %8638 = vmatpush1.msra.mxu0 0.0
      %8639 = vmatprep.subr.mxu0 0.0
      %8640 = vmatpush1.msra.mxu0 0.0
      %8641 = vmatprep.subr.mxu0 0.0
      %8642 = vmatpush1.msra.mxu0 0.0
      %8643 = vmatprep.subr.mxu0 0.0
      %8644 = vmatpush1.msra.mxu0 0.0
      %8645 = vmatprep.subr.mxu0 0.0
      %8646 = vmatpush1.msra.mxu0 0.0
      %8647 = vmatprep.subr.mxu0 0.0
      %8648 = vmatpush1.msra.mxu0 %v8248
      %8649 = vmatprep.subr.mxu0 0.0
      %8650 = vmatpush2.msra.mxu0 0.0
      %8651 = vmatprep.subr.mxu0 0.0
      %8652 = vmatpush2.msra.mxu0 0.0
      %8653 = vmatprep.subr.mxu0 0.0
      %8654 = vmatpush2.msra.mxu0 0.0
      %8655 = vmatprep.subr.mxu0 0.0
      %8656 = vmatpush2.msra.mxu0 0.0
      %8657 = vmatprep.subr.mxu0 0.0
      %8658 = vmatpush2.msra.mxu0 0.0
      %8659 = vmatprep.subr.mxu0 0.0
      %8660 = vmatpush2.msra.mxu0 0.0
      %8661 = vmatprep.subr.mxu0 0.0
      %8662 = vmatpush2.msra.mxu0 0.0
      %8663 = vmatprep.subr.mxu0 0.0
      %8664 = vmatpush2.msra.mxu0 0.0
      %8665 = vmatprep.subr.mxu0 0.0
      %8666 = vmatpush2.msra.mxu0 0.0
      %8667 = vmatprep.subr.mxu0 0.0
      %8668 = vmatpush2.msra.mxu0 0.0
      %8669 = vmatprep.subr.mxu0 0.0
      %8670 = vmatpush2.msra.mxu0 0.0
      %8671 = vmatprep.subr.mxu0 0.0
      %8672 = vmatpush2.msra.mxu0 0.0
      %8673 = vmatprep.subr.mxu0 0.0
      %8674 = vmatpush2.msra.mxu0 0.0
      %8675 = vmatprep.subr.mxu0 0.0
      %8676 = vmatpush2.msra.mxu0 0.0
      %8677 = vmatprep.subr.mxu0 0.0
      %8678 = vmatpush2.msra.mxu0 0.0
      %8679 = vmatprep.subr.mxu0 0.0
      %8680 = vmatpush2.msra.mxu0 0.0
      %8681 = vmatprep.mubr.f32.mxu0 0.0
      %8682 = vmatmul.mubr.f32.gmra.mxu0 %v8615
      %v8683 = vpop.f32.mrf.mxu0
      %v8684 = vadd.f32 0.0, %v8683
      %v8685 = vpop.f32.mrf.mxu0
      %8686 = vdwg.mxu0
      %v8688 = vsel %vm716, %v8611, 0
      %8690 = vmatprep.subr.mxu0 0.0
      %8691 = vmatpush1.msra.mxu0 0.0
      %8692 = vmatprep.subr.mxu0 0.0
      %8693 = vmatpush1.msra.mxu0 0.0
      %8694 = vmatprep.subr.mxu0 0.0
      %8695 = vmatpush1.msra.mxu0 0.0
      %8696 = vmatprep.subr.mxu0 0.0
      %8697 = vmatpush1.msra.mxu0 0.0
      %8698 = vmatprep.subr.mxu0 0.0
      %8699 = vmatpush1.msra.mxu0 0.0
      %8700 = vmatprep.subr.mxu0 0.0
      %8701 = vmatpush1.msra.mxu0 0.0
      %8702 = vmatprep.subr.mxu0 0.0
      %8703 = vmatpush1.msra.mxu0 0.0
      %8704 = vmatprep.subr.mxu0 0.0
      %8705 = vmatpush1.msra.mxu0 0.0
      %8706 = vmatprep.subr.mxu0 0.0
      %8707 = vmatpush1.msra.mxu0 0.0
      %8708 = vmatprep.subr.mxu0 0.0
      %8709 = vmatpush1.msra.mxu0 0.0
      %8710 = vmatprep.subr.mxu0 0.0
      %8711 = vmatpush1.msra.mxu0 0.0
      %8712 = vmatprep.subr.mxu0 0.0
      %8713 = vmatpush1.msra.mxu0 0.0
      %8714 = vmatprep.subr.mxu0 0.0
      %8715 = vmatpush1.msra.mxu0 0.0
      %8716 = vmatprep.subr.mxu0 0.0
      %8717 = vmatpush1.msra.mxu0 0.0
      %8718 = vmatprep.subr.mxu0 0.0
      %8719 = vmatpush1.msra.mxu0 0.0
      %8720 = vmatprep.subr.mxu0 0.0
      %8721 = vmatpush1.msra.mxu0 %v8253
      %8722 = vmatprep.subr.mxu0 0.0
      %8723 = vmatpush2.msra.mxu0 0.0
      %8724 = vmatprep.subr.mxu0 0.0
      %8725 = vmatpush2.msra.mxu0 0.0
      %8726 = vmatprep.subr.mxu0 0.0
      %8727 = vmatpush2.msra.mxu0 0.0
      %8728 = vmatprep.subr.mxu0 0.0
      %8729 = vmatpush2.msra.mxu0 0.0
      %8730 = vmatprep.subr.mxu0 0.0
      %8731 = vmatpush2.msra.mxu0 0.0
      %8732 = vmatprep.subr.mxu0 0.0
      %8733 = vmatpush2.msra.mxu0 0.0
      %8734 = vmatprep.subr.mxu0 0.0
      %8735 = vmatpush2.msra.mxu0 0.0
      %8736 = vmatprep.subr.mxu0 0.0
      %8737 = vmatpush2.msra.mxu0 0.0
      %8738 = vmatprep.subr.mxu0 0.0
      %8739 = vmatpush2.msra.mxu0 0.0
      %8740 = vmatprep.subr.mxu0 0.0
      %8741 = vmatpush2.msra.mxu0 0.0
      %8742 = vmatprep.subr.mxu0 0.0
      %8743 = vmatpush2.msra.mxu0 0.0
      %8744 = vmatprep.subr.mxu0 0.0
      %8745 = vmatpush2.msra.mxu0 0.0
      %8746 = vmatprep.subr.mxu0 0.0
      %8747 = vmatpush2.msra.mxu0 0.0
      %8748 = vmatprep.subr.mxu0 0.0
      %8749 = vmatpush2.msra.mxu0 0.0
      %8750 = vmatprep.subr.mxu0 0.0
      %8751 = vmatpush2.msra.mxu0 0.0
      %8752 = vmatprep.subr.mxu0 0.0
      %8753 = vmatpush2.msra.mxu0 0.0
      %8754 = vmatprep.mubr.f32.mxu0 0.0
      %8755 = vmatmul.mubr.f32.gmra.mxu0 %v8688
      %v8756 = vpop.f32.mrf.mxu0
      %v8757 = vadd.f32 0.0, %v8756
      %v8758 = vpop.f32.mrf.mxu0
      %8759 = vdwg.mxu0
      %v8761 = vsel %vm716, %v8612, 0
      %8763 = vmatprep.subr.mxu0 0.0
      %8764 = vmatpush1.msra.mxu0 0.0
      %8765 = vmatprep.subr.mxu0 0.0
      %8766 = vmatpush1.msra.mxu0 0.0
      %8767 = vmatprep.subr.mxu0 0.0
      %8768 = vmatpush1.msra.mxu0 0.0
      %8769 = vmatprep.subr.mxu0 0.0
      %8770 = vmatpush1.msra.mxu0 0.0
      %8771 = vmatprep.subr.mxu0 0.0
      %8772 = vmatpush1.msra.mxu0 0.0
      %8773 = vmatprep.subr.mxu0 0.0
      %8774 = vmatpush1.msra.mxu0 0.0
      %8775 = vmatprep.subr.mxu0 0.0
      %8776 = vmatpush1.msra.mxu0 0.0
      %8777 = vmatprep.subr.mxu0 0.0
      %8778 = vmatpush1.msra.mxu0 0.0
      %8779 = vmatprep.subr.mxu0 0.0
      %8780 = vmatpush1.msra.mxu0 0.0
      %8781 = vmatprep.subr.mxu0 0.0
      %8782 = vmatpush1.msra.mxu0 0.0
      %8783 = vmatprep.subr.mxu0 0.0
      %8784 = vmatpush1.msra.mxu0 0.0
      %8785 = vmatprep.subr.mxu0 0.0
      %8786 = vmatpush1.msra.mxu0 0.0
      %8787 = vmatprep.subr.mxu0 0.0
      %8788 = vmatpush1.msra.mxu0 0.0
      %8789 = vmatprep.subr.mxu0 0.0
      %8790 = vmatpush1.msra.mxu0 0.0
      %8791 = vmatprep.subr.mxu0 0.0
      %8792 = vmatpush1.msra.mxu0 0.0
      %8793 = vmatprep.subr.mxu0 0.0
      %8794 = vmatpush1.msra.mxu0 %v8258
      %8795 = vmatprep.subr.mxu0 0.0
      %8796 = vmatpush2.msra.mxu0 0.0
      %8797 = vmatprep.subr.mxu0 0.0
      %8798 = vmatpush2.msra.mxu0 0.0
      %8799 = vmatprep.subr.mxu0 0.0
      %8800 = vmatpush2.msra.mxu0 0.0
      %8801 = vmatprep.subr.mxu0 0.0
      %8802 = vmatpush2.msra.mxu0 0.0
      %8803 = vmatprep.subr.mxu0 0.0
      %8804 = vmatpush2.msra.mxu0 0.0
      %8805 = vmatprep.subr.mxu0 0.0
      %8806 = vmatpush2.msra.mxu0 0.0
      %8807 = vmatprep.subr.mxu0 0.0
      %8808 = vmatpush2.msra.mxu0 0.0
      %8809 = vmatprep.subr.mxu0 0.0
      %8810 = vmatpush2.msra.mxu0 0.0
      %8811 = vmatprep.subr.mxu0 0.0
      %8812 = vmatpush2.msra.mxu0 0.0
      %8813 = vmatprep.subr.mxu0 0.0
      %8814 = vmatpush2.msra.mxu0 0.0
      %8815 = vmatprep.subr.mxu0 0.0
      %8816 = vmatpush2.msra.mxu0 0.0
      %8817 = vmatprep.subr.mxu0 0.0
      %8818 = vmatpush2.msra.mxu0 0.0
      %8819 = vmatprep.subr.mxu0 0.0
      %8820 = vmatpush2.msra.mxu0 0.0
      %8821 = vmatprep.subr.mxu0 0.0
      %8822 = vmatpush2.msra.mxu0 0.0
      %8823 = vmatprep.subr.mxu0 0.0
      %8824 = vmatpush2.msra.mxu0 0.0
      %8825 = vmatprep.subr.mxu0 0.0
      %8826 = vmatpush2.msra.mxu0 0.0
      %8827 = vmatprep.mubr.f32.mxu0 0.0
      %8828 = vmatmul.mubr.f32.gmra.mxu0 %v8761
      %v8829 = vpop.f32.mrf.mxu0
      %v8830 = vadd.f32 0.0, %v8829
      %v8831 = vpop.f32.mrf.mxu0
      %8832 = vdwg.mxu0
      %v8834 = vsel %vm716, %v8613, 0
      %8836 = vmatprep.subr.mxu0 0.0
      %8837 = vmatpush1.msra.mxu0 0.0
      %8838 = vmatprep.subr.mxu0 0.0
      %8839 = vmatpush1.msra.mxu0 0.0
      %8840 = vmatprep.subr.mxu0 0.0
      %8841 = vmatpush1.msra.mxu0 0.0
      %8842 = vmatprep.subr.mxu0 0.0
      %8843 = vmatpush1.msra.mxu0 0.0
      %8844 = vmatprep.subr.mxu0 0.0
      %8845 = vmatpush1.msra.mxu0 0.0
      %8846 = vmatprep.subr.mxu0 0.0
      %8847 = vmatpush1.msra.mxu0 0.0
      %8848 = vmatprep.subr.mxu0 0.0
      %8849 = vmatpush1.msra.mxu0 0.0
      %8850 = vmatprep.subr.mxu0 0.0
      %8851 = vmatpush1.msra.mxu0 0.0
      %8852 = vmatprep.subr.mxu0 0.0
      %8853 = vmatpush1.msra.mxu0 0.0
      %8854 = vmatprep.subr.mxu0 0.0
      %8855 = vmatpush1.msra.mxu0 0.0
      %8856 = vmatprep.subr.mxu0 0.0
      %8857 = vmatpush1.msra.mxu0 0.0
      %8858 = vmatprep.subr.mxu0 0.0
      %8859 = vmatpush1.msra.mxu0 0.0
      %8860 = vmatprep.subr.mxu0 0.0
      %8861 = vmatpush1.msra.mxu0 0.0
      %8862 = vmatprep.subr.mxu0 0.0
      %8863 = vmatpush1.msra.mxu0 0.0
      %8864 = vmatprep.subr.mxu0 0.0
      %8865 = vmatpush1.msra.mxu0 0.0
      %8866 = vmatprep.subr.mxu0 0.0
      %8867 = vmatpush1.msra.mxu0 %v8263
      %8868 = vmatprep.subr.mxu0 0.0
      %8869 = vmatpush2.msra.mxu0 0.0
      %8870 = vmatprep.subr.mxu0 0.0
      %8871 = vmatpush2.msra.mxu0 0.0
      %8872 = vmatprep.subr.mxu0 0.0
      %8873 = vmatpush2.msra.mxu0 0.0
      %8874 = vmatprep.subr.mxu0 0.0
      %8875 = vmatpush2.msra.mxu0 0.0
      %8876 = vmatprep.subr.mxu0 0.0
      %8877 = vmatpush2.msra.mxu0 0.0
      %8878 = vmatprep.subr.mxu0 0.0
      %8879 = vmatpush2.msra.mxu0 0.0
      %8880 = vmatprep.subr.mxu0 0.0
      %8881 = vmatpush2.msra.mxu0 0.0
      %8882 = vmatprep.subr.mxu0 0.0
      %8883 = vmatpush2.msra.mxu0 0.0
      %8884 = vmatprep.subr.mxu0 0.0
      %8885 = vmatpush2.msra.mxu0 0.0
      %8886 = vmatprep.subr.mxu0 0.0
      %8887 = vmatpush2.msra.mxu0 0.0
      %8888 = vmatprep.subr.mxu0 0.0
      %8889 = vmatpush2.msra.mxu0 0.0
      %8890 = vmatprep.subr.mxu0 0.0
      %8891 = vmatpush2.msra.mxu0 0.0
      %8892 = vmatprep.subr.mxu0 0.0
      %8893 = vmatpush2.msra.mxu0 0.0
      %8894 = vmatprep.subr.mxu0 0.0
      %8895 = vmatpush2.msra.mxu0 0.0
      %8896 = vmatprep.subr.mxu0 0.0
      %8897 = vmatpush2.msra.mxu0 0.0
      %8898 = vmatprep.subr.mxu0 0.0
      %8899 = vmatpush2.msra.mxu0 0.0
      %8900 = vmatprep.mubr.f32.mxu0 0.0
      %8901 = vmatmul.mubr.f32.gmra.mxu0 %v8834
      %v8902 = vpop.f32.mrf.mxu0
      %v8903 = vadd.f32 0.0, %v8902
      %v8904 = vpop.f32.mrf.mxu0
      %8905 = vdwg.mxu0
      %s8906 = scalar_lea.vmem %s4, 56
      %v8907 = vld [vmem:[%s8906] sm:$0xff]
      %v8909 = vsel %vm716, %v8684, 0
      %v8912 = vsel %vm716, %v8757, 0
      %v8915 = vsel %vm716, %v8830, 0
      %v8918 = vsel %vm716, %v8903, 0
      %8920 = vmatprep.subr.mxu0 0.0
      %8921 = vmatpush1.msra.mxu0 0.0
      %8922 = vmatprep.subr.mxu0 0.0
      %8923 = vmatpush1.msra.mxu0 0.0
      %8924 = vmatprep.subr.mxu0 0.0
      %8925 = vmatpush1.msra.mxu0 0.0
      %8926 = vmatprep.subr.mxu0 0.0
      %8927 = vmatpush1.msra.mxu0 0.0
      %8928 = vmatprep.subr.mxu0 0.0
      %8929 = vmatpush1.msra.mxu0 0.0
      %8930 = vmatprep.subr.mxu0 0.0
      %8931 = vmatpush1.msra.mxu0 0.0
      %8932 = vmatprep.subr.mxu0 0.0
      %8933 = vmatpush1.msra.mxu0 0.0
      %8934 = vmatprep.subr.mxu0 0.0
      %8935 = vmatpush1.msra.mxu0 0.0
      %8936 = vmatprep.subr.mxu0 0.0
      %8937 = vmatpush1.msra.mxu0 0.0
      %8938 = vmatprep.subr.mxu0 0.0
      %8939 = vmatpush1.msra.mxu0 0.0
      %8940 = vmatprep.subr.mxu0 0.0
      %8941 = vmatpush1.msra.mxu0 0.0
      %8942 = vmatprep.subr.mxu0 0.0
      %8943 = vmatpush1.msra.mxu0 0.0
      %8944 = vmatprep.subr.mxu0 0.0
      %8945 = vmatpush1.msra.mxu0 0.0
      %8946 = vmatprep.subr.mxu0 0.0
      %8947 = vmatpush1.msra.mxu0 0.0
      %8948 = vmatprep.subr.mxu0 0.0
      %8949 = vmatpush1.msra.mxu0 0.0
      %8950 = vmatprep.subr.mxu0 0.0
      %8951 = vmatpush1.msra.mxu0 %v8907
      %8952 = vmatprep.subr.mxu0 0.0
      %8953 = vmatpush2.msra.mxu0 0.0
      %8954 = vmatprep.subr.mxu0 0.0
      %8955 = vmatpush2.msra.mxu0 0.0
      %8956 = vmatprep.subr.mxu0 0.0
      %8957 = vmatpush2.msra.mxu0 0.0
      %8958 = vmatprep.subr.mxu0 0.0
      %8959 = vmatpush2.msra.mxu0 0.0
      %8960 = vmatprep.subr.mxu0 0.0
      %8961 = vmatpush2.msra.mxu0 0.0
      %8962 = vmatprep.subr.mxu0 0.0
      %8963 = vmatpush2.msra.mxu0 0.0
      %8964 = vmatprep.subr.mxu0 0.0
      %8965 = vmatpush2.msra.mxu0 0.0
      %8966 = vmatprep.subr.mxu0 0.0
      %8967 = vmatpush2.msra.mxu0 0.0
      %8968 = vmatprep.subr.mxu0 0.0
      %8969 = vmatpush2.msra.mxu0 0.0
      %8970 = vmatprep.subr.mxu0 0.0
      %8971 = vmatpush2.msra.mxu0 0.0
      %8972 = vmatprep.subr.mxu0 0.0
      %8973 = vmatpush2.msra.mxu0 0.0
      %8974 = vmatprep.subr.mxu0 0.0
      %8975 = vmatpush2.msra.mxu0 0.0
      %8976 = vmatprep.subr.mxu0 0.0
      %8977 = vmatpush2.msra.mxu0 0.0
      %8978 = vmatprep.subr.mxu0 0.0
      %8979 = vmatpush2.msra.mxu0 0.0
      %8980 = vmatprep.subr.mxu0 0.0
      %8981 = vmatpush2.msra.mxu0 0.0
      %8982 = vmatprep.subr.mxu0 0.0
      %8983 = vmatpush2.msra.mxu0 0.0
      %8984 = vmatprep.mubr.f32.mxu0 0.0
      %8985 = vmatmul.mubr.f32.gmra.mxu0 %v8909
      %v8986 = vpop.f32.mrf.mxu0
      %v8987 = vadd.f32 0.0, %v8986
      %v8988 = vpop.f32.mrf.mxu0
      %8989 = vmatprep.mubr.f32.mxu0 0.0
      %8990 = vmatmul.mubr.f32.gmra.mxu0 %v8912
      %v8991 = vpop.f32.mrf.mxu0
      %v8992 = vadd.f32 0.0, %v8991
      %v8993 = vpop.f32.mrf.mxu0
      %8994 = vmatprep.mubr.f32.mxu0 0.0
      %8995 = vmatmul.mubr.f32.gmra.mxu0 %v8915
      %v8996 = vpop.f32.mrf.mxu0
      %v8997 = vadd.f32 0.0, %v8996
      %v8998 = vpop.f32.mrf.mxu0
      %8999 = vmatprep.mubr.f32.mxu0 0.0
      %9000 = vmatmul.mubr.f32.gmra.mxu0 %v8918
      %v9001 = vpop.f32.mrf.mxu0
      %v9002 = vadd.f32 0.0, %v9001
      %v9003 = vpop.f32.mrf.mxu0
      %9004 = vdwg.mxu0
      %v9005 = vadd.f32 %v7980, %v8987
      %v9006 = vadd.f32 %v7981, %v8992
      %v9007 = vadd.f32 %v7982, %v8997
      %v9008 = vadd.f32 %v7983, %v9002
      %v9009 = vlaneseq
      %v9010 = vshrl.u32 %v9009, 7
      %v9011 = vsub.s32 0, %v9010
      %v9012 = vrot.slane %v4898, %v9011
      %v9013 = vadd.f32 %v9005, %v9012
      %v9014 = vadd.f32 %v9006, %v9012
      %v9015 = vadd.f32 %v9007, %v9012
      %v9016 = vadd.f32 %v9008, %v9012
      %v9017 = vadd.f32 %v4894, %v9013
      %v9018 = vadd.f32 %v4895, %v9014
      %v9019 = vadd.f32 %v4896, %v9015
      %v9020 = vadd.f32 %v4897, %v9016
      %v9021 = vsel %vm444, %v9017, 0.0
      %9022 = vadd.xlane.f32.xlu0 %v9021
      %v9023 = vpop.xlane.xlu0 %9022
      %v9024 = vsel %vm444, %v9018, 0.0
      %9025 = vadd.xlane.f32.xlu0 %v9024
      %v9026 = vpop.xlane.xlu0 %9025
      %v9027 = vsel %vm444, %v9019, 0.0
      %9028 = vadd.xlane.f32.xlu0 %v9027
      %v9029 = vpop.xlane.xlu0 %9028
      %v9030 = vsel %vm444, %v9020, 0.0
      %9031 = vadd.xlane.f32.xlu0 %v9030
      %v9032 = vpop.xlane.xlu0 %9031
      %v9033 = vmul.f32 %v9023, %v4550
      %v9034 = vmul.f32 %v9026, %v4550
      %v9035 = vmul.f32 %v9029, %v4550
      %v9036 = vmul.f32 %v9032, %v4550
      %v9037 = vsub.f32 %v9017, %v9033
      %v9038 = vsub.f32 %v9018, %v9034
      %v9039 = vsub.f32 %v9019, %v9035
      %v9040 = vsub.f32 %v9020, %v9036
      %v9041 = vmul.f32 %v9037, %v9037
      %v9042 = vmul.f32 %v9038, %v9038
      %v9043 = vmul.f32 %v9039, %v9039
      %v9044 = vmul.f32 %v9040, %v9040
      %v9045 = vsel %vm444, %v9041, 0.0
      %9046 = vadd.xlane.f32.xlu0 %v9045
      %v9047 = vpop.xlane.xlu0 %9046
      %v9048 = vsel %vm444, %v9042, 0.0
      %9049 = vadd.xlane.f32.xlu0 %v9048
      %v9050 = vpop.xlane.xlu0 %9049
      %v9051 = vsel %vm444, %v9043, 0.0
      %9052 = vadd.xlane.f32.xlu0 %v9051
      %v9053 = vpop.xlane.xlu0 %9052
      %v9054 = vsel %vm444, %v9044, 0.0
      %9055 = vadd.xlane.f32.xlu0 %v9054
      %v9056 = vpop.xlane.xlu0 %9055
      %v9057 = vmul.f32 %v9047, %v4550
      %v9058 = vmul.f32 %v9050, %v4550
      %v9059 = vmul.f32 %v9053, %v4550
      %v9060 = vmul.f32 %v9056, %v4550
      %v9061 = vadd.f32 %v9057, 1e-05
      %v9062 = vadd.f32 %v9058, 1e-05
      %v9063 = vadd.f32 %v9059, 1e-05
      %v9064 = vadd.f32 %v9060, 1e-05
      %v9065 = vrsqrt.pop %v9061
      %v9066 = vrsqrt.pop %v9062
      %v9067 = vrsqrt.pop %v9063
      %v9068 = vrsqrt.pop %v9064
      %v9069 = vmul.f32 %v9037, %v9065
      %v9070 = vmul.f32 %v9038, %v9066
      %v9071 = vmul.f32 %v9039, %v9067
      %v9072 = vmul.f32 %v9040, %v9068
      %v9073 = vlaneseq
      %v9074 = vshrl.u32 %v9073, 7
      %v9075 = vsub.s32 0, %v9074
      %v9076 = vrot.slane %v4899, %v9075
      %v9077 = vmul.f32 %v9069, %v9076
      %v9078 = vmul.f32 %v9070, %v9076
      %v9079 = vmul.f32 %v9071, %v9076
      %v9080 = vmul.f32 %v9072, %v9076
      %v9081 = vlaneseq
      %v9082 = vshrl.u32 %v9081, 7
      %v9083 = vsub.s32 0, %v9082
      %v9084 = vrot.slane %v4900, %v9083
      %v9085 = vadd.f32 %v9077, %v9084
      %v9086 = vadd.f32 %v9078, %v9084
      %v9087 = vadd.f32 %v9079, %v9084
      %v9088 = vadd.f32 %v9080, %v9084
      %s9089 = scalar_lea.vmem %s5, 32
      %v9090 = vld [vmem:[%s9089] sm:$0xff]
      %v9091 = vld [vmem:[%s9089 + $0x8] sm:$0xff]
      %v9092 = vld [vmem:[%s9089 + $0x10] sm:$0xff]
      %v9093 = vld [vmem:[%s9089 + $0x18] sm:$0xff]
      %v9094 = vlaneseq
      %v9095 = vshrl.u32 %v9094, 7
      %v9096 = vsub.s32 0, %v9095
      %v9097 = vrot.slane %v4901, %v9096
      %v9099 = vsel %vm444, %v9085, 0
      %v9102 = vsel %vm444, %v9086, 0
      %v9105 = vsel %vm444, %v9087, 0
      %v9108 = vsel %vm444, %v9088, 0
      %9110 = vmatprep.subr.mxu0 0.0
      %9111 = vmatpush1.msra.mxu0 0.0
      %9112 = vmatprep.subr.mxu0 0.0
      %9113 = vmatpush1.msra.mxu0 0.0
      %9114 = vmatprep.subr.mxu0 0.0
      %9115 = vmatpush1.msra.mxu0 0.0
      %9116 = vmatprep.subr.mxu0 0.0
      %9117 = vmatpush1.msra.mxu0 0.0
      %9118 = vmatprep.subr.mxu0 0.0
      %9119 = vmatpush1.msra.mxu0 0.0
      %9120 = vmatprep.subr.mxu0 0.0
      %9121 = vmatpush1.msra.mxu0 0.0
      %9122 = vmatprep.subr.mxu0 0.0
      %9123 = vmatpush1.msra.mxu0 0.0
      %9124 = vmatprep.subr.mxu0 0.0
      %9125 = vmatpush1.msra.mxu0 0.0
      %9126 = vmatprep.subr.mxu0 0.0
      %9127 = vmatpush1.msra.mxu0 0.0
      %9128 = vmatprep.subr.mxu0 0.0
      %9129 = vmatpush1.msra.mxu0 0.0
      %9130 = vmatprep.subr.mxu0 0.0
      %9131 = vmatpush1.msra.mxu0 0.0
      %9132 = vmatprep.subr.mxu0 0.0
      %9133 = vmatpush1.msra.mxu0 0.0
      %9134 = vmatprep.subr.mxu0 0.0
      %9135 = vmatpush1.msra.mxu0 %v9093
      %9136 = vmatprep.subr.mxu0 0.0
      %9137 = vmatpush1.msra.mxu0 %v9092
      %9138 = vmatprep.subr.mxu0 0.0
      %9139 = vmatpush1.msra.mxu0 %v9091
      %9140 = vmatprep.subr.mxu0 0.0
      %9141 = vmatpush1.msra.mxu0 %v9090
      %9142 = vmatprep.subr.mxu0 0.0
      %9143 = vmatpush2.msra.mxu0 0.0
      %9144 = vmatprep.subr.mxu0 0.0
      %9145 = vmatpush2.msra.mxu0 0.0
      %9146 = vmatprep.subr.mxu0 0.0
      %9147 = vmatpush2.msra.mxu0 0.0
      %9148 = vmatprep.subr.mxu0 0.0
      %9149 = vmatpush2.msra.mxu0 0.0
      %9150 = vmatprep.subr.mxu0 0.0
      %9151 = vmatpush2.msra.mxu0 0.0
      %9152 = vmatprep.subr.mxu0 0.0
      %9153 = vmatpush2.msra.mxu0 0.0
      %9154 = vmatprep.subr.mxu0 0.0
      %9155 = vmatpush2.msra.mxu0 0.0
      %9156 = vmatprep.subr.mxu0 0.0
      %9157 = vmatpush2.msra.mxu0 0.0
      %9158 = vmatprep.subr.mxu0 0.0
      %9159 = vmatpush2.msra.mxu0 0.0
      %9160 = vmatprep.subr.mxu0 0.0
      %9161 = vmatpush2.msra.mxu0 0.0
      %9162 = vmatprep.subr.mxu0 0.0
      %9163 = vmatpush2.msra.mxu0 0.0
      %9164 = vmatprep.subr.mxu0 0.0
      %9165 = vmatpush2.msra.mxu0 0.0
      %9166 = vmatprep.subr.mxu0 0.0
      %9167 = vmatpush2.msra.mxu0 0.0
      %9168 = vmatprep.subr.mxu0 0.0
      %9169 = vmatpush2.msra.mxu0 0.0
      %9170 = vmatprep.subr.mxu0 0.0
      %9171 = vmatpush2.msra.mxu0 0.0
      %9172 = vmatprep.subr.mxu0 0.0
      %9173 = vmatpush2.msra.mxu0 0.0
      %9174 = vmatprep.mubr.f32.mxu0 0.0
      %9175 = vmatmul.mubr.f32.gmra.mxu0 %v9099
      %v9176 = vpop.f32.mrf.mxu0
      %v9177 = vadd.f32 %v9097, %v9176
      %v9178 = vpop.f32.mrf.mxu0
      %9179 = vmatprep.mubr.f32.mxu0 0.0
      %9180 = vmatmul.mubr.f32.gmra.mxu0 %v9102
      %v9181 = vpop.f32.mrf.mxu0
      %v9182 = vadd.f32 %v9097, %v9181
      %v9183 = vpop.f32.mrf.mxu0
      %9184 = vmatprep.mubr.f32.mxu0 0.0
      %9185 = vmatmul.mubr.f32.gmra.mxu0 %v9105
      %v9186 = vpop.f32.mrf.mxu0
      %v9187 = vadd.f32 %v9097, %v9186
      %v9188 = vpop.f32.mrf.mxu0
      %9189 = vmatprep.mubr.f32.mxu0 0.0
      %9190 = vmatmul.mubr.f32.gmra.mxu0 %v9108
      %v9191 = vpop.f32.mrf.mxu0
      %v9192 = vadd.f32 %v9097, %v9191
      %v9193 = vpop.f32.mrf.mxu0
      %9194 = vdwg.mxu0
      %v9195 = vmax.f32 %v9177, 0.0
      %v9196 = vmax.f32 %v9182, 0.0
      %v9197 = vmax.f32 %v9187, 0.0
      %v9198 = vmax.f32 %v9192, 0.0
      %s9199 = scalar_lea.vmem %s6, 64
      %v9200 = vld [vmem:[%s9199] sm:$0xff]
      %v9201 = vld [vmem:[%s9199 + $0x8] sm:$0xff]
      %v9202 = vld [vmem:[%s9199 + $0x10] sm:$0xff]
      %v9203 = vld [vmem:[%s9199 + $0x18] sm:$0xff]
      %v9204 = vld [vmem:[%s9199 + $0x20] sm:$0xff]
      %v9205 = vld [vmem:[%s9199 + $0x28] sm:$0xff]
      %v9206 = vld [vmem:[%s9199 + $0x30] sm:$0xff]
      %v9207 = vld [vmem:[%s9199 + $0x38] sm:$0xff]
      %v9208 = vlaneseq
      %v9209 = vshrl.u32 %v9208, 7
      %v9210 = vsub.s32 0, %v9209
      %v9211 = vrot.slane %v4902, %v9210
      %v9213 = vsel %vm4728, %v9195, 0
      %v9216 = vsel %vm4728, %v9196, 0
      %v9219 = vsel %vm4728, %v9197, 0
      %v9222 = vsel %vm4728, %v9198, 0
      %9224 = vmatprep.subr.mxu0 0.0
      %9225 = vmatpush1.msra.mxu0 0.0
      %9226 = vmatprep.subr.mxu0 0.0
      %9227 = vmatpush1.msra.mxu0 0.0
      %9228 = vmatprep.subr.mxu0 0.0
      %9229 = vmatpush1.msra.mxu0 0.0
      %9230 = vmatprep.subr.mxu0 0.0
      %9231 = vmatpush1.msra.mxu0 0.0
      %9232 = vmatprep.subr.mxu0 0.0
      %9233 = vmatpush1.msra.mxu0 0.0
      %9234 = vmatprep.subr.mxu0 0.0
      %9235 = vmatpush1.msra.mxu0 0.0
      %9236 = vmatprep.subr.mxu0 0.0
      %9237 = vmatpush1.msra.mxu0 0.0
      %9238 = vmatprep.subr.mxu0 0.0
      %9239 = vmatpush1.msra.mxu0 0.0
      %9240 = vmatprep.subr.mxu0 0.0
      %9241 = vmatpush1.msra.mxu0 %v9207
      %9242 = vmatprep.subr.mxu0 0.0
      %9243 = vmatpush1.msra.mxu0 %v9206
      %9244 = vmatprep.subr.mxu0 0.0
      %9245 = vmatpush1.msra.mxu0 %v9205
      %9246 = vmatprep.subr.mxu0 0.0
      %9247 = vmatpush1.msra.mxu0 %v9204
      %9248 = vmatprep.subr.mxu0 0.0
      %9249 = vmatpush1.msra.mxu0 %v9203
      %9250 = vmatprep.subr.mxu0 0.0
      %9251 = vmatpush1.msra.mxu0 %v9202
      %9252 = vmatprep.subr.mxu0 0.0
      %9253 = vmatpush1.msra.mxu0 %v9201
      %9254 = vmatprep.subr.mxu0 0.0
      %9255 = vmatpush1.msra.mxu0 %v9200
      %9256 = vmatprep.subr.mxu0 0.0
      %9257 = vmatpush2.msra.mxu0 0.0
      %9258 = vmatprep.subr.mxu0 0.0
      %9259 = vmatpush2.msra.mxu0 0.0
      %9260 = vmatprep.subr.mxu0 0.0
      %9261 = vmatpush2.msra.mxu0 0.0
      %9262 = vmatprep.subr.mxu0 0.0
      %9263 = vmatpush2.msra.mxu0 0.0
      %9264 = vmatprep.subr.mxu0 0.0
      %9265 = vmatpush2.msra.mxu0 0.0
      %9266 = vmatprep.subr.mxu0 0.0
      %9267 = vmatpush2.msra.mxu0 0.0
      %9268 = vmatprep.subr.mxu0 0.0
      %9269 = vmatpush2.msra.mxu0 0.0
      %9270 = vmatprep.subr.mxu0 0.0
      %9271 = vmatpush2.msra.mxu0 0.0
      %9272 = vmatprep.subr.mxu0 0.0
      %9273 = vmatpush2.msra.mxu0 0.0
      %9274 = vmatprep.subr.mxu0 0.0
      %9275 = vmatpush2.msra.mxu0 0.0
      %9276 = vmatprep.subr.mxu0 0.0
      %9277 = vmatpush2.msra.mxu0 0.0
      %9278 = vmatprep.subr.mxu0 0.0
      %9279 = vmatpush2.msra.mxu0 0.0
      %9280 = vmatprep.subr.mxu0 0.0
      %9281 = vmatpush2.msra.mxu0 0.0
      %9282 = vmatprep.subr.mxu0 0.0
      %9283 = vmatpush2.msra.mxu0 0.0
      %9284 = vmatprep.subr.mxu0 0.0
      %9285 = vmatpush2.msra.mxu0 0.0
      %9286 = vmatprep.subr.mxu0 0.0
      %9287 = vmatpush2.msra.mxu0 0.0
      %9288 = vmatprep.mubr.f32.mxu0 0.0
      %9289 = vmatmul.mubr.f32.gmra.mxu0 %v9213
      %v9290 = vpop.f32.mrf.mxu0
      %v9291 = vadd.f32 %v9211, %v9290
      %v9292 = vpop.f32.mrf.mxu0
      %9293 = vmatprep.mubr.f32.mxu0 0.0
      %9294 = vmatmul.mubr.f32.gmra.mxu0 %v9216
      %v9295 = vpop.f32.mrf.mxu0
      %v9296 = vadd.f32 %v9211, %v9295
      %v9297 = vpop.f32.mrf.mxu0
      %9298 = vmatprep.mubr.f32.mxu0 0.0
      %9299 = vmatmul.mubr.f32.gmra.mxu0 %v9219
      %v9300 = vpop.f32.mrf.mxu0
      %v9301 = vadd.f32 %v9211, %v9300
      %v9302 = vpop.f32.mrf.mxu0
      %9303 = vmatprep.mubr.f32.mxu0 0.0
      %9304 = vmatmul.mubr.f32.gmra.mxu0 %v9222
      %v9305 = vpop.f32.mrf.mxu0
      %v9306 = vadd.f32 %v9211, %v9305
      %v9307 = vpop.f32.mrf.mxu0
      %9308 = vdwg.mxu0
      %v9309 = vadd.f32 %v9085, %v9291
      %v9310 = vadd.f32 %v9086, %v9296
      %v9311 = vadd.f32 %v9087, %v9301
      %v9312 = vadd.f32 %v9088, %v9306
      %v9313 = vsel %vm444, %v9309, 0.0
      %9314 = vadd.xlane.f32.xlu0 %v9313
      %v9315 = vpop.xlane.xlu0 %9314
      %v9316 = vsel %vm444, %v9310, 0.0
      %9317 = vadd.xlane.f32.xlu0 %v9316
      %v9318 = vpop.xlane.xlu0 %9317
      %v9319 = vsel %vm444, %v9311, 0.0
      %9320 = vadd.xlane.f32.xlu0 %v9319
      %v9321 = vpop.xlane.xlu0 %9320
      %v9322 = vsel %vm444, %v9312, 0.0
      %9323 = vadd.xlane.f32.xlu0 %v9322
      %v9324 = vpop.xlane.xlu0 %9323
      %v9325 = vmul.f32 %v9315, %v4550
      %v9326 = vmul.f32 %v9318, %v4550
      %v9327 = vmul.f32 %v9321, %v4550
      %v9328 = vmul.f32 %v9324, %v4550
      %v9329 = vsub.f32 %v9309, %v9325
      %v9330 = vsub.f32 %v9310, %v9326
      %v9331 = vsub.f32 %v9311, %v9327
      %v9332 = vsub.f32 %v9312, %v9328
      %v9333 = vmul.f32 %v9329, %v9329
      %v9334 = vmul.f32 %v9330, %v9330
      %v9335 = vmul.f32 %v9331, %v9331
      %v9336 = vmul.f32 %v9332, %v9332
      %v9337 = vsel %vm444, %v9333, 0.0
      %9338 = vadd.xlane.f32.xlu0 %v9337
      %v9339 = vpop.xlane.xlu0 %9338
      %v9340 = vsel %vm444, %v9334, 0.0
      %9341 = vadd.xlane.f32.xlu0 %v9340
      %v9342 = vpop.xlane.xlu0 %9341
      %v9343 = vsel %vm444, %v9335, 0.0
      %9344 = vadd.xlane.f32.xlu0 %v9343
      %v9345 = vpop.xlane.xlu0 %9344
      %v9346 = vsel %vm444, %v9336, 0.0
      %9347 = vadd.xlane.f32.xlu0 %v9346
      %v9348 = vpop.xlane.xlu0 %9347
      %v9349 = vmul.f32 %v9339, %v4550
      %v9350 = vmul.f32 %v9342, %v4550
      %v9351 = vmul.f32 %v9345, %v4550
      %v9352 = vmul.f32 %v9348, %v4550
      %v9353 = vadd.f32 %v9349, 1e-05
      %v9354 = vadd.f32 %v9350, 1e-05
      %v9355 = vadd.f32 %v9351, 1e-05
      %v9356 = vadd.f32 %v9352, 1e-05
      %v9357 = vrsqrt.pop %v9353
      %v9358 = vrsqrt.pop %v9354
      %v9359 = vrsqrt.pop %v9355
      %v9360 = vrsqrt.pop %v9356
      %v9361 = vmul.f32 %v9329, %v9357
      %v9362 = vmul.f32 %v9330, %v9358
      %v9363 = vmul.f32 %v9331, %v9359
      %v9364 = vmul.f32 %v9332, %v9360
      %v9365 = vlaneseq
      %v9366 = vshrl.u32 %v9365, 7
      %v9367 = vsub.s32 0, %v9366
      %v9368 = vrot.slane %v4903, %v9367
      %v9369 = vmul.f32 %v9361, %v9368
      %v9370 = vmul.f32 %v9362, %v9368
      %v9371 = vmul.f32 %v9363, %v9368
      %v9372 = vmul.f32 %v9364, %v9368
      %v9373 = vlaneseq
      %v9374 = vshrl.u32 %v9373, 7
      %v9375 = vsub.s32 0, %v9374
      %v9376 = vrot.slane %v4904, %v9375
      %v9377 = vadd.f32 %v9369, %v9376
      %v9378 = vadd.f32 %v9370, %v9376
      %v9379 = vadd.f32 %v9371, %v9376
      %v9380 = vadd.f32 %v9372, %v9376
      %v9381 = vld [vmem:[%s7 + $0xf] sm:$0x1]
      %v9382 = vld [vmem:[%s7 + $0x10] sm:$0x1]
      %v9383 = vsel %vm444, %v9377, 0.0
      %9384 = vadd.xlane.f32.xlu0 %v9383
      %v9385 = vpop.xlane.xlu0 %9384
      %v9386 = vsel %vm444, %v9378, 0.0
      %9387 = vadd.xlane.f32.xlu0 %v9386
      %v9388 = vpop.xlane.xlu0 %9387
      %v9389 = vsel %vm444, %v9379, 0.0
      %9390 = vadd.xlane.f32.xlu0 %v9389
      %v9391 = vpop.xlane.xlu0 %9390
      %v9392 = vsel %vm444, %v9380, 0.0
      %9393 = vadd.xlane.f32.xlu0 %v9392
      %v9394 = vpop.xlane.xlu0 %9393
      %v9395 = vmul.f32 %v9385, %v4550
      %v9396 = vmul.f32 %v9388, %v4550
      %v9397 = vmul.f32 %v9391, %v4550
      %v9398 = vmul.f32 %v9394, %v4550
      %v9399 = vsub.f32 %v9377, %v9395
      %v9400 = vsub.f32 %v9378, %v9396
      %v9401 = vsub.f32 %v9379, %v9397
      %v9402 = vsub.f32 %v9380, %v9398
      %v9403 = vmul.f32 %v9399, %v9399
      %v9404 = vmul.f32 %v9400, %v9400
      %v9405 = vmul.f32 %v9401, %v9401
      %v9406 = vmul.f32 %v9402, %v9402
      %v9407 = vsel %vm444, %v9403, 0.0
      %9408 = vadd.xlane.f32.xlu0 %v9407
      %v9409 = vpop.xlane.xlu0 %9408
      %v9410 = vsel %vm444, %v9404, 0.0
      %9411 = vadd.xlane.f32.xlu0 %v9410
      %v9412 = vpop.xlane.xlu0 %9411
      %v9413 = vsel %vm444, %v9405, 0.0
      %9414 = vadd.xlane.f32.xlu0 %v9413
      %v9415 = vpop.xlane.xlu0 %9414
      %v9416 = vsel %vm444, %v9406, 0.0
      %9417 = vadd.xlane.f32.xlu0 %v9416
      %v9418 = vpop.xlane.xlu0 %9417
      %v9419 = vmul.f32 %v9409, %v4550
      %v9420 = vmul.f32 %v9412, %v4550
      %v9421 = vmul.f32 %v9415, %v4550
      %v9422 = vmul.f32 %v9418, %v4550
      %v9423 = vadd.f32 %v9419, 1e-05
      %v9424 = vadd.f32 %v9420, 1e-05
      %v9425 = vadd.f32 %v9421, 1e-05
      %v9426 = vadd.f32 %v9422, 1e-05
      %v9427 = vrsqrt.pop %v9423
      %v9428 = vrsqrt.pop %v9424
      %v9429 = vrsqrt.pop %v9425
      %v9430 = vrsqrt.pop %v9426
      %v9431 = vmul.f32 %v9399, %v9427
      %v9432 = vmul.f32 %v9400, %v9428
      %v9433 = vmul.f32 %v9401, %v9429
      %v9434 = vmul.f32 %v9402, %v9430
      %v9435 = vlaneseq
      %v9436 = vshrl.u32 %v9435, 7
      %v9437 = vsub.s32 0, %v9436
      %v9438 = vrot.slane %v9381, %v9437
      %v9439 = vmul.f32 %v9431, %v9438
      %v9440 = vmul.f32 %v9432, %v9438
      %v9441 = vmul.f32 %v9433, %v9438
      %v9442 = vmul.f32 %v9434, %v9438
      %v9443 = vlaneseq
      %v9444 = vshrl.u32 %v9443, 7
      %v9445 = vsub.s32 0, %v9444
      %v9446 = vrot.slane %v9382, %v9445
      %v9447 = vadd.f32 %v9439, %v9446
      %v9448 = vadd.f32 %v9440, %v9446
      %v9449 = vadd.f32 %v9441, %v9446
      %v9450 = vadd.f32 %v9442, %v9446
      %v9451 = vld [vmem:[%s7 + $0x12] sm:$0x1]
      %v9452 = vld [vmem:[%s7 + $0x11] sm:$0x1]
      %v9453 = vlaneseq
      %v9454 = vshrl.u32 %v9453, 7
      %v9455 = vsub.s32 0, %v9454
      %v9456 = vrot.slane %v9452, %v9455
      %v9457 = vmul.f32 %v9447, %v9456
      %v9458 = vmul.f32 %v9448, %v9456
      %v9459 = vmul.f32 %v9449, %v9456
      %v9460 = vmul.f32 %v9450, %v9456
      %v9465 = vrot.slane %v9458, 7
      %v9466 = vrot.slane %v9459, 6
      %vm9467 = vcmask 1041409
      %v9468 = vsel %vm9467, %v9466, %v9465
      %v9469 = vrot.slane %v9460, 5
      %vm9470 = vcmask 1042434
      %v9471 = vsel %vm9470, %v9469, %v9468
      %vm9474 = vcmask 261127
      %v9475 = vsel %vm9474, %v9457, 0.0
      %9476 = vadd.xlane.f32.xlu0 %v9475
      %v9477 = vpop.xlane.xlu0 %9476
      %vm9478 = vcmask 256000
      %v9479 = vsel %vm9478, %v9471, 0.0
      %9480 = vadd.xlane.f32.xlu0 %v9479
      %v9481 = vpop.xlane.xlu0 %9480
      %v9482 = vlaneseq
      %v9483 = vshrl.u32 %v9482, 7
      %v9484 = vsub.s32 0, %v9483
      %v9485 = vrot.slane %v9451, %v9484
      %v9486 = vadd.f32 %v9477, %v9485
      %v9487 = vadd.f32 %v9481, %v9485
      %v9488 = vtanh.pop %v9486
      %v9489 = vtanh.pop %v9487
      %v9490 = vsub.f32 %v9486, %v9488
      %v9491 = vsub.f32 %v9487, %v9489
      %vm9492 = vcmask 7175
      %9493 = vst.msk [vmem:[%s303 - $0x7] sm:$0x80] %vm9492, %v9490
      %vm9494 = vcmask 2048
      %9495 = vst.msk [vmem:[%s303 + $0x1] sm:$0x7] %vm9494, %v9491
      %p9496 = scmp.lt.s32.totalorder %s19, 1
      %s9497 = scalar_select %p9496, %s19, 1
      %s9498 = smul.addr %s9497, 4
      %s9499 = scalar_lea.vmem %s8, %s9498
      // Predicated region
      $region53: #{transformer_forward.1} parent=51 // pred_check
        %p9500 = pneg %p210
      $region54: #{transformer_forward.1} parent=51 // pred_check_branch
        %9502 = sbr.rel (%p9500) target = $region56
      $region55: #{transformer_forward.1} parent=51 // pred_region
        _
      $region56: #{transformer_forward.1} parent=51 // pred_fallthru
        _
    $region52: #{transformer_forward.1} parent=5 // pred_fallthru
      _
    %p9503 = scmp.le.s32.totalorder 2, %s14
    // Predicated region
    $region57: #{transformer_forward.1} parent=5 // pred_check
      %p9504 = pneg %p9503
    $region58: #{transformer_forward.1} parent=5 // pred_check_branch
      %9506 = sbr.rel (%p9504) target = $region60
    $region59: #{transformer_forward.1} parent=5 // pred_region
      %s9507 = ssub.s32 %s14, 2
      // Predicated region
      $region61: #{transformer_forward.1} parent=59 // pred_check
        %p9508 = pneg %p216
      $region62: #{transformer_forward.1} parent=59 // pred_check_branch
        %9510 = sbr.rel (%p9508) target = $region64
      $region63: #{transformer_forward.1} parent=59 // pred_region
        %p9511 = scmp.lt.s32.totalorder %s20, 1
        %s9512 = scalar_select %p9511, %s20, 1
        %s9513 = smul.addr %s9512, 4
        %s9514 = scalar_lea.vmem %s8, %s9513
      $region64: #{transformer_forward.1} parent=59 // pred_fallthru
        _
    $region60: #{transformer_forward.1} parent=5 // pred_fallthru
      _
  $region6: #{transformer_forward.1} parent=0 // loop_footer
    %s18 = sadd.s32 1, %s14
  $region7: #{transformer_forward.1} parent=0 // loop_footer_branch
    %13 = sbr.rel target = $region3
  $region8: #{transformer_forward.1} parent=0 // loop_exit
    _

</llo_original>
